<compile_context>
chip_gen: v7x
topology: tpu7x:2x2x1
jax: 0.10.0
libtpu: 0.0.40
codegen_flags: <defaults>
</compile_context>

<pallas_src>
import jax
import jax.numpy as jnp
import numpy as np
from jax import lax
from jax.experimental import pallas as pl
from jax.experimental.pallas import tpu as pltpu

LN_EPS = 1e-5  # nn.LayerNorm default eps


# ---------------------------------------------------------------------------
# Tile selection helpers (respect TPU (8, 128) block constraints).
# ---------------------------------------------------------------------------
def _pick_tile(n, cap, align=8):
    """Largest divisor of n that is <= cap and (a multiple of `align` or == n)."""
    cap = max(1, min(n, cap))
    for d in range(cap, 0, -1):
        if n % d == 0 and (d == n or d % align == 0):
            return d
    return n


def _pick_tj(n, cap, dh):
    """Divisor of n usable as j-tile: sublane-aligned and lane-dense (tj*dh % 128)."""
    def ok(d):
        return d == n or (d % 8 == 0 and (d * dh) % 128 == 0)

    divisors = [d for d in range(1, n + 1) if n % d == 0 and ok(d)]
    under = [d for d in divisors if d <= cap]
    return max(under) if under else min(divisors)


# ---------------------------------------------------------------------------
# Kernel 1: LayerNorm(dim_msa) + LinearNoBias(dim_msa -> 2*dim_hidden)
#   grid = (B, S, N // TI); each step handles TI sequence positions of one (b, s).
#   Outputs (bf16):
#     at : (B, N//TI, S, dh, TI)  "a" written transposed per tile (d-major) so the
#                                 fused kernel accumulates in a (d,i) x (j,e) layout
#     bv : (B, S, N, dh)          "b" in its natural layout
# ---------------------------------------------------------------------------
def _ln_hidden_kernel(msa_ref, g_ref, beta_ref, wa_ref, wb_ref, at_ref, bv_ref):
    x = msa_ref[0, 0]                                     # (TI, dm) f32
    mu = jnp.mean(x, axis=-1, keepdims=True)
    var = jnp.mean(jnp.square(x - mu), axis=-1, keepdims=True)
    xn = (x - mu) * lax.rsqrt(var + LN_EPS)
    xn = xn * g_ref[...] + beta_ref[...]
    a = jnp.dot(xn, wa_ref[...], preferred_element_type=jnp.float32)   # (TI, dh)
    b = jnp.dot(xn, wb_ref[...], preferred_element_type=jnp.float32)   # (TI, dh)
    at_ref[0, 0, 0] = a.T.astype(at_ref.dtype)            # (dh, TI)
    bv_ref[0, 0] = b.astype(bv_ref.dtype)                 # (TI, dh)


# ---------------------------------------------------------------------------
# Kernel 2 (fused): outer product over s + mean + pairwise projection (+ bias)
#   grid = (B, N//TI, N//TJ, S//TS); s is last / "arbitrary".
#   acc[(d,i),(j,e)] += sum_s a[s,i,d] * b[s,j,e]   (bf16 operands, f32 accumulate)
#   finalize: out[i,j,:] = sum_d acc[d-block, j-block] @ W3_scaled[d] + bias,
#   written straight into the (B, N, N, dp) output tile -- no HBM intermediate.
#   (1/num_msa is pre-folded into W3_scaled.)
# ---------------------------------------------------------------------------
def _fused_opm_kernel(at_ref, b_ref, w3_ref, bias_ref, out_ref, acc_ref):
    s_idx = pl.program_id(3)

    @pl.when(s_idx == 0)
    def _init():
        acc_ref[...] = jnp.zeros_like(acc_ref)

    a2 = at_ref[0, 0]          # (TS, dh*TI) bf16   rows s, cols (d, i)
    b2 = b_ref[0]              # (TS, TJ*dh) bf16   rows s, cols (j, e)
    acc_ref[...] += lax.dot_general(
        a2, b2, dimension_numbers=(((0,), (0,)), ((), ())),
        preferred_element_type=jnp.float32)

    @pl.when(s_idx == pl.num_programs(3) - 1)
    def _finalize():
        _, ti, tj, dp = out_ref.shape
        dh = w3_ref.shape[0]
        bias = bias_ref[...]                              # (1, dp)
        for j in range(tj):
            o_j = jnp.zeros((ti, dp), jnp.float32)
            for d in range(dh):
                blk = acc_ref[pl.ds(d * ti, ti), pl.ds(j * dh, dh)]   # (TI, dh)
                o_j = o_j + jnp.dot(blk, w3_ref[d],
                                    preferred_element_type=jnp.float32)
            out_ref[0, :, j, :] = o_j + bias


def outer_product_mean(msa, params):
    B, S, N, dm = msa.shape
    dh = params["w_hidden"].shape[1] // 2
    dp = params["w_pairwise"].shape[1]

    # --- tile sizes (re-derived per shape) -----------------------------------
    TI = _pick_tile(N, 128)
    ACC_BUDGET = 4 * 1024 * 1024                      # f32 accumulator cap
    TJ = _pick_tj(N, max(1, ACC_BUDGET // (4 * dh * dh * TI)), dh)
    TS = _pick_tile(S, 512)

    # keep kernel-2 VMEM (double-buffered inputs + accumulator) under ~24 MiB
    def _vmem_est(ts):
        return (4 * dh * TI * TJ * dh            # f32 accumulator (scratch)
                + 2 * 2 * ts * dh * TI           # "a" tile, bf16, double-buffered
                + 2 * 2 * ts * TJ * dh           # "b" tile, bf16, double-buffered
                + 2 * 4 * dh * dh * dp           # w3
                + 2 * 4 * TI * TJ * dp           # out tile
                + 2 * 4 * dp)                    # bias
    while _vmem_est(TS) > 24 * 1024 * 1024 and TS > 8:
        new_ts = _pick_tile(S, TS // 2)
        if new_ts == TS:
            break
        TS = new_ts

    NI = N // TI

    wa = params["w_hidden"][:, :dh]
    wb = params["w_hidden"][:, dh:]

    # ---- Kernel 1: LayerNorm + hidden projection (bf16 outputs) ------------
    at5, bact = pl.pallas_call(
        _ln_hidden_kernel,
        out_shape=(
            jax.ShapeDtypeStruct((B, NI, S, dh, TI), jnp.bfloat16),
            jax.ShapeDtypeStruct((B, S, N, dh), jnp.bfloat16),
        ),
        grid=(B, S, NI),
        in_specs=[
            pl.BlockSpec((1, 1, TI, dm), lambda b, s, ni: (b, s, ni, 0)),
            pl.BlockSpec((1, dm), lambda b, s, ni: (0, 0)),
            pl.BlockSpec((1, dm), lambda b, s, ni: (0, 0)),
            pl.BlockSpec((dm, dh), lambda b, s, ni: (0, 0)),
            pl.BlockSpec((dm, dh), lambda b, s, ni: (0, 0)),
        ],
        out_specs=(
            pl.BlockSpec((1, 1, 1, dh, TI), lambda b, s, ni: (b, ni, s, 0, 0)),
            pl.BlockSpec((1, 1, TI, dh), lambda b, s, ni: (b, s, ni, 0)),
        ),
        compiler_params=pltpu.CompilerParams(
            dimension_semantics=("parallel", "parallel", "parallel")),
    )(msa, params["ln_gamma"], params["ln_beta"], wa, wb)

    # free, layout-preserving reshapes (merge trailing dims only)
    at = at5.reshape(B, NI, S, dh * TI)        # [b, i_tile, s, (d, i)]
    bflat = bact.reshape(B, S, N * dh)         # [b, s, (j, e)]
    # fold the 1/num_msa mean into the projection weight (one tiny XLA op)
    w3 = (params["w_pairwise"] * (1.0 / S)).reshape(dh, dh, dp)

    # ---- Kernel 2: fused outer-product mean + pairwise projection ----------
    out = pl.pallas_call(
        _fused_opm_kernel,
        out_shape=jax.ShapeDtypeStruct((B, N, N, dp), jnp.float32),
        grid=(B, NI, N // TJ, S // TS),
        in_specs=[
            pl.BlockSpec((1, 1, TS, dh * TI), lambda b, i, j, s: (b, i, s, 0)),
            pl.BlockSpec((1, TS, TJ * dh), lambda b, i, j, s: (b, s, j)),
            pl.BlockSpec((dh, dh, dp), lambda b, i, j, s: (0, 0, 0)),
            pl.BlockSpec((1, dp), lambda b, i, j, s: (0, 0)),
        ],
        out_specs=pl.BlockSpec((1, TI, TJ, dp), lambda b, i, j, s: (b, i, j, 0)),
        scratch_shapes=[pltpu.VMEM((dh * TI, TJ * dh), jnp.float32)],
        compiler_params=pltpu.CompilerParams(
            dimension_semantics=("parallel", "parallel", "parallel", "arbitrary"),
            vmem_limit_bytes=32 * 1024 * 1024),
    )(at, bflat, w3, params["b_pairwise"])

    return out


def reference(msa, params):
    """Pure-JAX reference mirroring the PyTorch forward (no masks)."""
    dh = params["w_hidden"].shape[1] // 2
    mu = msa.mean(-1, keepdims=True)
    var = jnp.mean((msa - mu) ** 2, axis=-1, keepdims=True)
    x = (msa - mu) / jnp.sqrt(var + LN_EPS)
    x = x * params["ln_gamma"][0] + params["ln_beta"][0]
    h = jnp.einsum("bsnm,mh->bsnh", x, params["w_hidden"],
                   precision=jax.lax.Precision.HIGHEST)
    a, bb = h[..., :dh], h[..., dh:]
    op = jnp.einsum("bsid,bsje->bijde", a, bb,
                    precision=jax.lax.Precision.HIGHEST)
    opm = op / msa.shape[1]
    flat = opm.reshape(*opm.shape[:3], dh * dh)
    return (
        jnp.einsum("bijk,kp->bijp", flat, params["w_pairwise"],
                   precision=jax.lax.Precision.HIGHEST)
        + params["b_pairwise"][0]
    )


if __name__ == "__main__":
    # small, MSA-module-consistent shapes
    B, S, N = 2, 8, 8            # batch, num MSA sequences, sequence length
    DIM_MSA, DIM_HIDDEN, DIM_PAIRWISE = 32, 8, 32

    key = jax.random.PRNGKey(0)
    k_msa, k_g, k_b, k_wh, k_wp, k_bp = jax.random.split(key, 6)

    msa = jax.random.normal(k_msa, (B, S, N, DIM_MSA), dtype=jnp.float32)

    # Weight matrices are stored as the transpose of the PyTorch nn.Linear weights:
    #   w_hidden   == to_hidden.weight.T          (dim_msa, 2*dim_hidden), no bias
    #   w_pairwise == to_pairwise_repr.weight.T   (dim_hidden**2, dim_pairwise)
    params = {
        "ln_gamma": 1.0 + 0.1 * jax.random.normal(k_g, (1, DIM_MSA), jnp.float32),
        "ln_beta": 0.1 * jax.random.normal(k_b, (1, DIM_MSA), jnp.float32),
        "w_hidden": jax.random.uniform(
            k_wh, (DIM_MSA, 2 * DIM_HIDDEN), jnp.float32,
            minval=-1.0 / np.sqrt(DIM_MSA), maxval=1.0 / np.sqrt(DIM_MSA)),
        "w_pairwise": jax.random.uniform(
            k_wp, (DIM_HIDDEN * DIM_HIDDEN, DIM_PAIRWISE), jnp.float32,
            minval=-1.0 / DIM_HIDDEN, maxval=1.0 / DIM_HIDDEN),
        "b_pairwise": jax.random.uniform(
            k_bp, (1, DIM_PAIRWISE), jnp.float32,
            minval=-1.0 / DIM_HIDDEN, maxval=1.0 / DIM_HIDDEN),
    }

    fn = jax.jit(outer_product_mean)
    out = jax.block_until_ready(fn(msa, params))
    assert out.shape == (B, N, N, DIM_PAIRWISE)

    ref = jax.block_until_ready(reference(msa, params))
    np.testing.assert_allclose(np.asarray(out), np.asarray(ref), rtol=2e-2, atol=2e-2)

    print("KERNEL_OK")
</pallas_src>

<mosaic_0001>
module attributes {stable_mosaic.version = 11 : i64} {
  func.func @_ln_hidden_kernel(%arg0: i32, %arg1: i32, %arg2: i32, %arg3: memref<1x1x8x32xf32, #tpu.memory_space<vmem>>, %arg4: memref<1x32xf32, #tpu.memory_space<vmem>>, %arg5: memref<1x32xf32, #tpu.memory_space<vmem>>, %arg6: memref<32x8xf32, #tpu.memory_space<vmem>>, %arg7: memref<32x8xf32, #tpu.memory_space<vmem>>, %arg8: memref<1x1x1x8x8xbf16, #tpu.memory_space<vmem>>, %arg9: memref<1x1x8x8xbf16, #tpu.memory_space<vmem>>) attributes {dimension_semantics = [#tpu.dimension_semantics<parallel>, #tpu.dimension_semantics<parallel>, #tpu.dimension_semantics<parallel>], iteration_bounds = array<i64: 2, 8, 1>, scalar_prefetch = 0 : i64, scratch_operands = 0 : i64, tpu.core_type = #tpu.core_type<tc>, window_params = [{transform_indices = @transform_0, window_bounds = array<i64: 1, 1, 8, 32>}, {pipeline_mode = #tpu.pipeline_mode<synchronous>, transform_indices = @transform_1, window_bounds = array<i64: 1, 32>}, {pipeline_mode = #tpu.pipeline_mode<synchronous>, transform_indices = @transform_2, window_bounds = array<i64: 1, 32>}, {pipeline_mode = #tpu.pipeline_mode<synchronous>, transform_indices = @transform_3, window_bounds = array<i64: 32, 8>}, {pipeline_mode = #tpu.pipeline_mode<synchronous>, transform_indices = @transform_4, window_bounds = array<i64: 32, 8>}, {transform_indices = @transform_5, window_bounds = array<i64: 1, 1, 1, 8, 8>}, {transform_indices = @transform_6, window_bounds = array<i64: 1, 1, 8, 8>}]} {
    %c0 = arith.constant 0 : index
    %c0_0 = arith.constant 0 : index
    %c0_1 = arith.constant 0 : index
    %c0_2 = arith.constant 0 : index
    %0 = vector.load %arg3[%c0, %c0_0, %c0_1, %c0_2] : memref<1x1x8x32xf32, #tpu.memory_space<vmem>>, vector<1x1x8x32xf32>
    %1 = vector.shape_cast %0 : vector<1x1x8x32xf32> to vector<8x32xf32>
    %cst = arith.constant dense<0.000000e+00> : vector<8xf32>
    %2 = vector.multi_reduction <add>, %1, %cst [1] : vector<8x32xf32> to vector<8xf32>
    %3 = vector.shape_cast %2 : vector<8xf32> to vector<8x1xf32>
    %cst_3 = arith.constant 3.200000e+01 : f32
    %4 = vector.broadcast %cst_3 : f32 to vector<8x1xf32>
    %5 = arith.divf %3, %4 : vector<8x1xf32>
    %6 = vector.broadcast %5 : vector<8x1xf32> to vector<8x32xf32>
    %7 = arith.subf %1, %6 : vector<8x32xf32>
    %8 = arith.mulf %7, %7 : vector<8x32xf32>
    %cst_4 = arith.constant dense<0.000000e+00> : vector<8xf32>
    %9 = vector.multi_reduction <add>, %8, %cst_4 [1] : vector<8x32xf32> to vector<8xf32>
    %10 = vector.shape_cast %9 : vector<8xf32> to vector<8x1xf32>
    %cst_5 = arith.constant 3.200000e+01 : f32
    %11 = vector.broadcast %cst_5 : f32 to vector<8x1xf32>
    %12 = arith.divf %10, %11 : vector<8x1xf32>
    %13 = vector.broadcast %5 : vector<8x1xf32> to vector<8x32xf32>
    %14 = arith.subf %1, %13 : vector<8x32xf32>
    %cst_6 = arith.constant 9.99999974E-6 : f32
    %15 = vector.broadcast %cst_6 : f32 to vector<8x1xf32>
    %16 = arith.addf %12, %15 : vector<8x1xf32>
    %17 = math.rsqrt %16 : vector<8x1xf32>
    %18 = vector.broadcast %17 : vector<8x1xf32> to vector<8x32xf32>
    %19 = arith.mulf %14, %18 : vector<8x32xf32>
    %c0_7 = arith.constant 0 : index
    %c0_8 = arith.constant 0 : index
    %20 = vector.load %arg4[%c0_7, %c0_8] : memref<1x32xf32, #tpu.memory_space<vmem>>, vector<1x32xf32>
    %21 = vector.broadcast %20 : vector<1x32xf32> to vector<8x32xf32>
    %22 = arith.mulf %19, %21 : vector<8x32xf32>
    %c0_9 = arith.constant 0 : index
    %c0_10 = arith.constant 0 : index
    %23 = vector.load %arg5[%c0_9, %c0_10] : memref<1x32xf32, #tpu.memory_space<vmem>>, vector<1x32xf32>
    %24 = vector.broadcast %23 : vector<1x32xf32> to vector<8x32xf32>
    %25 = arith.addf %22, %24 : vector<8x32xf32>
    %c0_11 = arith.constant 0 : index
    %c0_12 = arith.constant 0 : index
    %26 = vector.load %arg6[%c0_11, %c0_12] : memref<32x8xf32, #tpu.memory_space<vmem>>, vector<32x8xf32>
    %cst_13 = arith.constant dense<0.000000e+00> : vector<8x8xf32>
    %27 = tpu.matmul %25, %26, %cst_13 {dimension_numbers = #tpu.dot_dimension_numbers<[1], [0], [0], [1], [0, 0, 1, 1], [], []>} : vector<8x32xf32>, vector<32x8xf32>, vector<8x8xf32> -> vector<8x8xf32>
    %c0_14 = arith.constant 0 : index
    %c0_15 = arith.constant 0 : index
    %28 = vector.load %arg7[%c0_14, %c0_15] : memref<32x8xf32, #tpu.memory_space<vmem>>, vector<32x8xf32>
    %cst_16 = arith.constant dense<0.000000e+00> : vector<8x8xf32>
    %29 = tpu.matmul %25, %28, %cst_16 {dimension_numbers = #tpu.dot_dimension_numbers<[1], [0], [0], [1], [0, 0, 1, 1], [], []>} : vector<8x32xf32>, vector<32x8xf32>, vector<8x8xf32> -> vector<8x8xf32>
    %30 = tpu.transpose %27, [1, 0] : vector<8x8xf32> -> vector<8x8xf32>
    %31 = arith.truncf %30 : vector<8x8xf32> to vector<8x8xbf16>
    %c0_17 = arith.constant 0 : index
    %c0_18 = arith.constant 0 : index
    %c0_19 = arith.constant 0 : index
    %c0_20 = arith.constant 0 : index
    %c0_21 = arith.constant 0 : index
    %32 = vector.load %arg8[%c0_17, %c0_18, %c0_19, %c0_20, %c0_21] : memref<1x1x1x8x8xbf16, #tpu.memory_space<vmem>>, vector<1x1x1x8x8xbf16>
    %33 = vector.shape_cast %32 : vector<1x1x1x8x8xbf16> to vector<8x8xbf16>
    %34 = vector.shape_cast %31 : vector<8x8xbf16> to vector<1x1x1x8x8xbf16>
    tpu.vector_store %arg8[%c0_17, %c0_18, %c0_19, %c0_20, %c0_21], %34 {strides = array<i32>} : memref<1x1x1x8x8xbf16, #tpu.memory_space<vmem>>, vector<1x1x1x8x8xbf16>,
    %35 = arith.truncf %29 : vector<8x8xf32> to vector<8x8xbf16>
    %c0_22 = arith.constant 0 : index
    %c0_23 = arith.constant 0 : index
    %c0_24 = arith.constant 0 : index
    %c0_25 = arith.constant 0 : index
    %36 = vector.load %arg9[%c0_22, %c0_23, %c0_24, %c0_25] : memref<1x1x8x8xbf16, #tpu.memory_space<vmem>>, vector<1x1x8x8xbf16>
    %37 = vector.shape_cast %36 : vector<1x1x8x8xbf16> to vector<8x8xbf16>
    %38 = vector.shape_cast %35 : vector<8x8xbf16> to vector<1x1x8x8xbf16>
    tpu.vector_store %arg9[%c0_22, %c0_23, %c0_24, %c0_25], %38 {strides = array<i32>} : memref<1x1x8x8xbf16, #tpu.memory_space<vmem>>, vector<1x1x8x8xbf16>,
    return
  }
  func.func @transform_0(%arg0: i32, %arg1: i32, %arg2: i32) -> (i32, i32, i32, i32) {
    %c0_i32 = arith.constant 0 : i32
    %c0_i32_0 = arith.constant 0 : i32
    return %arg0, %arg1, %arg2, %c0_i32 : i32, i32, i32, i32
  }
  func.func @transform_1(%arg0: i32, %arg1: i32, %arg2: i32) -> (i32, i32) {
    %c0_i32 = arith.constant 0 : i32
    %c0_i32_0 = arith.constant 0 : i32
    %c0_i32_1 = arith.constant 0 : i32
    return %c0_i32, %c0_i32_0 : i32, i32
  }
  func.func @transform_2(%arg0: i32, %arg1: i32, %arg2: i32) -> (i32, i32) {
    %c0_i32 = arith.constant 0 : i32
    %c0_i32_0 = arith.constant 0 : i32
    %c0_i32_1 = arith.constant 0 : i32
    return %c0_i32, %c0_i32_0 : i32, i32
  }
  func.func @transform_3(%arg0: i32, %arg1: i32, %arg2: i32) -> (i32, i32) {
    %c0_i32 = arith.constant 0 : i32
    %c0_i32_0 = arith.constant 0 : i32
    %c0_i32_1 = arith.constant 0 : i32
    return %c0_i32, %c0_i32_0 : i32, i32
  }
  func.func @transform_4(%arg0: i32, %arg1: i32, %arg2: i32) -> (i32, i32) {
    %c0_i32 = arith.constant 0 : i32
    %c0_i32_0 = arith.constant 0 : i32
    %c0_i32_1 = arith.constant 0 : i32
    return %c0_i32, %c0_i32_0 : i32, i32
  }
  func.func @transform_5(%arg0: i32, %arg1: i32, %arg2: i32) -> (i32, i32, i32, i32, i32) {
    %c0_i32 = arith.constant 0 : i32
    %c0_i32_0 = arith.constant 0 : i32
    %c0_i32_1 = arith.constant 0 : i32
    return %arg0, %arg2, %arg1, %c0_i32, %c0_i32_0 : i32, i32, i32, i32, i32
  }
  func.func @transform_6(%arg0: i32, %arg1: i32, %arg2: i32) -> (i32, i32, i32, i32) {
    %c0_i32 = arith.constant 0 : i32
    %c0_i32_0 = arith.constant 0 : i32
    return %arg0, %arg1, %arg2, %c0_i32 : i32, i32, i32, i32
  }
}

module attributes {stable_mosaic.version = 11 : i64} {
  func.func @_fused_opm_kernel(%arg0: i32, %arg1: i32, %arg2: i32, %arg3: i32, %arg4: memref<1x1x8x64xbf16, #tpu.memory_space<vmem>>, %arg5: memref<1x8x64xbf16, #tpu.memory_space<vmem>>, %arg6: memref<8x8x32xf32, #tpu.memory_space<vmem>>, %arg7: memref<1x32xf32, #tpu.memory_space<vmem>>, %arg8: memref<1x8x8x32xf32, #tpu.memory_space<vmem>>, %arg9: memref<64x64xf32, #tpu.memory_space<vmem>>) attributes {dimension_semantics = [#tpu.dimension_semantics<parallel>, #tpu.dimension_semantics<parallel>, #tpu.dimension_semantics<parallel>, #tpu.dimension_semantics<arbitrary>], iteration_bounds = array<i64: 2, 1, 1, 1>, scalar_prefetch = 0 : i64, scratch_operands = 1 : i64, tpu.core_type = #tpu.core_type<tc>, window_params = [{transform_indices = @transform_0, window_bounds = array<i64: 1, 1, 8, 64>}, {transform_indices = @transform_1, window_bounds = array<i64: 1, 8, 64>}, {pipeline_mode = #tpu.pipeline_mode<synchronous>, transform_indices = @transform_2, window_bounds = array<i64: 8, 8, 32>}, {pipeline_mode = #tpu.pipeline_mode<synchronous>, transform_indices = @transform_3, window_bounds = array<i64: 1, 32>}, {transform_indices = @transform_4, window_bounds = array<i64: 1, 8, 8, 32>}]} {
    %c0_i32 = arith.constant 0 : i32
    %0 = arith.cmpi eq, %arg3, %c0_i32 : i32
    %1 = arith.extui %0 : i1 to i32
    %c0_i32_0 = arith.constant 0 : i32
    %2 = arith.cmpi ne, %1, %c0_i32_0 : i32
    scf.if %2 {
      %cst_13 = arith.constant 0.000000e+00 : f32
      %14 = vector.broadcast %cst_13 : f32 to vector<64x64xf32>
      %c0_14 = arith.constant 0 : index
      %c0_15 = arith.constant 0 : index
      %15 = vector.load %arg9[%c0_14, %c0_15] : memref<64x64xf32, #tpu.memory_space<vmem>>, vector<64x64xf32>
      tpu.vector_store %arg9[%c0_14, %c0_15], %14 {strides = array<i32>} : memref<64x64xf32, #tpu.memory_space<vmem>>, vector<64x64xf32>,
    } else {
    }
    %c0 = arith.constant 0 : index
    %c0_1 = arith.constant 0 : index
    %c0_2 = arith.constant 0 : index
    %c0_3 = arith.constant 0 : index
    %3 = vector.load %arg4[%c0, %c0_1, %c0_2, %c0_3] : memref<1x1x8x64xbf16, #tpu.memory_space<vmem>>, vector<1x1x8x64xbf16>
    %4 = vector.shape_cast %3 : vector<1x1x8x64xbf16> to vector<8x64xbf16>
    %c0_4 = arith.constant 0 : index
    %c0_5 = arith.constant 0 : index
    %c0_6 = arith.constant 0 : index
    %5 = vector.load %arg5[%c0_4, %c0_5, %c0_6] : memref<1x8x64xbf16, #tpu.memory_space<vmem>>, vector<1x8x64xbf16>
    %6 = vector.shape_cast %5 : vector<1x8x64xbf16> to vector<8x64xbf16>
    %c0_7 = arith.constant 0 : index
    %c0_8 = arith.constant 0 : index
    %7 = vector.load %arg9[%c0_7, %c0_8] : memref<64x64xf32, #tpu.memory_space<vmem>>, vector<64x64xf32>
    %cst = arith.constant dense<0.000000e+00> : vector<64x64xf32>
    %8 = tpu.matmul %4, %6, %cst {dimension_numbers = #tpu.dot_dimension_numbers<[0], [0], [1], [1], [0, 1, 1, 1], [], []>} : vector<8x64xbf16>, vector<8x64xbf16>, vector<64x64xf32> -> vector<64x64xf32>
    %9 = arith.addf %7, %8 : vector<64x64xf32>
    %c0_9 = arith.constant 0 : index
    %c0_10 = arith.constant 0 : index
    %10 = vector.load %arg9[%c0_9, %c0_10] : memref<64x64xf32, #tpu.memory_space<vmem>>, vector<64x64xf32>
    tpu.vector_store %arg9[%c0_9, %c0_10], %9 {strides = array<i32>} : memref<64x64xf32, #tpu.memory_space<vmem>>, vector<64x64xf32>,
    %c0_i32_11 = arith.constant 0 : i32
    %11 = arith.cmpi eq, %arg3, %c0_i32_11 : i32
    %12 = arith.extui %11 : i1 to i32
    %c0_i32_12 = arith.constant 0 : i32
    %13 = arith.cmpi ne, %12, %c0_i32_12 : i32
    scf.if %13 {
      %c0_13 = arith.constant 0 : index
      %c0_14 = arith.constant 0 : index
      %14 = vector.load %arg7[%c0_13, %c0_14] : memref<1x32xf32, #tpu.memory_space<vmem>>, vector<1x32xf32>
      %cst_15 = arith.constant 0.000000e+00 : f32
      %15 = vector.broadcast %cst_15 : f32 to vector<8x32xf32>
      %c0_16 = arith.constant 0 : index
      %c0_17 = arith.constant 0 : index
      %16 = vector.load %arg9[%c0_16, %c0_17] : memref<64x64xf32, #tpu.memory_space<vmem>>, vector<8x8xf32>
      %c0_18 = arith.constant 0 : index
      %c0_19 = arith.constant 0 : index
      %c0_20 = arith.constant 0 : index
      %17 = vector.load %arg6[%c0_18, %c0_19, %c0_20] : memref<8x8x32xf32, #tpu.memory_space<vmem>>, vector<1x8x32xf32>
      %18 = vector.shape_cast %17 : vector<1x8x32xf32> to vector<8x32xf32>
      %cst_21 = arith.constant dense<0.000000e+00> : vector<8x32xf32>
      %19 = tpu.matmul %16, %18, %cst_21 {dimension_numbers = #tpu.dot_dimension_numbers<[1], [0], [0], [1], [0, 0, 1, 1], [], []>} : vector<8x8xf32>, vector<8x32xf32>, vector<8x32xf32> -> vector<8x32xf32>
      %20 = arith.addf %15, %19 : vector<8x32xf32>
      %c8 = arith.constant 8 : index
      %c0_22 = arith.constant 0 : index
      %21 = vector.load %arg9[%c8, %c0_22] : memref<64x64xf32, #tpu.memory_space<vmem>>, vector<8x8xf32>
      %c1 = arith.constant 1 : index
      %c0_23 = arith.constant 0 : index
      %c0_24 = arith.constant 0 : index
      %22 = vector.load %arg6[%c1, %c0_23, %c0_24] : memref<8x8x32xf32, #tpu.memory_space<vmem>>, vector<1x8x32xf32>
      %23 = vector.shape_cast %22 : vector<1x8x32xf32> to vector<8x32xf32>
      %cst_25 = arith.constant dense<0.000000e+00> : vector<8x32xf32>
      %24 = tpu.matmul %21, %23, %cst_25 {dimension_numbers = #tpu.dot_dimension_numbers<[1], [0], [0], [1], [0, 0, 1, 1], [], []>} : vector<8x8xf32>, vector<8x32xf32>, vector<8x32xf32> -> vector<8x32xf32>
      %25 = arith.addf %20, %24 : vector<8x32xf32>
      %c16 = arith.constant 16 : index
      %c0_26 = arith.constant 0 : index
      %26 = vector.load %arg9[%c16, %c0_26] : memref<64x64xf32, #tpu.memory_space<vmem>>, vector<8x8xf32>
      %c2 = arith.constant 2 : index
      %c0_27 = arith.constant 0 : index
      %c0_28 = arith.constant 0 : index
      %27 = vector.load %arg6[%c2, %c0_27, %c0_28] : memref<8x8x32xf32, #tpu.memory_space<vmem>>, vector<1x8x32xf32>
      %28 = vector.shape_cast %27 : vector<1x8x32xf32> to vector<8x32xf32>
      %cst_29 = arith.constant dense<0.000000e+00> : vector<8x32xf32>
      %29 = tpu.matmul %26, %28, %cst_29 {dimension_numbers = #tpu.dot_dimension_numbers<[1], [0], [0], [1], [0, 0, 1, 1], [], []>} : vector<8x8xf32>, vector<8x32xf32>, vector<8x32xf32> -> vector<8x32xf32>
      %30 = arith.addf %25, %29 : vector<8x32xf32>
      %c24 = arith.constant 24 : index
      %c0_30 = arith.constant 0 : index
      %31 = vector.load %arg9[%c24, %c0_30] : memref<64x64xf32, #tpu.memory_space<vmem>>, vector<8x8xf32>
      %c3 = arith.constant 3 : index
      %c0_31 = arith.constant 0 : index
      %c0_32 = arith.constant 0 : index
      %32 = vector.load %arg6[%c3, %c0_31, %c0_32] : memref<8x8x32xf32, #tpu.memory_space<vmem>>, vector<1x8x32xf32>
      %33 = vector.shape_cast %32 : vector<1x8x32xf32> to vector<8x32xf32>
      %cst_33 = arith.constant dense<0.000000e+00> : vector<8x32xf32>
      %34 = tpu.matmul %31, %33, %cst_33 {dimension_numbers = #tpu.dot_dimension_numbers<[1], [0], [0], [1], [0, 0, 1, 1], [], []>} : vector<8x8xf32>, vector<8x32xf32>, vector<8x32xf32> -> vector<8x32xf32>
      %35 = arith.addf %30, %34 : vector<8x32xf32>
      %c32 = arith.constant 32 : index
      %c0_34 = arith.constant 0 : index
      %36 = vector.load %arg9[%c32, %c0_34] : memref<64x64xf32, #tpu.memory_space<vmem>>, vector<8x8xf32>
      %c4 = arith.constant 4 : index
      %c0_35 = arith.constant 0 : index
      %c0_36 = arith.constant 0 : index
      %37 = vector.load %arg6[%c4, %c0_35, %c0_36] : memref<8x8x32xf32, #tpu.memory_space<vmem>>, vector<1x8x32xf32>
      %38 = vector.shape_cast %37 : vector<1x8x32xf32> to vector<8x32xf32>
      %cst_37 = arith.constant dense<0.000000e+00> : vector<8x32xf32>
      %39 = tpu.matmul %36, %38, %cst_37 {dimension_numbers = #tpu.dot_dimension_numbers<[1], [0], [0], [1], [0, 0, 1, 1], [], []>} : vector<8x8xf32>, vector<8x32xf32>, vector<8x32xf32> -> vector<8x32xf32>
      %40 = arith.addf %35, %39 : vector<8x32xf32>
      %c40 = arith.constant 40 : index
      %c0_38 = arith.constant 0 : index
      %41 = vector.load %arg9[%c40, %c0_38] : memref<64x64xf32, #tpu.memory_space<vmem>>, vector<8x8xf32>
      %c5 = arith.constant 5 : index
      %c0_39 = arith.constant 0 : index
      %c0_40 = arith.constant 0 : index
      %42 = vector.load %arg6[%c5, %c0_39, %c0_40] : memref<8x8x32xf32, #tpu.memory_space<vmem>>, vector<1x8x32xf32>
      %43 = vector.shape_cast %42 : vector<1x8x32xf32> to vector<8x32xf32>
      %cst_41 = arith.constant dense<0.000000e+00> : vector<8x32xf32>
      %44 = tpu.matmul %41, %43, %cst_41 {dimension_numbers = #tpu.dot_dimension_numbers<[1], [0], [0], [1], [0, 0, 1, 1], [], []>} : vector<8x8xf32>, vector<8x32xf32>, vector<8x32xf32> -> vector<8x32xf32>
      %45 = arith.addf %40, %44 : vector<8x32xf32>
      %c48 = arith.constant 48 : index
      %c0_42 = arith.constant 0 : index
      %46 = vector.load %arg9[%c48, %c0_42] : memref<64x64xf32, #tpu.memory_space<vmem>>, vector<8x8xf32>
      %c6 = arith.constant 6 : index
      %c0_43 = arith.constant 0 : index
      %c0_44 = arith.constant 0 : index
      %47 = vector.load %arg6[%c6, %c0_43, %c0_44] : memref<8x8x32xf32, #tpu.memory_space<vmem>>, vector<1x8x32xf32>
      %48 = vector.shape_cast %47 : vector<1x8x32xf32> to vector<8x32xf32>
      %cst_45 = arith.constant dense<0.000000e+00> : vector<8x32xf32>
      %49 = tpu.matmul %46, %48, %cst_45 {dimension_numbers = #tpu.dot_dimension_numbers<[1], [0], [0], [1], [0, 0, 1, 1], [], []>} : vector<8x8xf32>, vector<8x32xf32>, vector<8x32xf32> -> vector<8x32xf32>
      %50 = arith.addf %45, %49 : vector<8x32xf32>
      %c56 = arith.constant 56 : index
      %c0_46 = arith.constant 0 : index
      %51 = vector.load %arg9[%c56, %c0_46] : memref<64x64xf32, #tpu.memory_space<vmem>>, vector<8x8xf32>
      %c7 = arith.constant 7 : index
      %c0_47 = arith.constant 0 : index
      %c0_48 = arith.constant 0 : index
      %52 = vector.load %arg6[%c7, %c0_47, %c0_48] : memref<8x8x32xf32, #tpu.memory_space<vmem>>, vector<1x8x32xf32>
      %53 = vector.shape_cast %52 : vector<1x8x32xf32> to vector<8x32xf32>
      %cst_49 = arith.constant dense<0.000000e+00> : vector<8x32xf32>
      %54 = tpu.matmul %51, %53, %cst_49 {dimension_numbers = #tpu.dot_dimension_numbers<[1], [0], [0], [1], [0, 0, 1, 1], [], []>} : vector<8x8xf32>, vector<8x32xf32>, vector<8x32xf32> -> vector<8x32xf32>
      %55 = arith.addf %50, %54 : vector<8x32xf32>
      %56 = vector.broadcast %14 : vector<1x32xf32> to vector<8x32xf32>
      %57 = arith.addf %55, %56 : vector<8x32xf32>
      %c0_50 = arith.constant 0 : index
      %c0_51 = arith.constant 0 : index
      %c0_52 = arith.constant 0 : index
      %c0_53 = arith.constant 0 : index
      %58 = vector.load %arg8[%c0_50, %c0_51, %c0_52, %c0_53] : memref<1x8x8x32xf32, #tpu.memory_space<vmem>>, vector<1x8x1x32xf32>
      %59 = vector.shape_cast %58 : vector<1x8x1x32xf32> to vector<8x32xf32>
      %60 = vector.shape_cast %57 : vector<8x32xf32> to vector<1x8x1x32xf32>
      tpu.vector_store %arg8[%c0_50, %c0_51, %c0_52, %c0_53], %60 {strides = array<i32>} : memref<1x8x8x32xf32, #tpu.memory_space<vmem>>, vector<1x8x1x32xf32>,
      %cst_54 = arith.constant 0.000000e+00 : f32
      %61 = vector.broadcast %cst_54 : f32 to vector<8x32xf32>
      %c0_55 = arith.constant 0 : index
      %c8_56 = arith.constant 8 : index
      %62 = vector.load %arg9[%c0_55, %c8_56] : memref<64x64xf32, #tpu.memory_space<vmem>>, vector<8x8xf32>
      %c0_57 = arith.constant 0 : index
      %c0_58 = arith.constant 0 : index
      %c0_59 = arith.constant 0 : index
      %63 = vector.load %arg6[%c0_57, %c0_58, %c0_59] : memref<8x8x32xf32, #tpu.memory_space<vmem>>, vector<1x8x32xf32>
      %64 = vector.shape_cast %63 : vector<1x8x32xf32> to vector<8x32xf32>
      %cst_60 = arith.constant dense<0.000000e+00> : vector<8x32xf32>
      %65 = tpu.matmul %62, %64, %cst_60 {dimension_numbers = #tpu.dot_dimension_numbers<[1], [0], [0], [1], [0, 0, 1, 1], [], []>} : vector<8x8xf32>, vector<8x32xf32>, vector<8x32xf32> -> vector<8x32xf32>
      %66 = arith.addf %61, %65 : vector<8x32xf32>
      %c8_61 = arith.constant 8 : index
      %c8_62 = arith.constant 8 : index
      %67 = vector.load %arg9[%c8_61, %c8_62] : memref<64x64xf32, #tpu.memory_space<vmem>>, vector<8x8xf32>
      %c1_63 = arith.constant 1 : index
      %c0_64 = arith.constant 0 : index
      %c0_65 = arith.constant 0 : index
      %68 = vector.load %arg6[%c1_63, %c0_64, %c0_65] : memref<8x8x32xf32, #tpu.memory_space<vmem>>, vector<1x8x32xf32>
      %69 = vector.shape_cast %68 : vector<1x8x32xf32> to vector<8x32xf32>
      %cst_66 = arith.constant dense<0.000000e+00> : vector<8x32xf32>
      %70 = tpu.matmul %67, %69, %cst_66 {dimension_numbers = #tpu.dot_dimension_numbers<[1], [0], [0], [1], [0, 0, 1, 1], [], []>} : vector<8x8xf32>, vector<8x32xf32>, vector<8x32xf32> -> vector<8x32xf32>
      %71 = arith.addf %66, %70 : vector<8x32xf32>
      %c16_67 = arith.constant 16 : index
      %c8_68 = arith.constant 8 : index
      %72 = vector.load %arg9[%c16_67, %c8_68] : memref<64x64xf32, #tpu.memory_space<vmem>>, vector<8x8xf32>
      %c2_69 = arith.constant 2 : index
      %c0_70 = arith.constant 0 : index
      %c0_71 = arith.constant 0 : index
      %73 = vector.load %arg6[%c2_69, %c0_70, %c0_71] : memref<8x8x32xf32, #tpu.memory_space<vmem>>, vector<1x8x32xf32>
      %74 = vector.shape_cast %73 : vector<1x8x32xf32> to vector<8x32xf32>
      %cst_72 = arith.constant dense<0.000000e+00> : vector<8x32xf32>
      %75 = tpu.matmul %72, %74, %cst_72 {dimension_numbers = #tpu.dot_dimension_numbers<[1], [0], [0], [1], [0, 0, 1, 1], [], []>} : vector<8x8xf32>, vector<8x32xf32>, vector<8x32xf32> -> vector<8x32xf32>
      %76 = arith.addf %71, %75 : vector<8x32xf32>
      %c24_73 = arith.constant 24 : index
      %c8_74 = arith.constant 8 : index
      %77 = vector.load %arg9[%c24_73, %c8_74] : memref<64x64xf32, #tpu.memory_space<vmem>>, vector<8x8xf32>
      %c3_75 = arith.constant 3 : index
      %c0_76 = arith.constant 0 : index
      %c0_77 = arith.constant 0 : index
      %78 = vector.load %arg6[%c3_75, %c0_76, %c0_77] : memref<8x8x32xf32, #tpu.memory_space<vmem>>, vector<1x8x32xf32>
      %79 = vector.shape_cast %78 : vector<1x8x32xf32> to vector<8x32xf32>
      %cst_78 = arith.constant dense<0.000000e+00> : vector<8x32xf32>
      %80 = tpu.matmul %77, %79, %cst_78 {dimension_numbers = #tpu.dot_dimension_numbers<[1], [0], [0], [1], [0, 0, 1, 1], [], []>} : vector<8x8xf32>, vector<8x32xf32>, vector<8x32xf32> -> vector<8x32xf32>
      %81 = arith.addf %76, %80 : vector<8x32xf32>
      %c32_79 = arith.constant 32 : index
      %c8_80 = arith.constant 8 : index
      %82 = vector.load %arg9[%c32_79, %c8_80] : memref<64x64xf32, #tpu.memory_space<vmem>>, vector<8x8xf32>
      %c4_81 = arith.constant 4 : index
      %c0_82 = arith.constant 0 : index
      %c0_83 = arith.constant 0 : index
      %83 = vector.load %arg6[%c4_81, %c0_82, %c0_83] : memref<8x8x32xf32, #tpu.memory_space<vmem>>, vector<1x8x32xf32>
      %84 = vector.shape_cast %83 : vector<1x8x32xf32> to vector<8x32xf32>
      %cst_84 = arith.constant dense<0.000000e+00> : vector<8x32xf32>
      %85 = tpu.matmul %82, %84, %cst_84 {dimension_numbers = #tpu.dot_dimension_numbers<[1], [0], [0], [1], [0, 0, 1, 1], [], []>} : vector<8x8xf32>, vector<8x32xf32>, vector<8x32xf32> -> vector<8x32xf32>
      %86 = arith.addf %81, %85 : vector<8x32xf32>
      %c40_85 = arith.constant 40 : index
      %c8_86 = arith.constant 8 : index
      %87 = vector.load %arg9[%c40_85, %c8_86] : memref<64x64xf32, #tpu.memory_space<vmem>>, vector<8x8xf32>
      %c5_87 = arith.constant 5 : index
      %c0_88 = arith.constant 0 : index
      %c0_89 = arith.constant 0 : index
      %88 = vector.load %arg6[%c5_87, %c0_88, %c0_89] : memref<8x8x32xf32, #tpu.memory_space<vmem>>, vector<1x8x32xf32>
      %89 = vector.shape_cast %88 : vector<1x8x32xf32> to vector<8x32xf32>
      %cst_90 = arith.constant dense<0.000000e+00> : vector<8x32xf32>
      %90 = tpu.matmul %87, %89, %cst_90 {dimension_numbers = #tpu.dot_dimension_numbers<[1], [0], [0], [1], [0, 0, 1, 1], [], []>} : vector<8x8xf32>, vector<8x32xf32>, vector<8x32xf32> -> vector<8x32xf32>
      %91 = arith.addf %86, %90 : vector<8x32xf32>
      %c48_91 = arith.constant 48 : index
      %c8_92 = arith.constant 8 : index
      %92 = vector.load %arg9[%c48_91, %c8_92] : memref<64x64xf32, #tpu.memory_space<vmem>>, vector<8x8xf32>
      %c6_93 = arith.constant 6 : index
      %c0_94 = arith.constant 0 : index
      %c0_95 = arith.constant 0 : index
      %93 = vector.load %arg6[%c6_93, %c0_94, %c0_95] : memref<8x8x32xf32, #tpu.memory_space<vmem>>, vector<1x8x32xf32>
      %94 = vector.shape_cast %93 : vector<1x8x32xf32> to vector<8x32xf32>
      %cst_96 = arith.constant dense<0.000000e+00> : vector<8x32xf32>
      %95 = tpu.matmul %92, %94, %cst_96 {dimension_numbers = #tpu.dot_dimension_numbers<[1], [0], [0], [1], [0, 0, 1, 1], [], []>} : vector<8x8xf32>, vector<8x32xf32>, vector<8x32xf32> -> vector<8x32xf32>
      %96 = arith.addf %91, %95 : vector<8x32xf32>
      %c56_97 = arith.constant 56 : index
      %c8_98 = arith.constant 8 : index
      %97 = vector.load %arg9[%c56_97, %c8_98] : memref<64x64xf32, #tpu.memory_space<vmem>>, vector<8x8xf32>
      %c7_99 = arith.constant 7 : index
      %c0_100 = arith.constant 0 : index
      %c0_101 = arith.constant 0 : index
      %98 = vector.load %arg6[%c7_99, %c0_100, %c0_101] : memref<8x8x32xf32, #tpu.memory_space<vmem>>, vector<1x8x32xf32>
      %99 = vector.shape_cast %98 : vector<1x8x32xf32> to vector<8x32xf32>
      %cst_102 = arith.constant dense<0.000000e+00> : vector<8x32xf32>
      %100 = tpu.matmul %97, %99, %cst_102 {dimension_numbers = #tpu.dot_dimension_numbers<[1], [0], [0], [1], [0, 0, 1, 1], [], []>} : vector<8x8xf32>, vector<8x32xf32>, vector<8x32xf32> -> vector<8x32xf32>
      %101 = arith.addf %96, %100 : vector<8x32xf32>
      %102 = vector.broadcast %14 : vector<1x32xf32> to vector<8x32xf32>
      %103 = arith.addf %101, %102 : vector<8x32xf32>
      %c0_103 = arith.constant 0 : index
      %c0_104 = arith.constant 0 : index
      %c1_105 = arith.constant 1 : index
      %c0_106 = arith.constant 0 : index
      %104 = vector.load %arg8[%c0_103, %c0_104, %c1_105, %c0_106] : memref<1x8x8x32xf32, #tpu.memory_space<vmem>>, vector<1x8x1x32xf32>
      %105 = vector.shape_cast %104 : vector<1x8x1x32xf32> to vector<8x32xf32>
      %106 = vector.shape_cast %103 : vector<8x32xf32> to vector<1x8x1x32xf32>
      tpu.vector_store %arg8[%c0_103, %c0_104, %c1_105, %c0_106], %106 {strides = array<i32>} : memref<1x8x8x32xf32, #tpu.memory_space<vmem>>, vector<1x8x1x32xf32>,
      %cst_107 = arith.constant 0.000000e+00 : f32
      %107 = vector.broadcast %cst_107 : f32 to vector<8x32xf32>
      %c0_108 = arith.constant 0 : index
      %c16_109 = arith.constant 16 : index
      %108 = vector.load %arg9[%c0_108, %c16_109] : memref<64x64xf32, #tpu.memory_space<vmem>>, vector<8x8xf32>
      %c0_110 = arith.constant 0 : index
      %c0_111 = arith.constant 0 : index
      %c0_112 = arith.constant 0 : index
      %109 = vector.load %arg6[%c0_110, %c0_111, %c0_112] : memref<8x8x32xf32, #tpu.memory_space<vmem>>, vector<1x8x32xf32>
      %110 = vector.shape_cast %109 : vector<1x8x32xf32> to vector<8x32xf32>
      %cst_113 = arith.constant dense<0.000000e+00> : vector<8x32xf32>
      %111 = tpu.matmul %108, %110, %cst_113 {dimension_numbers = #tpu.dot_dimension_numbers<[1], [0], [0], [1], [0, 0, 1, 1], [], []>} : vector<8x8xf32>, vector<8x32xf32>, vector<8x32xf32> -> vector<8x32xf32>
      %112 = arith.addf %107, %111 : vector<8x32xf32>
      %c8_114 = arith.constant 8 : index
      %c16_115 = arith.constant 16 : index
      %113 = vector.load %arg9[%c8_114, %c16_115] : memref<64x64xf32, #tpu.memory_space<vmem>>, vector<8x8xf32>
      %c1_116 = arith.constant 1 : index
      %c0_117 = arith.constant 0 : index
      %c0_118 = arith.constant 0 : index
      %114 = vector.load %arg6[%c1_116, %c0_117, %c0_118] : memref<8x8x32xf32, #tpu.memory_space<vmem>>, vector<1x8x32xf32>
      %115 = vector.shape_cast %114 : vector<1x8x32xf32> to vector<8x32xf32>
      %cst_119 = arith.constant dense<0.000000e+00> : vector<8x32xf32>
      %116 = tpu.matmul %113, %115, %cst_119 {dimension_numbers = #tpu.dot_dimension_numbers<[1], [0], [0], [1], [0, 0, 1, 1], [], []>} : vector<8x8xf32>, vector<8x32xf32>, vector<8x32xf32> -> vector<8x32xf32>
      %117 = arith.addf %112, %116 : vector<8x32xf32>
      %c16_120 = arith.constant 16 : index
      %c16_121 = arith.constant 16 : index
      %118 = vector.load %arg9[%c16_120, %c16_121] : memref<64x64xf32, #tpu.memory_space<vmem>>, vector<8x8xf32>
      %c2_122 = arith.constant 2 : index
      %c0_123 = arith.constant 0 : index
      %c0_124 = arith.constant 0 : index
      %119 = vector.load %arg6[%c2_122, %c0_123, %c0_124] : memref<8x8x32xf32, #tpu.memory_space<vmem>>, vector<1x8x32xf32>
      %120 = vector.shape_cast %119 : vector<1x8x32xf32> to vector<8x32xf32>
      %cst_125 = arith.constant dense<0.000000e+00> : vector<8x32xf32>
      %121 = tpu.matmul %118, %120, %cst_125 {dimension_numbers = #tpu.dot_dimension_numbers<[1], [0], [0], [1], [0, 0, 1, 1], [], []>} : vector<8x8xf32>, vector<8x32xf32>, vector<8x32xf32> -> vector<8x32xf32>
      %122 = arith.addf %117, %121 : vector<8x32xf32>
      %c24_126 = arith.constant 24 : index
      %c16_127 = arith.constant 16 : index
      %123 = vector.load %arg9[%c24_126, %c16_127] : memref<64x64xf32, #tpu.memory_space<vmem>>, vector<8x8xf32>
      %c3_128 = arith.constant 3 : index
      %c0_129 = arith.constant 0 : index
      %c0_130 = arith.constant 0 : index
      %124 = vector.load %arg6[%c3_128, %c0_129, %c0_130] : memref<8x8x32xf32, #tpu.memory_space<vmem>>, vector<1x8x32xf32>
      %125 = vector.shape_cast %124 : vector<1x8x32xf32> to vector<8x32xf32>
      %cst_131 = arith.constant dense<0.000000e+00> : vector<8x32xf32>
      %126 = tpu.matmul %123, %125, %cst_131 {dimension_numbers = #tpu.dot_dimension_numbers<[1], [0], [0], [1], [0, 0, 1, 1], [], []>} : vector<8x8xf32>, vector<8x32xf32>, vector<8x32xf32> -> vector<8x32xf32>
      %127 = arith.addf %122, %126 : vector<8x32xf32>
      %c32_132 = arith.constant 32 : index
      %c16_133 = arith.constant 16 : index
      %128 = vector.load %arg9[%c32_132, %c16_133] : memref<64x64xf32, #tpu.memory_space<vmem>>, vector<8x8xf32>
      %c4_134 = arith.constant 4 : index
      %c0_135 = arith.constant 0 : index
      %c0_136 = arith.constant 0 : index
      %129 = vector.load %arg6[%c4_134, %c0_135, %c0_136] : memref<8x8x32xf32, #tpu.memory_space<vmem>>, vector<1x8x32xf32>
      %130 = vector.shape_cast %129 : vector<1x8x32xf32> to vector<8x32xf32>
      %cst_137 = arith.constant dense<0.000000e+00> : vector<8x32xf32>
      %131 = tpu.matmul %128, %130, %cst_137 {dimension_numbers = #tpu.dot_dimension_numbers<[1], [0], [0], [1], [0, 0, 1, 1], [], []>} : vector<8x8xf32>, vector<8x32xf32>, vector<8x32xf32> -> vector<8x32xf32>
      %132 = arith.addf %127, %131 : vector<8x32xf32>
      %c40_138 = arith.constant 40 : index
      %c16_139 = arith.constant 16 : index
      %133 = vector.load %arg9[%c40_138, %c16_139] : memref<64x64xf32, #tpu.memory_space<vmem>>, vector<8x8xf32>
      %c5_140 = arith.constant 5 : index
      %c0_141 = arith.constant 0 : index
      %c0_142 = arith.constant 0 : index
      %134 = vector.load %arg6[%c5_140, %c0_141, %c0_142] : memref<8x8x32xf32, #tpu.memory_space<vmem>>, vector<1x8x32xf32>
      %135 = vector.shape_cast %134 : vector<1x8x32xf32> to vector<8x32xf32>
      %cst_143 = arith.constant dense<0.000000e+00> : vector<8x32xf32>
      %136 = tpu.matmul %133, %135, %cst_143 {dimension_numbers = #tpu.dot_dimension_numbers<[1], [0], [0], [1], [0, 0, 1, 1], [], []>} : vector<8x8xf32>, vector<8x32xf32>, vector<8x32xf32> -> vector<8x32xf32>
      %137 = arith.addf %132, %136 : vector<8x32xf32>
      %c48_144 = arith.constant 48 : index
      %c16_145 = arith.constant 16 : index
      %138 = vector.load %arg9[%c48_144, %c16_145] : memref<64x64xf32, #tpu.memory_space<vmem>>, vector<8x8xf32>
      %c6_146 = arith.constant 6 : index
      %c0_147 = arith.constant 0 : index
      %c0_148 = arith.constant 0 : index
      %139 = vector.load %arg6[%c6_146, %c0_147, %c0_148] : memref<8x8x32xf32, #tpu.memory_space<vmem>>, vector<1x8x32xf32>
      %140 = vector.shape_cast %139 : vector<1x8x32xf32> to vector<8x32xf32>
      %cst_149 = arith.constant dense<0.000000e+00> : vector<8x32xf32>
      %141 = tpu.matmul %138, %140, %cst_149 {dimension_numbers = #tpu.dot_dimension_numbers<[1], [0], [0], [1], [0, 0, 1, 1], [], []>} : vector<8x8xf32>, vector<8x32xf32>, vector<8x32xf32> -> vector<8x32xf32>
      %142 = arith.addf %137, %141 : vector<8x32xf32>
      %c56_150 = arith.constant 56 : index
      %c16_151 = arith.constant 16 : index
      %143 = vector.load %arg9[%c56_150, %c16_151] : memref<64x64xf32, #tpu.memory_space<vmem>>, vector<8x8xf32>
      %c7_152 = arith.constant 7 : index
      %c0_153 = arith.constant 0 : index
      %c0_154 = arith.constant 0 : index
      %144 = vector.load %arg6[%c7_152, %c0_153, %c0_154] : memref<8x8x32xf32, #tpu.memory_space<vmem>>, vector<1x8x32xf32>
      %145 = vector.shape_cast %144 : vector<1x8x32xf32> to vector<8x32xf32>
      %cst_155 = arith.constant dense<0.000000e+00> : vector<8x32xf32>
      %146 = tpu.matmul %143, %145, %cst_155 {dimension_numbers = #tpu.dot_dimension_numbers<[1], [0], [0], [1], [0, 0, 1, 1], [], []>} : vector<8x8xf32>, vector<8x32xf32>, vector<8x32xf32> -> vector<8x32xf32>
      %147 = arith.addf %142, %146 : vector<8x32xf32>
      %148 = vector.broadcast %14 : vector<1x32xf32> to vector<8x32xf32>
      %149 = arith.addf %147, %148 : vector<8x32xf32>
      %c0_156 = arith.constant 0 : index
      %c0_157 = arith.constant 0 : index
      %c2_158 = arith.constant 2 : index
      %c0_159 = arith.constant 0 : index
      %150 = vector.load %arg8[%c0_156, %c0_157, %c2_158, %c0_159] : memref<1x8x8x32xf32, #tpu.memory_space<vmem>>, vector<1x8x1x32xf32>
      %151 = vector.shape_cast %150 : vector<1x8x1x32xf32> to vector<8x32xf32>
      %152 = vector.shape_cast %149 : vector<8x32xf32> to vector<1x8x1x32xf32>
      tpu.vector_store %arg8[%c0_156, %c0_157, %c2_158, %c0_159], %152 {strides = array<i32>} : memref<1x8x8x32xf32, #tpu.memory_space<vmem>>, vector<1x8x1x32xf32>,
      %cst_160 = arith.constant 0.000000e+00 : f32
      %153 = vector.broadcast %cst_160 : f32 to vector<8x32xf32>
      %c0_161 = arith.constant 0 : index
      %c24_162 = arith.constant 24 : index
      %154 = vector.load %arg9[%c0_161, %c24_162] : memref<64x64xf32, #tpu.memory_space<vmem>>, vector<8x8xf32>
      %c0_163 = arith.constant 0 : index
      %c0_164 = arith.constant 0 : index
      %c0_165 = arith.constant 0 : index
      %155 = vector.load %arg6[%c0_163, %c0_164, %c0_165] : memref<8x8x32xf32, #tpu.memory_space<vmem>>, vector<1x8x32xf32>
      %156 = vector.shape_cast %155 : vector<1x8x32xf32> to vector<8x32xf32>
      %cst_166 = arith.constant dense<0.000000e+00> : vector<8x32xf32>
      %157 = tpu.matmul %154, %156, %cst_166 {dimension_numbers = #tpu.dot_dimension_numbers<[1], [0], [0], [1], [0, 0, 1, 1], [], []>} : vector<8x8xf32>, vector<8x32xf32>, vector<8x32xf32> -> vector<8x32xf32>
      %158 = arith.addf %153, %157 : vector<8x32xf32>
      %c8_167 = arith.constant 8 : index
      %c24_168 = arith.constant 24 : index
      %159 = vector.load %arg9[%c8_167, %c24_168] : memref<64x64xf32, #tpu.memory_space<vmem>>, vector<8x8xf32>
      %c1_169 = arith.constant 1 : index
      %c0_170 = arith.constant 0 : index
      %c0_171 = arith.constant 0 : index
      %160 = vector.load %arg6[%c1_169, %c0_170, %c0_171] : memref<8x8x32xf32, #tpu.memory_space<vmem>>, vector<1x8x32xf32>
      %161 = vector.shape_cast %160 : vector<1x8x32xf32> to vector<8x32xf32>
      %cst_172 = arith.constant dense<0.000000e+00> : vector<8x32xf32>
      %162 = tpu.matmul %159, %161, %cst_172 {dimension_numbers = #tpu.dot_dimension_numbers<[1], [0], [0], [1], [0, 0, 1, 1], [], []>} : vector<8x8xf32>, vector<8x32xf32>, vector<8x32xf32> -> vector<8x32xf32>
      %163 = arith.addf %158, %162 : vector<8x32xf32>
      %c16_173 = arith.constant 16 : index
      %c24_174 = arith.constant 24 : index
      %164 = vector.load %arg9[%c16_173, %c24_174] : memref<64x64xf32, #tpu.memory_space<vmem>>, vector<8x8xf32>
      %c2_175 = arith.constant 2 : index
      %c0_176 = arith.constant 0 : index
      %c0_177 = arith.constant 0 : index
      %165 = vector.load %arg6[%c2_175, %c0_176, %c0_177] : memref<8x8x32xf32, #tpu.memory_space<vmem>>, vector<1x8x32xf32>
      %166 = vector.shape_cast %165 : vector<1x8x32xf32> to vector<8x32xf32>
      %cst_178 = arith.constant dense<0.000000e+00> : vector<8x32xf32>
      %167 = tpu.matmul %164, %166, %cst_178 {dimension_numbers = #tpu.dot_dimension_numbers<[1], [0], [0], [1], [0, 0, 1, 1], [], []>} : vector<8x8xf32>, vector<8x32xf32>, vector<8x32xf32> -> vector<8x32xf32>
      %168 = arith.addf %163, %167 : vector<8x32xf32>
      %c24_179 = arith.constant 24 : index
      %c24_180 = arith.constant 24 : index
      %169 = vector.load %arg9[%c24_179, %c24_180] : memref<64x64xf32, #tpu.memory_space<vmem>>, vector<8x8xf32>
      %c3_181 = arith.constant 3 : index
      %c0_182 = arith.constant 0 : index
      %c0_183 = arith.constant 0 : index
      %170 = vector.load %arg6[%c3_181, %c0_182, %c0_183] : memref<8x8x32xf32, #tpu.memory_space<vmem>>, vector<1x8x32xf32>
      %171 = vector.shape_cast %170 : vector<1x8x32xf32> to vector<8x32xf32>
      %cst_184 = arith.constant dense<0.000000e+00> : vector<8x32xf32>
      %172 = tpu.matmul %169, %171, %cst_184 {dimension_numbers = #tpu.dot_dimension_numbers<[1], [0], [0], [1], [0, 0, 1, 1], [], []>} : vector<8x8xf32>, vector<8x32xf32>, vector<8x32xf32> -> vector<8x32xf32>
      %173 = arith.addf %168, %172 : vector<8x32xf32>
      %c32_185 = arith.constant 32 : index
      %c24_186 = arith.constant 24 : index
      %174 = vector.load %arg9[%c32_185, %c24_186] : memref<64x64xf32, #tpu.memory_space<vmem>>, vector<8x8xf32>
      %c4_187 = arith.constant 4 : index
      %c0_188 = arith.constant 0 : index
      %c0_189 = arith.constant 0 : index
      %175 = vector.load %arg6[%c4_187, %c0_188, %c0_189] : memref<8x8x32xf32, #tpu.memory_space<vmem>>, vector<1x8x32xf32>
      %176 = vector.shape_cast %175 : vector<1x8x32xf32> to vector<8x32xf32>
      %cst_190 = arith.constant dense<0.000000e+00> : vector<8x32xf32>
      %177 = tpu.matmul %174, %176, %cst_190 {dimension_numbers = #tpu.dot_dimension_numbers<[1], [0], [0], [1], [0, 0, 1, 1], [], []>} : vector<8x8xf32>, vector<8x32xf32>, vector<8x32xf32> -> vector<8x32xf32>
      %178 = arith.addf %173, %177 : vector<8x32xf32>
      %c40_191 = arith.constant 40 : index
      %c24_192 = arith.constant 24 : index
      %179 = vector.load %arg9[%c40_191, %c24_192] : memref<64x64xf32, #tpu.memory_space<vmem>>, vector<8x8xf32>
      %c5_193 = arith.constant 5 : index
      %c0_194 = arith.constant 0 : index
      %c0_195 = arith.constant 0 : index
      %180 = vector.load %arg6[%c5_193, %c0_194, %c0_195] : memref<8x8x32xf32, #tpu.memory_space<vmem>>, vector<1x8x32xf32>
      %181 = vector.shape_cast %180 : vector<1x8x32xf32> to vector<8x32xf32>
      %cst_196 = arith.constant dense<0.000000e+00> : vector<8x32xf32>
      %182 = tpu.matmul %179, %181, %cst_196 {dimension_numbers = #tpu.dot_dimension_numbers<[1], [0], [0], [1], [0, 0, 1, 1], [], []>} : vector<8x8xf32>, vector<8x32xf32>, vector<8x32xf32> -> vector<8x32xf32>
      %183 = arith.addf %178, %182 : vector<8x32xf32>
      %c48_197 = arith.constant 48 : index
      %c24_198 = arith.constant 24 : index
      %184 = vector.load %arg9[%c48_197, %c24_198] : memref<64x64xf32, #tpu.memory_space<vmem>>, vector<8x8xf32>
      %c6_199 = arith.constant 6 : index
      %c0_200 = arith.constant 0 : index
      %c0_201 = arith.constant 0 : index
      %185 = vector.load %arg6[%c6_199, %c0_200, %c0_201] : memref<8x8x32xf32, #tpu.memory_space<vmem>>, vector<1x8x32xf32>
      %186 = vector.shape_cast %185 : vector<1x8x32xf32> to vector<8x32xf32>
      %cst_202 = arith.constant dense<0.000000e+00> : vector<8x32xf32>
      %187 = tpu.matmul %184, %186, %cst_202 {dimension_numbers = #tpu.dot_dimension_numbers<[1], [0], [0], [1], [0, 0, 1, 1], [], []>} : vector<8x8xf32>, vector<8x32xf32>, vector<8x32xf32> -> vector<8x32xf32>
      %188 = arith.addf %183, %187 : vector<8x32xf32>
      %c56_203 = arith.constant 56 : index
      %c24_204 = arith.constant 24 : index
      %189 = vector.load %arg9[%c56_203, %c24_204] : memref<64x64xf32, #tpu.memory_space<vmem>>, vector<8x8xf32>
      %c7_205 = arith.constant 7 : index
      %c0_206 = arith.constant 0 : index
      %c0_207 = arith.constant 0 : index
      %190 = vector.load %arg6[%c7_205, %c0_206, %c0_207] : memref<8x8x32xf32, #tpu.memory_space<vmem>>, vector<1x8x32xf32>
      %191 = vector.shape_cast %190 : vector<1x8x32xf32> to vector<8x32xf32>
      %cst_208 = arith.constant dense<0.000000e+00> : vector<8x32xf32>
      %192 = tpu.matmul %189, %191, %cst_208 {dimension_numbers = #tpu.dot_dimension_numbers<[1], [0], [0], [1], [0, 0, 1, 1], [], []>} : vector<8x8xf32>, vector<8x32xf32>, vector<8x32xf32> -> vector<8x32xf32>
      %193 = arith.addf %188, %192 : vector<8x32xf32>
      %194 = vector.broadcast %14 : vector<1x32xf32> to vector<8x32xf32>
      %195 = arith.addf %193, %194 : vector<8x32xf32>
      %c0_209 = arith.constant 0 : index
      %c0_210 = arith.constant 0 : index
      %c3_211 = arith.constant 3 : index
      %c0_212 = arith.constant 0 : index
      %196 = vector.load %arg8[%c0_209, %c0_210, %c3_211, %c0_212] : memref<1x8x8x32xf32, #tpu.memory_space<vmem>>, vector<1x8x1x32xf32>
      %197 = vector.shape_cast %196 : vector<1x8x1x32xf32> to vector<8x32xf32>
      %198 = vector.shape_cast %195 : vector<8x32xf32> to vector<1x8x1x32xf32>
      tpu.vector_store %arg8[%c0_209, %c0_210, %c3_211, %c0_212], %198 {strides = array<i32>} : memref<1x8x8x32xf32, #tpu.memory_space<vmem>>, vector<1x8x1x32xf32>,
      %cst_213 = arith.constant 0.000000e+00 : f32
      %199 = vector.broadcast %cst_213 : f32 to vector<8x32xf32>
      %c0_214 = arith.constant 0 : index
      %c32_215 = arith.constant 32 : index
      %200 = vector.load %arg9[%c0_214, %c32_215] : memref<64x64xf32, #tpu.memory_space<vmem>>, vector<8x8xf32>
      %c0_216 = arith.constant 0 : index
      %c0_217 = arith.constant 0 : index
      %c0_218 = arith.constant 0 : index
      %201 = vector.load %arg6[%c0_216, %c0_217, %c0_218] : memref<8x8x32xf32, #tpu.memory_space<vmem>>, vector<1x8x32xf32>
      %202 = vector.shape_cast %201 : vector<1x8x32xf32> to vector<8x32xf32>
      %cst_219 = arith.constant dense<0.000000e+00> : vector<8x32xf32>
      %203 = tpu.matmul %200, %202, %cst_219 {dimension_numbers = #tpu.dot_dimension_numbers<[1], [0], [0], [1], [0, 0, 1, 1], [], []>} : vector<8x8xf32>, vector<8x32xf32>, vector<8x32xf32> -> vector<8x32xf32>
      %204 = arith.addf %199, %203 : vector<8x32xf32>
      %c8_220 = arith.constant 8 : index
      %c32_221 = arith.constant 32 : index
      %205 = vector.load %arg9[%c8_220, %c32_221] : memref<64x64xf32, #tpu.memory_space<vmem>>, vector<8x8xf32>
      %c1_222 = arith.constant 1 : index
      %c0_223 = arith.constant 0 : index
      %c0_224 = arith.constant 0 : index
      %206 = vector.load %arg6[%c1_222, %c0_223, %c0_224] : memref<8x8x32xf32, #tpu.memory_space<vmem>>, vector<1x8x32xf32>
      %207 = vector.shape_cast %206 : vector<1x8x32xf32> to vector<8x32xf32>
      %cst_225 = arith.constant dense<0.000000e+00> : vector<8x32xf32>
      %208 = tpu.matmul %205, %207, %cst_225 {dimension_numbers = #tpu.dot_dimension_numbers<[1], [0], [0], [1], [0, 0, 1, 1], [], []>} : vector<8x8xf32>, vector<8x32xf32>, vector<8x32xf32> -> vector<8x32xf32>
      %209 = arith.addf %204, %208 : vector<8x32xf32>
      %c16_226 = arith.constant 16 : index
      %c32_227 = arith.constant 32 : index
      %210 = vector.load %arg9[%c16_226, %c32_227] : memref<64x64xf32, #tpu.memory_space<vmem>>, vector<8x8xf32>
      %c2_228 = arith.constant 2 : index
      %c0_229 = arith.constant 0 : index
      %c0_230 = arith.constant 0 : index
      %211 = vector.load %arg6[%c2_228, %c0_229, %c0_230] : memref<8x8x32xf32, #tpu.memory_space<vmem>>, vector<1x8x32xf32>
      %212 = vector.shape_cast %211 : vector<1x8x32xf32> to vector<8x32xf32>
      %cst_231 = arith.constant dense<0.000000e+00> : vector<8x32xf32>
      %213 = tpu.matmul %210, %212, %cst_231 {dimension_numbers = #tpu.dot_dimension_numbers<[1], [0], [0], [1], [0, 0, 1, 1], [], []>} : vector<8x8xf32>, vector<8x32xf32>, vector<8x32xf32> -> vector<8x32xf32>
      %214 = arith.addf %209, %213 : vector<8x32xf32>
      %c24_232 = arith.constant 24 : index
      %c32_233 = arith.constant 32 : index
      %215 = vector.load %arg9[%c24_232, %c32_233] : memref<64x64xf32, #tpu.memory_space<vmem>>, vector<8x8xf32>
      %c3_234 = arith.constant 3 : index
      %c0_235 = arith.constant 0 : index
      %c0_236 = arith.constant 0 : index
      %216 = vector.load %arg6[%c3_234, %c0_235, %c0_236] : memref<8x8x32xf32, #tpu.memory_space<vmem>>, vector<1x8x32xf32>
      %217 = vector.shape_cast %216 : vector<1x8x32xf32> to vector<8x32xf32>
      %cst_237 = arith.constant dense<0.000000e+00> : vector<8x32xf32>
      %218 = tpu.matmul %215, %217, %cst_237 {dimension_numbers = #tpu.dot_dimension_numbers<[1], [0], [0], [1], [0, 0, 1, 1], [], []>} : vector<8x8xf32>, vector<8x32xf32>, vector<8x32xf32> -> vector<8x32xf32>
      %219 = arith.addf %214, %218 : vector<8x32xf32>
      %c32_238 = arith.constant 32 : index
      %c32_239 = arith.constant 32 : index
      %220 = vector.load %arg9[%c32_238, %c32_239] : memref<64x64xf32, #tpu.memory_space<vmem>>, vector<8x8xf32>
      %c4_240 = arith.constant 4 : index
      %c0_241 = arith.constant 0 : index
      %c0_242 = arith.constant 0 : index
      %221 = vector.load %arg6[%c4_240, %c0_241, %c0_242] : memref<8x8x32xf32, #tpu.memory_space<vmem>>, vector<1x8x32xf32>
      %222 = vector.shape_cast %221 : vector<1x8x32xf32> to vector<8x32xf32>
      %cst_243 = arith.constant dense<0.000000e+00> : vector<8x32xf32>
      %223 = tpu.matmul %220, %222, %cst_243 {dimension_numbers = #tpu.dot_dimension_numbers<[1], [0], [0], [1], [0, 0, 1, 1], [], []>} : vector<8x8xf32>, vector<8x32xf32>, vector<8x32xf32> -> vector<8x32xf32>
      %224 = arith.addf %219, %223 : vector<8x32xf32>
      %c40_244 = arith.constant 40 : index
      %c32_245 = arith.constant 32 : index
      %225 = vector.load %arg9[%c40_244, %c32_245] : memref<64x64xf32, #tpu.memory_space<vmem>>, vector<8x8xf32>
      %c5_246 = arith.constant 5 : index
      %c0_247 = arith.constant 0 : index
      %c0_248 = arith.constant 0 : index
      %226 = vector.load %arg6[%c5_246, %c0_247, %c0_248] : memref<8x8x32xf32, #tpu.memory_space<vmem>>, vector<1x8x32xf32>
      %227 = vector.shape_cast %226 : vector<1x8x32xf32> to vector<8x32xf32>
      %cst_249 = arith.constant dense<0.000000e+00> : vector<8x32xf32>
      %228 = tpu.matmul %225, %227, %cst_249 {dimension_numbers = #tpu.dot_dimension_numbers<[1], [0], [0], [1], [0, 0, 1, 1], [], []>} : vector<8x8xf32>, vector<8x32xf32>, vector<8x32xf32> -> vector<8x32xf32>
      %229 = arith.addf %224, %228 : vector<8x32xf32>
      %c48_250 = arith.constant 48 : index
      %c32_251 = arith.constant 32 : index
      %230 = vector.load %arg9[%c48_250, %c32_251] : memref<64x64xf32, #tpu.memory_space<vmem>>, vector<8x8xf32>
      %c6_252 = arith.constant 6 : index
      %c0_253 = arith.constant 0 : index
      %c0_254 = arith.constant 0 : index
      %231 = vector.load %arg6[%c6_252, %c0_253, %c0_254] : memref<8x8x32xf32, #tpu.memory_space<vmem>>, vector<1x8x32xf32>
      %232 = vector.shape_cast %231 : vector<1x8x32xf32> to vector<8x32xf32>
      %cst_255 = arith.constant dense<0.000000e+00> : vector<8x32xf32>
      %233 = tpu.matmul %230, %232, %cst_255 {dimension_numbers = #tpu.dot_dimension_numbers<[1], [0], [0], [1], [0, 0, 1, 1], [], []>} : vector<8x8xf32>, vector<8x32xf32>, vector<8x32xf32> -> vector<8x32xf32>
      %234 = arith.addf %229, %233 : vector<8x32xf32>
      %c56_256 = arith.constant 56 : index
      %c32_257 = arith.constant 32 : index
      %235 = vector.load %arg9[%c56_256, %c32_257] : memref<64x64xf32, #tpu.memory_space<vmem>>, vector<8x8xf32>
      %c7_258 = arith.constant 7 : index
      %c0_259 = arith.constant 0 : index
      %c0_260 = arith.constant 0 : index
      %236 = vector.load %arg6[%c7_258, %c0_259, %c0_260] : memref<8x8x32xf32, #tpu.memory_space<vmem>>, vector<1x8x32xf32>
      %237 = vector.shape_cast %236 : vector<1x8x32xf32> to vector<8x32xf32>
      %cst_261 = arith.constant dense<0.000000e+00> : vector<8x32xf32>
      %238 = tpu.matmul %235, %237, %cst_261 {dimension_numbers = #tpu.dot_dimension_numbers<[1], [0], [0], [1], [0, 0, 1, 1], [], []>} : vector<8x8xf32>, vector<8x32xf32>, vector<8x32xf32> -> vector<8x32xf32>
      %239 = arith.addf %234, %238 : vector<8x32xf32>
      %240 = vector.broadcast %14 : vector<1x32xf32> to vector<8x32xf32>
      %241 = arith.addf %239, %240 : vector<8x32xf32>
      %c0_262 = arith.constant 0 : index
      %c0_263 = arith.constant 0 : index
      %c4_264 = arith.constant 4 : index
      %c0_265 = arith.constant 0 : index
      %242 = vector.load %arg8[%c0_262, %c0_263, %c4_264, %c0_265] : memref<1x8x8x32xf32, #tpu.memory_space<vmem>>, vector<1x8x1x32xf32>
      %243 = vector.shape_cast %242 : vector<1x8x1x32xf32> to vector<8x32xf32>
      %244 = vector.shape_cast %241 : vector<8x32xf32> to vector<1x8x1x32xf32>
      tpu.vector_store %arg8[%c0_262, %c0_263, %c4_264, %c0_265], %244 {strides = array<i32>} : memref<1x8x8x32xf32, #tpu.memory_space<vmem>>, vector<1x8x1x32xf32>,
      %cst_266 = arith.constant 0.000000e+00 : f32
      %245 = vector.broadcast %cst_266 : f32 to vector<8x32xf32>
      %c0_267 = arith.constant 0 : index
      %c40_268 = arith.constant 40 : index
      %246 = vector.load %arg9[%c0_267, %c40_268] : memref<64x64xf32, #tpu.memory_space<vmem>>, vector<8x8xf32>
      %c0_269 = arith.constant 0 : index
      %c0_270 = arith.constant 0 : index
      %c0_271 = arith.constant 0 : index
      %247 = vector.load %arg6[%c0_269, %c0_270, %c0_271] : memref<8x8x32xf32, #tpu.memory_space<vmem>>, vector<1x8x32xf32>
      %248 = vector.shape_cast %247 : vector<1x8x32xf32> to vector<8x32xf32>
      %cst_272 = arith.constant dense<0.000000e+00> : vector<8x32xf32>
      %249 = tpu.matmul %246, %248, %cst_272 {dimension_numbers = #tpu.dot_dimension_numbers<[1], [0], [0], [1], [0, 0, 1, 1], [], []>} : vector<8x8xf32>, vector<8x32xf32>, vector<8x32xf32> -> vector<8x32xf32>
      %250 = arith.addf %245, %249 : vector<8x32xf32>
      %c8_273 = arith.constant 8 : index
      %c40_274 = arith.constant 40 : index
      %251 = vector.load %arg9[%c8_273, %c40_274] : memref<64x64xf32, #tpu.memory_space<vmem>>, vector<8x8xf32>
      %c1_275 = arith.constant 1 : index
      %c0_276 = arith.constant 0 : index
      %c0_277 = arith.constant 0 : index
      %252 = vector.load %arg6[%c1_275, %c0_276, %c0_277] : memref<8x8x32xf32, #tpu.memory_space<vmem>>, vector<1x8x32xf32>
      %253 = vector.shape_cast %252 : vector<1x8x32xf32> to vector<8x32xf32>
      %cst_278 = arith.constant dense<0.000000e+00> : vector<8x32xf32>
      %254 = tpu.matmul %251, %253, %cst_278 {dimension_numbers = #tpu.dot_dimension_numbers<[1], [0], [0], [1], [0, 0, 1, 1], [], []>} : vector<8x8xf32>, vector<8x32xf32>, vector<8x32xf32> -> vector<8x32xf32>
      %255 = arith.addf %250, %254 : vector<8x32xf32>
      %c16_279 = arith.constant 16 : index
      %c40_280 = arith.constant 40 : index
      %256 = vector.load %arg9[%c16_279, %c40_280] : memref<64x64xf32, #tpu.memory_space<vmem>>, vector<8x8xf32>
      %c2_281 = arith.constant 2 : index
      %c0_282 = arith.constant 0 : index
      %c0_283 = arith.constant 0 : index
      %257 = vector.load %arg6[%c2_281, %c0_282, %c0_283] : memref<8x8x32xf32, #tpu.memory_space<vmem>>, vector<1x8x32xf32>
      %258 = vector.shape_cast %257 : vector<1x8x32xf32> to vector<8x32xf32>
      %cst_284 = arith.constant dense<0.000000e+00> : vector<8x32xf32>
      %259 = tpu.matmul %256, %258, %cst_284 {dimension_numbers = #tpu.dot_dimension_numbers<[1], [0], [0], [1], [0, 0, 1, 1], [], []>} : vector<8x8xf32>, vector<8x32xf32>, vector<8x32xf32> -> vector<8x32xf32>
      %260 = arith.addf %255, %259 : vector<8x32xf32>
      %c24_285 = arith.constant 24 : index
      %c40_286 = arith.constant 40 : index
      %261 = vector.load %arg9[%c24_285, %c40_286] : memref<64x64xf32, #tpu.memory_space<vmem>>, vector<8x8xf32>
      %c3_287 = arith.constant 3 : index
      %c0_288 = arith.constant 0 : index
      %c0_289 = arith.constant 0 : index
      %262 = vector.load %arg6[%c3_287, %c0_288, %c0_289] : memref<8x8x32xf32, #tpu.memory_space<vmem>>, vector<1x8x32xf32>
      %263 = vector.shape_cast %262 : vector<1x8x32xf32> to vector<8x32xf32>
      %cst_290 = arith.constant dense<0.000000e+00> : vector<8x32xf32>
      %264 = tpu.matmul %261, %263, %cst_290 {dimension_numbers = #tpu.dot_dimension_numbers<[1], [0], [0], [1], [0, 0, 1, 1], [], []>} : vector<8x8xf32>, vector<8x32xf32>, vector<8x32xf32> -> vector<8x32xf32>
      %265 = arith.addf %260, %264 : vector<8x32xf32>
      %c32_291 = arith.constant 32 : index
      %c40_292 = arith.constant 40 : index
      %266 = vector.load %arg9[%c32_291, %c40_292] : memref<64x64xf32, #tpu.memory_space<vmem>>, vector<8x8xf32>
      %c4_293 = arith.constant 4 : index
      %c0_294 = arith.constant 0 : index
      %c0_295 = arith.constant 0 : index
      %267 = vector.load %arg6[%c4_293, %c0_294, %c0_295] : memref<8x8x32xf32, #tpu.memory_space<vmem>>, vector<1x8x32xf32>
      %268 = vector.shape_cast %267 : vector<1x8x32xf32> to vector<8x32xf32>
      %cst_296 = arith.constant dense<0.000000e+00> : vector<8x32xf32>
      %269 = tpu.matmul %266, %268, %cst_296 {dimension_numbers = #tpu.dot_dimension_numbers<[1], [0], [0], [1], [0, 0, 1, 1], [], []>} : vector<8x8xf32>, vector<8x32xf32>, vector<8x32xf32> -> vector<8x32xf32>
      %270 = arith.addf %265, %269 : vector<8x32xf32>
      %c40_297 = arith.constant 40 : index
      %c40_298 = arith.constant 40 : index
      %271 = vector.load %arg9[%c40_297, %c40_298] : memref<64x64xf32, #tpu.memory_space<vmem>>, vector<8x8xf32>
      %c5_299 = arith.constant 5 : index
      %c0_300 = arith.constant 0 : index
      %c0_301 = arith.constant 0 : index
      %272 = vector.load %arg6[%c5_299, %c0_300, %c0_301] : memref<8x8x32xf32, #tpu.memory_space<vmem>>, vector<1x8x32xf32>
      %273 = vector.shape_cast %272 : vector<1x8x32xf32> to vector<8x32xf32>
      %cst_302 = arith.constant dense<0.000000e+00> : vector<8x32xf32>
      %274 = tpu.matmul %271, %273, %cst_302 {dimension_numbers = #tpu.dot_dimension_numbers<[1], [0], [0], [1], [0, 0, 1, 1], [], []>} : vector<8x8xf32>, vector<8x32xf32>, vector<8x32xf32> -> vector<8x32xf32>
      %275 = arith.addf %270, %274 : vector<8x32xf32>
      %c48_303 = arith.constant 48 : index
      %c40_304 = arith.constant 40 : index
      %276 = vector.load %arg9[%c48_303, %c40_304] : memref<64x64xf32, #tpu.memory_space<vmem>>, vector<8x8xf32>
      %c6_305 = arith.constant 6 : index
      %c0_306 = arith.constant 0 : index
      %c0_307 = arith.constant 0 : index
      %277 = vector.load %arg6[%c6_305, %c0_306, %c0_307] : memref<8x8x32xf32, #tpu.memory_space<vmem>>, vector<1x8x32xf32>
      %278 = vector.shape_cast %277 : vector<1x8x32xf32> to vector<8x32xf32>
      %cst_308 = arith.constant dense<0.000000e+00> : vector<8x32xf32>
      %279 = tpu.matmul %276, %278, %cst_308 {dimension_numbers = #tpu.dot_dimension_numbers<[1], [0], [0], [1], [0, 0, 1, 1], [], []>} : vector<8x8xf32>, vector<8x32xf32>, vector<8x32xf32> -> vector<8x32xf32>
      %280 = arith.addf %275, %279 : vector<8x32xf32>
      %c56_309 = arith.constant 56 : index
      %c40_310 = arith.constant 40 : index
      %281 = vector.load %arg9[%c56_309, %c40_310] : memref<64x64xf32, #tpu.memory_space<vmem>>, vector<8x8xf32>
      %c7_311 = arith.constant 7 : index
      %c0_312 = arith.constant 0 : index
      %c0_313 = arith.constant 0 : index
      %282 = vector.load %arg6[%c7_311, %c0_312, %c0_313] : memref<8x8x32xf32, #tpu.memory_space<vmem>>, vector<1x8x32xf32>
      %283 = vector.shape_cast %282 : vector<1x8x32xf32> to vector<8x32xf32>
      %cst_314 = arith.constant dense<0.000000e+00> : vector<8x32xf32>
      %284 = tpu.matmul %281, %283, %cst_314 {dimension_numbers = #tpu.dot_dimension_numbers<[1], [0], [0], [1], [0, 0, 1, 1], [], []>} : vector<8x8xf32>, vector<8x32xf32>, vector<8x32xf32> -> vector<8x32xf32>
      %285 = arith.addf %280, %284 : vector<8x32xf32>
      %286 = vector.broadcast %14 : vector<1x32xf32> to vector<8x32xf32>
      %287 = arith.addf %285, %286 : vector<8x32xf32>
      %c0_315 = arith.constant 0 : index
      %c0_316 = arith.constant 0 : index
      %c5_317 = arith.constant 5 : index
      %c0_318 = arith.constant 0 : index
      %288 = vector.load %arg8[%c0_315, %c0_316, %c5_317, %c0_318] : memref<1x8x8x32xf32, #tpu.memory_space<vmem>>, vector<1x8x1x32xf32>
      %289 = vector.shape_cast %288 : vector<1x8x1x32xf32> to vector<8x32xf32>
      %290 = vector.shape_cast %287 : vector<8x32xf32> to vector<1x8x1x32xf32>
      tpu.vector_store %arg8[%c0_315, %c0_316, %c5_317, %c0_318], %290 {strides = array<i32>} : memref<1x8x8x32xf32, #tpu.memory_space<vmem>>, vector<1x8x1x32xf32>,
      %cst_319 = arith.constant 0.000000e+00 : f32
      %291 = vector.broadcast %cst_319 : f32 to vector<8x32xf32>
      %c0_320 = arith.constant 0 : index
      %c48_321 = arith.constant 48 : index
      %292 = vector.load %arg9[%c0_320, %c48_321] : memref<64x64xf32, #tpu.memory_space<vmem>>, vector<8x8xf32>
      %c0_322 = arith.constant 0 : index
      %c0_323 = arith.constant 0 : index
      %c0_324 = arith.constant 0 : index
      %293 = vector.load %arg6[%c0_322, %c0_323, %c0_324] : memref<8x8x32xf32, #tpu.memory_space<vmem>>, vector<1x8x32xf32>
      %294 = vector.shape_cast %293 : vector<1x8x32xf32> to vector<8x32xf32>
      %cst_325 = arith.constant dense<0.000000e+00> : vector<8x32xf32>
      %295 = tpu.matmul %292, %294, %cst_325 {dimension_numbers = #tpu.dot_dimension_numbers<[1], [0], [0], [1], [0, 0, 1, 1], [], []>} : vector<8x8xf32>, vector<8x32xf32>, vector<8x32xf32> -> vector<8x32xf32>
      %296 = arith.addf %291, %295 : vector<8x32xf32>
      %c8_326 = arith.constant 8 : index
      %c48_327 = arith.constant 48 : index
      %297 = vector.load %arg9[%c8_326, %c48_327] : memref<64x64xf32, #tpu.memory_space<vmem>>, vector<8x8xf32>
      %c1_328 = arith.constant 1 : index
      %c0_329 = arith.constant 0 : index
      %c0_330 = arith.constant 0 : index
      %298 = vector.load %arg6[%c1_328, %c0_329, %c0_330] : memref<8x8x32xf32, #tpu.memory_space<vmem>>, vector<1x8x32xf32>
      %299 = vector.shape_cast %298 : vector<1x8x32xf32> to vector<8x32xf32>
      %cst_331 = arith.constant dense<0.000000e+00> : vector<8x32xf32>
      %300 = tpu.matmul %297, %299, %cst_331 {dimension_numbers = #tpu.dot_dimension_numbers<[1], [0], [0], [1], [0, 0, 1, 1], [], []>} : vector<8x8xf32>, vector<8x32xf32>, vector<8x32xf32> -> vector<8x32xf32>
      %301 = arith.addf %296, %300 : vector<8x32xf32>
      %c16_332 = arith.constant 16 : index
      %c48_333 = arith.constant 48 : index
      %302 = vector.load %arg9[%c16_332, %c48_333] : memref<64x64xf32, #tpu.memory_space<vmem>>, vector<8x8xf32>
      %c2_334 = arith.constant 2 : index
      %c0_335 = arith.constant 0 : index
      %c0_336 = arith.constant 0 : index
      %303 = vector.load %arg6[%c2_334, %c0_335, %c0_336] : memref<8x8x32xf32, #tpu.memory_space<vmem>>, vector<1x8x32xf32>
      %304 = vector.shape_cast %303 : vector<1x8x32xf32> to vector<8x32xf32>
      %cst_337 = arith.constant dense<0.000000e+00> : vector<8x32xf32>
      %305 = tpu.matmul %302, %304, %cst_337 {dimension_numbers = #tpu.dot_dimension_numbers<[1], [0], [0], [1], [0, 0, 1, 1], [], []>} : vector<8x8xf32>, vector<8x32xf32>, vector<8x32xf32> -> vector<8x32xf32>
      %306 = arith.addf %301, %305 : vector<8x32xf32>
      %c24_338 = arith.constant 24 : index
      %c48_339 = arith.constant 48 : index
      %307 = vector.load %arg9[%c24_338, %c48_339] : memref<64x64xf32, #tpu.memory_space<vmem>>, vector<8x8xf32>
      %c3_340 = arith.constant 3 : index
      %c0_341 = arith.constant 0 : index
      %c0_342 = arith.constant 0 : index
      %308 = vector.load %arg6[%c3_340, %c0_341, %c0_342] : memref<8x8x32xf32, #tpu.memory_space<vmem>>, vector<1x8x32xf32>
      %309 = vector.shape_cast %308 : vector<1x8x32xf32> to vector<8x32xf32>
      %cst_343 = arith.constant dense<0.000000e+00> : vector<8x32xf32>
      %310 = tpu.matmul %307, %309, %cst_343 {dimension_numbers = #tpu.dot_dimension_numbers<[1], [0], [0], [1], [0, 0, 1, 1], [], []>} : vector<8x8xf32>, vector<8x32xf32>, vector<8x32xf32> -> vector<8x32xf32>
      %311 = arith.addf %306, %310 : vector<8x32xf32>
      %c32_344 = arith.constant 32 : index
      %c48_345 = arith.constant 48 : index
      %312 = vector.load %arg9[%c32_344, %c48_345] : memref<64x64xf32, #tpu.memory_space<vmem>>, vector<8x8xf32>
      %c4_346 = arith.constant 4 : index
      %c0_347 = arith.constant 0 : index
      %c0_348 = arith.constant 0 : index
      %313 = vector.load %arg6[%c4_346, %c0_347, %c0_348] : memref<8x8x32xf32, #tpu.memory_space<vmem>>, vector<1x8x32xf32>
      %314 = vector.shape_cast %313 : vector<1x8x32xf32> to vector<8x32xf32>
      %cst_349 = arith.constant dense<0.000000e+00> : vector<8x32xf32>
      %315 = tpu.matmul %312, %314, %cst_349 {dimension_numbers = #tpu.dot_dimension_numbers<[1], [0], [0], [1], [0, 0, 1, 1], [], []>} : vector<8x8xf32>, vector<8x32xf32>, vector<8x32xf32> -> vector<8x32xf32>
      %316 = arith.addf %311, %315 : vector<8x32xf32>
      %c40_350 = arith.constant 40 : index
      %c48_351 = arith.constant 48 : index
      %317 = vector.load %arg9[%c40_350, %c48_351] : memref<64x64xf32, #tpu.memory_space<vmem>>, vector<8x8xf32>
      %c5_352 = arith.constant 5 : index
      %c0_353 = arith.constant 0 : index
      %c0_354 = arith.constant 0 : index
      %318 = vector.load %arg6[%c5_352, %c0_353, %c0_354] : memref<8x8x32xf32, #tpu.memory_space<vmem>>, vector<1x8x32xf32>
      %319 = vector.shape_cast %318 : vector<1x8x32xf32> to vector<8x32xf32>
      %cst_355 = arith.constant dense<0.000000e+00> : vector<8x32xf32>
      %320 = tpu.matmul %317, %319, %cst_355 {dimension_numbers = #tpu.dot_dimension_numbers<[1], [0], [0], [1], [0, 0, 1, 1], [], []>} : vector<8x8xf32>, vector<8x32xf32>, vector<8x32xf32> -> vector<8x32xf32>
      %321 = arith.addf %316, %320 : vector<8x32xf32>
      %c48_356 = arith.constant 48 : index
      %c48_357 = arith.constant 48 : index
      %322 = vector.load %arg9[%c48_356, %c48_357] : memref<64x64xf32, #tpu.memory_space<vmem>>, vector<8x8xf32>
      %c6_358 = arith.constant 6 : index
      %c0_359 = arith.constant 0 : index
      %c0_360 = arith.constant 0 : index
      %323 = vector.load %arg6[%c6_358, %c0_359, %c0_360] : memref<8x8x32xf32, #tpu.memory_space<vmem>>, vector<1x8x32xf32>
      %324 = vector.shape_cast %323 : vector<1x8x32xf32> to vector<8x32xf32>
      %cst_361 = arith.constant dense<0.000000e+00> : vector<8x32xf32>
      %325 = tpu.matmul %322, %324, %cst_361 {dimension_numbers = #tpu.dot_dimension_numbers<[1], [0], [0], [1], [0, 0, 1, 1], [], []>} : vector<8x8xf32>, vector<8x32xf32>, vector<8x32xf32> -> vector<8x32xf32>
      %326 = arith.addf %321, %325 : vector<8x32xf32>
      %c56_362 = arith.constant 56 : index
      %c48_363 = arith.constant 48 : index
      %327 = vector.load %arg9[%c56_362, %c48_363] : memref<64x64xf32, #tpu.memory_space<vmem>>, vector<8x8xf32>
      %c7_364 = arith.constant 7 : index
      %c0_365 = arith.constant 0 : index
      %c0_366 = arith.constant 0 : index
      %328 = vector.load %arg6[%c7_364, %c0_365, %c0_366] : memref<8x8x32xf32, #tpu.memory_space<vmem>>, vector<1x8x32xf32>
      %329 = vector.shape_cast %328 : vector<1x8x32xf32> to vector<8x32xf32>
      %cst_367 = arith.constant dense<0.000000e+00> : vector<8x32xf32>
      %330 = tpu.matmul %327, %329, %cst_367 {dimension_numbers = #tpu.dot_dimension_numbers<[1], [0], [0], [1], [0, 0, 1, 1], [], []>} : vector<8x8xf32>, vector<8x32xf32>, vector<8x32xf32> -> vector<8x32xf32>
      %331 = arith.addf %326, %330 : vector<8x32xf32>
      %332 = vector.broadcast %14 : vector<1x32xf32> to vector<8x32xf32>
      %333 = arith.addf %331, %332 : vector<8x32xf32>
      %c0_368 = arith.constant 0 : index
      %c0_369 = arith.constant 0 : index
      %c6_370 = arith.constant 6 : index
      %c0_371 = arith.constant 0 : index
      %334 = vector.load %arg8[%c0_368, %c0_369, %c6_370, %c0_371] : memref<1x8x8x32xf32, #tpu.memory_space<vmem>>, vector<1x8x1x32xf32>
      %335 = vector.shape_cast %334 : vector<1x8x1x32xf32> to vector<8x32xf32>
      %336 = vector.shape_cast %333 : vector<8x32xf32> to vector<1x8x1x32xf32>
      tpu.vector_store %arg8[%c0_368, %c0_369, %c6_370, %c0_371], %336 {strides = array<i32>} : memref<1x8x8x32xf32, #tpu.memory_space<vmem>>, vector<1x8x1x32xf32>,
      %cst_372 = arith.constant 0.000000e+00 : f32
      %337 = vector.broadcast %cst_372 : f32 to vector<8x32xf32>
      %c0_373 = arith.constant 0 : index
      %c56_374 = arith.constant 56 : index
      %338 = vector.load %arg9[%c0_373, %c56_374] : memref<64x64xf32, #tpu.memory_space<vmem>>, vector<8x8xf32>
      %c0_375 = arith.constant 0 : index
      %c0_376 = arith.constant 0 : index
      %c0_377 = arith.constant 0 : index
      %339 = vector.load %arg6[%c0_375, %c0_376, %c0_377] : memref<8x8x32xf32, #tpu.memory_space<vmem>>, vector<1x8x32xf32>
      %340 = vector.shape_cast %339 : vector<1x8x32xf32> to vector<8x32xf32>
      %cst_378 = arith.constant dense<0.000000e+00> : vector<8x32xf32>
      %341 = tpu.matmul %338, %340, %cst_378 {dimension_numbers = #tpu.dot_dimension_numbers<[1], [0], [0], [1], [0, 0, 1, 1], [], []>} : vector<8x8xf32>, vector<8x32xf32>, vector<8x32xf32> -> vector<8x32xf32>
      %342 = arith.addf %337, %341 : vector<8x32xf32>
      %c8_379 = arith.constant 8 : index
      %c56_380 = arith.constant 56 : index
      %343 = vector.load %arg9[%c8_379, %c56_380] : memref<64x64xf32, #tpu.memory_space<vmem>>, vector<8x8xf32>
      %c1_381 = arith.constant 1 : index
      %c0_382 = arith.constant 0 : index
      %c0_383 = arith.constant 0 : index
      %344 = vector.load %arg6[%c1_381, %c0_382, %c0_383] : memref<8x8x32xf32, #tpu.memory_space<vmem>>, vector<1x8x32xf32>
      %345 = vector.shape_cast %344 : vector<1x8x32xf32> to vector<8x32xf32>
      %cst_384 = arith.constant dense<0.000000e+00> : vector<8x32xf32>
      %346 = tpu.matmul %343, %345, %cst_384 {dimension_numbers = #tpu.dot_dimension_numbers<[1], [0], [0], [1], [0, 0, 1, 1], [], []>} : vector<8x8xf32>, vector<8x32xf32>, vector<8x32xf32> -> vector<8x32xf32>
      %347 = arith.addf %342, %346 : vector<8x32xf32>
      %c16_385 = arith.constant 16 : index
      %c56_386 = arith.constant 56 : index
      %348 = vector.load %arg9[%c16_385, %c56_386] : memref<64x64xf32, #tpu.memory_space<vmem>>, vector<8x8xf32>
      %c2_387 = arith.constant 2 : index
      %c0_388 = arith.constant 0 : index
      %c0_389 = arith.constant 0 : index
      %349 = vector.load %arg6[%c2_387, %c0_388, %c0_389] : memref<8x8x32xf32, #tpu.memory_space<vmem>>, vector<1x8x32xf32>
      %350 = vector.shape_cast %349 : vector<1x8x32xf32> to vector<8x32xf32>
      %cst_390 = arith.constant dense<0.000000e+00> : vector<8x32xf32>
      %351 = tpu.matmul %348, %350, %cst_390 {dimension_numbers = #tpu.dot_dimension_numbers<[1], [0], [0], [1], [0, 0, 1, 1], [], []>} : vector<8x8xf32>, vector<8x32xf32>, vector<8x32xf32> -> vector<8x32xf32>
      %352 = arith.addf %347, %351 : vector<8x32xf32>
      %c24_391 = arith.constant 24 : index
      %c56_392 = arith.constant 56 : index
      %353 = vector.load %arg9[%c24_391, %c56_392] : memref<64x64xf32, #tpu.memory_space<vmem>>, vector<8x8xf32>
      %c3_393 = arith.constant 3 : index
      %c0_394 = arith.constant 0 : index
      %c0_395 = arith.constant 0 : index
      %354 = vector.load %arg6[%c3_393, %c0_394, %c0_395] : memref<8x8x32xf32, #tpu.memory_space<vmem>>, vector<1x8x32xf32>
      %355 = vector.shape_cast %354 : vector<1x8x32xf32> to vector<8x32xf32>
      %cst_396 = arith.constant dense<0.000000e+00> : vector<8x32xf32>
      %356 = tpu.matmul %353, %355, %cst_396 {dimension_numbers = #tpu.dot_dimension_numbers<[1], [0], [0], [1], [0, 0, 1, 1], [], []>} : vector<8x8xf32>, vector<8x32xf32>, vector<8x32xf32> -> vector<8x32xf32>
      %357 = arith.addf %352, %356 : vector<8x32xf32>
      %c32_397 = arith.constant 32 : index
      %c56_398 = arith.constant 56 : index
      %358 = vector.load %arg9[%c32_397, %c56_398] : memref<64x64xf32, #tpu.memory_space<vmem>>, vector<8x8xf32>
      %c4_399 = arith.constant 4 : index
      %c0_400 = arith.constant 0 : index
      %c0_401 = arith.constant 0 : index
      %359 = vector.load %arg6[%c4_399, %c0_400, %c0_401] : memref<8x8x32xf32, #tpu.memory_space<vmem>>, vector<1x8x32xf32>
      %360 = vector.shape_cast %359 : vector<1x8x32xf32> to vector<8x32xf32>
      %cst_402 = arith.constant dense<0.000000e+00> : vector<8x32xf32>
      %361 = tpu.matmul %358, %360, %cst_402 {dimension_numbers = #tpu.dot_dimension_numbers<[1], [0], [0], [1], [0, 0, 1, 1], [], []>} : vector<8x8xf32>, vector<8x32xf32>, vector<8x32xf32> -> vector<8x32xf32>
      %362 = arith.addf %357, %361 : vector<8x32xf32>
      %c40_403 = arith.constant 40 : index
      %c56_404 = arith.constant 56 : index
      %363 = vector.load %arg9[%c40_403, %c56_404] : memref<64x64xf32, #tpu.memory_space<vmem>>, vector<8x8xf32>
      %c5_405 = arith.constant 5 : index
      %c0_406 = arith.constant 0 : index
      %c0_407 = arith.constant 0 : index
      %364 = vector.load %arg6[%c5_405, %c0_406, %c0_407] : memref<8x8x32xf32, #tpu.memory_space<vmem>>, vector<1x8x32xf32>
      %365 = vector.shape_cast %364 : vector<1x8x32xf32> to vector<8x32xf32>
      %cst_408 = arith.constant dense<0.000000e+00> : vector<8x32xf32>
      %366 = tpu.matmul %363, %365, %cst_408 {dimension_numbers = #tpu.dot_dimension_numbers<[1], [0], [0], [1], [0, 0, 1, 1], [], []>} : vector<8x8xf32>, vector<8x32xf32>, vector<8x32xf32> -> vector<8x32xf32>
      %367 = arith.addf %362, %366 : vector<8x32xf32>
      %c48_409 = arith.constant 48 : index
      %c56_410 = arith.constant 56 : index
      %368 = vector.load %arg9[%c48_409, %c56_410] : memref<64x64xf32, #tpu.memory_space<vmem>>, vector<8x8xf32>
      %c6_411 = arith.constant 6 : index
      %c0_412 = arith.constant 0 : index
      %c0_413 = arith.constant 0 : index
      %369 = vector.load %arg6[%c6_411, %c0_412, %c0_413] : memref<8x8x32xf32, #tpu.memory_space<vmem>>, vector<1x8x32xf32>
      %370 = vector.shape_cast %369 : vector<1x8x32xf32> to vector<8x32xf32>
      %cst_414 = arith.constant dense<0.000000e+00> : vector<8x32xf32>
      %371 = tpu.matmul %368, %370, %cst_414 {dimension_numbers = #tpu.dot_dimension_numbers<[1], [0], [0], [1], [0, 0, 1, 1], [], []>} : vector<8x8xf32>, vector<8x32xf32>, vector<8x32xf32> -> vector<8x32xf32>
      %372 = arith.addf %367, %371 : vector<8x32xf32>
      %c56_415 = arith.constant 56 : index
      %c56_416 = arith.constant 56 : index
      %373 = vector.load %arg9[%c56_415, %c56_416] : memref<64x64xf32, #tpu.memory_space<vmem>>, vector<8x8xf32>
      %c7_417 = arith.constant 7 : index
      %c0_418 = arith.constant 0 : index
      %c0_419 = arith.constant 0 : index
      %374 = vector.load %arg6[%c7_417, %c0_418, %c0_419] : memref<8x8x32xf32, #tpu.memory_space<vmem>>, vector<1x8x32xf32>
      %375 = vector.shape_cast %374 : vector<1x8x32xf32> to vector<8x32xf32>
      %cst_420 = arith.constant dense<0.000000e+00> : vector<8x32xf32>
      %376 = tpu.matmul %373, %375, %cst_420 {dimension_numbers = #tpu.dot_dimension_numbers<[1], [0], [0], [1], [0, 0, 1, 1], [], []>} : vector<8x8xf32>, vector<8x32xf32>, vector<8x32xf32> -> vector<8x32xf32>
      %377 = arith.addf %372, %376 : vector<8x32xf32>
      %378 = vector.broadcast %14 : vector<1x32xf32> to vector<8x32xf32>
      %379 = arith.addf %377, %378 : vector<8x32xf32>
      %c0_421 = arith.constant 0 : index
      %c0_422 = arith.constant 0 : index
      %c7_423 = arith.constant 7 : index
      %c0_424 = arith.constant 0 : index
      %380 = vector.load %arg8[%c0_421, %c0_422, %c7_423, %c0_424] : memref<1x8x8x32xf32, #tpu.memory_space<vmem>>, vector<1x8x1x32xf32>
      %381 = vector.shape_cast %380 : vector<1x8x1x32xf32> to vector<8x32xf32>
      %382 = vector.shape_cast %379 : vector<8x32xf32> to vector<1x8x1x32xf32>
      tpu.vector_store %arg8[%c0_421, %c0_422, %c7_423, %c0_424], %382 {strides = array<i32>} : memref<1x8x8x32xf32, #tpu.memory_space<vmem>>, vector<1x8x1x32xf32>,
    } else {
    }
    return
  }
  func.func @transform_0(%arg0: i32, %arg1: i32, %arg2: i32, %arg3: i32) -> (i32, i32, i32, i32) {
    %c0_i32 = arith.constant 0 : i32
    %c0_i32_0 = arith.constant 0 : i32
    return %arg0, %arg1, %arg3, %c0_i32 : i32, i32, i32, i32
  }
  func.func @transform_1(%arg0: i32, %arg1: i32, %arg2: i32, %arg3: i32) -> (i32, i32, i32) {
    %c0_i32 = arith.constant 0 : i32
    return %arg0, %arg3, %arg2 : i32, i32, i32
  }
  func.func @transform_2(%arg0: i32, %arg1: i32, %arg2: i32, %arg3: i32) -> (i32, i32, i32) {
    %c0_i32 = arith.constant 0 : i32
    %c0_i32_0 = arith.constant 0 : i32
    %c0_i32_1 = arith.constant 0 : i32
    %c0_i32_2 = arith.constant 0 : i32
    return %c0_i32, %c0_i32_0, %c0_i32_1 : i32, i32, i32
  }
  func.func @transform_3(%arg0: i32, %arg1: i32, %arg2: i32, %arg3: i32) -> (i32, i32) {
    %c0_i32 = arith.constant 0 : i32
    %c0_i32_0 = arith.constant 0 : i32
    %c0_i32_1 = arith.constant 0 : i32
    return %c0_i32, %c0_i32_0 : i32, i32
  }
  func.func @transform_4(%arg0: i32, %arg1: i32, %arg2: i32, %arg3: i32) -> (i32, i32, i32, i32) {
    %c0_i32 = arith.constant 0 : i32
    %c0_i32_0 = arith.constant 0 : i32
    return %arg0, %arg1, %arg2, %c0_i32 : i32, i32, i32, i32
  }
}

</mosaic_0001>

<llo_original>
// kernel: outer_product_mean.2
$region0: #{outer_product_mean.2}
  #allocation0 [shape = 'u32[]', space=smem, size = 0x4, offset = 0x4, fixed_abs, tag = 'smem constant byte address 0x4 - core index']
  #allocation1 [shape = 'u32[144,128]{1,0:T(1,128)}', space=vmem, size = 0x12000, scoped, tag = 'internal scratch']
  %s0 = inlined_call_operand.vmem [shape: f32[2,8,8,32], index: 0, kind: input, shape index: {}]
  %s1 = inlined_call_operand.vmem [shape: f32[1,32], index: 1, kind: input, shape index: {}]
  %s2 = inlined_call_operand.vmem [shape: f32[1,32], index: 2, kind: input, shape index: {}]
  %s3 = inlined_call_operand.vmem [shape: f32[32,8], index: 3, kind: input, shape index: {}]
  %s4 = inlined_call_operand.vmem [shape: f32[32,8], index: 4, kind: input, shape index: {}]
  %s5 = inlined_call_operand.vmem [shape: bf16[2,1,8,8,8], index: 5, kind: output, shape index: {0}]
  %s6 = inlined_call_operand.vmem [shape: bf16[2,8,8,8], index: 6, kind: output, shape index: {1}]
  %7 = xla_tuple %s5, %s6
  %s8 = sld [smem:[#allocation0]]
  $region61: #{outer_product_mean.2} parent=0
    _
  %s10 = ssub.s32 1, %s8
  %s11 = scalar_select 0, %s10, %s8
  loop: start=0, step=1, limit=18
  $region2: #{outer_product_mean.2} parent=0 // loop_pre_header
    _
  $region3: #{outer_product_mean.2} parent=0 // loop_header
    %s13 = sphi 0, %s17
    %p14 = scmp.ge.s32.totalorder %s13, 18
    %s20 = sphi 0, %s39
    %s21 = sphi 0, %s35
    %s22 = sphi 0, %s31
    %s23 = sphi 0, %s20
    %s24 = sphi 0, %s21
    %s25 = sphi 0, %s22
    %s26 = sphi 0, %s23
    %s27 = sphi 0, %s24
    %s28 = sphi 0, %s25
    %s46 = sphi 0, %s48
    %s49 = sphi 0, %s46
    %s50 = sphi 0, %s49
    %s66 = sphi 0, %s50
    %s70 = sphi 0, %s70
    %s72 = sphi 0, %s70
    %s73 = sphi 0, %s72
    %s87 = sphi 0, %s73
    %s91 = sphi 0, %s91
    %s93 = sphi 0, %s91
    %s94 = sphi 0, %s93
    %s108 = sphi 0, %s94
    %s112 = sphi 0, %s112
    %s114 = sphi 0, %s112
    %s115 = sphi 0, %s114
    %s129 = sphi 0, %s115
    %s133 = sphi 0, %s133
    %s135 = sphi 0, %s133
    %s136 = sphi 0, %s135
    %s150 = sphi 0, %s136
    %s160 = sphi 0, %s162
    %s163 = sphi 0, %s160
    %s164 = sphi 0, %s163
    %s180 = sphi 0, %s164
    %s190 = sphi 0, %s192
    %s193 = sphi 0, %s190
    %s194 = sphi 0, %s193
    %s210 = sphi 0, %s194
  $region4: #{outer_product_mean.2} parent=0 // loop_header_branch
    %16 = sbr.rel (%p14) target = $region8
  $region5: #{outer_product_mean.2} parent=0 // loop_body
    %s18 = ssub.s32 %s13, 1
    %s19 = ssub.s32 %s13, 2
    %s29 = sadd.s32 1, %s22
    %p30 = scmp.ge.s32.totalorder %s29, 1
    %s31 = scalar_select %p30, 0, %s29
    %s32 = sadd.s32 1, %s21
    %s33 = scalar_select %p30, %s32, %s21
    %p34 = scmp.ge.s32.totalorder %s33, 8
    %s35 = scalar_select %p34, 0, %s33
    %s36 = sadd.s32 1, %s20
    %s37 = scalar_select %p34, %s36, %s20
    %p38 = scmp.ge.s32.totalorder %s37, 2
    %s39 = scalar_select %p38, 0, %s37
    %s40 = ssub.s32 %s20, %s39
    %s41 = ssub.s32 %s21, %s35
    %s42 = sor.u32 %s40, %s41
    %s43 = ssub.s32 %s22, %s31
    %s44 = sor.u32 %s42, %s43
    %p45 = scmp.eq.s32.totalorder %s44, 0
    %s47 = sadd.s32 %s46, 1
    %s48 = scalar_select %p45, %s46, %s47
    %p51 = pneg %p45
    %p52 = scmp.eq.s32.totalorder %s13, 15
    %p53 = por %p51, %p52
    %p54 = scmp.ne.s32.totalorder %s46, %s49
    %p55 = scmp.eq.s32.totalorder %s13, 0
    %p56 = por %p54, %p55
    %p57 = scmp.ne.s32.totalorder %s46, %s49
    %p58 = scmp.eq.s32.totalorder %s18, 15
    %p59 = por %p57, %p58
    %p60 = scmp.ne.s32.totalorder %s49, %s50
    %p61 = scmp.eq.s32.totalorder %s18, 0
    %p62 = por %p60, %p61
    %p63 = scmp.ne.s32.totalorder %s49, %s50
    %p64 = scmp.eq.s32.totalorder %s19, 15
    %p65 = por %p63, %p64
    %p67 = scmp.ne.s32.totalorder %s50, %s66
    %p68 = scmp.eq.s32.totalorder %s19, 0
    %p69 = por %p67, %p68
    %s71 = sadd.s32 %s70, 1
    %p74 = scmp.eq.s32.totalorder %s13, 15
    %p75 = scmp.ne.s32.totalorder %s70, %s72
    %p76 = scmp.eq.s32.totalorder %s13, 0
    %p77 = por %p75, %p76
    %p78 = scmp.ne.s32.totalorder %s70, %s72
    %p79 = scmp.eq.s32.totalorder %s18, 15
    %p80 = por %p78, %p79
    %p81 = scmp.ne.s32.totalorder %s72, %s73
    %p82 = scmp.eq.s32.totalorder %s18, 0
    %p83 = por %p81, %p82
    %p84 = scmp.ne.s32.totalorder %s72, %s73
    %p85 = scmp.eq.s32.totalorder %s19, 15
    %p86 = por %p84, %p85
    %p88 = scmp.ne.s32.totalorder %s73, %s87
    %p89 = scmp.eq.s32.totalorder %s19, 0
    %p90 = por %p88, %p89
    %s92 = sadd.s32 %s91, 1
    %p95 = scmp.eq.s32.totalorder %s13, 15
    %p96 = scmp.ne.s32.totalorder %s91, %s93
    %p97 = scmp.eq.s32.totalorder %s13, 0
    %p98 = por %p96, %p97
    %p99 = scmp.ne.s32.totalorder %s91, %s93
    %p100 = scmp.eq.s32.totalorder %s18, 15
    %p101 = por %p99, %p100
    %p102 = scmp.ne.s32.totalorder %s93, %s94
    %p103 = scmp.eq.s32.totalorder %s18, 0
    %p104 = por %p102, %p103
    %p105 = scmp.ne.s32.totalorder %s93, %s94
    %p106 = scmp.eq.s32.totalorder %s19, 15
    %p107 = por %p105, %p106
    %p109 = scmp.ne.s32.totalorder %s94, %s108
    %p110 = scmp.eq.s32.totalorder %s19, 0
    %p111 = por %p109, %p110
    %s113 = sadd.s32 %s112, 1
    %p116 = scmp.eq.s32.totalorder %s13, 15
    %p117 = scmp.ne.s32.totalorder %s112, %s114
    %p118 = scmp.eq.s32.totalorder %s13, 0
    %p119 = por %p117, %p118
    %p120 = scmp.ne.s32.totalorder %s112, %s114
    %p121 = scmp.eq.s32.totalorder %s18, 15
    %p122 = por %p120, %p121
    %p123 = scmp.ne.s32.totalorder %s114, %s115
    %p124 = scmp.eq.s32.totalorder %s18, 0
    %p125 = por %p123, %p124
    %p126 = scmp.ne.s32.totalorder %s114, %s115
    %p127 = scmp.eq.s32.totalorder %s19, 15
    %p128 = por %p126, %p127
    %p130 = scmp.ne.s32.totalorder %s115, %s129
    %p131 = scmp.eq.s32.totalorder %s19, 0
    %p132 = por %p130, %p131
    %s134 = sadd.s32 %s133, 1
    %p137 = scmp.eq.s32.totalorder %s13, 15
    %p138 = scmp.ne.s32.totalorder %s133, %s135
    %p139 = scmp.eq.s32.totalorder %s13, 0
    %p140 = por %p138, %p139
    %p141 = scmp.ne.s32.totalorder %s133, %s135
    %p142 = scmp.eq.s32.totalorder %s18, 15
    %p143 = por %p141, %p142
    %p144 = scmp.ne.s32.totalorder %s135, %s136
    %p145 = scmp.eq.s32.totalorder %s18, 0
    %p146 = por %p144, %p145
    %p147 = scmp.ne.s32.totalorder %s135, %s136
    %p148 = scmp.eq.s32.totalorder %s19, 15
    %p149 = por %p147, %p148
    %p151 = scmp.ne.s32.totalorder %s136, %s150
    %p152 = scmp.eq.s32.totalorder %s19, 0
    %p153 = por %p151, %p152
    %s154 = ssub.s32 %s20, %s39
    %s155 = ssub.s32 %s22, %s31
    %s156 = sor.u32 %s154, %s155
    %s157 = ssub.s32 %s21, %s35
    %s158 = sor.u32 %s156, %s157
    %p159 = scmp.eq.s32.totalorder %s158, 0
    %s161 = sadd.s32 %s160, 1
    %s162 = scalar_select %p159, %s160, %s161
    %p165 = pneg %p159
    %p166 = scmp.eq.s32.totalorder %s13, 15
    %p167 = por %p165, %p166
    %p168 = scmp.ne.s32.totalorder %s160, %s163
    %p169 = scmp.eq.s32.totalorder %s13, 0
    %p170 = por %p168, %p169
    %p171 = scmp.ne.s32.totalorder %s160, %s163
    %p172 = scmp.eq.s32.totalorder %s18, 15
    %p173 = por %p171, %p172
    %p174 = scmp.ne.s32.totalorder %s163, %s164
    %p175 = scmp.eq.s32.totalorder %s18, 0
    %p176 = por %p174, %p175
    %p177 = scmp.ne.s32.totalorder %s163, %s164
    %p178 = scmp.eq.s32.totalorder %s19, 15
    %p179 = por %p177, %p178
    %p181 = scmp.ne.s32.totalorder %s164, %s180
    %p182 = scmp.eq.s32.totalorder %s19, 0
    %p183 = por %p181, %p182
    %s184 = ssub.s32 %s20, %s39
    %s185 = ssub.s32 %s21, %s35
    %s186 = sor.u32 %s184, %s185
    %s187 = ssub.s32 %s22, %s31
    %s188 = sor.u32 %s186, %s187
    %p189 = scmp.eq.s32.totalorder %s188, 0
    %s191 = sadd.s32 %s190, 1
    %s192 = scalar_select %p189, %s190, %s191
    %p195 = pneg %p189
    %p196 = scmp.eq.s32.totalorder %s13, 15
    %p197 = por %p195, %p196
    %p198 = scmp.ne.s32.totalorder %s190, %s193
    %p199 = scmp.eq.s32.totalorder %s13, 0
    %p200 = por %p198, %p199
    %p201 = scmp.ne.s32.totalorder %s190, %s193
    %p202 = scmp.eq.s32.totalorder %s18, 15
    %p203 = por %p201, %p202
    %p204 = scmp.ne.s32.totalorder %s193, %s194
    %p205 = scmp.eq.s32.totalorder %s18, 0
    %p206 = por %p204, %p205
    %p207 = scmp.ne.s32.totalorder %s193, %s194
    %p208 = scmp.eq.s32.totalorder %s19, 15
    %p209 = por %p207, %p208
    %p211 = scmp.ne.s32.totalorder %s194, %s210
    %p212 = scmp.eq.s32.totalorder %s19, 0
    %p213 = por %p211, %p212
    %p214 = scmp.le.s32.totalorder 1, %s13
    %p215 = scmp.lt.s32.totalorder %s13, 17
    %p216 = pnand %p214, %p215
    %p217 = pneg %p216
    // Predicated region
    $region9: #{outer_product_mean.2} parent=5 // pred_check
      _
    $region10: #{outer_product_mean.2} parent=5 // pred_check_branch
      %219 = sbr.rel (%p216) target = $region12
    $region11: #{outer_product_mean.2} parent=5 // pred_region
      %s220 = ssub.s32 %s13, 1
      // Predicated region
      $region13: #{outer_product_mean.2} parent=11 // pred_check
        %p221 = pneg %p83
      $region14: #{outer_product_mean.2} parent=11 // pred_check_branch
        %223 = sbr.rel (%p221) target = $region16
      $region15: #{outer_product_mean.2} parent=11 // pred_region
        _
      $region16: #{outer_product_mean.2} parent=11 // pred_fallthru
        _
      // Predicated region
      $region17: #{outer_product_mean.2} parent=11 // pred_check
        %p224 = pneg %p104
      $region18: #{outer_product_mean.2} parent=11 // pred_check_branch
        %226 = sbr.rel (%p224) target = $region20
      $region19: #{outer_product_mean.2} parent=11 // pred_region
        _
      $region20: #{outer_product_mean.2} parent=11 // pred_fallthru
        _
      // Predicated region
      $region21: #{outer_product_mean.2} parent=11 // pred_check
        %p227 = pneg %p125
      $region22: #{outer_product_mean.2} parent=11 // pred_check_branch
        %229 = sbr.rel (%p227) target = $region24
      $region23: #{outer_product_mean.2} parent=11 // pred_region
        _
      $region24: #{outer_product_mean.2} parent=11 // pred_fallthru
        _
      // Predicated region
      $region25: #{outer_product_mean.2} parent=11 // pred_check
        %p230 = pneg %p146
      $region26: #{outer_product_mean.2} parent=11 // pred_check_branch
        %232 = sbr.rel (%p230) target = $region28
      $region27: #{outer_product_mean.2} parent=11 // pred_region
        _
      $region28: #{outer_product_mean.2} parent=11 // pred_fallthru
        _
    $region12: #{outer_product_mean.2} parent=5 // pred_fallthru
      _
    %p233 = scmp.lt.s32.totalorder %s13, 16
    // Predicated region
    $region29: #{outer_product_mean.2} parent=5 // pred_check
      %p234 = pneg %p233
    $region30: #{outer_product_mean.2} parent=5 // pred_check_branch
      %236 = sbr.rel (%p234) target = $region32
    $region31: #{outer_product_mean.2} parent=5 // pred_region
      // Predicated region
      $region33: #{outer_product_mean.2} parent=31 // pred_check
        %p237 = pneg %p56
      $region34: #{outer_product_mean.2} parent=31 // pred_check_branch
        %239 = sbr.rel (%p237) target = $region36
      $region35: #{outer_product_mean.2} parent=31 // pred_region
        %p240 = scmp.lt.s32.totalorder %s20, 1
        %s241 = scalar_select %p240, %s20, 1
        %p242 = scmp.lt.s32.totalorder %s21, 7
        %s243 = scalar_select %p242, %s21, 7
        %p244 = scmp.lt.s32.totalorder %s22, 0
        %s245 = scalar_select %p244, %s22, 0
        %s246 = sadd.s32 %s245, %s243
        %s247 = smul.addr %s241, 8
        %s248 = sadd.s32 %s246, %s247
        %s249 = smul.addr %s248, 8
        %s250 = scalar_lea.vmem %s0, %s249
      $region36: #{outer_product_mean.2} parent=31 // pred_fallthru
        _
    $region32: #{outer_product_mean.2} parent=5 // pred_fallthru
      _
    %p251 = scmp.le.s32.totalorder 1, %s13
    %p252 = scmp.lt.s32.totalorder %s13, 17
    %p253 = pnand %p251, %p252
    %p254 = pneg %p253
    // Predicated region
    $region37: #{outer_product_mean.2} parent=5 // pred_check
      _
    $region38: #{outer_product_mean.2} parent=5 // pred_check_branch
      %256 = sbr.rel (%p253) target = $region40
    $region39: #{outer_product_mean.2} parent=5 // pred_region
      %s257 = ssub.s32 %s13, 1
      %p258 = scmp.lt.s32.totalorder %s23, 1
      %s259 = scalar_select %p258, %s23, 1
      %p260 = scmp.lt.s32.totalorder %s24, 7
      %s261 = scalar_select %p260, %s24, 7
      %p262 = scmp.lt.s32.totalorder %s25, 0
      %s263 = scalar_select %p262, %s25, 0
      %s264 = sadd.s32 %s263, %s261
      %s265 = smul.addr %s259, 8
      %s266 = sadd.s32 %s264, %s265
      %s267 = smul.addr %s266, 8
      %s268 = scalar_lea.vmem %s0, %s267
      %p269 = pneg %p62
      %p270 = pneg %p59
      %p271 = pneg %p83
      %p272 = pneg %p80
      %p273 = pneg %p104
      %p274 = pneg %p101
      %p275 = pneg %p125
      %p276 = pneg %p122
      %p277 = pneg %p146
      %p278 = pneg %p143
      %p279 = pneg %p176
      %p280 = pneg %p173
      %p281 = scmp.lt.s32.totalorder %s23, 1
      %s282 = scalar_select %p281, %s23, 1
      %p283 = scmp.lt.s32.totalorder %s25, 0
      %s284 = scalar_select %p283, %s25, 0
      %p285 = scmp.lt.s32.totalorder %s24, 7
      %s286 = scalar_select %p285, %s24, 7
      %s287 = smul.addr %s284, 8
      %s288 = sadd.s32 %s286, %s287
      %s289 = smul.addr %s282, 8
      %s290 = sadd.s32 %s288, %s289
      %s291 = smul.addr %s290, 4
      %s292 = scalar_lea.vmem %s5, %s291
      %p293 = pneg %p206
      %p294 = pneg %p203
      %p295 = scmp.lt.s32.totalorder %s23, 1
      %s296 = scalar_select %p295, %s23, 1
      %p297 = scmp.lt.s32.totalorder %s24, 7
      %s298 = scalar_select %p297, %s24, 7
      %p299 = scmp.lt.s32.totalorder %s25, 0
      %s300 = scalar_select %p299, %s25, 0
      %s301 = sadd.s32 %s300, %s298
      %s302 = smul.addr %s296, 8
      %s303 = sadd.s32 %s301, %s302
      %s304 = smul.addr %s303, 4
      %s305 = scalar_lea.vmem %s6, %s304
      %p306 = scmp.lt.s32.totalorder %s23, 1
      %s307 = scalar_select %p306, %s23, 1
      %p308 = scmp.lt.s32.totalorder %s24, 7
      %s309 = scalar_select %p308, %s24, 7
      %p310 = scmp.lt.s32.totalorder %s25, 0
      %s311 = scalar_select %p310, %s25, 0
      %s312 = sadd.s32 %s311, %s309
      %s313 = smul.addr %s307, 8
      %s314 = sadd.s32 %s312, %s313
      %s315 = smul.addr %s314, 8
      %s316 = scalar_lea.vmem %s0, %s315
      %p317 = scmp.lt.s32.totalorder %s23, 1
      %s318 = scalar_select %p317, %s23, 1
      %p319 = scmp.lt.s32.totalorder %s25, 0
      %s320 = scalar_select %p319, %s25, 0
      %p321 = scmp.lt.s32.totalorder %s24, 7
      %s322 = scalar_select %p321, %s24, 7
      %s323 = smul.addr %s320, 8
      %s324 = sadd.s32 %s322, %s323
      %s325 = smul.addr %s318, 8
      %s326 = sadd.s32 %s324, %s325
      %s327 = smul.addr %s326, 4
      %s328 = scalar_lea.vmem %s5, %s327
      %p329 = scmp.lt.s32.totalorder %s23, 1
      %s330 = scalar_select %p329, %s23, 1
      %p331 = scmp.lt.s32.totalorder %s24, 7
      %s332 = scalar_select %p331, %s24, 7
      %p333 = scmp.lt.s32.totalorder %s25, 0
      %s334 = scalar_select %p333, %s25, 0
      %s335 = sadd.s32 %s334, %s332
      %s336 = smul.addr %s330, 8
      %s337 = sadd.s32 %s335, %s336
      %s338 = smul.addr %s337, 4
      %s339 = scalar_lea.vmem %s6, %s338
      %v340 = vld [vmem:[%s316] sm:$0xff]
      %vm341 = vcmask 261120
      %v342 = vsel %vm341, %v340, 0.0
      %343 = vadd.xlane.f32.xlu0 %v342
      %v344 = vpop.xlane.xlu0 %343
      %v345 = vrcp.pop 32.0
      %v346 = vmul.f32 %v344, %v345
      %v347 = vsub.f32 %v340, %v346
      %v348 = vmul.f32 %v347, %v347
      %v349 = vsel %vm341, %v348, 0.0
      %350 = vadd.xlane.f32.xlu0 %v349
      %v351 = vpop.xlane.xlu0 %350
      %v352 = vmul.f32 %v351, %v345
      %v353 = vadd.f32 %v352, 1e-05
      %v354 = vrsqrt.pop %v353
      %v355 = vmul.f32 %v347, %v354
      %v356 = vld [vmem:[%s1] sm:$0x1]
      %v358 = vlaneseq
      %v359 = vshrl.u32 %v358, 7
      %v360 = vsub.s32 0, %v359
      %v361 = vrot.slane %v356, %v360
      %v363 = vmul.f32 %v355, %v361
      %v364 = vld [vmem:[%s2] sm:$0x1]
      %v366 = vlaneseq
      %v367 = vshrl.u32 %v366, 7
      %v368 = vsub.s32 0, %v367
      %v369 = vrot.slane %v364, %v368
      %v371 = vadd.f32 %v363, %v369
      %v372 = vld [vmem:[%s3] sm:$0xff]
      %v373 = vld [vmem:[%s3 + $0x8] sm:$0xff]
      %v374 = vld [vmem:[%s3 + $0x10] sm:$0xff]
      %v375 = vld [vmem:[%s3 + $0x18] sm:$0xff]
      %v377 = vsel %vm341, %v371, 0
      %379 = vmatprep.subr.mxu0 0.0
      %380 = vmatpush1.msra.mxu0 %v372
      %381 = vmatprep.subr.mxu0 0.0
      %382 = vmatpush1.msra.mxu0 %v373
      %383 = vmatprep.subr.mxu0 0.0
      %384 = vmatpush1.msra.mxu0 %v374
      %385 = vmatprep.subr.mxu0 0.0
      %386 = vmatpush1.msra.mxu0 %v375
      %387 = vmatprep.subr.mxu0 0.0
      %388 = vmatpush1.msra.mxu0 0.0
      %389 = vmatprep.subr.mxu0 0.0
      %390 = vmatpush1.msra.mxu0 0.0
      %391 = vmatprep.subr.mxu0 0.0
      %392 = vmatpush1.msra.mxu0 0.0
      %393 = vmatprep.subr.mxu0 0.0
      %394 = vmatpush1.msra.mxu0 0.0
      %395 = vmatprep.subr.mxu0 0.0
      %396 = vmatpush1.msra.mxu0 0.0
      %397 = vmatprep.subr.mxu0 0.0
      %398 = vmatpush1.msra.mxu0 0.0
      %399 = vmatprep.subr.mxu0 0.0
      %400 = vmatpush1.msra.mxu0 0.0
      %401 = vmatprep.subr.mxu0 0.0
      %402 = vmatpush1.msra.mxu0 0.0
      %403 = vmatprep.subr.mxu0 0.0
      %404 = vmatpush1.msra.mxu0 0.0
      %405 = vmatprep.subr.mxu0 0.0
      %406 = vmatpush1.msra.mxu0 0.0
      %407 = vmatprep.subr.mxu0 0.0
      %408 = vmatpush1.msra.mxu0 0.0
      %409 = vmatprep.subr.mxu0 0.0
      %410 = vmatpush1.msra.mxu0 0.0
      %411 = vmatprep.subr.mxu0 0.0
      %412 = vmatpush1.msra.mxu0 0.0
      %413 = vmatprep.subr.mxu0 0.0
      %414 = vmatpush1.msra.mxu0 0.0
      %415 = vmatprep.subr.mxu0 0.0
      %416 = vmatpush1.msra.mxu0 0.0
      %417 = vmatprep.subr.mxu0 0.0
      %418 = vmatpush1.msra.mxu0 0.0
      %419 = vmatprep.subr.mxu0 0.0
      %420 = vmatpush1.msra.mxu0 0.0
      %421 = vmatprep.subr.mxu0 0.0
      %422 = vmatpush1.msra.mxu0 0.0
      %423 = vmatprep.subr.mxu0 0.0
      %424 = vmatpush1.msra.mxu0 0.0
      %425 = vmatprep.subr.mxu0 0.0
      %426 = vmatpush1.msra.mxu0 0.0
      %427 = vmatprep.subr.mxu0 0.0
      %428 = vmatpush1.msra.mxu0 0.0
      %429 = vmatprep.subr.mxu0 0.0
      %430 = vmatpush1.msra.mxu0 0.0
      %431 = vmatprep.subr.mxu0 0.0
      %432 = vmatpush1.msra.mxu0 0.0
      %433 = vmatprep.subr.mxu0 0.0
      %434 = vmatpush1.msra.mxu0 0.0
      %435 = vmatprep.subr.mxu0 0.0
      %436 = vmatpush1.msra.mxu0 0.0
      %437 = vmatprep.subr.mxu0 0.0
      %438 = vmatpush1.msra.mxu0 0.0
      %439 = vmatprep.subr.mxu0 0.0
      %440 = vmatpush1.msra.mxu0 0.0
      %441 = vmatprep.subr.mxu0 0.0
      %442 = vmatpush1.msra.mxu0 0.0
      %443 = vmatprep.mubr.f32.mxu0 0.0
      %444 = vmatmul.mubr.f32.gmra.mrb[0].mxu0 %v377
      %v445 = vpop.f32.mrb[0].mxu0
      %v446 = vadd.f32 0.0, %v445
      %v447 = vpop.f32.mrb[0].mxu0
      %448 = vdwg.mxu0
      %v449 = vld [vmem:[%s4] sm:$0xff]
      %v450 = vld [vmem:[%s4 + $0x8] sm:$0xff]
      %v451 = vld [vmem:[%s4 + $0x10] sm:$0xff]
      %v452 = vld [vmem:[%s4 + $0x18] sm:$0xff]
      %453 = vmatprep.subr.mxu0 0.0
      %454 = vmatpush1.msra.mxu0 %v449
      %455 = vmatprep.subr.mxu0 0.0
      %456 = vmatpush1.msra.mxu0 %v450
      %457 = vmatprep.subr.mxu0 0.0
      %458 = vmatpush1.msra.mxu0 %v451
      %459 = vmatprep.subr.mxu0 0.0
      %460 = vmatpush1.msra.mxu0 %v452
      %461 = vmatprep.subr.mxu0 0.0
      %462 = vmatpush1.msra.mxu0 0.0
      %463 = vmatprep.subr.mxu0 0.0
      %464 = vmatpush1.msra.mxu0 0.0
      %465 = vmatprep.subr.mxu0 0.0
      %466 = vmatpush1.msra.mxu0 0.0
      %467 = vmatprep.subr.mxu0 0.0
      %468 = vmatpush1.msra.mxu0 0.0
      %469 = vmatprep.subr.mxu0 0.0
      %470 = vmatpush1.msra.mxu0 0.0
      %471 = vmatprep.subr.mxu0 0.0
      %472 = vmatpush1.msra.mxu0 0.0
      %473 = vmatprep.subr.mxu0 0.0
      %474 = vmatpush1.msra.mxu0 0.0
      %475 = vmatprep.subr.mxu0 0.0
      %476 = vmatpush1.msra.mxu0 0.0
      %477 = vmatprep.subr.mxu0 0.0
      %478 = vmatpush1.msra.mxu0 0.0
      %479 = vmatprep.subr.mxu0 0.0
      %480 = vmatpush1.msra.mxu0 0.0
      %481 = vmatprep.subr.mxu0 0.0
      %482 = vmatpush1.msra.mxu0 0.0
      %483 = vmatprep.subr.mxu0 0.0
      %484 = vmatpush1.msra.mxu0 0.0
      %485 = vmatprep.subr.mxu0 0.0
      %486 = vmatpush1.msra.mxu0 0.0
      %487 = vmatprep.subr.mxu0 0.0
      %488 = vmatpush1.msra.mxu0 0.0
      %489 = vmatprep.subr.mxu0 0.0
      %490 = vmatpush1.msra.mxu0 0.0
      %491 = vmatprep.subr.mxu0 0.0
      %492 = vmatpush1.msra.mxu0 0.0
      %493 = vmatprep.subr.mxu0 0.0
      %494 = vmatpush1.msra.mxu0 0.0
      %495 = vmatprep.subr.mxu0 0.0
      %496 = vmatpush1.msra.mxu0 0.0
      %497 = vmatprep.subr.mxu0 0.0
      %498 = vmatpush1.msra.mxu0 0.0
      %499 = vmatprep.subr.mxu0 0.0
      %500 = vmatpush1.msra.mxu0 0.0
      %501 = vmatprep.subr.mxu0 0.0
      %502 = vmatpush1.msra.mxu0 0.0
      %503 = vmatprep.subr.mxu0 0.0
      %504 = vmatpush1.msra.mxu0 0.0
      %505 = vmatprep.subr.mxu0 0.0
      %506 = vmatpush1.msra.mxu0 0.0
      %507 = vmatprep.subr.mxu0 0.0
      %508 = vmatpush1.msra.mxu0 0.0
      %509 = vmatprep.subr.mxu0 0.0
      %510 = vmatpush1.msra.mxu0 0.0
      %511 = vmatprep.subr.mxu0 0.0
      %512 = vmatpush1.msra.mxu0 0.0
      %513 = vmatprep.subr.mxu0 0.0
      %514 = vmatpush1.msra.mxu0 0.0
      %515 = vmatprep.subr.mxu0 0.0
      %516 = vmatpush1.msra.mxu0 0.0
      %517 = vmatprep.mubr.f32.mxu0 0.0
      %518 = vmatmul.mubr.f32.gmra.mrb[0].mxu0 %v377
      %v519 = vpop.f32.mrb[0].mxu0
      %v520 = vadd.f32 0.0, %v519
      %v521 = vpop.f32.mrb[0].mxu0
      %522 = vdwg.mxu0
      %523 = vxpose.xlu0.b32.start [1/16] %v446, 128
      %524 = vxpose.xlu0.b32.cont [2/16] 0.0, 128
      %525 = vxpose.xlu0.b32.cont [3/16] 0.0, 128
      %526 = vxpose.xlu0.b32.cont [4/16] 0.0, 128
      %527 = vxpose.xlu0.b32.cont [5/16] 0.0, 128
      %528 = vxpose.xlu0.b32.cont [6/16] 0.0, 128
      %529 = vxpose.xlu0.b32.cont [7/16] 0.0, 128
      %530 = vxpose.xlu0.b32.cont [8/16] 0.0, 128
      %531 = vxpose.xlu0.b32.cont [9/16] 0.0, 128
      %532 = vxpose.xlu0.b32.cont [10/16] 0.0, 128
      %533 = vxpose.xlu0.b32.cont [11/16] 0.0, 128
      %534 = vxpose.xlu0.b32.cont [12/16] 0.0, 128
      %535 = vxpose.xlu0.b32.cont [13/16] 0.0, 128
      %536 = vxpose.xlu0.b32.cont [14/16] 0.0, 128
      %537 = vxpose.xlu0.b32.cont [15/16] 0.0, 128
      %538 = vxpose.xlu0.b32.end [16/16] 0.0, 128
      %v539 = vpop.trf.xlu0
      %v540 = vpop.trf.xlu0
      %v541 = vpop.trf.xlu0
      %v542 = vpop.trf.xlu0
      %v543 = vpop.trf.xlu0
      %v544 = vpop.trf.xlu0
      %v545 = vpop.trf.xlu0
      %v546 = vpop.trf.xlu0
      %v547 = vpop.trf.xlu0
      %v548 = vpop.trf.xlu0
      %v549 = vpop.trf.xlu0
      %v550 = vpop.trf.xlu0
      %v551 = vpop.trf.xlu0
      %v552 = vpop.trf.xlu0
      %v553 = vpop.trf.xlu0
      %v554 = vpop.trf.xlu0
      %v555 = vpack.c.bf16 %v539, %v539
      %vm556 = vcmask 60416
      %557 = vst.msk [vmem:[%s328] sm:$0xf] %vm556, %v555
      %v558 = vpack.c.bf16 %v520, %v520
      %559 = vst.msk [vmem:[%s339] sm:$0xf] %vm556, %v558
      %p560 = scmp.lt.s32.totalorder %s23, 1
      %s561 = scalar_select %p560, %s23, 1
      %p562 = scmp.lt.s32.totalorder %s25, 0
      %s563 = scalar_select %p562, %s25, 0
      %p564 = scmp.lt.s32.totalorder %s24, 7
      %s565 = scalar_select %p564, %s24, 7
      %s566 = smul.addr %s563, 8
      %s567 = sadd.s32 %s565, %s566
      %s568 = smul.addr %s561, 8
      %s569 = sadd.s32 %s567, %s568
      %s570 = smul.addr %s569, 4
      %s571 = scalar_lea.vmem %s5, %s570
      %p572 = scmp.lt.s32.totalorder %s23, 1
      %s573 = scalar_select %p572, %s23, 1
      %p574 = scmp.lt.s32.totalorder %s24, 7
      %s575 = scalar_select %p574, %s24, 7
      %p576 = scmp.lt.s32.totalorder %s25, 0
      %s577 = scalar_select %p576, %s25, 0
      %s578 = sadd.s32 %s577, %s575
      %s579 = smul.addr %s573, 8
      %s580 = sadd.s32 %s578, %s579
      %s581 = smul.addr %s580, 4
      %s582 = scalar_lea.vmem %s6, %s581
      // Predicated region
      $region41: #{outer_product_mean.2} parent=39 // pred_check
        %p583 = pneg %p173
      $region42: #{outer_product_mean.2} parent=39 // pred_check_branch
        %585 = sbr.rel (%p583) target = $region44
      $region43: #{outer_product_mean.2} parent=39 // pred_region
        _
      $region44: #{outer_product_mean.2} parent=39 // pred_fallthru
        _
      // Predicated region
      $region45: #{outer_product_mean.2} parent=39 // pred_check
        %p586 = pneg %p203
      $region46: #{outer_product_mean.2} parent=39 // pred_check_branch
        %588 = sbr.rel (%p586) target = $region48
      $region47: #{outer_product_mean.2} parent=39 // pred_region
        _
      $region48: #{outer_product_mean.2} parent=39 // pred_fallthru
        _
    $region40: #{outer_product_mean.2} parent=5 // pred_fallthru
      _
    %p589 = scmp.le.s32.totalorder 2, %s13
    // Predicated region
    $region49: #{outer_product_mean.2} parent=5 // pred_check
      %p590 = pneg %p589
    $region50: #{outer_product_mean.2} parent=5 // pred_check_branch
      %592 = sbr.rel (%p590) target = $region52
    $region51: #{outer_product_mean.2} parent=5 // pred_region
      %s593 = ssub.s32 %s13, 2
      // Predicated region
      $region53: #{outer_product_mean.2} parent=51 // pred_check
        %p594 = pneg %p179
      $region54: #{outer_product_mean.2} parent=51 // pred_check_branch
        %596 = sbr.rel (%p594) target = $region56
      $region55: #{outer_product_mean.2} parent=51 // pred_region
        %p597 = scmp.lt.s32.totalorder %s26, 1
        %s598 = scalar_select %p597, %s26, 1
        %p599 = scmp.lt.s32.totalorder %s28, 0
        %s600 = scalar_select %p599, %s28, 0
        %p601 = scmp.lt.s32.totalorder %s27, 7
        %s602 = scalar_select %p601, %s27, 7
        %s603 = smul.addr %s600, 8
        %s604 = sadd.s32 %s602, %s603
        %s605 = smul.addr %s598, 8
        %s606 = sadd.s32 %s604, %s605
        %s607 = smul.addr %s606, 4
        %s608 = scalar_lea.vmem %s5, %s607
      $region56: #{outer_product_mean.2} parent=51 // pred_fallthru
        _
      // Predicated region
      $region57: #{outer_product_mean.2} parent=51 // pred_check
        %p609 = pneg %p209
      $region58: #{outer_product_mean.2} parent=51 // pred_check_branch
        %611 = sbr.rel (%p609) target = $region60
      $region59: #{outer_product_mean.2} parent=51 // pred_region
        %p612 = scmp.lt.s32.totalorder %s26, 1
        %s613 = scalar_select %p612, %s26, 1
        %p614 = scmp.lt.s32.totalorder %s27, 7
        %s615 = scalar_select %p614, %s27, 7
        %p616 = scmp.lt.s32.totalorder %s28, 0
        %s617 = scalar_select %p616, %s28, 0
        %s618 = sadd.s32 %s617, %s615
        %s619 = smul.addr %s613, 8
        %s620 = sadd.s32 %s618, %s619
        %s621 = smul.addr %s620, 4
        %s622 = scalar_lea.vmem %s6, %s621
      $region60: #{outer_product_mean.2} parent=51 // pred_fallthru
        _
    $region52: #{outer_product_mean.2} parent=5 // pred_fallthru
      _
  $region6: #{outer_product_mean.2} parent=0 // loop_footer
    %s17 = sadd.s32 1, %s13
  $region7: #{outer_product_mean.2} parent=0 // loop_footer_branch
    %12 = sbr.rel target = $region3
  $region8: #{outer_product_mean.2} parent=0 // loop_exit
    _

// kernel: outer_product_mean.3
$region0: #{outer_product_mean.3}
  #allocation0 [shape = 'u32[]', space=smem, size = 0x4, offset = 0x4, fixed_abs, tag = 'smem constant byte address 0x4 - core index']
  #allocation1 [shape = 'u32[144,128]{1,0:T(1,128)}', space=vmem, size = 0x12000, scoped, tag = 'internal scratch']
  #allocation2 [shape = 'f32[64,64]{1,0:T(8,128)}', space=vmem, size = 0x8000, scoped, tag = 'scratch operand']
  %s0 = inlined_call_operand.vmem [shape: bf16[2,1,8,64], index: 0, kind: input, shape index: {}]
  %s1 = inlined_call_operand.vmem [shape: bf16[2,8,64], index: 1, kind: input, shape index: {}]
  %s2 = inlined_call_operand.vmem [shape: f32[8,8,32], index: 2, kind: input, shape index: {}]
  %s3 = inlined_call_operand.vmem [shape: f32[1,32], index: 3, kind: input, shape index: {}]
  %s4 = inlined_call_operand.hbm [shape: f32[2,8,8,32], index: 4, kind: output, shape index: {}]
  %s5 = sld [smem:[#allocation0]]
  $region57: #{outer_product_mean.3} parent=0
    _
  %s7 = ssub.s32 1, %s5
  %s8 = scalar_select 0, %s7, %s5
  $region1: #{outer_product_mean.3} parent=0
    #allocation3 [shape = 'u8[65536]{0}', space=vmem, size = 0x10000, scoped, tag = 'output window, operand 0']
    #allocation4 [shape = 's32[2]{0}', space=sflag, size = 0x8, scoped, tag = 'scoped memory for outer_product_mean.3']
    %9 = vsyncpa [#allocation4], 0
    %s10 = scalar_lea.sflag [#allocation4], 1
    %11 = vsyncpa %s10, 0
    loop: start=0, step=1, limit=4
    $region2: #{outer_product_mean.3} parent=1 // loop_pre_header
      _
    $region3: #{outer_product_mean.3} parent=1 // loop_header
      %s13 = sphi 0, %s17
      %p14 = scmp.ge.s32.totalorder %s13, 4
      %s20 = sphi 0, %s46
      %s21 = sphi 0, %s42
      %s22 = sphi 0, %s38
      %s23 = sphi 0, %s34
      %s24 = sphi 0, %s20
      %s25 = sphi 0, %s21
      %s26 = sphi 0, %s22
      %s27 = sphi 0, %s23
      %s28 = sphi 0, %s24
      %s29 = sphi 0, %s25
      %s30 = sphi 0, %s26
      %s31 = sphi 0, %s27
      %s53 = sphi 0, %s55
      %s56 = sphi 0, %s53
      %s57 = sphi 0, %s56
      %s73 = sphi 0, %s57
      %s83 = sphi 0, %s85
      %s86 = sphi 0, %s83
      %s87 = sphi 0, %s86
      %s103 = sphi 0, %s87
      %s107 = sphi 0, %s107
      %s109 = sphi 0, %s107
      %s110 = sphi 0, %s109
      %s124 = sphi 0, %s110
      %s128 = sphi 0, %s128
      %s130 = sphi 0, %s128
      %s131 = sphi 0, %s130
      %s145 = sphi 0, %s131
      %s155 = sphi 0, %s157
      %s158 = sphi 0, %s155
      %s159 = sphi 0, %s158
      %s175 = sphi 0, %s159
    $region4: #{outer_product_mean.3} parent=1 // loop_header_branch
      %16 = sbr.rel (%p14) target = $region8
    $region5: #{outer_product_mean.3} parent=1 // loop_body
      %s18 = ssub.s32 %s13, 1
      %s19 = ssub.s32 %s13, 2
      %s32 = sadd.s32 1, %s23
      %p33 = scmp.ge.s32.totalorder %s32, 1
      %s34 = scalar_select %p33, 0, %s32
      %s35 = sadd.s32 1, %s22
      %s36 = scalar_select %p33, %s35, %s22
      %p37 = scmp.ge.s32.totalorder %s36, 1
      %s38 = scalar_select %p37, 0, %s36
      %s39 = sadd.s32 1, %s21
      %s40 = scalar_select %p37, %s39, %s21
      %p41 = scmp.ge.s32.totalorder %s40, 1
      %s42 = scalar_select %p41, 0, %s40
      %s43 = sadd.s32 1, %s20
      %s44 = scalar_select %p41, %s43, %s20
      %p45 = scmp.ge.s32.totalorder %s44, 2
      %s46 = scalar_select %p45, 0, %s44
      %s47 = ssub.s32 %s20, %s46
      %s48 = ssub.s32 %s21, %s42
      %s49 = sor.u32 %s47, %s48
      %s50 = ssub.s32 %s23, %s34
      %s51 = sor.u32 %s49, %s50
      %p52 = scmp.eq.s32.totalorder %s51, 0
      %s54 = sadd.s32 %s53, 1
      %s55 = scalar_select %p52, %s53, %s54
      %p58 = pneg %p52
      %p59 = scmp.eq.s32.totalorder %s13, 1
      %p60 = por %p58, %p59
      %p61 = scmp.ne.s32.totalorder %s53, %s56
      %p62 = scmp.eq.s32.totalorder %s13, 0
      %p63 = por %p61, %p62
      %p64 = scmp.ne.s32.totalorder %s53, %s56
      %p65 = scmp.eq.s32.totalorder %s18, 1
      %p66 = por %p64, %p65
      %p67 = scmp.ne.s32.totalorder %s56, %s57
      %p68 = scmp.eq.s32.totalorder %s18, 0
      %p69 = por %p67, %p68
      %p70 = scmp.ne.s32.totalorder %s56, %s57
      %p71 = scmp.eq.s32.totalorder %s19, 1
      %p72 = por %p70, %p71
      %p74 = scmp.ne.s32.totalorder %s57, %s73
      %p75 = scmp.eq.s32.totalorder %s19, 0
      %p76 = por %p74, %p75
      %s77 = ssub.s32 %s20, %s46
      %s78 = ssub.s32 %s23, %s34
      %s79 = sor.u32 %s77, %s78
      %s80 = ssub.s32 %s22, %s38
      %s81 = sor.u32 %s79, %s80
      %p82 = scmp.eq.s32.totalorder %s81, 0
      %s84 = sadd.s32 %s83, 1
      %s85 = scalar_select %p82, %s83, %s84
      %p88 = pneg %p82
      %p89 = scmp.eq.s32.totalorder %s13, 1
      %p90 = por %p88, %p89
      %p91 = scmp.ne.s32.totalorder %s83, %s86
      %p92 = scmp.eq.s32.totalorder %s13, 0
      %p93 = por %p91, %p92
      %p94 = scmp.ne.s32.totalorder %s83, %s86
      %p95 = scmp.eq.s32.totalorder %s18, 1
      %p96 = por %p94, %p95
      %p97 = scmp.ne.s32.totalorder %s86, %s87
      %p98 = scmp.eq.s32.totalorder %s18, 0
      %p99 = por %p97, %p98
      %p100 = scmp.ne.s32.totalorder %s86, %s87
      %p101 = scmp.eq.s32.totalorder %s19, 1
      %p102 = por %p100, %p101
      %p104 = scmp.ne.s32.totalorder %s87, %s103
      %p105 = scmp.eq.s32.totalorder %s19, 0
      %p106 = por %p104, %p105
      %s108 = sadd.s32 %s107, 1
      %p111 = scmp.eq.s32.totalorder %s13, 1
      %p112 = scmp.ne.s32.totalorder %s107, %s109
      %p113 = scmp.eq.s32.totalorder %s13, 0
      %p114 = por %p112, %p113
      %p115 = scmp.ne.s32.totalorder %s107, %s109
      %p116 = scmp.eq.s32.totalorder %s18, 1
      %p117 = por %p115, %p116
      %p118 = scmp.ne.s32.totalorder %s109, %s110
      %p119 = scmp.eq.s32.totalorder %s18, 0
      %p120 = por %p118, %p119
      %p121 = scmp.ne.s32.totalorder %s109, %s110
      %p122 = scmp.eq.s32.totalorder %s19, 1
      %p123 = por %p121, %p122
      %p125 = scmp.ne.s32.totalorder %s110, %s124
      %p126 = scmp.eq.s32.totalorder %s19, 0
      %p127 = por %p125, %p126
      %s129 = sadd.s32 %s128, 1
      %p132 = scmp.eq.s32.totalorder %s13, 1
      %p133 = scmp.ne.s32.totalorder %s128, %s130
      %p134 = scmp.eq.s32.totalorder %s13, 0
      %p135 = por %p133, %p134
      %p136 = scmp.ne.s32.totalorder %s128, %s130
      %p137 = scmp.eq.s32.totalorder %s18, 1
      %p138 = por %p136, %p137
      %p139 = scmp.ne.s32.totalorder %s130, %s131
      %p140 = scmp.eq.s32.totalorder %s18, 0
      %p141 = por %p139, %p140
      %p142 = scmp.ne.s32.totalorder %s130, %s131
      %p143 = scmp.eq.s32.totalorder %s19, 1
      %p144 = por %p142, %p143
      %p146 = scmp.ne.s32.totalorder %s131, %s145
      %p147 = scmp.eq.s32.totalorder %s19, 0
      %p148 = por %p146, %p147
      %s149 = ssub.s32 %s20, %s46
      %s150 = ssub.s32 %s21, %s42
      %s151 = sor.u32 %s149, %s150
      %s152 = ssub.s32 %s22, %s38
      %s153 = sor.u32 %s151, %s152
      %p154 = scmp.eq.s32.totalorder %s153, 0
      %s156 = sadd.s32 %s155, 1
      %s157 = scalar_select %p154, %s155, %s156
      %p160 = pneg %p154
      %p161 = scmp.eq.s32.totalorder %s13, 1
      %p162 = por %p160, %p161
      %p163 = scmp.ne.s32.totalorder %s155, %s158
      %p164 = scmp.eq.s32.totalorder %s13, 0
      %p165 = por %p163, %p164
      %p166 = scmp.ne.s32.totalorder %s155, %s158
      %p167 = scmp.eq.s32.totalorder %s18, 1
      %p168 = por %p166, %p167
      %p169 = scmp.ne.s32.totalorder %s158, %s159
      %p170 = scmp.eq.s32.totalorder %s18, 0
      %p171 = por %p169, %p170
      %p172 = scmp.ne.s32.totalorder %s158, %s159
      %p173 = scmp.eq.s32.totalorder %s19, 1
      %p174 = por %p172, %p173
      %p176 = scmp.ne.s32.totalorder %s159, %s175
      %p177 = scmp.eq.s32.totalorder %s19, 0
      %p178 = por %p176, %p177
      %p179 = scmp.le.s32.totalorder 1, %s13
      %p180 = scmp.lt.s32.totalorder %s13, 3
      %p181 = pnand %p179, %p180
      %p182 = pneg %p181
      // Predicated region
      $region9: #{outer_product_mean.3} parent=5 // pred_check
        _
      $region10: #{outer_product_mean.3} parent=5 // pred_check_branch
        %184 = sbr.rel (%p181) target = $region12
      $region11: #{outer_product_mean.3} parent=5 // pred_region
        %s185 = ssub.s32 %s13, 1
        // Predicated region
        $region13: #{outer_product_mean.3} parent=11 // pred_check
          %p186 = pneg %p120
        $region14: #{outer_product_mean.3} parent=11 // pred_check_branch
          %188 = sbr.rel (%p186) target = $region16
        $region15: #{outer_product_mean.3} parent=11 // pred_region
          _
        $region16: #{outer_product_mean.3} parent=11 // pred_fallthru
          _
        // Predicated region
        $region17: #{outer_product_mean.3} parent=11 // pred_check
          %p189 = pneg %p141
        $region18: #{outer_product_mean.3} parent=11 // pred_check_branch
          %191 = sbr.rel (%p189) target = $region20
        $region19: #{outer_product_mean.3} parent=11 // pred_region
          _
        $region20: #{outer_product_mean.3} parent=11 // pred_fallthru
          _
      $region12: #{outer_product_mean.3} parent=5 // pred_fallthru
        _
      %p192 = scmp.lt.s32.totalorder %s13, 2
      // Predicated region
      $region21: #{outer_product_mean.3} parent=5 // pred_check
        %p193 = pneg %p192
      $region22: #{outer_product_mean.3} parent=5 // pred_check_branch
        %195 = sbr.rel (%p193) target = $region24
      $region23: #{outer_product_mean.3} parent=5 // pred_region
        // Predicated region
        $region25: #{outer_product_mean.3} parent=23 // pred_check
          %p196 = pneg %p63
        $region26: #{outer_product_mean.3} parent=23 // pred_check_branch
          %198 = sbr.rel (%p196) target = $region28
        $region27: #{outer_product_mean.3} parent=23 // pred_region
          %p199 = scmp.lt.s32.totalorder %s20, 1
          %s200 = scalar_select %p199, %s20, 1
          %p201 = scmp.lt.s32.totalorder %s21, 0
          %s202 = scalar_select %p201, %s21, 0
          %p203 = scmp.lt.s32.totalorder %s23, 0
          %s204 = scalar_select %p203, %s23, 0
          %s205 = sadd.s32 %s204, %s202
          %s206 = sadd.s32 %s205, %s200
          %s207 = smul.addr %s206, 4
          %s208 = scalar_lea.vmem %s0, %s207
        $region28: #{outer_product_mean.3} parent=23 // pred_fallthru
          _
        // Predicated region
        $region29: #{outer_product_mean.3} parent=23 // pred_check
          %p209 = pneg %p93
        $region30: #{outer_product_mean.3} parent=23 // pred_check_branch
          %211 = sbr.rel (%p209) target = $region32
        $region31: #{outer_product_mean.3} parent=23 // pred_region
          %p212 = scmp.lt.s32.totalorder %s20, 1
          %s213 = scalar_select %p212, %s20, 1
          %p214 = scmp.lt.s32.totalorder %s23, 0
          %s215 = scalar_select %p214, %s23, 0
          %p216 = scmp.lt.s32.totalorder %s22, 0
          %s217 = scalar_select %p216, %s22, 0
          %s218 = sadd.s32 %s217, %s215
          %s219 = sadd.s32 %s218, %s213
          %s220 = smul.addr %s219, 4
          %s221 = scalar_lea.vmem %s1, %s220
        $region32: #{outer_product_mean.3} parent=23 // pred_fallthru
          _
      $region24: #{outer_product_mean.3} parent=5 // pred_fallthru
        _
      %p222 = scmp.le.s32.totalorder 1, %s13
      %p223 = scmp.lt.s32.totalorder %s13, 3
      %p224 = pnand %p222, %p223
      %p225 = pneg %p224
      // Predicated region
      $region33: #{outer_product_mean.3} parent=5 // pred_check
        _
      $region34: #{outer_product_mean.3} parent=5 // pred_check_branch
        %227 = sbr.rel (%p224) target = $region36
      $region35: #{outer_product_mean.3} parent=5 // pred_region
        %s228 = ssub.s32 %s13, 1
        %p229 = scmp.lt.s32.totalorder %s24, 1
        %s230 = scalar_select %p229, %s24, 1
        %p231 = scmp.lt.s32.totalorder %s25, 0
        %s232 = scalar_select %p231, %s25, 0
        %p233 = scmp.lt.s32.totalorder %s27, 0
        %s234 = scalar_select %p233, %s27, 0
        %s235 = sadd.s32 %s234, %s232
        %s236 = sadd.s32 %s235, %s230
        %s237 = smul.addr %s236, 4
        %s238 = scalar_lea.vmem %s0, %s237
        %p239 = pneg %p69
        %p240 = pneg %p66
        %p241 = scmp.lt.s32.totalorder %s24, 1
        %s242 = scalar_select %p241, %s24, 1
        %p243 = scmp.lt.s32.totalorder %s27, 0
        %s244 = scalar_select %p243, %s27, 0
        %p245 = scmp.lt.s32.totalorder %s26, 0
        %s246 = scalar_select %p245, %s26, 0
        %s247 = sadd.s32 %s246, %s244
        %s248 = sadd.s32 %s247, %s242
        %s249 = smul.addr %s248, 4
        %s250 = scalar_lea.vmem %s1, %s249
        %p251 = pneg %p99
        %p252 = pneg %p96
        %p253 = pneg %p120
        %p254 = pneg %p117
        %p255 = pneg %p141
        %p256 = pneg %p138
        %p257 = pneg %p171
        %p258 = pneg %p168
        %s259 = sand.u32 %s158, 1
        %s260 = scalar_lea.sflag [#allocation4], %s259
        %s261 = sand.u32 %s158, 1
        %s262 = smul.addr %s261, 64
        %s263 = scalar_lea.vmem [#allocation3], %s262
        %p264 = scmp.lt.s32.totalorder %s24, 1
        %s265 = scalar_select %p264, %s24, 1
        %p266 = scmp.lt.s32.totalorder %s25, 0
        %s267 = scalar_select %p266, %s25, 0
        %p268 = scmp.lt.s32.totalorder %s27, 0
        %s269 = scalar_select %p268, %s27, 0
        %s270 = sadd.s32 %s269, %s267
        %s271 = sadd.s32 %s270, %s265
        %s272 = smul.addr %s271, 4
        %s273 = scalar_lea.vmem %s0, %s272
        %p274 = scmp.lt.s32.totalorder %s24, 1
        %s275 = scalar_select %p274, %s24, 1
        %p276 = scmp.lt.s32.totalorder %s27, 0
        %s277 = scalar_select %p276, %s27, 0
        %p278 = scmp.lt.s32.totalorder %s26, 0
        %s279 = scalar_select %p278, %s26, 0
        %s280 = sadd.s32 %s279, %s277
        %s281 = sadd.s32 %s280, %s275
        %s282 = smul.addr %s281, 4
        %s283 = scalar_lea.vmem %s1, %s282
        %s284 = smul.u32 8, %s25
        %p286 = scmp.eq.s32.totalorder %s27, 0
        // Predicated region
        $region37: #{outer_product_mean.3} parent=35 // pred_check
          %p287 = pneg %p286
        $region38: #{outer_product_mean.3} parent=35 // pred_check_branch
          %289 = sbr.rel (%p287) target = $region40
        $region39: #{outer_product_mean.3} parent=35 // pred_region
          %vm290 = vcmask 523264
          %291 = vst.msk [vmem:[#allocation2] sm:$0xff] %vm290, 0.0
          %292 = vst.msk [vmem:[#allocation2 + $0x8] sm:$0xff] %vm290, 0.0
          %293 = vst.msk [vmem:[#allocation2 + $0x10] sm:$0xff] %vm290, 0.0
          %294 = vst.msk [vmem:[#allocation2 + $0x18] sm:$0xff] %vm290, 0.0
          %295 = vst.msk [vmem:[#allocation2 + $0x20] sm:$0xff] %vm290, 0.0
          %296 = vst.msk [vmem:[#allocation2 + $0x28] sm:$0xff] %vm290, 0.0
          %297 = vst.msk [vmem:[#allocation2 + $0x30] sm:$0xff] %vm290, 0.0
          %298 = vst.msk [vmem:[#allocation2 + $0x38] sm:$0xff] %vm290, 0.0
        $region40: #{outer_product_mean.3} parent=35 // pred_fallthru
          _
        %v299 = vld [vmem:[%s273] sm:$0xf]
        %v300 = vld [vmem:[%s283] sm:$0xf]
        %v301 = vld [vmem:[#allocation2] sm:$0xff]
        %v302 = vld [vmem:[#allocation2 + $0x8] sm:$0xff]
        %v303 = vld [vmem:[#allocation2 + $0x10] sm:$0xff]
        %v304 = vld [vmem:[#allocation2 + $0x18] sm:$0xff]
        %v305 = vld [vmem:[#allocation2 + $0x20] sm:$0xff]
        %v306 = vld [vmem:[#allocation2 + $0x28] sm:$0xff]
        %v307 = vld [vmem:[#allocation2 + $0x30] sm:$0xff]
        %v308 = vld [vmem:[#allocation2 + $0x38] sm:$0xff]
        %309 = vxpose.xlu0.c.b16.start [1/8] %v299, 128
        %310 = vxpose.xlu0.c.b16.cont [2/8] 0, 128
        %311 = vxpose.xlu0.c.b16.cont [3/8] 0, 128
        %312 = vxpose.xlu0.c.b16.cont [4/8] 0, 128
        %313 = vxpose.xlu0.c.b16.cont [5/8] 0, 128
        %314 = vxpose.xlu0.c.b16.cont [6/8] 0, 128
        %315 = vxpose.xlu0.c.b16.cont [7/8] 0, 128
        %316 = vxpose.xlu0.c.b16.end [8/8] 0, 128
        %v317 = vpop.trf.xlu0
        %v318 = vpop.trf.xlu0
        %v319 = vpop.trf.xlu0
        %v320 = vpop.trf.xlu0
        %v321 = vpop.trf.xlu0
        %v322 = vpop.trf.xlu0
        %v323 = vpop.trf.xlu0
        %v324 = vpop.trf.xlu0
        %vm325 = vcmask 64512
        %v327 = vsel %vm325, %v317, 0
        %v330 = vsel %vm325, %v318, 0
        %v333 = vsel %vm325, %v319, 0
        %v336 = vsel %vm325, %v320, 0
        %vm338 = vcmask 1043456
        %v340 = vsel %vm338, %v300, 0
        %342 = vmatprep.subr.bf16.mxu0 0
        %343 = vmatpush1.bf16.msra.mxu0 %v340
        %344 = vmatprep.subr.bf16.mxu0 0
        %345 = vmatpush1.bf16.msra.mxu0 0
        %346 = vmatprep.subr.bf16.mxu0 0
        %347 = vmatpush1.bf16.msra.mxu0 0
        %348 = vmatprep.subr.bf16.mxu0 0
        %349 = vmatpush1.bf16.msra.mxu0 0
        %350 = vmatprep.subr.bf16.mxu0 0
        %351 = vmatpush1.bf16.msra.mxu0 0
        %352 = vmatprep.subr.bf16.mxu0 0
        %353 = vmatpush1.bf16.msra.mxu0 0
        %354 = vmatprep.subr.bf16.mxu0 0
        %355 = vmatpush1.bf16.msra.mxu0 0
        %356 = vmatprep.subr.bf16.mxu0 0
        %357 = vmatpush1.bf16.msra.mxu0 0
        %358 = vmatprep.subr.bf16.mxu0 0
        %359 = vmatpush1.bf16.msra.mxu0 0
        %360 = vmatprep.subr.bf16.mxu0 0
        %361 = vmatpush1.bf16.msra.mxu0 0
        %362 = vmatprep.subr.bf16.mxu0 0
        %363 = vmatpush1.bf16.msra.mxu0 0
        %364 = vmatprep.subr.bf16.mxu0 0
        %365 = vmatpush1.bf16.msra.mxu0 0
        %366 = vmatprep.subr.bf16.mxu0 0
        %367 = vmatpush1.bf16.msra.mxu0 0
        %368 = vmatprep.subr.bf16.mxu0 0
        %369 = vmatpush1.bf16.msra.mxu0 0
        %370 = vmatprep.subr.bf16.mxu0 0
        %371 = vmatpush1.bf16.msra.mxu0 0
        %372 = vmatprep.subr.bf16.mxu0 0
        %373 = vmatpush1.bf16.msra.mxu0 0
        %374 = vmatprep.mubr.bf16.mxu0 0
        %375 = vmatmul.mubr.bf16.gmra.mrb[0].mxu0 %v327
        %v376 = vpop.f32.mrb[0].mxu0
        %v377 = vadd.f32 0.0, %v376
        %v378 = vpop.f32.mrb[0].mxu0
        %v379 = vpop.f32.mrb[0].mxu0
        %v380 = vadd.f32 0.0, %v379
        %v381 = vpop.f32.mrb[0].mxu0
        %382 = vmatprep.mubr.bf16.mxu0 0
        %383 = vmatmul.mubr.bf16.gmra.mrb[0].mxu0 %v330
        %v384 = vpop.f32.mrb[0].mxu0
        %v385 = vadd.f32 0.0, %v384
        %v386 = vpop.f32.mrb[0].mxu0
        %v387 = vpop.f32.mrb[0].mxu0
        %v388 = vadd.f32 0.0, %v387
        %v389 = vpop.f32.mrb[0].mxu0
        %390 = vmatprep.mubr.bf16.mxu0 0
        %391 = vmatmul.mubr.bf16.gmra.mrb[0].mxu0 %v333
        %v392 = vpop.f32.mrb[0].mxu0
        %v393 = vadd.f32 0.0, %v392
        %v394 = vpop.f32.mrb[0].mxu0
        %v395 = vpop.f32.mrb[0].mxu0
        %v396 = vadd.f32 0.0, %v395
        %v397 = vpop.f32.mrb[0].mxu0
        %398 = vmatprep.mubr.bf16.mxu0 0
        %399 = vmatmul.mubr.bf16.gmra.mrb[0].mxu0 %v336
        %v400 = vpop.f32.mrb[0].mxu0
        %v401 = vadd.f32 0.0, %v400
        %v402 = vpop.f32.mrb[0].mxu0
        %v403 = vpop.f32.mrb[0].mxu0
        %v404 = vadd.f32 0.0, %v403
        %v405 = vpop.f32.mrb[0].mxu0
        %406 = vdwg.mxu0
        %v407 = vadd.f32 %v301, %v377
        %v408 = vadd.f32 %v302, %v380
        %v409 = vadd.f32 %v303, %v385
        %v410 = vadd.f32 %v304, %v388
        %v411 = vadd.f32 %v305, %v393
        %v412 = vadd.f32 %v306, %v396
        %v413 = vadd.f32 %v307, %v401
        %v414 = vadd.f32 %v308, %v404
        %vm415 = vcmask 523264
        %416 = vst.msk [vmem:[#allocation2] sm:$0xff] %vm415, %v407
        %417 = vst.msk [vmem:[#allocation2 + $0x8] sm:$0xff] %vm415, %v408
        %418 = vst.msk [vmem:[#allocation2 + $0x10] sm:$0xff] %vm415, %v409
        %419 = vst.msk [vmem:[#allocation2 + $0x18] sm:$0xff] %vm415, %v410
        %420 = vst.msk [vmem:[#allocation2 + $0x20] sm:$0xff] %vm415, %v411
        %421 = vst.msk [vmem:[#allocation2 + $0x28] sm:$0xff] %vm415, %v412
        %422 = vst.msk [vmem:[#allocation2 + $0x30] sm:$0xff] %vm415, %v413
        %423 = vst.msk [vmem:[#allocation2 + $0x38] sm:$0xff] %vm415, %v414
        // Predicated region
        $region41: #{outer_product_mean.3} parent=35 // pred_check
          %p424 = pneg %p286
        $region42: #{outer_product_mean.3} parent=35 // pred_check_branch
          %426 = sbr.rel (%p424) target = $region44
        $region43: #{outer_product_mean.3} parent=35 // pred_region
          %v427 = vld [vmem:[%s3] sm:$0x1]
          %v428 = vld [vmem:[#allocation2] sm:$0xff]
          %v429 = vld [vmem:[%s2] sm:$0xff]
          %v430 = vld [vmem:[#allocation2 + $0x8] sm:$0xff]
          %s431 = scalar_lea.vmem %s2, 8
          %v432 = vld [vmem:[%s431] sm:$0xff]
          %v434 = vsel %vm325, %v430, 0
          %436 = vmatprep.subr.mxu0 0.0
          %437 = vmatpush1.msra.mxu0 %v432
          %438 = vmatprep.subr.mxu0 0.0
          %439 = vmatpush1.msra.mxu0 0.0
          %440 = vmatprep.subr.mxu0 0.0
          %441 = vmatpush1.msra.mxu0 0.0
          %442 = vmatprep.subr.mxu0 0.0
          %443 = vmatpush1.msra.mxu0 0.0
          %444 = vmatprep.subr.mxu0 0.0
          %445 = vmatpush1.msra.mxu0 0.0
          %446 = vmatprep.subr.mxu0 0.0
          %447 = vmatpush1.msra.mxu0 0.0
          %448 = vmatprep.subr.mxu0 0.0
          %449 = vmatpush1.msra.mxu0 0.0
          %450 = vmatprep.subr.mxu0 0.0
          %451 = vmatpush1.msra.mxu0 0.0
          %452 = vmatprep.subr.mxu0 0.0
          %453 = vmatpush1.msra.mxu0 0.0
          %454 = vmatprep.subr.mxu0 0.0
          %455 = vmatpush1.msra.mxu0 0.0
          %456 = vmatprep.subr.mxu0 0.0
          %457 = vmatpush1.msra.mxu0 0.0
          %458 = vmatprep.subr.mxu0 0.0
          %459 = vmatpush1.msra.mxu0 0.0
          %460 = vmatprep.subr.mxu0 0.0
          %461 = vmatpush1.msra.mxu0 0.0
          %462 = vmatprep.subr.mxu0 0.0
          %463 = vmatpush1.msra.mxu0 0.0
          %464 = vmatprep.subr.mxu0 0.0
          %465 = vmatpush1.msra.mxu0 0.0
          %466 = vmatprep.subr.mxu0 0.0
          %467 = vmatpush1.msra.mxu0 0.0
          %468 = vmatprep.subr.mxu0 0.0
          %469 = vmatpush1.msra.mxu0 0.0
          %470 = vmatprep.subr.mxu0 0.0
          %471 = vmatpush1.msra.mxu0 0.0
          %472 = vmatprep.subr.mxu0 0.0
          %473 = vmatpush1.msra.mxu0 0.0
          %474 = vmatprep.subr.mxu0 0.0
          %475 = vmatpush1.msra.mxu0 0.0
          %476 = vmatprep.subr.mxu0 0.0
          %477 = vmatpush1.msra.mxu0 0.0
          %478 = vmatprep.subr.mxu0 0.0
          %479 = vmatpush1.msra.mxu0 0.0
          %480 = vmatprep.subr.mxu0 0.0
          %481 = vmatpush1.msra.mxu0 0.0
          %482 = vmatprep.subr.mxu0 0.0
          %483 = vmatpush1.msra.mxu0 0.0
          %484 = vmatprep.subr.mxu0 0.0
          %485 = vmatpush1.msra.mxu0 0.0
          %486 = vmatprep.subr.mxu0 0.0
          %487 = vmatpush1.msra.mxu0 0.0
          %488 = vmatprep.subr.mxu0 0.0
          %489 = vmatpush1.msra.mxu0 0.0
          %490 = vmatprep.subr.mxu0 0.0
          %491 = vmatpush1.msra.mxu0 0.0
          %492 = vmatprep.subr.mxu0 0.0
          %493 = vmatpush1.msra.mxu0 0.0
          %494 = vmatprep.subr.mxu0 0.0
          %495 = vmatpush1.msra.mxu0 0.0
          %496 = vmatprep.subr.mxu0 0.0
          %497 = vmatpush1.msra.mxu0 0.0
          %498 = vmatprep.subr.mxu0 0.0
          %499 = vmatpush1.msra.mxu0 0.0
          %500 = vmatprep.mubr.f32.mxu0 0.0
          %501 = vmatmul.mubr.f32.gmra.mrb[0].mxu0 %v434
          %v502 = vpop.f32.mrb[0].mxu0
          %v503 = vadd.f32 0.0, %v502
          %v504 = vpop.f32.mrb[0].mxu0
          %505 = vdwg.mxu0
          %v507 = vsel %vm325, %v428, 0
          %509 = vmatprep.subr.mxu0 0.0
          %510 = vmatpush1.msra.mxu0 %v429
          %511 = vmatprep.subr.mxu0 0.0
          %512 = vmatpush1.msra.mxu0 0.0
          %513 = vmatprep.subr.mxu0 0.0
          %514 = vmatpush1.msra.mxu0 0.0
          %515 = vmatprep.subr.mxu0 0.0
          %516 = vmatpush1.msra.mxu0 0.0
          %517 = vmatprep.subr.mxu0 0.0
          %518 = vmatpush1.msra.mxu0 0.0
          %519 = vmatprep.subr.mxu0 0.0
          %520 = vmatpush1.msra.mxu0 0.0
          %521 = vmatprep.subr.mxu0 0.0
          %522 = vmatpush1.msra.mxu0 0.0
          %523 = vmatprep.subr.mxu0 0.0
          %524 = vmatpush1.msra.mxu0 0.0
          %525 = vmatprep.subr.mxu0 0.0
          %526 = vmatpush1.msra.mxu0 0.0
          %527 = vmatprep.subr.mxu0 0.0
          %528 = vmatpush1.msra.mxu0 0.0
          %529 = vmatprep.subr.mxu0 0.0
          %530 = vmatpush1.msra.mxu0 0.0
          %531 = vmatprep.subr.mxu0 0.0
          %532 = vmatpush1.msra.mxu0 0.0
          %533 = vmatprep.subr.mxu0 0.0
          %534 = vmatpush1.msra.mxu0 0.0
          %535 = vmatprep.subr.mxu0 0.0
          %536 = vmatpush1.msra.mxu0 0.0
          %537 = vmatprep.subr.mxu0 0.0
          %538 = vmatpush1.msra.mxu0 0.0
          %539 = vmatprep.subr.mxu0 0.0
          %540 = vmatpush1.msra.mxu0 0.0
          %541 = vmatprep.subr.mxu0 0.0
          %542 = vmatpush1.msra.mxu0 0.0
          %543 = vmatprep.subr.mxu0 0.0
          %544 = vmatpush1.msra.mxu0 0.0
          %545 = vmatprep.subr.mxu0 0.0
          %546 = vmatpush1.msra.mxu0 0.0
          %547 = vmatprep.subr.mxu0 0.0
          %548 = vmatpush1.msra.mxu0 0.0
          %549 = vmatprep.subr.mxu0 0.0
          %550 = vmatpush1.msra.mxu0 0.0
          %551 = vmatprep.subr.mxu0 0.0
          %552 = vmatpush1.msra.mxu0 0.0
          %553 = vmatprep.subr.mxu0 0.0
          %554 = vmatpush1.msra.mxu0 0.0
          %555 = vmatprep.subr.mxu0 0.0
          %556 = vmatpush1.msra.mxu0 0.0
          %557 = vmatprep.subr.mxu0 0.0
          %558 = vmatpush1.msra.mxu0 0.0
          %559 = vmatprep.subr.mxu0 0.0
          %560 = vmatpush1.msra.mxu0 0.0
          %561 = vmatprep.subr.mxu0 0.0
          %562 = vmatpush1.msra.mxu0 0.0
          %563 = vmatprep.subr.mxu0 0.0
          %564 = vmatpush1.msra.mxu0 0.0
          %565 = vmatprep.subr.mxu0 0.0
          %566 = vmatpush1.msra.mxu0 0.0
          %567 = vmatprep.subr.mxu0 0.0
          %568 = vmatpush1.msra.mxu0 0.0
          %569 = vmatprep.subr.mxu0 0.0
          %570 = vmatpush1.msra.mxu0 0.0
          %571 = vmatprep.subr.mxu0 0.0
          %572 = vmatpush1.msra.mxu0 0.0
          %573 = vmatprep.mubr.f32.mxu0 0.0
          %574 = vmatmul.mubr.f32.gmra.mrb[0].mxu0 %v507
          %v575 = vpop.f32.mrb[0].mxu0
          %v576 = vadd.f32 %v503, %v575
          %v577 = vpop.f32.mrb[0].mxu0
          %578 = vdwg.mxu0
          %v579 = vld [vmem:[#allocation2 + $0x10] sm:$0xff]
          %s580 = scalar_lea.vmem %s2, 16
          %v581 = vld [vmem:[%s580] sm:$0xff]
          %v583 = vsel %vm325, %v579, 0
          %585 = vmatprep.subr.mxu0 0.0
          %586 = vmatpush1.msra.mxu0 %v581
          %587 = vmatprep.subr.mxu0 0.0
          %588 = vmatpush1.msra.mxu0 0.0
          %589 = vmatprep.subr.mxu0 0.0
          %590 = vmatpush1.msra.mxu0 0.0
          %591 = vmatprep.subr.mxu0 0.0
          %592 = vmatpush1.msra.mxu0 0.0
          %593 = vmatprep.subr.mxu0 0.0
          %594 = vmatpush1.msra.mxu0 0.0
          %595 = vmatprep.subr.mxu0 0.0
          %596 = vmatpush1.msra.mxu0 0.0
          %597 = vmatprep.subr.mxu0 0.0
          %598 = vmatpush1.msra.mxu0 0.0
          %599 = vmatprep.subr.mxu0 0.0
          %600 = vmatpush1.msra.mxu0 0.0
          %601 = vmatprep.subr.mxu0 0.0
          %602 = vmatpush1.msra.mxu0 0.0
          %603 = vmatprep.subr.mxu0 0.0
          %604 = vmatpush1.msra.mxu0 0.0
          %605 = vmatprep.subr.mxu0 0.0
          %606 = vmatpush1.msra.mxu0 0.0
          %607 = vmatprep.subr.mxu0 0.0
          %608 = vmatpush1.msra.mxu0 0.0
          %609 = vmatprep.subr.mxu0 0.0
          %610 = vmatpush1.msra.mxu0 0.0
          %611 = vmatprep.subr.mxu0 0.0
          %612 = vmatpush1.msra.mxu0 0.0
          %613 = vmatprep.subr.mxu0 0.0
          %614 = vmatpush1.msra.mxu0 0.0
          %615 = vmatprep.subr.mxu0 0.0
          %616 = vmatpush1.msra.mxu0 0.0
          %617 = vmatprep.subr.mxu0 0.0
          %618 = vmatpush1.msra.mxu0 0.0
          %619 = vmatprep.subr.mxu0 0.0
          %620 = vmatpush1.msra.mxu0 0.0
          %621 = vmatprep.subr.mxu0 0.0
          %622 = vmatpush1.msra.mxu0 0.0
          %623 = vmatprep.subr.mxu0 0.0
          %624 = vmatpush1.msra.mxu0 0.0
          %625 = vmatprep.subr.mxu0 0.0
          %626 = vmatpush1.msra.mxu0 0.0
          %627 = vmatprep.subr.mxu0 0.0
          %628 = vmatpush1.msra.mxu0 0.0
          %629 = vmatprep.subr.mxu0 0.0
          %630 = vmatpush1.msra.mxu0 0.0
          %631 = vmatprep.subr.mxu0 0.0
          %632 = vmatpush1.msra.mxu0 0.0
          %633 = vmatprep.subr.mxu0 0.0
          %634 = vmatpush1.msra.mxu0 0.0
          %635 = vmatprep.subr.mxu0 0.0
          %636 = vmatpush1.msra.mxu0 0.0
          %637 = vmatprep.subr.mxu0 0.0
          %638 = vmatpush1.msra.mxu0 0.0
          %639 = vmatprep.subr.mxu0 0.0
          %640 = vmatpush1.msra.mxu0 0.0
          %641 = vmatprep.subr.mxu0 0.0
          %642 = vmatpush1.msra.mxu0 0.0
          %643 = vmatprep.subr.mxu0 0.0
          %644 = vmatpush1.msra.mxu0 0.0
          %645 = vmatprep.subr.mxu0 0.0
          %646 = vmatpush1.msra.mxu0 0.0
          %647 = vmatprep.subr.mxu0 0.0
          %648 = vmatpush1.msra.mxu0 0.0
          %649 = vmatprep.mubr.f32.mxu0 0.0
          %650 = vmatmul.mubr.f32.gmra.mrb[0].mxu0 %v583
          %v651 = vpop.f32.mrb[0].mxu0
          %v652 = vadd.f32 0.0, %v651
          %v653 = vpop.f32.mrb[0].mxu0
          %654 = vdwg.mxu0
          %v655 = vadd.f32 %v576, %v652
          %v656 = vld [vmem:[#allocation2 + $0x18] sm:$0xff]
          %s657 = scalar_lea.vmem %s2, 24
          %v658 = vld [vmem:[%s657] sm:$0xff]
          %v660 = vsel %vm325, %v656, 0
          %662 = vmatprep.subr.mxu0 0.0
          %663 = vmatpush1.msra.mxu0 %v658
          %664 = vmatprep.subr.mxu0 0.0
          %665 = vmatpush1.msra.mxu0 0.0
          %666 = vmatprep.subr.mxu0 0.0
          %667 = vmatpush1.msra.mxu0 0.0
          %668 = vmatprep.subr.mxu0 0.0
          %669 = vmatpush1.msra.mxu0 0.0
          %670 = vmatprep.subr.mxu0 0.0
          %671 = vmatpush1.msra.mxu0 0.0
          %672 = vmatprep.subr.mxu0 0.0
          %673 = vmatpush1.msra.mxu0 0.0
          %674 = vmatprep.subr.mxu0 0.0
          %675 = vmatpush1.msra.mxu0 0.0
          %676 = vmatprep.subr.mxu0 0.0
          %677 = vmatpush1.msra.mxu0 0.0
          %678 = vmatprep.subr.mxu0 0.0
          %679 = vmatpush1.msra.mxu0 0.0
          %680 = vmatprep.subr.mxu0 0.0
          %681 = vmatpush1.msra.mxu0 0.0
          %682 = vmatprep.subr.mxu0 0.0
          %683 = vmatpush1.msra.mxu0 0.0
          %684 = vmatprep.subr.mxu0 0.0
          %685 = vmatpush1.msra.mxu0 0.0
          %686 = vmatprep.subr.mxu0 0.0
          %687 = vmatpush1.msra.mxu0 0.0
          %688 = vmatprep.subr.mxu0 0.0
          %689 = vmatpush1.msra.mxu0 0.0
          %690 = vmatprep.subr.mxu0 0.0
          %691 = vmatpush1.msra.mxu0 0.0
          %692 = vmatprep.subr.mxu0 0.0
          %693 = vmatpush1.msra.mxu0 0.0
          %694 = vmatprep.subr.mxu0 0.0
          %695 = vmatpush1.msra.mxu0 0.0
          %696 = vmatprep.subr.mxu0 0.0
          %697 = vmatpush1.msra.mxu0 0.0
          %698 = vmatprep.subr.mxu0 0.0
          %699 = vmatpush1.msra.mxu0 0.0
          %700 = vmatprep.subr.mxu0 0.0
          %701 = vmatpush1.msra.mxu0 0.0
          %702 = vmatprep.subr.mxu0 0.0
          %703 = vmatpush1.msra.mxu0 0.0
          %704 = vmatprep.subr.mxu0 0.0
          %705 = vmatpush1.msra.mxu0 0.0
          %706 = vmatprep.subr.mxu0 0.0
          %707 = vmatpush1.msra.mxu0 0.0
          %708 = vmatprep.subr.mxu0 0.0
          %709 = vmatpush1.msra.mxu0 0.0
          %710 = vmatprep.subr.mxu0 0.0
          %711 = vmatpush1.msra.mxu0 0.0
          %712 = vmatprep.subr.mxu0 0.0
          %713 = vmatpush1.msra.mxu0 0.0
          %714 = vmatprep.subr.mxu0 0.0
          %715 = vmatpush1.msra.mxu0 0.0
          %716 = vmatprep.subr.mxu0 0.0
          %717 = vmatpush1.msra.mxu0 0.0
          %718 = vmatprep.subr.mxu0 0.0
          %719 = vmatpush1.msra.mxu0 0.0
          %720 = vmatprep.subr.mxu0 0.0
          %721 = vmatpush1.msra.mxu0 0.0
          %722 = vmatprep.subr.mxu0 0.0
          %723 = vmatpush1.msra.mxu0 0.0
          %724 = vmatprep.subr.mxu0 0.0
          %725 = vmatpush1.msra.mxu0 0.0
          %726 = vmatprep.mubr.f32.mxu0 0.0
          %727 = vmatmul.mubr.f32.gmra.mrb[0].mxu0 %v660
          %v728 = vpop.f32.mrb[0].mxu0
          %v729 = vadd.f32 0.0, %v728
          %v730 = vpop.f32.mrb[0].mxu0
          %731 = vdwg.mxu0
          %v732 = vadd.f32 %v655, %v729
          %v733 = vld [vmem:[#allocation2 + $0x20] sm:$0xff]
          %s734 = scalar_lea.vmem %s2, 32
          %v735 = vld [vmem:[%s734] sm:$0xff]
          %v737 = vsel %vm325, %v733, 0
          %739 = vmatprep.subr.mxu0 0.0
          %740 = vmatpush1.msra.mxu0 %v735
          %741 = vmatprep.subr.mxu0 0.0
          %742 = vmatpush1.msra.mxu0 0.0
          %743 = vmatprep.subr.mxu0 0.0
          %744 = vmatpush1.msra.mxu0 0.0
          %745 = vmatprep.subr.mxu0 0.0
          %746 = vmatpush1.msra.mxu0 0.0
          %747 = vmatprep.subr.mxu0 0.0
          %748 = vmatpush1.msra.mxu0 0.0
          %749 = vmatprep.subr.mxu0 0.0
          %750 = vmatpush1.msra.mxu0 0.0
          %751 = vmatprep.subr.mxu0 0.0
          %752 = vmatpush1.msra.mxu0 0.0
          %753 = vmatprep.subr.mxu0 0.0
          %754 = vmatpush1.msra.mxu0 0.0
          %755 = vmatprep.subr.mxu0 0.0
          %756 = vmatpush1.msra.mxu0 0.0
          %757 = vmatprep.subr.mxu0 0.0
          %758 = vmatpush1.msra.mxu0 0.0
          %759 = vmatprep.subr.mxu0 0.0
          %760 = vmatpush1.msra.mxu0 0.0
          %761 = vmatprep.subr.mxu0 0.0
          %762 = vmatpush1.msra.mxu0 0.0
          %763 = vmatprep.subr.mxu0 0.0
          %764 = vmatpush1.msra.mxu0 0.0
          %765 = vmatprep.subr.mxu0 0.0
          %766 = vmatpush1.msra.mxu0 0.0
          %767 = vmatprep.subr.mxu0 0.0
          %768 = vmatpush1.msra.mxu0 0.0
          %769 = vmatprep.subr.mxu0 0.0
          %770 = vmatpush1.msra.mxu0 0.0
          %771 = vmatprep.subr.mxu0 0.0
          %772 = vmatpush1.msra.mxu0 0.0
          %773 = vmatprep.subr.mxu0 0.0
          %774 = vmatpush1.msra.mxu0 0.0
          %775 = vmatprep.subr.mxu0 0.0
          %776 = vmatpush1.msra.mxu0 0.0
          %777 = vmatprep.subr.mxu0 0.0
          %778 = vmatpush1.msra.mxu0 0.0
          %779 = vmatprep.subr.mxu0 0.0
          %780 = vmatpush1.msra.mxu0 0.0
          %781 = vmatprep.subr.mxu0 0.0
          %782 = vmatpush1.msra.mxu0 0.0
          %783 = vmatprep.subr.mxu0 0.0
          %784 = vmatpush1.msra.mxu0 0.0
          %785 = vmatprep.subr.mxu0 0.0
          %786 = vmatpush1.msra.mxu0 0.0
          %787 = vmatprep.subr.mxu0 0.0
          %788 = vmatpush1.msra.mxu0 0.0
          %789 = vmatprep.subr.mxu0 0.0
          %790 = vmatpush1.msra.mxu0 0.0
          %791 = vmatprep.subr.mxu0 0.0
          %792 = vmatpush1.msra.mxu0 0.0
          %793 = vmatprep.subr.mxu0 0.0
          %794 = vmatpush1.msra.mxu0 0.0
          %795 = vmatprep.subr.mxu0 0.0
          %796 = vmatpush1.msra.mxu0 0.0
          %797 = vmatprep.subr.mxu0 0.0
          %798 = vmatpush1.msra.mxu0 0.0
          %799 = vmatprep.subr.mxu0 0.0
          %800 = vmatpush1.msra.mxu0 0.0
          %801 = vmatprep.subr.mxu0 0.0
          %802 = vmatpush1.msra.mxu0 0.0
          %803 = vmatprep.mubr.f32.mxu0 0.0
          %804 = vmatmul.mubr.f32.gmra.mrb[0].mxu0 %v737
          %v805 = vpop.f32.mrb[0].mxu0
          %v806 = vadd.f32 0.0, %v805
          %v807 = vpop.f32.mrb[0].mxu0
          %808 = vdwg.mxu0
          %v809 = vadd.f32 %v732, %v806
          %v810 = vld [vmem:[#allocation2 + $0x28] sm:$0xff]
          %s811 = scalar_lea.vmem %s2, 40
          %v812 = vld [vmem:[%s811] sm:$0xff]
          %v814 = vsel %vm325, %v810, 0
          %816 = vmatprep.subr.mxu0 0.0
          %817 = vmatpush1.msra.mxu0 %v812
          %818 = vmatprep.subr.mxu0 0.0
          %819 = vmatpush1.msra.mxu0 0.0
          %820 = vmatprep.subr.mxu0 0.0
          %821 = vmatpush1.msra.mxu0 0.0
          %822 = vmatprep.subr.mxu0 0.0
          %823 = vmatpush1.msra.mxu0 0.0
          %824 = vmatprep.subr.mxu0 0.0
          %825 = vmatpush1.msra.mxu0 0.0
          %826 = vmatprep.subr.mxu0 0.0
          %827 = vmatpush1.msra.mxu0 0.0
          %828 = vmatprep.subr.mxu0 0.0
          %829 = vmatpush1.msra.mxu0 0.0
          %830 = vmatprep.subr.mxu0 0.0
          %831 = vmatpush1.msra.mxu0 0.0
          %832 = vmatprep.subr.mxu0 0.0
          %833 = vmatpush1.msra.mxu0 0.0
          %834 = vmatprep.subr.mxu0 0.0
          %835 = vmatpush1.msra.mxu0 0.0
          %836 = vmatprep.subr.mxu0 0.0
          %837 = vmatpush1.msra.mxu0 0.0
          %838 = vmatprep.subr.mxu0 0.0
          %839 = vmatpush1.msra.mxu0 0.0
          %840 = vmatprep.subr.mxu0 0.0
          %841 = vmatpush1.msra.mxu0 0.0
          %842 = vmatprep.subr.mxu0 0.0
          %843 = vmatpush1.msra.mxu0 0.0
          %844 = vmatprep.subr.mxu0 0.0
          %845 = vmatpush1.msra.mxu0 0.0
          %846 = vmatprep.subr.mxu0 0.0
          %847 = vmatpush1.msra.mxu0 0.0
          %848 = vmatprep.subr.mxu0 0.0
          %849 = vmatpush1.msra.mxu0 0.0
          %850 = vmatprep.subr.mxu0 0.0
          %851 = vmatpush1.msra.mxu0 0.0
          %852 = vmatprep.subr.mxu0 0.0
          %853 = vmatpush1.msra.mxu0 0.0
          %854 = vmatprep.subr.mxu0 0.0
          %855 = vmatpush1.msra.mxu0 0.0
          %856 = vmatprep.subr.mxu0 0.0
          %857 = vmatpush1.msra.mxu0 0.0
          %858 = vmatprep.subr.mxu0 0.0
          %859 = vmatpush1.msra.mxu0 0.0
          %860 = vmatprep.subr.mxu0 0.0
          %861 = vmatpush1.msra.mxu0 0.0
          %862 = vmatprep.subr.mxu0 0.0
          %863 = vmatpush1.msra.mxu0 0.0
          %864 = vmatprep.subr.mxu0 0.0
          %865 = vmatpush1.msra.mxu0 0.0
          %866 = vmatprep.subr.mxu0 0.0
          %867 = vmatpush1.msra.mxu0 0.0
          %868 = vmatprep.subr.mxu0 0.0
          %869 = vmatpush1.msra.mxu0 0.0
          %870 = vmatprep.subr.mxu0 0.0
          %871 = vmatpush1.msra.mxu0 0.0
          %872 = vmatprep.subr.mxu0 0.0
          %873 = vmatpush1.msra.mxu0 0.0
          %874 = vmatprep.subr.mxu0 0.0
          %875 = vmatpush1.msra.mxu0 0.0
          %876 = vmatprep.subr.mxu0 0.0
          %877 = vmatpush1.msra.mxu0 0.0
          %878 = vmatprep.subr.mxu0 0.0
          %879 = vmatpush1.msra.mxu0 0.0
          %880 = vmatprep.mubr.f32.mxu0 0.0
          %881 = vmatmul.mubr.f32.gmra.mrb[0].mxu0 %v814
          %v882 = vpop.f32.mrb[0].mxu0
          %v883 = vadd.f32 0.0, %v882
          %v884 = vpop.f32.mrb[0].mxu0
          %885 = vdwg.mxu0
          %v886 = vadd.f32 %v809, %v883
          %v887 = vld [vmem:[#allocation2 + $0x30] sm:$0xff]
          %s888 = scalar_lea.vmem %s2, 48
          %v889 = vld [vmem:[%s888] sm:$0xff]
          %v891 = vsel %vm325, %v887, 0
          %893 = vmatprep.subr.mxu0 0.0
          %894 = vmatpush1.msra.mxu0 %v889
          %895 = vmatprep.subr.mxu0 0.0
          %896 = vmatpush1.msra.mxu0 0.0
          %897 = vmatprep.subr.mxu0 0.0
          %898 = vmatpush1.msra.mxu0 0.0
          %899 = vmatprep.subr.mxu0 0.0
          %900 = vmatpush1.msra.mxu0 0.0
          %901 = vmatprep.subr.mxu0 0.0
          %902 = vmatpush1.msra.mxu0 0.0
          %903 = vmatprep.subr.mxu0 0.0
          %904 = vmatpush1.msra.mxu0 0.0
          %905 = vmatprep.subr.mxu0 0.0
          %906 = vmatpush1.msra.mxu0 0.0
          %907 = vmatprep.subr.mxu0 0.0
          %908 = vmatpush1.msra.mxu0 0.0
          %909 = vmatprep.subr.mxu0 0.0
          %910 = vmatpush1.msra.mxu0 0.0
          %911 = vmatprep.subr.mxu0 0.0
          %912 = vmatpush1.msra.mxu0 0.0
          %913 = vmatprep.subr.mxu0 0.0
          %914 = vmatpush1.msra.mxu0 0.0
          %915 = vmatprep.subr.mxu0 0.0
          %916 = vmatpush1.msra.mxu0 0.0
          %917 = vmatprep.subr.mxu0 0.0
          %918 = vmatpush1.msra.mxu0 0.0
          %919 = vmatprep.subr.mxu0 0.0
          %920 = vmatpush1.msra.mxu0 0.0
          %921 = vmatprep.subr.mxu0 0.0
          %922 = vmatpush1.msra.mxu0 0.0
          %923 = vmatprep.subr.mxu0 0.0
          %924 = vmatpush1.msra.mxu0 0.0
          %925 = vmatprep.subr.mxu0 0.0
          %926 = vmatpush1.msra.mxu0 0.0
          %927 = vmatprep.subr.mxu0 0.0
          %928 = vmatpush1.msra.mxu0 0.0
          %929 = vmatprep.subr.mxu0 0.0
          %930 = vmatpush1.msra.mxu0 0.0
          %931 = vmatprep.subr.mxu0 0.0
          %932 = vmatpush1.msra.mxu0 0.0
          %933 = vmatprep.subr.mxu0 0.0
          %934 = vmatpush1.msra.mxu0 0.0
          %935 = vmatprep.subr.mxu0 0.0
          %936 = vmatpush1.msra.mxu0 0.0
          %937 = vmatprep.subr.mxu0 0.0
          %938 = vmatpush1.msra.mxu0 0.0
          %939 = vmatprep.subr.mxu0 0.0
          %940 = vmatpush1.msra.mxu0 0.0
          %941 = vmatprep.subr.mxu0 0.0
          %942 = vmatpush1.msra.mxu0 0.0
          %943 = vmatprep.subr.mxu0 0.0
          %944 = vmatpush1.msra.mxu0 0.0
          %945 = vmatprep.subr.mxu0 0.0
          %946 = vmatpush1.msra.mxu0 0.0
          %947 = vmatprep.subr.mxu0 0.0
          %948 = vmatpush1.msra.mxu0 0.0
          %949 = vmatprep.subr.mxu0 0.0
          %950 = vmatpush1.msra.mxu0 0.0
          %951 = vmatprep.subr.mxu0 0.0
          %952 = vmatpush1.msra.mxu0 0.0
          %953 = vmatprep.subr.mxu0 0.0
          %954 = vmatpush1.msra.mxu0 0.0
          %955 = vmatprep.subr.mxu0 0.0
          %956 = vmatpush1.msra.mxu0 0.0
          %957 = vmatprep.mubr.f32.mxu0 0.0
          %958 = vmatmul.mubr.f32.gmra.mrb[0].mxu0 %v891
          %v959 = vpop.f32.mrb[0].mxu0
          %v960 = vadd.f32 0.0, %v959
          %v961 = vpop.f32.mrb[0].mxu0
          %962 = vdwg.mxu0
          %v963 = vadd.f32 %v886, %v960
          %v964 = vld [vmem:[#allocation2 + $0x38] sm:$0xff]
          %s965 = scalar_lea.vmem %s2, 56
          %v966 = vld [vmem:[%s965] sm:$0xff]
          %v968 = vsel %vm325, %v964, 0
          %970 = vmatprep.subr.mxu0 0.0
          %971 = vmatpush1.msra.mxu0 %v966
          %972 = vmatprep.subr.mxu0 0.0
          %973 = vmatpush1.msra.mxu0 0.0
          %974 = vmatprep.subr.mxu0 0.0
          %975 = vmatpush1.msra.mxu0 0.0
          %976 = vmatprep.subr.mxu0 0.0
          %977 = vmatpush1.msra.mxu0 0.0
          %978 = vmatprep.subr.mxu0 0.0
          %979 = vmatpush1.msra.mxu0 0.0
          %980 = vmatprep.subr.mxu0 0.0
          %981 = vmatpush1.msra.mxu0 0.0
          %982 = vmatprep.subr.mxu0 0.0
          %983 = vmatpush1.msra.mxu0 0.0
          %984 = vmatprep.subr.mxu0 0.0
          %985 = vmatpush1.msra.mxu0 0.0
          %986 = vmatprep.subr.mxu0 0.0
          %987 = vmatpush1.msra.mxu0 0.0
          %988 = vmatprep.subr.mxu0 0.0
          %989 = vmatpush1.msra.mxu0 0.0
          %990 = vmatprep.subr.mxu0 0.0
          %991 = vmatpush1.msra.mxu0 0.0
          %992 = vmatprep.subr.mxu0 0.0
          %993 = vmatpush1.msra.mxu0 0.0
          %994 = vmatprep.subr.mxu0 0.0
          %995 = vmatpush1.msra.mxu0 0.0
          %996 = vmatprep.subr.mxu0 0.0
          %997 = vmatpush1.msra.mxu0 0.0
          %998 = vmatprep.subr.mxu0 0.0
          %999 = vmatpush1.msra.mxu0 0.0
          %1000 = vmatprep.subr.mxu0 0.0
          %1001 = vmatpush1.msra.mxu0 0.0
          %1002 = vmatprep.subr.mxu0 0.0
          %1003 = vmatpush1.msra.mxu0 0.0
          %1004 = vmatprep.subr.mxu0 0.0
          %1005 = vmatpush1.msra.mxu0 0.0
          %1006 = vmatprep.subr.mxu0 0.0
          %1007 = vmatpush1.msra.mxu0 0.0
          %1008 = vmatprep.subr.mxu0 0.0
          %1009 = vmatpush1.msra.mxu0 0.0
          %1010 = vmatprep.subr.mxu0 0.0
          %1011 = vmatpush1.msra.mxu0 0.0
          %1012 = vmatprep.subr.mxu0 0.0
          %1013 = vmatpush1.msra.mxu0 0.0
          %1014 = vmatprep.subr.mxu0 0.0
          %1015 = vmatpush1.msra.mxu0 0.0
          %1016 = vmatprep.subr.mxu0 0.0
          %1017 = vmatpush1.msra.mxu0 0.0
          %1018 = vmatprep.subr.mxu0 0.0
          %1019 = vmatpush1.msra.mxu0 0.0
          %1020 = vmatprep.subr.mxu0 0.0
          %1021 = vmatpush1.msra.mxu0 0.0
          %1022 = vmatprep.subr.mxu0 0.0
          %1023 = vmatpush1.msra.mxu0 0.0
          %1024 = vmatprep.subr.mxu0 0.0
          %1025 = vmatpush1.msra.mxu0 0.0
          %1026 = vmatprep.subr.mxu0 0.0
          %1027 = vmatpush1.msra.mxu0 0.0
          %1028 = vmatprep.subr.mxu0 0.0
          %1029 = vmatpush1.msra.mxu0 0.0
          %1030 = vmatprep.subr.mxu0 0.0
          %1031 = vmatpush1.msra.mxu0 0.0
          %1032 = vmatprep.subr.mxu0 0.0
          %1033 = vmatpush1.msra.mxu0 0.0
          %1034 = vmatprep.mubr.f32.mxu0 0.0
          %1035 = vmatmul.mubr.f32.gmra.mrb[0].mxu0 %v968
          %v1036 = vpop.f32.mrb[0].mxu0
          %v1037 = vadd.f32 0.0, %v1036
          %v1038 = vpop.f32.mrb[0].mxu0
          %1039 = vdwg.mxu0
          %v1040 = vadd.f32 %v963, %v1037
          %v1042 = vlaneseq
          %v1043 = vshrl.u32 %v1042, 7
          %v1044 = vsub.s32 0, %v1043
          %v1045 = vrot.slane %v427, %v1044
          %v1047 = vadd.f32 %v1040, %v1045
          %v1049 = vcombine.high %v1047, %v1047
          %v1051 = vunpack.c.l.s4 1966171168
          %v1052 = vunpack.c.0.s8 %v1051
          %v1053 = vlaneseq
          %v1054 = vshrl.u32 %v1053, 7
          %v1055 = vsub.s32 %v1052, %v1054
          %v1056 = vrot.slane %v1047, %v1055
          %v1058 = vunpack.c.l.s4 1966171168
          %v1059 = vunpack.c.0.s8 %v1058
          %v1060 = vlaneseq
          %v1061 = vshrl.u32 %v1060, 7
          %v1062 = vsub.s32 %v1059, %v1061
          %v1063 = vrot.slane %v1049, %v1062
          %v1064 = vcombine.high %v1056, %v1056
          %v1065 = vcombine.high %v1063, %v1063
          %v1067 = vunpack.c.l.s4 1966171168
          %v1068 = vunpack.c.0.s8 %v1067
          %v1069 = vlaneseq
          %v1070 = vshrl.u32 %v1069, 7
          %v1071 = vsub.s32 %v1068, %v1070
          %v1072 = vrot.slane %v1056, %v1071
          %v1074 = vunpack.c.l.s4 1966171168
          %v1075 = vunpack.c.0.s8 %v1074
          %v1076 = vlaneseq
          %v1077 = vshrl.u32 %v1076, 7
          %v1078 = vsub.s32 %v1075, %v1077
          %v1079 = vrot.slane %v1063, %v1078
          %v1081 = vunpack.c.l.s4 1966171168
          %v1082 = vunpack.c.0.s8 %v1081
          %v1083 = vlaneseq
          %v1084 = vshrl.u32 %v1083, 7
          %v1085 = vsub.s32 %v1082, %v1084
          %v1086 = vrot.slane %v1064, %v1085
          %v1088 = vunpack.c.l.s4 1966171168
          %v1089 = vunpack.c.0.s8 %v1088
          %v1090 = vlaneseq
          %v1091 = vshrl.u32 %v1090, 7
          %v1092 = vsub.s32 %v1089, %v1091
          %v1093 = vrot.slane %v1065, %v1092
          %v1094 = vcombine.high %v1072, %v1072
          %v1095 = vcombine.high %v1079, %v1079
          %v1096 = vcombine.high %v1086, %v1086
          %v1097 = vcombine.high %v1093, %v1093
          %vm1106 = vcmask 253952
          %1107 = vst.msk [vmem:[%s263] sm:$0x1] %vm1106, %v1072
          %1108 = vst.msk [vmem:[%s263 + $0x8] sm:$0x1] %vm1106, %v1086
          %1109 = vst.msk [vmem:[%s263 + $0x10] sm:$0x1] %vm1106, %v1094
          %1110 = vst.msk [vmem:[%s263 + $0x18] sm:$0x1] %vm1106, %v1096
          %1111 = vst.msk [vmem:[%s263 + $0x20] sm:$0x1] %vm1106, %v1079
          %1112 = vst.msk [vmem:[%s263 + $0x28] sm:$0x1] %vm1106, %v1093
          %1113 = vst.msk [vmem:[%s263 + $0x30] sm:$0x1] %vm1106, %v1095
          %1114 = vst.msk [vmem:[%s263 + $0x38] sm:$0x1] %vm1106, %v1097
          %v1115 = vld [vmem:[#allocation2] sm:$0xff]
          %v1116 = vld [vmem:[%s2] sm:$0xff]
          %v1117 = vld [vmem:[#allocation2 + $0x8] sm:$0xff]
          %v1118 = vld [vmem:[%s431] sm:$0xff]
          %1120 = vrot.lane.b32.xlu0 %v1117, 120
          %v1121 = vpop.permute.xlu0 %1120
          %v1122 = vsel %vm325, %v1121, 0
          %1124 = vmatprep.subr.mxu0 0.0
          %1125 = vmatpush1.msra.mxu0 %v1118
          %1126 = vmatprep.subr.mxu0 0.0
          %1127 = vmatpush1.msra.mxu0 0.0
          %1128 = vmatprep.subr.mxu0 0.0
          %1129 = vmatpush1.msra.mxu0 0.0
          %1130 = vmatprep.subr.mxu0 0.0
          %1131 = vmatpush1.msra.mxu0 0.0
          %1132 = vmatprep.subr.mxu0 0.0
          %1133 = vmatpush1.msra.mxu0 0.0
          %1134 = vmatprep.subr.mxu0 0.0
          %1135 = vmatpush1.msra.mxu0 0.0
          %1136 = vmatprep.subr.mxu0 0.0
          %1137 = vmatpush1.msra.mxu0 0.0
          %1138 = vmatprep.subr.mxu0 0.0
          %1139 = vmatpush1.msra.mxu0 0.0
          %1140 = vmatprep.subr.mxu0 0.0
          %1141 = vmatpush1.msra.mxu0 0.0
          %1142 = vmatprep.subr.mxu0 0.0
          %1143 = vmatpush1.msra.mxu0 0.0
          %1144 = vmatprep.subr.mxu0 0.0
          %1145 = vmatpush1.msra.mxu0 0.0
          %1146 = vmatprep.subr.mxu0 0.0
          %1147 = vmatpush1.msra.mxu0 0.0
          %1148 = vmatprep.subr.mxu0 0.0
          %1149 = vmatpush1.msra.mxu0 0.0
          %1150 = vmatprep.subr.mxu0 0.0
          %1151 = vmatpush1.msra.mxu0 0.0
          %1152 = vmatprep.subr.mxu0 0.0
          %1153 = vmatpush1.msra.mxu0 0.0
          %1154 = vmatprep.subr.mxu0 0.0
          %1155 = vmatpush1.msra.mxu0 0.0
          %1156 = vmatprep.subr.mxu0 0.0
          %1157 = vmatpush1.msra.mxu0 0.0
          %1158 = vmatprep.subr.mxu0 0.0
          %1159 = vmatpush1.msra.mxu0 0.0
          %1160 = vmatprep.subr.mxu0 0.0
          %1161 = vmatpush1.msra.mxu0 0.0
          %1162 = vmatprep.subr.mxu0 0.0
          %1163 = vmatpush1.msra.mxu0 0.0
          %1164 = vmatprep.subr.mxu0 0.0
          %1165 = vmatpush1.msra.mxu0 0.0
          %1166 = vmatprep.subr.mxu0 0.0
          %1167 = vmatpush1.msra.mxu0 0.0
          %1168 = vmatprep.subr.mxu0 0.0
          %1169 = vmatpush1.msra.mxu0 0.0
          %1170 = vmatprep.subr.mxu0 0.0
          %1171 = vmatpush1.msra.mxu0 0.0
          %1172 = vmatprep.subr.mxu0 0.0
          %1173 = vmatpush1.msra.mxu0 0.0
          %1174 = vmatprep.subr.mxu0 0.0
          %1175 = vmatpush1.msra.mxu0 0.0
          %1176 = vmatprep.subr.mxu0 0.0
          %1177 = vmatpush1.msra.mxu0 0.0
          %1178 = vmatprep.subr.mxu0 0.0
          %1179 = vmatpush1.msra.mxu0 0.0
          %1180 = vmatprep.subr.mxu0 0.0
          %1181 = vmatpush1.msra.mxu0 0.0
          %1182 = vmatprep.subr.mxu0 0.0
          %1183 = vmatpush1.msra.mxu0 0.0
          %1184 = vmatprep.subr.mxu0 0.0
          %1185 = vmatpush1.msra.mxu0 0.0
          %1186 = vmatprep.subr.mxu0 0.0
          %1187 = vmatpush1.msra.mxu0 0.0
          %1188 = vmatprep.mubr.f32.mxu0 0.0
          %1189 = vmatmul.mubr.f32.gmra.mrb[0].mxu0 %v1122
          %v1190 = vpop.f32.mrb[0].mxu0
          %v1191 = vadd.f32 0.0, %v1190
          %v1192 = vpop.f32.mrb[0].mxu0
          %1193 = vdwg.mxu0
          %1195 = vrot.lane.b32.xlu0 %v1115, 120
          %v1196 = vpop.permute.xlu0 %1195
          %v1197 = vsel %vm325, %v1196, 0
          %1199 = vmatprep.subr.mxu0 0.0
          %1200 = vmatpush1.msra.mxu0 %v1116
          %1201 = vmatprep.subr.mxu0 0.0
          %1202 = vmatpush1.msra.mxu0 0.0
          %1203 = vmatprep.subr.mxu0 0.0
          %1204 = vmatpush1.msra.mxu0 0.0
          %1205 = vmatprep.subr.mxu0 0.0
          %1206 = vmatpush1.msra.mxu0 0.0
          %1207 = vmatprep.subr.mxu0 0.0
          %1208 = vmatpush1.msra.mxu0 0.0
          %1209 = vmatprep.subr.mxu0 0.0
          %1210 = vmatpush1.msra.mxu0 0.0
          %1211 = vmatprep.subr.mxu0 0.0
          %1212 = vmatpush1.msra.mxu0 0.0
          %1213 = vmatprep.subr.mxu0 0.0
          %1214 = vmatpush1.msra.mxu0 0.0
          %1215 = vmatprep.subr.mxu0 0.0
          %1216 = vmatpush1.msra.mxu0 0.0
          %1217 = vmatprep.subr.mxu0 0.0
          %1218 = vmatpush1.msra.mxu0 0.0
          %1219 = vmatprep.subr.mxu0 0.0
          %1220 = vmatpush1.msra.mxu0 0.0
          %1221 = vmatprep.subr.mxu0 0.0
          %1222 = vmatpush1.msra.mxu0 0.0
          %1223 = vmatprep.subr.mxu0 0.0
          %1224 = vmatpush1.msra.mxu0 0.0
          %1225 = vmatprep.subr.mxu0 0.0
          %1226 = vmatpush1.msra.mxu0 0.0
          %1227 = vmatprep.subr.mxu0 0.0
          %1228 = vmatpush1.msra.mxu0 0.0
          %1229 = vmatprep.subr.mxu0 0.0
          %1230 = vmatpush1.msra.mxu0 0.0
          %1231 = vmatprep.subr.mxu0 0.0
          %1232 = vmatpush1.msra.mxu0 0.0
          %1233 = vmatprep.subr.mxu0 0.0
          %1234 = vmatpush1.msra.mxu0 0.0
          %1235 = vmatprep.subr.mxu0 0.0
          %1236 = vmatpush1.msra.mxu0 0.0
          %1237 = vmatprep.subr.mxu0 0.0
          %1238 = vmatpush1.msra.mxu0 0.0
          %1239 = vmatprep.subr.mxu0 0.0
          %1240 = vmatpush1.msra.mxu0 0.0
          %1241 = vmatprep.subr.mxu0 0.0
          %1242 = vmatpush1.msra.mxu0 0.0
          %1243 = vmatprep.subr.mxu0 0.0
          %1244 = vmatpush1.msra.mxu0 0.0
          %1245 = vmatprep.subr.mxu0 0.0
          %1246 = vmatpush1.msra.mxu0 0.0
          %1247 = vmatprep.subr.mxu0 0.0
          %1248 = vmatpush1.msra.mxu0 0.0
          %1249 = vmatprep.subr.mxu0 0.0
          %1250 = vmatpush1.msra.mxu0 0.0
          %1251 = vmatprep.subr.mxu0 0.0
          %1252 = vmatpush1.msra.mxu0 0.0
          %1253 = vmatprep.subr.mxu0 0.0
          %1254 = vmatpush1.msra.mxu0 0.0
          %1255 = vmatprep.subr.mxu0 0.0
          %1256 = vmatpush1.msra.mxu0 0.0
          %1257 = vmatprep.subr.mxu0 0.0
          %1258 = vmatpush1.msra.mxu0 0.0
          %1259 = vmatprep.subr.mxu0 0.0
          %1260 = vmatpush1.msra.mxu0 0.0
          %1261 = vmatprep.subr.mxu0 0.0
          %1262 = vmatpush1.msra.mxu0 0.0
          %1263 = vmatprep.mubr.f32.mxu0 0.0
          %1264 = vmatmul.mubr.f32.gmra.mrb[0].mxu0 %v1197
          %v1265 = vpop.f32.mrb[0].mxu0
          %v1266 = vadd.f32 %v1191, %v1265
          %v1267 = vpop.f32.mrb[0].mxu0
          %1268 = vdwg.mxu0
          %v1269 = vld [vmem:[#allocation2 + $0x10] sm:$0xff]
          %v1270 = vld [vmem:[%s580] sm:$0xff]
          %1272 = vrot.lane.b32.xlu0 %v1269, 120
          %v1273 = vpop.permute.xlu0 %1272
          %v1274 = vsel %vm325, %v1273, 0
          %1276 = vmatprep.subr.mxu0 0.0
          %1277 = vmatpush1.msra.mxu0 %v1270
          %1278 = vmatprep.subr.mxu0 0.0
          %1279 = vmatpush1.msra.mxu0 0.0
          %1280 = vmatprep.subr.mxu0 0.0
          %1281 = vmatpush1.msra.mxu0 0.0
          %1282 = vmatprep.subr.mxu0 0.0
          %1283 = vmatpush1.msra.mxu0 0.0
          %1284 = vmatprep.subr.mxu0 0.0
          %1285 = vmatpush1.msra.mxu0 0.0
          %1286 = vmatprep.subr.mxu0 0.0
          %1287 = vmatpush1.msra.mxu0 0.0
          %1288 = vmatprep.subr.mxu0 0.0
          %1289 = vmatpush1.msra.mxu0 0.0
          %1290 = vmatprep.subr.mxu0 0.0
          %1291 = vmatpush1.msra.mxu0 0.0
          %1292 = vmatprep.subr.mxu0 0.0
          %1293 = vmatpush1.msra.mxu0 0.0
          %1294 = vmatprep.subr.mxu0 0.0
          %1295 = vmatpush1.msra.mxu0 0.0
          %1296 = vmatprep.subr.mxu0 0.0
          %1297 = vmatpush1.msra.mxu0 0.0
          %1298 = vmatprep.subr.mxu0 0.0
          %1299 = vmatpush1.msra.mxu0 0.0
          %1300 = vmatprep.subr.mxu0 0.0
          %1301 = vmatpush1.msra.mxu0 0.0
          %1302 = vmatprep.subr.mxu0 0.0
          %1303 = vmatpush1.msra.mxu0 0.0
          %1304 = vmatprep.subr.mxu0 0.0
          %1305 = vmatpush1.msra.mxu0 0.0
          %1306 = vmatprep.subr.mxu0 0.0
          %1307 = vmatpush1.msra.mxu0 0.0
          %1308 = vmatprep.subr.mxu0 0.0
          %1309 = vmatpush1.msra.mxu0 0.0
          %1310 = vmatprep.subr.mxu0 0.0
          %1311 = vmatpush1.msra.mxu0 0.0
          %1312 = vmatprep.subr.mxu0 0.0
          %1313 = vmatpush1.msra.mxu0 0.0
          %1314 = vmatprep.subr.mxu0 0.0
          %1315 = vmatpush1.msra.mxu0 0.0
          %1316 = vmatprep.subr.mxu0 0.0
          %1317 = vmatpush1.msra.mxu0 0.0
          %1318 = vmatprep.subr.mxu0 0.0
          %1319 = vmatpush1.msra.mxu0 0.0
          %1320 = vmatprep.subr.mxu0 0.0
          %1321 = vmatpush1.msra.mxu0 0.0
          %1322 = vmatprep.subr.mxu0 0.0
          %1323 = vmatpush1.msra.mxu0 0.0
          %1324 = vmatprep.subr.mxu0 0.0
          %1325 = vmatpush1.msra.mxu0 0.0
          %1326 = vmatprep.subr.mxu0 0.0
          %1327 = vmatpush1.msra.mxu0 0.0
          %1328 = vmatprep.subr.mxu0 0.0
          %1329 = vmatpush1.msra.mxu0 0.0
          %1330 = vmatprep.subr.mxu0 0.0
          %1331 = vmatpush1.msra.mxu0 0.0
          %1332 = vmatprep.subr.mxu0 0.0
          %1333 = vmatpush1.msra.mxu0 0.0
          %1334 = vmatprep.subr.mxu0 0.0
          %1335 = vmatpush1.msra.mxu0 0.0
          %1336 = vmatprep.subr.mxu0 0.0
          %1337 = vmatpush1.msra.mxu0 0.0
          %1338 = vmatprep.subr.mxu0 0.0
          %1339 = vmatpush1.msra.mxu0 0.0
          %1340 = vmatprep.mubr.f32.mxu0 0.0
          %1341 = vmatmul.mubr.f32.gmra.mrb[0].mxu0 %v1274
          %v1342 = vpop.f32.mrb[0].mxu0
          %v1343 = vadd.f32 0.0, %v1342
          %v1344 = vpop.f32.mrb[0].mxu0
          %1345 = vdwg.mxu0
          %v1346 = vadd.f32 %v1266, %v1343
          %v1347 = vld [vmem:[#allocation2 + $0x18] sm:$0xff]
          %v1348 = vld [vmem:[%s657] sm:$0xff]
          %1350 = vrot.lane.b32.xlu0 %v1347, 120
          %v1351 = vpop.permute.xlu0 %1350
          %v1352 = vsel %vm325, %v1351, 0
          %1354 = vmatprep.subr.mxu0 0.0
          %1355 = vmatpush1.msra.mxu0 %v1348
          %1356 = vmatprep.subr.mxu0 0.0
          %1357 = vmatpush1.msra.mxu0 0.0
          %1358 = vmatprep.subr.mxu0 0.0
          %1359 = vmatpush1.msra.mxu0 0.0
          %1360 = vmatprep.subr.mxu0 0.0
          %1361 = vmatpush1.msra.mxu0 0.0
          %1362 = vmatprep.subr.mxu0 0.0
          %1363 = vmatpush1.msra.mxu0 0.0
          %1364 = vmatprep.subr.mxu0 0.0
          %1365 = vmatpush1.msra.mxu0 0.0
          %1366 = vmatprep.subr.mxu0 0.0
          %1367 = vmatpush1.msra.mxu0 0.0
          %1368 = vmatprep.subr.mxu0 0.0
          %1369 = vmatpush1.msra.mxu0 0.0
          %1370 = vmatprep.subr.mxu0 0.0
          %1371 = vmatpush1.msra.mxu0 0.0
          %1372 = vmatprep.subr.mxu0 0.0
          %1373 = vmatpush1.msra.mxu0 0.0
          %1374 = vmatprep.subr.mxu0 0.0
          %1375 = vmatpush1.msra.mxu0 0.0
          %1376 = vmatprep.subr.mxu0 0.0
          %1377 = vmatpush1.msra.mxu0 0.0
          %1378 = vmatprep.subr.mxu0 0.0
          %1379 = vmatpush1.msra.mxu0 0.0
          %1380 = vmatprep.subr.mxu0 0.0
          %1381 = vmatpush1.msra.mxu0 0.0
          %1382 = vmatprep.subr.mxu0 0.0
          %1383 = vmatpush1.msra.mxu0 0.0
          %1384 = vmatprep.subr.mxu0 0.0
          %1385 = vmatpush1.msra.mxu0 0.0
          %1386 = vmatprep.subr.mxu0 0.0
          %1387 = vmatpush1.msra.mxu0 0.0
          %1388 = vmatprep.subr.mxu0 0.0
          %1389 = vmatpush1.msra.mxu0 0.0
          %1390 = vmatprep.subr.mxu0 0.0
          %1391 = vmatpush1.msra.mxu0 0.0
          %1392 = vmatprep.subr.mxu0 0.0
          %1393 = vmatpush1.msra.mxu0 0.0
          %1394 = vmatprep.subr.mxu0 0.0
          %1395 = vmatpush1.msra.mxu0 0.0
          %1396 = vmatprep.subr.mxu0 0.0
          %1397 = vmatpush1.msra.mxu0 0.0
          %1398 = vmatprep.subr.mxu0 0.0
          %1399 = vmatpush1.msra.mxu0 0.0
          %1400 = vmatprep.subr.mxu0 0.0
          %1401 = vmatpush1.msra.mxu0 0.0
          %1402 = vmatprep.subr.mxu0 0.0
          %1403 = vmatpush1.msra.mxu0 0.0
          %1404 = vmatprep.subr.mxu0 0.0
          %1405 = vmatpush1.msra.mxu0 0.0
          %1406 = vmatprep.subr.mxu0 0.0
          %1407 = vmatpush1.msra.mxu0 0.0
          %1408 = vmatprep.subr.mxu0 0.0
          %1409 = vmatpush1.msra.mxu0 0.0
          %1410 = vmatprep.subr.mxu0 0.0
          %1411 = vmatpush1.msra.mxu0 0.0
          %1412 = vmatprep.subr.mxu0 0.0
          %1413 = vmatpush1.msra.mxu0 0.0
          %1414 = vmatprep.subr.mxu0 0.0
          %1415 = vmatpush1.msra.mxu0 0.0
          %1416 = vmatprep.subr.mxu0 0.0
          %1417 = vmatpush1.msra.mxu0 0.0
          %1418 = vmatprep.mubr.f32.mxu0 0.0
          %1419 = vmatmul.mubr.f32.gmra.mrb[0].mxu0 %v1352
          %v1420 = vpop.f32.mrb[0].mxu0
          %v1421 = vadd.f32 0.0, %v1420
          %v1422 = vpop.f32.mrb[0].mxu0
          %1423 = vdwg.mxu0
          %v1424 = vadd.f32 %v1346, %v1421
          %v1425 = vld [vmem:[#allocation2 + $0x20] sm:$0xff]
          %v1426 = vld [vmem:[%s734] sm:$0xff]
          %1428 = vrot.lane.b32.xlu0 %v1425, 120
          %v1429 = vpop.permute.xlu0 %1428
          %v1430 = vsel %vm325, %v1429, 0
          %1432 = vmatprep.subr.mxu0 0.0
          %1433 = vmatpush1.msra.mxu0 %v1426
          %1434 = vmatprep.subr.mxu0 0.0
          %1435 = vmatpush1.msra.mxu0 0.0
          %1436 = vmatprep.subr.mxu0 0.0
          %1437 = vmatpush1.msra.mxu0 0.0
          %1438 = vmatprep.subr.mxu0 0.0
          %1439 = vmatpush1.msra.mxu0 0.0
          %1440 = vmatprep.subr.mxu0 0.0
          %1441 = vmatpush1.msra.mxu0 0.0
          %1442 = vmatprep.subr.mxu0 0.0
          %1443 = vmatpush1.msra.mxu0 0.0
          %1444 = vmatprep.subr.mxu0 0.0
          %1445 = vmatpush1.msra.mxu0 0.0
          %1446 = vmatprep.subr.mxu0 0.0
          %1447 = vmatpush1.msra.mxu0 0.0
          %1448 = vmatprep.subr.mxu0 0.0
          %1449 = vmatpush1.msra.mxu0 0.0
          %1450 = vmatprep.subr.mxu0 0.0
          %1451 = vmatpush1.msra.mxu0 0.0
          %1452 = vmatprep.subr.mxu0 0.0
          %1453 = vmatpush1.msra.mxu0 0.0
          %1454 = vmatprep.subr.mxu0 0.0
          %1455 = vmatpush1.msra.mxu0 0.0
          %1456 = vmatprep.subr.mxu0 0.0
          %1457 = vmatpush1.msra.mxu0 0.0
          %1458 = vmatprep.subr.mxu0 0.0
          %1459 = vmatpush1.msra.mxu0 0.0
          %1460 = vmatprep.subr.mxu0 0.0
          %1461 = vmatpush1.msra.mxu0 0.0
          %1462 = vmatprep.subr.mxu0 0.0
          %1463 = vmatpush1.msra.mxu0 0.0
          %1464 = vmatprep.subr.mxu0 0.0
          %1465 = vmatpush1.msra.mxu0 0.0
          %1466 = vmatprep.subr.mxu0 0.0
          %1467 = vmatpush1.msra.mxu0 0.0
          %1468 = vmatprep.subr.mxu0 0.0
          %1469 = vmatpush1.msra.mxu0 0.0
          %1470 = vmatprep.subr.mxu0 0.0
          %1471 = vmatpush1.msra.mxu0 0.0
          %1472 = vmatprep.subr.mxu0 0.0
          %1473 = vmatpush1.msra.mxu0 0.0
          %1474 = vmatprep.subr.mxu0 0.0
          %1475 = vmatpush1.msra.mxu0 0.0
          %1476 = vmatprep.subr.mxu0 0.0
          %1477 = vmatpush1.msra.mxu0 0.0
          %1478 = vmatprep.subr.mxu0 0.0
          %1479 = vmatpush1.msra.mxu0 0.0
          %1480 = vmatprep.subr.mxu0 0.0
          %1481 = vmatpush1.msra.mxu0 0.0
          %1482 = vmatprep.subr.mxu0 0.0
          %1483 = vmatpush1.msra.mxu0 0.0
          %1484 = vmatprep.subr.mxu0 0.0
          %1485 = vmatpush1.msra.mxu0 0.0
          %1486 = vmatprep.subr.mxu0 0.0
          %1487 = vmatpush1.msra.mxu0 0.0
          %1488 = vmatprep.subr.mxu0 0.0
          %1489 = vmatpush1.msra.mxu0 0.0
          %1490 = vmatprep.subr.mxu0 0.0
          %1491 = vmatpush1.msra.mxu0 0.0
          %1492 = vmatprep.subr.mxu0 0.0
          %1493 = vmatpush1.msra.mxu0 0.0
          %1494 = vmatprep.subr.mxu0 0.0
          %1495 = vmatpush1.msra.mxu0 0.0
          %1496 = vmatprep.mubr.f32.mxu0 0.0
          %1497 = vmatmul.mubr.f32.gmra.mrb[0].mxu0 %v1430
          %v1498 = vpop.f32.mrb[0].mxu0
          %v1499 = vadd.f32 0.0, %v1498
          %v1500 = vpop.f32.mrb[0].mxu0
          %1501 = vdwg.mxu0
          %v1502 = vadd.f32 %v1424, %v1499
          %v1503 = vld [vmem:[#allocation2 + $0x28] sm:$0xff]
          %v1504 = vld [vmem:[%s811] sm:$0xff]
          %1506 = vrot.lane.b32.xlu0 %v1503, 120
          %v1507 = vpop.permute.xlu0 %1506
          %v1508 = vsel %vm325, %v1507, 0
          %1510 = vmatprep.subr.mxu0 0.0
          %1511 = vmatpush1.msra.mxu0 %v1504
          %1512 = vmatprep.subr.mxu0 0.0
          %1513 = vmatpush1.msra.mxu0 0.0
          %1514 = vmatprep.subr.mxu0 0.0
          %1515 = vmatpush1.msra.mxu0 0.0
          %1516 = vmatprep.subr.mxu0 0.0
          %1517 = vmatpush1.msra.mxu0 0.0
          %1518 = vmatprep.subr.mxu0 0.0
          %1519 = vmatpush1.msra.mxu0 0.0
          %1520 = vmatprep.subr.mxu0 0.0
          %1521 = vmatpush1.msra.mxu0 0.0
          %1522 = vmatprep.subr.mxu0 0.0
          %1523 = vmatpush1.msra.mxu0 0.0
          %1524 = vmatprep.subr.mxu0 0.0
          %1525 = vmatpush1.msra.mxu0 0.0
          %1526 = vmatprep.subr.mxu0 0.0
          %1527 = vmatpush1.msra.mxu0 0.0
          %1528 = vmatprep.subr.mxu0 0.0
          %1529 = vmatpush1.msra.mxu0 0.0
          %1530 = vmatprep.subr.mxu0 0.0
          %1531 = vmatpush1.msra.mxu0 0.0
          %1532 = vmatprep.subr.mxu0 0.0
          %1533 = vmatpush1.msra.mxu0 0.0
          %1534 = vmatprep.subr.mxu0 0.0
          %1535 = vmatpush1.msra.mxu0 0.0
          %1536 = vmatprep.subr.mxu0 0.0
          %1537 = vmatpush1.msra.mxu0 0.0
          %1538 = vmatprep.subr.mxu0 0.0
          %1539 = vmatpush1.msra.mxu0 0.0
          %1540 = vmatprep.subr.mxu0 0.0
          %1541 = vmatpush1.msra.mxu0 0.0
          %1542 = vmatprep.subr.mxu0 0.0
          %1543 = vmatpush1.msra.mxu0 0.0
          %1544 = vmatprep.subr.mxu0 0.0
          %1545 = vmatpush1.msra.mxu0 0.0
          %1546 = vmatprep.subr.mxu0 0.0
          %1547 = vmatpush1.msra.mxu0 0.0
          %1548 = vmatprep.subr.mxu0 0.0
          %1549 = vmatpush1.msra.mxu0 0.0
          %1550 = vmatprep.subr.mxu0 0.0
          %1551 = vmatpush1.msra.mxu0 0.0
          %1552 = vmatprep.subr.mxu0 0.0
          %1553 = vmatpush1.msra.mxu0 0.0
          %1554 = vmatprep.subr.mxu0 0.0
          %1555 = vmatpush1.msra.mxu0 0.0
          %1556 = vmatprep.subr.mxu0 0.0
          %1557 = vmatpush1.msra.mxu0 0.0
          %1558 = vmatprep.subr.mxu0 0.0
          %1559 = vmatpush1.msra.mxu0 0.0
          %1560 = vmatprep.subr.mxu0 0.0
          %1561 = vmatpush1.msra.mxu0 0.0
          %1562 = vmatprep.subr.mxu0 0.0
          %1563 = vmatpush1.msra.mxu0 0.0
          %1564 = vmatprep.subr.mxu0 0.0
          %1565 = vmatpush1.msra.mxu0 0.0
          %1566 = vmatprep.subr.mxu0 0.0
          %1567 = vmatpush1.msra.mxu0 0.0
          %1568 = vmatprep.subr.mxu0 0.0
          %1569 = vmatpush1.msra.mxu0 0.0
          %1570 = vmatprep.subr.mxu0 0.0
          %1571 = vmatpush1.msra.mxu0 0.0
          %1572 = vmatprep.subr.mxu0 0.0
          %1573 = vmatpush1.msra.mxu0 0.0
          %1574 = vmatprep.mubr.f32.mxu0 0.0
          %1575 = vmatmul.mubr.f32.gmra.mrb[0].mxu0 %v1508
          %v1576 = vpop.f32.mrb[0].mxu0
          %v1577 = vadd.f32 0.0, %v1576
          %v1578 = vpop.f32.mrb[0].mxu0
          %1579 = vdwg.mxu0
          %v1580 = vadd.f32 %v1502, %v1577
          %v1581 = vld [vmem:[#allocation2 + $0x30] sm:$0xff]
          %v1582 = vld [vmem:[%s888] sm:$0xff]
          %1584 = vrot.lane.b32.xlu0 %v1581, 120
          %v1585 = vpop.permute.xlu0 %1584
          %v1586 = vsel %vm325, %v1585, 0
          %1588 = vmatprep.subr.mxu0 0.0
          %1589 = vmatpush1.msra.mxu0 %v1582
          %1590 = vmatprep.subr.mxu0 0.0
          %1591 = vmatpush1.msra.mxu0 0.0
          %1592 = vmatprep.subr.mxu0 0.0
          %1593 = vmatpush1.msra.mxu0 0.0
          %1594 = vmatprep.subr.mxu0 0.0
          %1595 = vmatpush1.msra.mxu0 0.0
          %1596 = vmatprep.subr.mxu0 0.0
          %1597 = vmatpush1.msra.mxu0 0.0
          %1598 = vmatprep.subr.mxu0 0.0
          %1599 = vmatpush1.msra.mxu0 0.0
          %1600 = vmatprep.subr.mxu0 0.0
          %1601 = vmatpush1.msra.mxu0 0.0
          %1602 = vmatprep.subr.mxu0 0.0
          %1603 = vmatpush1.msra.mxu0 0.0
          %1604 = vmatprep.subr.mxu0 0.0
          %1605 = vmatpush1.msra.mxu0 0.0
          %1606 = vmatprep.subr.mxu0 0.0
          %1607 = vmatpush1.msra.mxu0 0.0
          %1608 = vmatprep.subr.mxu0 0.0
          %1609 = vmatpush1.msra.mxu0 0.0
          %1610 = vmatprep.subr.mxu0 0.0
          %1611 = vmatpush1.msra.mxu0 0.0
          %1612 = vmatprep.subr.mxu0 0.0
          %1613 = vmatpush1.msra.mxu0 0.0
          %1614 = vmatprep.subr.mxu0 0.0
          %1615 = vmatpush1.msra.mxu0 0.0
          %1616 = vmatprep.subr.mxu0 0.0
          %1617 = vmatpush1.msra.mxu0 0.0
          %1618 = vmatprep.subr.mxu0 0.0
          %1619 = vmatpush1.msra.mxu0 0.0
          %1620 = vmatprep.subr.mxu0 0.0
          %1621 = vmatpush1.msra.mxu0 0.0
          %1622 = vmatprep.subr.mxu0 0.0
          %1623 = vmatpush1.msra.mxu0 0.0
          %1624 = vmatprep.subr.mxu0 0.0
          %1625 = vmatpush1.msra.mxu0 0.0
          %1626 = vmatprep.subr.mxu0 0.0
          %1627 = vmatpush1.msra.mxu0 0.0
          %1628 = vmatprep.subr.mxu0 0.0
          %1629 = vmatpush1.msra.mxu0 0.0
          %1630 = vmatprep.subr.mxu0 0.0
          %1631 = vmatpush1.msra.mxu0 0.0
          %1632 = vmatprep.subr.mxu0 0.0
          %1633 = vmatpush1.msra.mxu0 0.0
          %1634 = vmatprep.subr.mxu0 0.0
          %1635 = vmatpush1.msra.mxu0 0.0
          %1636 = vmatprep.subr.mxu0 0.0
          %1637 = vmatpush1.msra.mxu0 0.0
          %1638 = vmatprep.subr.mxu0 0.0
          %1639 = vmatpush1.msra.mxu0 0.0
          %1640 = vmatprep.subr.mxu0 0.0
          %1641 = vmatpush1.msra.mxu0 0.0
          %1642 = vmatprep.subr.mxu0 0.0
          %1643 = vmatpush1.msra.mxu0 0.0
          %1644 = vmatprep.subr.mxu0 0.0
          %1645 = vmatpush1.msra.mxu0 0.0
          %1646 = vmatprep.subr.mxu0 0.0
          %1647 = vmatpush1.msra.mxu0 0.0
          %1648 = vmatprep.subr.mxu0 0.0
          %1649 = vmatpush1.msra.mxu0 0.0
          %1650 = vmatprep.subr.mxu0 0.0
          %1651 = vmatpush1.msra.mxu0 0.0
          %1652 = vmatprep.mubr.f32.mxu0 0.0
          %1653 = vmatmul.mubr.f32.gmra.mrb[0].mxu0 %v1586
          %v1654 = vpop.f32.mrb[0].mxu0
          %v1655 = vadd.f32 0.0, %v1654
          %v1656 = vpop.f32.mrb[0].mxu0
          %1657 = vdwg.mxu0
          %v1658 = vadd.f32 %v1580, %v1655
          %v1659 = vld [vmem:[#allocation2 + $0x38] sm:$0xff]
          %v1660 = vld [vmem:[%s965] sm:$0xff]
          %1662 = vrot.lane.b32.xlu0 %v1659, 120
          %v1663 = vpop.permute.xlu0 %1662
          %v1664 = vsel %vm325, %v1663, 0
          %1666 = vmatprep.subr.mxu0 0.0
          %1667 = vmatpush1.msra.mxu0 %v1660
          %1668 = vmatprep.subr.mxu0 0.0
          %1669 = vmatpush1.msra.mxu0 0.0
          %1670 = vmatprep.subr.mxu0 0.0
          %1671 = vmatpush1.msra.mxu0 0.0
          %1672 = vmatprep.subr.mxu0 0.0
          %1673 = vmatpush1.msra.mxu0 0.0
          %1674 = vmatprep.subr.mxu0 0.0
          %1675 = vmatpush1.msra.mxu0 0.0
          %1676 = vmatprep.subr.mxu0 0.0
          %1677 = vmatpush1.msra.mxu0 0.0
          %1678 = vmatprep.subr.mxu0 0.0
          %1679 = vmatpush1.msra.mxu0 0.0
          %1680 = vmatprep.subr.mxu0 0.0
          %1681 = vmatpush1.msra.mxu0 0.0
          %1682 = vmatprep.subr.mxu0 0.0
          %1683 = vmatpush1.msra.mxu0 0.0
          %1684 = vmatprep.subr.mxu0 0.0
          %1685 = vmatpush1.msra.mxu0 0.0
          %1686 = vmatprep.subr.mxu0 0.0
          %1687 = vmatpush1.msra.mxu0 0.0
          %1688 = vmatprep.subr.mxu0 0.0
          %1689 = vmatpush1.msra.mxu0 0.0
          %1690 = vmatprep.subr.mxu0 0.0
          %1691 = vmatpush1.msra.mxu0 0.0
          %1692 = vmatprep.subr.mxu0 0.0
          %1693 = vmatpush1.msra.mxu0 0.0
          %1694 = vmatprep.subr.mxu0 0.0
          %1695 = vmatpush1.msra.mxu0 0.0
          %1696 = vmatprep.subr.mxu0 0.0
          %1697 = vmatpush1.msra.mxu0 0.0
          %1698 = vmatprep.subr.mxu0 0.0
          %1699 = vmatpush1.msra.mxu0 0.0
          %1700 = vmatprep.subr.mxu0 0.0
          %1701 = vmatpush1.msra.mxu0 0.0
          %1702 = vmatprep.subr.mxu0 0.0
          %1703 = vmatpush1.msra.mxu0 0.0
          %1704 = vmatprep.subr.mxu0 0.0
          %1705 = vmatpush1.msra.mxu0 0.0
          %1706 = vmatprep.subr.mxu0 0.0
          %1707 = vmatpush1.msra.mxu0 0.0
          %1708 = vmatprep.subr.mxu0 0.0
          %1709 = vmatpush1.msra.mxu0 0.0
          %1710 = vmatprep.subr.mxu0 0.0
          %1711 = vmatpush1.msra.mxu0 0.0
          %1712 = vmatprep.subr.mxu0 0.0
          %1713 = vmatpush1.msra.mxu0 0.0
          %1714 = vmatprep.subr.mxu0 0.0
          %1715 = vmatpush1.msra.mxu0 0.0
          %1716 = vmatprep.subr.mxu0 0.0
          %1717 = vmatpush1.msra.mxu0 0.0
          %1718 = vmatprep.subr.mxu0 0.0
          %1719 = vmatpush1.msra.mxu0 0.0
          %1720 = vmatprep.subr.mxu0 0.0
          %1721 = vmatpush1.msra.mxu0 0.0
          %1722 = vmatprep.subr.mxu0 0.0
          %1723 = vmatpush1.msra.mxu0 0.0
          %1724 = vmatprep.subr.mxu0 0.0
          %1725 = vmatpush1.msra.mxu0 0.0
          %1726 = vmatprep.subr.mxu0 0.0
          %1727 = vmatpush1.msra.mxu0 0.0
          %1728 = vmatprep.subr.mxu0 0.0
          %1729 = vmatpush1.msra.mxu0 0.0
          %1730 = vmatprep.mubr.f32.mxu0 0.0
          %1731 = vmatmul.mubr.f32.gmra.mrb[0].mxu0 %v1664
          %v1732 = vpop.f32.mrb[0].mxu0
          %v1733 = vadd.f32 0.0, %v1732
          %v1734 = vpop.f32.mrb[0].mxu0
          %1735 = vdwg.mxu0
          %v1736 = vadd.f32 %v1658, %v1733
          %v1737 = vadd.f32 %v1736, %v1045
          %v1739 = vcombine.high %v1737, %v1737
          %v1741 = vunpack.c.l.s4 1966171168
          %v1742 = vunpack.c.0.s8 %v1741
          %v1743 = vlaneseq
          %v1744 = vshrl.u32 %v1743, 7
          %v1745 = vsub.s32 %v1742, %v1744
          %v1746 = vrot.slane %v1737, %v1745
          %v1748 = vunpack.c.l.s4 1966171168
          %v1749 = vunpack.c.0.s8 %v1748
          %v1750 = vlaneseq
          %v1751 = vshrl.u32 %v1750, 7
          %v1752 = vsub.s32 %v1749, %v1751
          %v1753 = vrot.slane %v1739, %v1752
          %v1754 = vcombine.high %v1746, %v1746
          %v1755 = vcombine.high %v1753, %v1753
          %v1757 = vunpack.c.l.s4 1966171168
          %v1758 = vunpack.c.0.s8 %v1757
          %v1759 = vlaneseq
          %v1760 = vshrl.u32 %v1759, 7
          %v1761 = vsub.s32 %v1758, %v1760
          %v1762 = vrot.slane %v1746, %v1761
          %v1764 = vunpack.c.l.s4 1966171168
          %v1765 = vunpack.c.0.s8 %v1764
          %v1766 = vlaneseq
          %v1767 = vshrl.u32 %v1766, 7
          %v1768 = vsub.s32 %v1765, %v1767
          %v1769 = vrot.slane %v1753, %v1768
          %v1771 = vunpack.c.l.s4 1966171168
          %v1772 = vunpack.c.0.s8 %v1771
          %v1773 = vlaneseq
          %v1774 = vshrl.u32 %v1773, 7
          %v1775 = vsub.s32 %v1772, %v1774
          %v1776 = vrot.slane %v1754, %v1775
          %v1778 = vunpack.c.l.s4 1966171168
          %v1779 = vunpack.c.0.s8 %v1778
          %v1780 = vlaneseq
          %v1781 = vshrl.u32 %v1780, 7
          %v1782 = vsub.s32 %v1779, %v1781
          %v1783 = vrot.slane %v1755, %v1782
          %v1784 = vcombine.high %v1762, %v1762
          %v1785 = vcombine.high %v1769, %v1769
          %v1786 = vcombine.high %v1776, %v1776
          %v1787 = vcombine.high %v1783, %v1783
          %1796 = vst.msk [vmem:[%s263 + $0x1] sm:$0x1] %vm1106, %v1762
          %1797 = vst.msk [vmem:[%s263 + $0x9] sm:$0x1] %vm1106, %v1776
          %1798 = vst.msk [vmem:[%s263 + $0x11] sm:$0x1] %vm1106, %v1784
          %1799 = vst.msk [vmem:[%s263 + $0x19] sm:$0x1] %vm1106, %v1786
          %1800 = vst.msk [vmem:[%s263 + $0x21] sm:$0x1] %vm1106, %v1769
          %1801 = vst.msk [vmem:[%s263 + $0x29] sm:$0x1] %vm1106, %v1783
          %1802 = vst.msk [vmem:[%s263 + $0x31] sm:$0x1] %vm1106, %v1785
          %1803 = vst.msk [vmem:[%s263 + $0x39] sm:$0x1] %vm1106, %v1787
          %v1804 = vld [vmem:[#allocation2] sm:$0xff]
          %v1805 = vld [vmem:[%s2] sm:$0xff]
          %v1806 = vld [vmem:[#allocation2 + $0x8] sm:$0xff]
          %v1807 = vld [vmem:[%s431] sm:$0xff]
          %1809 = vrot.lane.b32.xlu0 %v1806, 112
          %v1810 = vpop.permute.xlu0 %1809
          %v1811 = vsel %vm325, %v1810, 0
          %1813 = vmatprep.subr.mxu0 0.0
          %1814 = vmatpush1.msra.mxu0 %v1807
          %1815 = vmatprep.subr.mxu0 0.0
          %1816 = vmatpush1.msra.mxu0 0.0
          %1817 = vmatprep.subr.mxu0 0.0
          %1818 = vmatpush1.msra.mxu0 0.0
          %1819 = vmatprep.subr.mxu0 0.0
          %1820 = vmatpush1.msra.mxu0 0.0
          %1821 = vmatprep.subr.mxu0 0.0
          %1822 = vmatpush1.msra.mxu0 0.0
          %1823 = vmatprep.subr.mxu0 0.0
          %1824 = vmatpush1.msra.mxu0 0.0
          %1825 = vmatprep.subr.mxu0 0.0
          %1826 = vmatpush1.msra.mxu0 0.0
          %1827 = vmatprep.subr.mxu0 0.0
          %1828 = vmatpush1.msra.mxu0 0.0
          %1829 = vmatprep.subr.mxu0 0.0
          %1830 = vmatpush1.msra.mxu0 0.0
          %1831 = vmatprep.subr.mxu0 0.0
          %1832 = vmatpush1.msra.mxu0 0.0
          %1833 = vmatprep.subr.mxu0 0.0
          %1834 = vmatpush1.msra.mxu0 0.0
          %1835 = vmatprep.subr.mxu0 0.0
          %1836 = vmatpush1.msra.mxu0 0.0
          %1837 = vmatprep.subr.mxu0 0.0
          %1838 = vmatpush1.msra.mxu0 0.0
          %1839 = vmatprep.subr.mxu0 0.0
          %1840 = vmatpush1.msra.mxu0 0.0
          %1841 = vmatprep.subr.mxu0 0.0
          %1842 = vmatpush1.msra.mxu0 0.0
          %1843 = vmatprep.subr.mxu0 0.0
          %1844 = vmatpush1.msra.mxu0 0.0
          %1845 = vmatprep.subr.mxu0 0.0
          %1846 = vmatpush1.msra.mxu0 0.0
          %1847 = vmatprep.subr.mxu0 0.0
          %1848 = vmatpush1.msra.mxu0 0.0
          %1849 = vmatprep.subr.mxu0 0.0
          %1850 = vmatpush1.msra.mxu0 0.0
          %1851 = vmatprep.subr.mxu0 0.0
          %1852 = vmatpush1.msra.mxu0 0.0
          %1853 = vmatprep.subr.mxu0 0.0
          %1854 = vmatpush1.msra.mxu0 0.0
          %1855 = vmatprep.subr.mxu0 0.0
          %1856 = vmatpush1.msra.mxu0 0.0
          %1857 = vmatprep.subr.mxu0 0.0
          %1858 = vmatpush1.msra.mxu0 0.0
          %1859 = vmatprep.subr.mxu0 0.0
          %1860 = vmatpush1.msra.mxu0 0.0
          %1861 = vmatprep.subr.mxu0 0.0
          %1862 = vmatpush1.msra.mxu0 0.0
          %1863 = vmatprep.subr.mxu0 0.0
          %1864 = vmatpush1.msra.mxu0 0.0
          %1865 = vmatprep.subr.mxu0 0.0
          %1866 = vmatpush1.msra.mxu0 0.0
          %1867 = vmatprep.subr.mxu0 0.0
          %1868 = vmatpush1.msra.mxu0 0.0
          %1869 = vmatprep.subr.mxu0 0.0
          %1870 = vmatpush1.msra.mxu0 0.0
          %1871 = vmatprep.subr.mxu0 0.0
          %1872 = vmatpush1.msra.mxu0 0.0
          %1873 = vmatprep.subr.mxu0 0.0
          %1874 = vmatpush1.msra.mxu0 0.0
          %1875 = vmatprep.subr.mxu0 0.0
          %1876 = vmatpush1.msra.mxu0 0.0
          %1877 = vmatprep.mubr.f32.mxu0 0.0
          %1878 = vmatmul.mubr.f32.gmra.mrb[0].mxu0 %v1811
          %v1879 = vpop.f32.mrb[0].mxu0
          %v1880 = vadd.f32 0.0, %v1879
          %v1881 = vpop.f32.mrb[0].mxu0
          %1882 = vdwg.mxu0
          %1884 = vrot.lane.b32.xlu0 %v1804, 112
          %v1885 = vpop.permute.xlu0 %1884
          %v1886 = vsel %vm325, %v1885, 0
          %1888 = vmatprep.subr.mxu0 0.0
          %1889 = vmatpush1.msra.mxu0 %v1805
          %1890 = vmatprep.subr.mxu0 0.0
          %1891 = vmatpush1.msra.mxu0 0.0
          %1892 = vmatprep.subr.mxu0 0.0
          %1893 = vmatpush1.msra.mxu0 0.0
          %1894 = vmatprep.subr.mxu0 0.0
          %1895 = vmatpush1.msra.mxu0 0.0
          %1896 = vmatprep.subr.mxu0 0.0
          %1897 = vmatpush1.msra.mxu0 0.0
          %1898 = vmatprep.subr.mxu0 0.0
          %1899 = vmatpush1.msra.mxu0 0.0
          %1900 = vmatprep.subr.mxu0 0.0
          %1901 = vmatpush1.msra.mxu0 0.0
          %1902 = vmatprep.subr.mxu0 0.0
          %1903 = vmatpush1.msra.mxu0 0.0
          %1904 = vmatprep.subr.mxu0 0.0
          %1905 = vmatpush1.msra.mxu0 0.0
          %1906 = vmatprep.subr.mxu0 0.0
          %1907 = vmatpush1.msra.mxu0 0.0
          %1908 = vmatprep.subr.mxu0 0.0
          %1909 = vmatpush1.msra.mxu0 0.0
          %1910 = vmatprep.subr.mxu0 0.0
          %1911 = vmatpush1.msra.mxu0 0.0
          %1912 = vmatprep.subr.mxu0 0.0
          %1913 = vmatpush1.msra.mxu0 0.0
          %1914 = vmatprep.subr.mxu0 0.0
          %1915 = vmatpush1.msra.mxu0 0.0
          %1916 = vmatprep.subr.mxu0 0.0
          %1917 = vmatpush1.msra.mxu0 0.0
          %1918 = vmatprep.subr.mxu0 0.0
          %1919 = vmatpush1.msra.mxu0 0.0
          %1920 = vmatprep.subr.mxu0 0.0
          %1921 = vmatpush1.msra.mxu0 0.0
          %1922 = vmatprep.subr.mxu0 0.0
          %1923 = vmatpush1.msra.mxu0 0.0
          %1924 = vmatprep.subr.mxu0 0.0
          %1925 = vmatpush1.msra.mxu0 0.0
          %1926 = vmatprep.subr.mxu0 0.0
          %1927 = vmatpush1.msra.mxu0 0.0
          %1928 = vmatprep.subr.mxu0 0.0
          %1929 = vmatpush1.msra.mxu0 0.0
          %1930 = vmatprep.subr.mxu0 0.0
          %1931 = vmatpush1.msra.mxu0 0.0
          %1932 = vmatprep.subr.mxu0 0.0
          %1933 = vmatpush1.msra.mxu0 0.0
          %1934 = vmatprep.subr.mxu0 0.0
          %1935 = vmatpush1.msra.mxu0 0.0
          %1936 = vmatprep.subr.mxu0 0.0
          %1937 = vmatpush1.msra.mxu0 0.0
          %1938 = vmatprep.subr.mxu0 0.0
          %1939 = vmatpush1.msra.mxu0 0.0
          %1940 = vmatprep.subr.mxu0 0.0
          %1941 = vmatpush1.msra.mxu0 0.0
          %1942 = vmatprep.subr.mxu0 0.0
          %1943 = vmatpush1.msra.mxu0 0.0
          %1944 = vmatprep.subr.mxu0 0.0
          %1945 = vmatpush1.msra.mxu0 0.0
          %1946 = vmatprep.subr.mxu0 0.0
          %1947 = vmatpush1.msra.mxu0 0.0
          %1948 = vmatprep.subr.mxu0 0.0
          %1949 = vmatpush1.msra.mxu0 0.0
          %1950 = vmatprep.subr.mxu0 0.0
          %1951 = vmatpush1.msra.mxu0 0.0
          %1952 = vmatprep.mubr.f32.mxu0 0.0
          %1953 = vmatmul.mubr.f32.gmra.mrb[0].mxu0 %v1886
          %v1954 = vpop.f32.mrb[0].mxu0
          %v1955 = vadd.f32 %v1880, %v1954
          %v1956 = vpop.f32.mrb[0].mxu0
          %1957 = vdwg.mxu0
          %v1958 = vld [vmem:[#allocation2 + $0x10] sm:$0xff]
          %v1959 = vld [vmem:[%s580] sm:$0xff]
          %1961 = vrot.lane.b32.xlu0 %v1958, 112
          %v1962 = vpop.permute.xlu0 %1961
          %v1963 = vsel %vm325, %v1962, 0
          %1965 = vmatprep.subr.mxu0 0.0
          %1966 = vmatpush1.msra.mxu0 %v1959
          %1967 = vmatprep.subr.mxu0 0.0
          %1968 = vmatpush1.msra.mxu0 0.0
          %1969 = vmatprep.subr.mxu0 0.0
          %1970 = vmatpush1.msra.mxu0 0.0
          %1971 = vmatprep.subr.mxu0 0.0
          %1972 = vmatpush1.msra.mxu0 0.0
          %1973 = vmatprep.subr.mxu0 0.0
          %1974 = vmatpush1.msra.mxu0 0.0
          %1975 = vmatprep.subr.mxu0 0.0
          %1976 = vmatpush1.msra.mxu0 0.0
          %1977 = vmatprep.subr.mxu0 0.0
          %1978 = vmatpush1.msra.mxu0 0.0
          %1979 = vmatprep.subr.mxu0 0.0
          %1980 = vmatpush1.msra.mxu0 0.0
          %1981 = vmatprep.subr.mxu0 0.0
          %1982 = vmatpush1.msra.mxu0 0.0
          %1983 = vmatprep.subr.mxu0 0.0
          %1984 = vmatpush1.msra.mxu0 0.0
          %1985 = vmatprep.subr.mxu0 0.0
          %1986 = vmatpush1.msra.mxu0 0.0
          %1987 = vmatprep.subr.mxu0 0.0
          %1988 = vmatpush1.msra.mxu0 0.0
          %1989 = vmatprep.subr.mxu0 0.0
          %1990 = vmatpush1.msra.mxu0 0.0
          %1991 = vmatprep.subr.mxu0 0.0
          %1992 = vmatpush1.msra.mxu0 0.0
          %1993 = vmatprep.subr.mxu0 0.0
          %1994 = vmatpush1.msra.mxu0 0.0
          %1995 = vmatprep.subr.mxu0 0.0
          %1996 = vmatpush1.msra.mxu0 0.0
          %1997 = vmatprep.subr.mxu0 0.0
          %1998 = vmatpush1.msra.mxu0 0.0
          %1999 = vmatprep.subr.mxu0 0.0
          %2000 = vmatpush1.msra.mxu0 0.0
          %2001 = vmatprep.subr.mxu0 0.0
          %2002 = vmatpush1.msra.mxu0 0.0
          %2003 = vmatprep.subr.mxu0 0.0
          %2004 = vmatpush1.msra.mxu0 0.0
          %2005 = vmatprep.subr.mxu0 0.0
          %2006 = vmatpush1.msra.mxu0 0.0
          %2007 = vmatprep.subr.mxu0 0.0
          %2008 = vmatpush1.msra.mxu0 0.0
          %2009 = vmatprep.subr.mxu0 0.0
          %2010 = vmatpush1.msra.mxu0 0.0
          %2011 = vmatprep.subr.mxu0 0.0
          %2012 = vmatpush1.msra.mxu0 0.0
          %2013 = vmatprep.subr.mxu0 0.0
          %2014 = vmatpush1.msra.mxu0 0.0
          %2015 = vmatprep.subr.mxu0 0.0
          %2016 = vmatpush1.msra.mxu0 0.0
          %2017 = vmatprep.subr.mxu0 0.0
          %2018 = vmatpush1.msra.mxu0 0.0
          %2019 = vmatprep.subr.mxu0 0.0
          %2020 = vmatpush1.msra.mxu0 0.0
          %2021 = vmatprep.subr.mxu0 0.0
          %2022 = vmatpush1.msra.mxu0 0.0
          %2023 = vmatprep.subr.mxu0 0.0
          %2024 = vmatpush1.msra.mxu0 0.0
          %2025 = vmatprep.subr.mxu0 0.0
          %2026 = vmatpush1.msra.mxu0 0.0
          %2027 = vmatprep.subr.mxu0 0.0
          %2028 = vmatpush1.msra.mxu0 0.0
          %2029 = vmatprep.mubr.f32.mxu0 0.0
          %2030 = vmatmul.mubr.f32.gmra.mrb[0].mxu0 %v1963
          %v2031 = vpop.f32.mrb[0].mxu0
          %v2032 = vadd.f32 0.0, %v2031
          %v2033 = vpop.f32.mrb[0].mxu0
          %2034 = vdwg.mxu0
          %v2035 = vadd.f32 %v1955, %v2032
          %v2036 = vld [vmem:[#allocation2 + $0x18] sm:$0xff]
          %v2037 = vld [vmem:[%s657] sm:$0xff]
          %2039 = vrot.lane.b32.xlu0 %v2036, 112
          %v2040 = vpop.permute.xlu0 %2039
          %v2041 = vsel %vm325, %v2040, 0
          %2043 = vmatprep.subr.mxu0 0.0
          %2044 = vmatpush1.msra.mxu0 %v2037
          %2045 = vmatprep.subr.mxu0 0.0
          %2046 = vmatpush1.msra.mxu0 0.0
          %2047 = vmatprep.subr.mxu0 0.0
          %2048 = vmatpush1.msra.mxu0 0.0
          %2049 = vmatprep.subr.mxu0 0.0
          %2050 = vmatpush1.msra.mxu0 0.0
          %2051 = vmatprep.subr.mxu0 0.0
          %2052 = vmatpush1.msra.mxu0 0.0
          %2053 = vmatprep.subr.mxu0 0.0
          %2054 = vmatpush1.msra.mxu0 0.0
          %2055 = vmatprep.subr.mxu0 0.0
          %2056 = vmatpush1.msra.mxu0 0.0
          %2057 = vmatprep.subr.mxu0 0.0
          %2058 = vmatpush1.msra.mxu0 0.0
          %2059 = vmatprep.subr.mxu0 0.0
          %2060 = vmatpush1.msra.mxu0 0.0
          %2061 = vmatprep.subr.mxu0 0.0
          %2062 = vmatpush1.msra.mxu0 0.0
          %2063 = vmatprep.subr.mxu0 0.0
          %2064 = vmatpush1.msra.mxu0 0.0
          %2065 = vmatprep.subr.mxu0 0.0
          %2066 = vmatpush1.msra.mxu0 0.0
          %2067 = vmatprep.subr.mxu0 0.0
          %2068 = vmatpush1.msra.mxu0 0.0
          %2069 = vmatprep.subr.mxu0 0.0
          %2070 = vmatpush1.msra.mxu0 0.0
          %2071 = vmatprep.subr.mxu0 0.0
          %2072 = vmatpush1.msra.mxu0 0.0
          %2073 = vmatprep.subr.mxu0 0.0
          %2074 = vmatpush1.msra.mxu0 0.0
          %2075 = vmatprep.subr.mxu0 0.0
          %2076 = vmatpush1.msra.mxu0 0.0
          %2077 = vmatprep.subr.mxu0 0.0
          %2078 = vmatpush1.msra.mxu0 0.0
          %2079 = vmatprep.subr.mxu0 0.0
          %2080 = vmatpush1.msra.mxu0 0.0
          %2081 = vmatprep.subr.mxu0 0.0
          %2082 = vmatpush1.msra.mxu0 0.0
          %2083 = vmatprep.subr.mxu0 0.0
          %2084 = vmatpush1.msra.mxu0 0.0
          %2085 = vmatprep.subr.mxu0 0.0
          %2086 = vmatpush1.msra.mxu0 0.0
          %2087 = vmatprep.subr.mxu0 0.0
          %2088 = vmatpush1.msra.mxu0 0.0
          %2089 = vmatprep.subr.mxu0 0.0
          %2090 = vmatpush1.msra.mxu0 0.0
          %2091 = vmatprep.subr.mxu0 0.0
          %2092 = vmatpush1.msra.mxu0 0.0
          %2093 = vmatprep.subr.mxu0 0.0
          %2094 = vmatpush1.msra.mxu0 0.0
          %2095 = vmatprep.subr.mxu0 0.0
          %2096 = vmatpush1.msra.mxu0 0.0
          %2097 = vmatprep.subr.mxu0 0.0
          %2098 = vmatpush1.msra.mxu0 0.0
          %2099 = vmatprep.subr.mxu0 0.0
          %2100 = vmatpush1.msra.mxu0 0.0
          %2101 = vmatprep.subr.mxu0 0.0
          %2102 = vmatpush1.msra.mxu0 0.0
          %2103 = vmatprep.subr.mxu0 0.0
          %2104 = vmatpush1.msra.mxu0 0.0
          %2105 = vmatprep.subr.mxu0 0.0
          %2106 = vmatpush1.msra.mxu0 0.0
          %2107 = vmatprep.mubr.f32.mxu0 0.0
          %2108 = vmatmul.mubr.f32.gmra.mrb[0].mxu0 %v2041
          %v2109 = vpop.f32.mrb[0].mxu0
          %v2110 = vadd.f32 0.0, %v2109
          %v2111 = vpop.f32.mrb[0].mxu0
          %2112 = vdwg.mxu0
          %v2113 = vadd.f32 %v2035, %v2110
          %v2114 = vld [vmem:[#allocation2 + $0x20] sm:$0xff]
          %v2115 = vld [vmem:[%s734] sm:$0xff]
          %2117 = vrot.lane.b32.xlu0 %v2114, 112
          %v2118 = vpop.permute.xlu0 %2117
          %v2119 = vsel %vm325, %v2118, 0
          %2121 = vmatprep.subr.mxu0 0.0
          %2122 = vmatpush1.msra.mxu0 %v2115
          %2123 = vmatprep.subr.mxu0 0.0
          %2124 = vmatpush1.msra.mxu0 0.0
          %2125 = vmatprep.subr.mxu0 0.0
          %2126 = vmatpush1.msra.mxu0 0.0
          %2127 = vmatprep.subr.mxu0 0.0
          %2128 = vmatpush1.msra.mxu0 0.0
          %2129 = vmatprep.subr.mxu0 0.0
          %2130 = vmatpush1.msra.mxu0 0.0
          %2131 = vmatprep.subr.mxu0 0.0
          %2132 = vmatpush1.msra.mxu0 0.0
          %2133 = vmatprep.subr.mxu0 0.0
          %2134 = vmatpush1.msra.mxu0 0.0
          %2135 = vmatprep.subr.mxu0 0.0
          %2136 = vmatpush1.msra.mxu0 0.0
          %2137 = vmatprep.subr.mxu0 0.0
          %2138 = vmatpush1.msra.mxu0 0.0
          %2139 = vmatprep.subr.mxu0 0.0
          %2140 = vmatpush1.msra.mxu0 0.0
          %2141 = vmatprep.subr.mxu0 0.0
          %2142 = vmatpush1.msra.mxu0 0.0
          %2143 = vmatprep.subr.mxu0 0.0
          %2144 = vmatpush1.msra.mxu0 0.0
          %2145 = vmatprep.subr.mxu0 0.0
          %2146 = vmatpush1.msra.mxu0 0.0
          %2147 = vmatprep.subr.mxu0 0.0
          %2148 = vmatpush1.msra.mxu0 0.0
          %2149 = vmatprep.subr.mxu0 0.0
          %2150 = vmatpush1.msra.mxu0 0.0
          %2151 = vmatprep.subr.mxu0 0.0
          %2152 = vmatpush1.msra.mxu0 0.0
          %2153 = vmatprep.subr.mxu0 0.0
          %2154 = vmatpush1.msra.mxu0 0.0
          %2155 = vmatprep.subr.mxu0 0.0
          %2156 = vmatpush1.msra.mxu0 0.0
          %2157 = vmatprep.subr.mxu0 0.0
          %2158 = vmatpush1.msra.mxu0 0.0
          %2159 = vmatprep.subr.mxu0 0.0
          %2160 = vmatpush1.msra.mxu0 0.0
          %2161 = vmatprep.subr.mxu0 0.0
          %2162 = vmatpush1.msra.mxu0 0.0
          %2163 = vmatprep.subr.mxu0 0.0
          %2164 = vmatpush1.msra.mxu0 0.0
          %2165 = vmatprep.subr.mxu0 0.0
          %2166 = vmatpush1.msra.mxu0 0.0
          %2167 = vmatprep.subr.mxu0 0.0
          %2168 = vmatpush1.msra.mxu0 0.0
          %2169 = vmatprep.subr.mxu0 0.0
          %2170 = vmatpush1.msra.mxu0 0.0
          %2171 = vmatprep.subr.mxu0 0.0
          %2172 = vmatpush1.msra.mxu0 0.0
          %2173 = vmatprep.subr.mxu0 0.0
          %2174 = vmatpush1.msra.mxu0 0.0
          %2175 = vmatprep.subr.mxu0 0.0
          %2176 = vmatpush1.msra.mxu0 0.0
          %2177 = vmatprep.subr.mxu0 0.0
          %2178 = vmatpush1.msra.mxu0 0.0
          %2179 = vmatprep.subr.mxu0 0.0
          %2180 = vmatpush1.msra.mxu0 0.0
          %2181 = vmatprep.subr.mxu0 0.0
          %2182 = vmatpush1.msra.mxu0 0.0
          %2183 = vmatprep.subr.mxu0 0.0
          %2184 = vmatpush1.msra.mxu0 0.0
          %2185 = vmatprep.mubr.f32.mxu0 0.0
          %2186 = vmatmul.mubr.f32.gmra.mrb[0].mxu0 %v2119
          %v2187 = vpop.f32.mrb[0].mxu0
          %v2188 = vadd.f32 0.0, %v2187
          %v2189 = vpop.f32.mrb[0].mxu0
          %2190 = vdwg.mxu0
          %v2191 = vadd.f32 %v2113, %v2188
          %v2192 = vld [vmem:[#allocation2 + $0x28] sm:$0xff]
          %v2193 = vld [vmem:[%s811] sm:$0xff]
          %2195 = vrot.lane.b32.xlu0 %v2192, 112
          %v2196 = vpop.permute.xlu0 %2195
          %v2197 = vsel %vm325, %v2196, 0
          %2199 = vmatprep.subr.mxu0 0.0
          %2200 = vmatpush1.msra.mxu0 %v2193
          %2201 = vmatprep.subr.mxu0 0.0
          %2202 = vmatpush1.msra.mxu0 0.0
          %2203 = vmatprep.subr.mxu0 0.0
          %2204 = vmatpush1.msra.mxu0 0.0
          %2205 = vmatprep.subr.mxu0 0.0
          %2206 = vmatpush1.msra.mxu0 0.0
          %2207 = vmatprep.subr.mxu0 0.0
          %2208 = vmatpush1.msra.mxu0 0.0
          %2209 = vmatprep.subr.mxu0 0.0
          %2210 = vmatpush1.msra.mxu0 0.0
          %2211 = vmatprep.subr.mxu0 0.0
          %2212 = vmatpush1.msra.mxu0 0.0
          %2213 = vmatprep.subr.mxu0 0.0
          %2214 = vmatpush1.msra.mxu0 0.0
          %2215 = vmatprep.subr.mxu0 0.0
          %2216 = vmatpush1.msra.mxu0 0.0
          %2217 = vmatprep.subr.mxu0 0.0
          %2218 = vmatpush1.msra.mxu0 0.0
          %2219 = vmatprep.subr.mxu0 0.0
          %2220 = vmatpush1.msra.mxu0 0.0
          %2221 = vmatprep.subr.mxu0 0.0
          %2222 = vmatpush1.msra.mxu0 0.0
          %2223 = vmatprep.subr.mxu0 0.0
          %2224 = vmatpush1.msra.mxu0 0.0
          %2225 = vmatprep.subr.mxu0 0.0
          %2226 = vmatpush1.msra.mxu0 0.0
          %2227 = vmatprep.subr.mxu0 0.0
          %2228 = vmatpush1.msra.mxu0 0.0
          %2229 = vmatprep.subr.mxu0 0.0
          %2230 = vmatpush1.msra.mxu0 0.0
          %2231 = vmatprep.subr.mxu0 0.0
          %2232 = vmatpush1.msra.mxu0 0.0
          %2233 = vmatprep.subr.mxu0 0.0
          %2234 = vmatpush1.msra.mxu0 0.0
          %2235 = vmatprep.subr.mxu0 0.0
          %2236 = vmatpush1.msra.mxu0 0.0
          %2237 = vmatprep.subr.mxu0 0.0
          %2238 = vmatpush1.msra.mxu0 0.0
          %2239 = vmatprep.subr.mxu0 0.0
          %2240 = vmatpush1.msra.mxu0 0.0
          %2241 = vmatprep.subr.mxu0 0.0
          %2242 = vmatpush1.msra.mxu0 0.0
          %2243 = vmatprep.subr.mxu0 0.0
          %2244 = vmatpush1.msra.mxu0 0.0
          %2245 = vmatprep.subr.mxu0 0.0
          %2246 = vmatpush1.msra.mxu0 0.0
          %2247 = vmatprep.subr.mxu0 0.0
          %2248 = vmatpush1.msra.mxu0 0.0
          %2249 = vmatprep.subr.mxu0 0.0
          %2250 = vmatpush1.msra.mxu0 0.0
          %2251 = vmatprep.subr.mxu0 0.0
          %2252 = vmatpush1.msra.mxu0 0.0
          %2253 = vmatprep.subr.mxu0 0.0
          %2254 = vmatpush1.msra.mxu0 0.0
          %2255 = vmatprep.subr.mxu0 0.0
          %2256 = vmatpush1.msra.mxu0 0.0
          %2257 = vmatprep.subr.mxu0 0.0
          %2258 = vmatpush1.msra.mxu0 0.0
          %2259 = vmatprep.subr.mxu0 0.0
          %2260 = vmatpush1.msra.mxu0 0.0
          %2261 = vmatprep.subr.mxu0 0.0
          %2262 = vmatpush1.msra.mxu0 0.0
          %2263 = vmatprep.mubr.f32.mxu0 0.0
          %2264 = vmatmul.mubr.f32.gmra.mrb[0].mxu0 %v2197
          %v2265 = vpop.f32.mrb[0].mxu0
          %v2266 = vadd.f32 0.0, %v2265
          %v2267 = vpop.f32.mrb[0].mxu0
          %2268 = vdwg.mxu0
          %v2269 = vadd.f32 %v2191, %v2266
          %v2270 = vld [vmem:[#allocation2 + $0x30] sm:$0xff]
          %v2271 = vld [vmem:[%s888] sm:$0xff]
          %2273 = vrot.lane.b32.xlu0 %v2270, 112
          %v2274 = vpop.permute.xlu0 %2273
          %v2275 = vsel %vm325, %v2274, 0
          %2277 = vmatprep.subr.mxu0 0.0
          %2278 = vmatpush1.msra.mxu0 %v2271
          %2279 = vmatprep.subr.mxu0 0.0
          %2280 = vmatpush1.msra.mxu0 0.0
          %2281 = vmatprep.subr.mxu0 0.0
          %2282 = vmatpush1.msra.mxu0 0.0
          %2283 = vmatprep.subr.mxu0 0.0
          %2284 = vmatpush1.msra.mxu0 0.0
          %2285 = vmatprep.subr.mxu0 0.0
          %2286 = vmatpush1.msra.mxu0 0.0
          %2287 = vmatprep.subr.mxu0 0.0
          %2288 = vmatpush1.msra.mxu0 0.0
          %2289 = vmatprep.subr.mxu0 0.0
          %2290 = vmatpush1.msra.mxu0 0.0
          %2291 = vmatprep.subr.mxu0 0.0
          %2292 = vmatpush1.msra.mxu0 0.0
          %2293 = vmatprep.subr.mxu0 0.0
          %2294 = vmatpush1.msra.mxu0 0.0
          %2295 = vmatprep.subr.mxu0 0.0
          %2296 = vmatpush1.msra.mxu0 0.0
          %2297 = vmatprep.subr.mxu0 0.0
          %2298 = vmatpush1.msra.mxu0 0.0
          %2299 = vmatprep.subr.mxu0 0.0
          %2300 = vmatpush1.msra.mxu0 0.0
          %2301 = vmatprep.subr.mxu0 0.0
          %2302 = vmatpush1.msra.mxu0 0.0
          %2303 = vmatprep.subr.mxu0 0.0
          %2304 = vmatpush1.msra.mxu0 0.0
          %2305 = vmatprep.subr.mxu0 0.0
          %2306 = vmatpush1.msra.mxu0 0.0
          %2307 = vmatprep.subr.mxu0 0.0
          %2308 = vmatpush1.msra.mxu0 0.0
          %2309 = vmatprep.subr.mxu0 0.0
          %2310 = vmatpush1.msra.mxu0 0.0
          %2311 = vmatprep.subr.mxu0 0.0
          %2312 = vmatpush1.msra.mxu0 0.0
          %2313 = vmatprep.subr.mxu0 0.0
          %2314 = vmatpush1.msra.mxu0 0.0
          %2315 = vmatprep.subr.mxu0 0.0
          %2316 = vmatpush1.msra.mxu0 0.0
          %2317 = vmatprep.subr.mxu0 0.0
          %2318 = vmatpush1.msra.mxu0 0.0
          %2319 = vmatprep.subr.mxu0 0.0
          %2320 = vmatpush1.msra.mxu0 0.0
          %2321 = vmatprep.subr.mxu0 0.0
          %2322 = vmatpush1.msra.mxu0 0.0
          %2323 = vmatprep.subr.mxu0 0.0
          %2324 = vmatpush1.msra.mxu0 0.0
          %2325 = vmatprep.subr.mxu0 0.0
          %2326 = vmatpush1.msra.mxu0 0.0
          %2327 = vmatprep.subr.mxu0 0.0
          %2328 = vmatpush1.msra.mxu0 0.0
          %2329 = vmatprep.subr.mxu0 0.0
          %2330 = vmatpush1.msra.mxu0 0.0
          %2331 = vmatprep.subr.mxu0 0.0
          %2332 = vmatpush1.msra.mxu0 0.0
          %2333 = vmatprep.subr.mxu0 0.0
          %2334 = vmatpush1.msra.mxu0 0.0
          %2335 = vmatprep.subr.mxu0 0.0
          %2336 = vmatpush1.msra.mxu0 0.0
          %2337 = vmatprep.subr.mxu0 0.0
          %2338 = vmatpush1.msra.mxu0 0.0
          %2339 = vmatprep.subr.mxu0 0.0
          %2340 = vmatpush1.msra.mxu0 0.0
          %2341 = vmatprep.mubr.f32.mxu0 0.0
          %2342 = vmatmul.mubr.f32.gmra.mrb[0].mxu0 %v2275
          %v2343 = vpop.f32.mrb[0].mxu0
          %v2344 = vadd.f32 0.0, %v2343
          %v2345 = vpop.f32.mrb[0].mxu0
          %2346 = vdwg.mxu0
          %v2347 = vadd.f32 %v2269, %v2344
          %v2348 = vld [vmem:[#allocation2 + $0x38] sm:$0xff]
          %v2349 = vld [vmem:[%s965] sm:$0xff]
          %2351 = vrot.lane.b32.xlu0 %v2348, 112
          %v2352 = vpop.permute.xlu0 %2351
          %v2353 = vsel %vm325, %v2352, 0
          %2355 = vmatprep.subr.mxu0 0.0
          %2356 = vmatpush1.msra.mxu0 %v2349
          %2357 = vmatprep.subr.mxu0 0.0
          %2358 = vmatpush1.msra.mxu0 0.0
          %2359 = vmatprep.subr.mxu0 0.0
          %2360 = vmatpush1.msra.mxu0 0.0
          %2361 = vmatprep.subr.mxu0 0.0
          %2362 = vmatpush1.msra.mxu0 0.0
          %2363 = vmatprep.subr.mxu0 0.0
          %2364 = vmatpush1.msra.mxu0 0.0
          %2365 = vmatprep.subr.mxu0 0.0
          %2366 = vmatpush1.msra.mxu0 0.0
          %2367 = vmatprep.subr.mxu0 0.0
          %2368 = vmatpush1.msra.mxu0 0.0
          %2369 = vmatprep.subr.mxu0 0.0
          %2370 = vmatpush1.msra.mxu0 0.0
          %2371 = vmatprep.subr.mxu0 0.0
          %2372 = vmatpush1.msra.mxu0 0.0
          %2373 = vmatprep.subr.mxu0 0.0
          %2374 = vmatpush1.msra.mxu0 0.0
          %2375 = vmatprep.subr.mxu0 0.0
          %2376 = vmatpush1.msra.mxu0 0.0
          %2377 = vmatprep.subr.mxu0 0.0
          %2378 = vmatpush1.msra.mxu0 0.0
          %2379 = vmatprep.subr.mxu0 0.0
          %2380 = vmatpush1.msra.mxu0 0.0
          %2381 = vmatprep.subr.mxu0 0.0
          %2382 = vmatpush1.msra.mxu0 0.0
          %2383 = vmatprep.subr.mxu0 0.0
          %2384 = vmatpush1.msra.mxu0 0.0
          %2385 = vmatprep.subr.mxu0 0.0
          %2386 = vmatpush1.msra.mxu0 0.0
          %2387 = vmatprep.subr.mxu0 0.0
          %2388 = vmatpush1.msra.mxu0 0.0
          %2389 = vmatprep.subr.mxu0 0.0
          %2390 = vmatpush1.msra.mxu0 0.0
          %2391 = vmatprep.subr.mxu0 0.0
          %2392 = vmatpush1.msra.mxu0 0.0
          %2393 = vmatprep.subr.mxu0 0.0
          %2394 = vmatpush1.msra.mxu0 0.0
          %2395 = vmatprep.subr.mxu0 0.0
          %2396 = vmatpush1.msra.mxu0 0.0
          %2397 = vmatprep.subr.mxu0 0.0
          %2398 = vmatpush1.msra.mxu0 0.0
          %2399 = vmatprep.subr.mxu0 0.0
          %2400 = vmatpush1.msra.mxu0 0.0
          %2401 = vmatprep.subr.mxu0 0.0
          %2402 = vmatpush1.msra.mxu0 0.0
          %2403 = vmatprep.subr.mxu0 0.0
          %2404 = vmatpush1.msra.mxu0 0.0
          %2405 = vmatprep.subr.mxu0 0.0
          %2406 = vmatpush1.msra.mxu0 0.0
          %2407 = vmatprep.subr.mxu0 0.0
          %2408 = vmatpush1.msra.mxu0 0.0
          %2409 = vmatprep.subr.mxu0 0.0
          %2410 = vmatpush1.msra.mxu0 0.0
          %2411 = vmatprep.subr.mxu0 0.0
          %2412 = vmatpush1.msra.mxu0 0.0
          %2413 = vmatprep.subr.mxu0 0.0
          %2414 = vmatpush1.msra.mxu0 0.0
          %2415 = vmatprep.subr.mxu0 0.0
          %2416 = vmatpush1.msra.mxu0 0.0
          %2417 = vmatprep.subr.mxu0 0.0
          %2418 = vmatpush1.msra.mxu0 0.0
          %2419 = vmatprep.mubr.f32.mxu0 0.0
          %2420 = vmatmul.mubr.f32.gmra.mrb[0].mxu0 %v2353
          %v2421 = vpop.f32.mrb[0].mxu0
          %v2422 = vadd.f32 0.0, %v2421
          %v2423 = vpop.f32.mrb[0].mxu0
          %2424 = vdwg.mxu0
          %v2425 = vadd.f32 %v2347, %v2422
          %v2426 = vadd.f32 %v2425, %v1045
          %v2428 = vcombine.high %v2426, %v2426
          %v2430 = vunpack.c.l.s4 1966171168
          %v2431 = vunpack.c.0.s8 %v2430
          %v2432 = vlaneseq
          %v2433 = vshrl.u32 %v2432, 7
          %v2434 = vsub.s32 %v2431, %v2433
          %v2435 = vrot.slane %v2426, %v2434
          %v2437 = vunpack.c.l.s4 1966171168
          %v2438 = vunpack.c.0.s8 %v2437
          %v2439 = vlaneseq
          %v2440 = vshrl.u32 %v2439, 7
          %v2441 = vsub.s32 %v2438, %v2440
          %v2442 = vrot.slane %v2428, %v2441
          %v2443 = vcombine.high %v2435, %v2435
          %v2444 = vcombine.high %v2442, %v2442
          %v2446 = vunpack.c.l.s4 1966171168
          %v2447 = vunpack.c.0.s8 %v2446
          %v2448 = vlaneseq
          %v2449 = vshrl.u32 %v2448, 7
          %v2450 = vsub.s32 %v2447, %v2449
          %v2451 = vrot.slane %v2435, %v2450
          %v2453 = vunpack.c.l.s4 1966171168
          %v2454 = vunpack.c.0.s8 %v2453
          %v2455 = vlaneseq
          %v2456 = vshrl.u32 %v2455, 7
          %v2457 = vsub.s32 %v2454, %v2456
          %v2458 = vrot.slane %v2442, %v2457
          %v2460 = vunpack.c.l.s4 1966171168
          %v2461 = vunpack.c.0.s8 %v2460
          %v2462 = vlaneseq
          %v2463 = vshrl.u32 %v2462, 7
          %v2464 = vsub.s32 %v2461, %v2463
          %v2465 = vrot.slane %v2443, %v2464
          %v2467 = vunpack.c.l.s4 1966171168
          %v2468 = vunpack.c.0.s8 %v2467
          %v2469 = vlaneseq
          %v2470 = vshrl.u32 %v2469, 7
          %v2471 = vsub.s32 %v2468, %v2470
          %v2472 = vrot.slane %v2444, %v2471
          %v2473 = vcombine.high %v2451, %v2451
          %v2474 = vcombine.high %v2458, %v2458
          %v2475 = vcombine.high %v2465, %v2465
          %v2476 = vcombine.high %v2472, %v2472
          %2485 = vst.msk [vmem:[%s263 + $0x2] sm:$0x1] %vm1106, %v2451
          %2486 = vst.msk [vmem:[%s263 + $0xa] sm:$0x1] %vm1106, %v2465
          %2487 = vst.msk [vmem:[%s263 + $0x12] sm:$0x1] %vm1106, %v2473
          %2488 = vst.msk [vmem:[%s263 + $0x1a] sm:$0x1] %vm1106, %v2475
          %2489 = vst.msk [vmem:[%s263 + $0x22] sm:$0x1] %vm1106, %v2458
          %2490 = vst.msk [vmem:[%s263 + $0x2a] sm:$0x1] %vm1106, %v2472
          %2491 = vst.msk [vmem:[%s263 + $0x32] sm:$0x1] %vm1106, %v2474
          %2492 = vst.msk [vmem:[%s263 + $0x3a] sm:$0x1] %vm1106, %v2476
          %v2493 = vld [vmem:[#allocation2] sm:$0xff]
          %v2494 = vld [vmem:[%s2] sm:$0xff]
          %v2495 = vld [vmem:[#allocation2 + $0x8] sm:$0xff]
          %v2496 = vld [vmem:[%s431] sm:$0xff]
          %2498 = vrot.lane.b32.xlu0 %v2495, 104
          %v2499 = vpop.permute.xlu0 %2498
          %v2500 = vsel %vm325, %v2499, 0
          %2502 = vmatprep.subr.mxu0 0.0
          %2503 = vmatpush1.msra.mxu0 %v2496
          %2504 = vmatprep.subr.mxu0 0.0
          %2505 = vmatpush1.msra.mxu0 0.0
          %2506 = vmatprep.subr.mxu0 0.0
          %2507 = vmatpush1.msra.mxu0 0.0
          %2508 = vmatprep.subr.mxu0 0.0
          %2509 = vmatpush1.msra.mxu0 0.0
          %2510 = vmatprep.subr.mxu0 0.0
          %2511 = vmatpush1.msra.mxu0 0.0
          %2512 = vmatprep.subr.mxu0 0.0
          %2513 = vmatpush1.msra.mxu0 0.0
          %2514 = vmatprep.subr.mxu0 0.0
          %2515 = vmatpush1.msra.mxu0 0.0
          %2516 = vmatprep.subr.mxu0 0.0
          %2517 = vmatpush1.msra.mxu0 0.0
          %2518 = vmatprep.subr.mxu0 0.0
          %2519 = vmatpush1.msra.mxu0 0.0
          %2520 = vmatprep.subr.mxu0 0.0
          %2521 = vmatpush1.msra.mxu0 0.0
          %2522 = vmatprep.subr.mxu0 0.0
          %2523 = vmatpush1.msra.mxu0 0.0
          %2524 = vmatprep.subr.mxu0 0.0
          %2525 = vmatpush1.msra.mxu0 0.0
          %2526 = vmatprep.subr.mxu0 0.0
          %2527 = vmatpush1.msra.mxu0 0.0
          %2528 = vmatprep.subr.mxu0 0.0
          %2529 = vmatpush1.msra.mxu0 0.0
          %2530 = vmatprep.subr.mxu0 0.0
          %2531 = vmatpush1.msra.mxu0 0.0
          %2532 = vmatprep.subr.mxu0 0.0
          %2533 = vmatpush1.msra.mxu0 0.0
          %2534 = vmatprep.subr.mxu0 0.0
          %2535 = vmatpush1.msra.mxu0 0.0
          %2536 = vmatprep.subr.mxu0 0.0
          %2537 = vmatpush1.msra.mxu0 0.0
          %2538 = vmatprep.subr.mxu0 0.0
          %2539 = vmatpush1.msra.mxu0 0.0
          %2540 = vmatprep.subr.mxu0 0.0
          %2541 = vmatpush1.msra.mxu0 0.0
          %2542 = vmatprep.subr.mxu0 0.0
          %2543 = vmatpush1.msra.mxu0 0.0
          %2544 = vmatprep.subr.mxu0 0.0
          %2545 = vmatpush1.msra.mxu0 0.0
          %2546 = vmatprep.subr.mxu0 0.0
          %2547 = vmatpush1.msra.mxu0 0.0
          %2548 = vmatprep.subr.mxu0 0.0
          %2549 = vmatpush1.msra.mxu0 0.0
          %2550 = vmatprep.subr.mxu0 0.0
          %2551 = vmatpush1.msra.mxu0 0.0
          %2552 = vmatprep.subr.mxu0 0.0
          %2553 = vmatpush1.msra.mxu0 0.0
          %2554 = vmatprep.subr.mxu0 0.0
          %2555 = vmatpush1.msra.mxu0 0.0
          %2556 = vmatprep.subr.mxu0 0.0
          %2557 = vmatpush1.msra.mxu0 0.0
          %2558 = vmatprep.subr.mxu0 0.0
          %2559 = vmatpush1.msra.mxu0 0.0
          %2560 = vmatprep.subr.mxu0 0.0
          %2561 = vmatpush1.msra.mxu0 0.0
          %2562 = vmatprep.subr.mxu0 0.0
          %2563 = vmatpush1.msra.mxu0 0.0
          %2564 = vmatprep.subr.mxu0 0.0
          %2565 = vmatpush1.msra.mxu0 0.0
          %2566 = vmatprep.mubr.f32.mxu0 0.0
          %2567 = vmatmul.mubr.f32.gmra.mrb[0].mxu0 %v2500
          %v2568 = vpop.f32.mrb[0].mxu0
          %v2569 = vadd.f32 0.0, %v2568
          %v2570 = vpop.f32.mrb[0].mxu0
          %2571 = vdwg.mxu0
          %2573 = vrot.lane.b32.xlu0 %v2493, 104
          %v2574 = vpop.permute.xlu0 %2573
          %v2575 = vsel %vm325, %v2574, 0
          %2577 = vmatprep.subr.mxu0 0.0
          %2578 = vmatpush1.msra.mxu0 %v2494
          %2579 = vmatprep.subr.mxu0 0.0
          %2580 = vmatpush1.msra.mxu0 0.0
          %2581 = vmatprep.subr.mxu0 0.0
          %2582 = vmatpush1.msra.mxu0 0.0
          %2583 = vmatprep.subr.mxu0 0.0
          %2584 = vmatpush1.msra.mxu0 0.0
          %2585 = vmatprep.subr.mxu0 0.0
          %2586 = vmatpush1.msra.mxu0 0.0
          %2587 = vmatprep.subr.mxu0 0.0
          %2588 = vmatpush1.msra.mxu0 0.0
          %2589 = vmatprep.subr.mxu0 0.0
          %2590 = vmatpush1.msra.mxu0 0.0
          %2591 = vmatprep.subr.mxu0 0.0
          %2592 = vmatpush1.msra.mxu0 0.0
          %2593 = vmatprep.subr.mxu0 0.0
          %2594 = vmatpush1.msra.mxu0 0.0
          %2595 = vmatprep.subr.mxu0 0.0
          %2596 = vmatpush1.msra.mxu0 0.0
          %2597 = vmatprep.subr.mxu0 0.0
          %2598 = vmatpush1.msra.mxu0 0.0
          %2599 = vmatprep.subr.mxu0 0.0
          %2600 = vmatpush1.msra.mxu0 0.0
          %2601 = vmatprep.subr.mxu0 0.0
          %2602 = vmatpush1.msra.mxu0 0.0
          %2603 = vmatprep.subr.mxu0 0.0
          %2604 = vmatpush1.msra.mxu0 0.0
          %2605 = vmatprep.subr.mxu0 0.0
          %2606 = vmatpush1.msra.mxu0 0.0
          %2607 = vmatprep.subr.mxu0 0.0
          %2608 = vmatpush1.msra.mxu0 0.0
          %2609 = vmatprep.subr.mxu0 0.0
          %2610 = vmatpush1.msra.mxu0 0.0
          %2611 = vmatprep.subr.mxu0 0.0
          %2612 = vmatpush1.msra.mxu0 0.0
          %2613 = vmatprep.subr.mxu0 0.0
          %2614 = vmatpush1.msra.mxu0 0.0
          %2615 = vmatprep.subr.mxu0 0.0
          %2616 = vmatpush1.msra.mxu0 0.0
          %2617 = vmatprep.subr.mxu0 0.0
          %2618 = vmatpush1.msra.mxu0 0.0
          %2619 = vmatprep.subr.mxu0 0.0
          %2620 = vmatpush1.msra.mxu0 0.0
          %2621 = vmatprep.subr.mxu0 0.0
          %2622 = vmatpush1.msra.mxu0 0.0
          %2623 = vmatprep.subr.mxu0 0.0
          %2624 = vmatpush1.msra.mxu0 0.0
          %2625 = vmatprep.subr.mxu0 0.0
          %2626 = vmatpush1.msra.mxu0 0.0
          %2627 = vmatprep.subr.mxu0 0.0
          %2628 = vmatpush1.msra.mxu0 0.0
          %2629 = vmatprep.subr.mxu0 0.0
          %2630 = vmatpush1.msra.mxu0 0.0
          %2631 = vmatprep.subr.mxu0 0.0
          %2632 = vmatpush1.msra.mxu0 0.0
          %2633 = vmatprep.subr.mxu0 0.0
          %2634 = vmatpush1.msra.mxu0 0.0
          %2635 = vmatprep.subr.mxu0 0.0
          %2636 = vmatpush1.msra.mxu0 0.0
          %2637 = vmatprep.subr.mxu0 0.0
          %2638 = vmatpush1.msra.mxu0 0.0
          %2639 = vmatprep.subr.mxu0 0.0
          %2640 = vmatpush1.msra.mxu0 0.0
          %2641 = vmatprep.mubr.f32.mxu0 0.0
          %2642 = vmatmul.mubr.f32.gmra.mrb[0].mxu0 %v2575
          %v2643 = vpop.f32.mrb[0].mxu0
          %v2644 = vadd.f32 %v2569, %v2643
          %v2645 = vpop.f32.mrb[0].mxu0
          %2646 = vdwg.mxu0
          %v2647 = vld [vmem:[#allocation2 + $0x10] sm:$0xff]
          %v2648 = vld [vmem:[%s580] sm:$0xff]
          %2650 = vrot.lane.b32.xlu0 %v2647, 104
          %v2651 = vpop.permute.xlu0 %2650
          %v2652 = vsel %vm325, %v2651, 0
          %2654 = vmatprep.subr.mxu0 0.0
          %2655 = vmatpush1.msra.mxu0 %v2648
          %2656 = vmatprep.subr.mxu0 0.0
          %2657 = vmatpush1.msra.mxu0 0.0
          %2658 = vmatprep.subr.mxu0 0.0
          %2659 = vmatpush1.msra.mxu0 0.0
          %2660 = vmatprep.subr.mxu0 0.0
          %2661 = vmatpush1.msra.mxu0 0.0
          %2662 = vmatprep.subr.mxu0 0.0
          %2663 = vmatpush1.msra.mxu0 0.0
          %2664 = vmatprep.subr.mxu0 0.0
          %2665 = vmatpush1.msra.mxu0 0.0
          %2666 = vmatprep.subr.mxu0 0.0
          %2667 = vmatpush1.msra.mxu0 0.0
          %2668 = vmatprep.subr.mxu0 0.0
          %2669 = vmatpush1.msra.mxu0 0.0
          %2670 = vmatprep.subr.mxu0 0.0
          %2671 = vmatpush1.msra.mxu0 0.0
          %2672 = vmatprep.subr.mxu0 0.0
          %2673 = vmatpush1.msra.mxu0 0.0
          %2674 = vmatprep.subr.mxu0 0.0
          %2675 = vmatpush1.msra.mxu0 0.0
          %2676 = vmatprep.subr.mxu0 0.0
          %2677 = vmatpush1.msra.mxu0 0.0
          %2678 = vmatprep.subr.mxu0 0.0
          %2679 = vmatpush1.msra.mxu0 0.0
          %2680 = vmatprep.subr.mxu0 0.0
          %2681 = vmatpush1.msra.mxu0 0.0
          %2682 = vmatprep.subr.mxu0 0.0
          %2683 = vmatpush1.msra.mxu0 0.0
          %2684 = vmatprep.subr.mxu0 0.0
          %2685 = vmatpush1.msra.mxu0 0.0
          %2686 = vmatprep.subr.mxu0 0.0
          %2687 = vmatpush1.msra.mxu0 0.0
          %2688 = vmatprep.subr.mxu0 0.0
          %2689 = vmatpush1.msra.mxu0 0.0
          %2690 = vmatprep.subr.mxu0 0.0
          %2691 = vmatpush1.msra.mxu0 0.0
          %2692 = vmatprep.subr.mxu0 0.0
          %2693 = vmatpush1.msra.mxu0 0.0
          %2694 = vmatprep.subr.mxu0 0.0
          %2695 = vmatpush1.msra.mxu0 0.0
          %2696 = vmatprep.subr.mxu0 0.0
          %2697 = vmatpush1.msra.mxu0 0.0
          %2698 = vmatprep.subr.mxu0 0.0
          %2699 = vmatpush1.msra.mxu0 0.0
          %2700 = vmatprep.subr.mxu0 0.0
          %2701 = vmatpush1.msra.mxu0 0.0
          %2702 = vmatprep.subr.mxu0 0.0
          %2703 = vmatpush1.msra.mxu0 0.0
          %2704 = vmatprep.subr.mxu0 0.0
          %2705 = vmatpush1.msra.mxu0 0.0
          %2706 = vmatprep.subr.mxu0 0.0
          %2707 = vmatpush1.msra.mxu0 0.0
          %2708 = vmatprep.subr.mxu0 0.0
          %2709 = vmatpush1.msra.mxu0 0.0
          %2710 = vmatprep.subr.mxu0 0.0
          %2711 = vmatpush1.msra.mxu0 0.0
          %2712 = vmatprep.subr.mxu0 0.0
          %2713 = vmatpush1.msra.mxu0 0.0
          %2714 = vmatprep.subr.mxu0 0.0
          %2715 = vmatpush1.msra.mxu0 0.0
          %2716 = vmatprep.subr.mxu0 0.0
          %2717 = vmatpush1.msra.mxu0 0.0
          %2718 = vmatprep.mubr.f32.mxu0 0.0
          %2719 = vmatmul.mubr.f32.gmra.mrb[0].mxu0 %v2652
          %v2720 = vpop.f32.mrb[0].mxu0
          %v2721 = vadd.f32 0.0, %v2720
          %v2722 = vpop.f32.mrb[0].mxu0
          %2723 = vdwg.mxu0
          %v2724 = vadd.f32 %v2644, %v2721
          %v2725 = vld [vmem:[#allocation2 + $0x18] sm:$0xff]
          %v2726 = vld [vmem:[%s657] sm:$0xff]
          %2728 = vrot.lane.b32.xlu0 %v2725, 104
          %v2729 = vpop.permute.xlu0 %2728
          %v2730 = vsel %vm325, %v2729, 0
          %2732 = vmatprep.subr.mxu0 0.0
          %2733 = vmatpush1.msra.mxu0 %v2726
          %2734 = vmatprep.subr.mxu0 0.0
          %2735 = vmatpush1.msra.mxu0 0.0
          %2736 = vmatprep.subr.mxu0 0.0
          %2737 = vmatpush1.msra.mxu0 0.0
          %2738 = vmatprep.subr.mxu0 0.0
          %2739 = vmatpush1.msra.mxu0 0.0
          %2740 = vmatprep.subr.mxu0 0.0
          %2741 = vmatpush1.msra.mxu0 0.0
          %2742 = vmatprep.subr.mxu0 0.0
          %2743 = vmatpush1.msra.mxu0 0.0
          %2744 = vmatprep.subr.mxu0 0.0
          %2745 = vmatpush1.msra.mxu0 0.0
          %2746 = vmatprep.subr.mxu0 0.0
          %2747 = vmatpush1.msra.mxu0 0.0
          %2748 = vmatprep.subr.mxu0 0.0
          %2749 = vmatpush1.msra.mxu0 0.0
          %2750 = vmatprep.subr.mxu0 0.0
          %2751 = vmatpush1.msra.mxu0 0.0
          %2752 = vmatprep.subr.mxu0 0.0
          %2753 = vmatpush1.msra.mxu0 0.0
          %2754 = vmatprep.subr.mxu0 0.0
          %2755 = vmatpush1.msra.mxu0 0.0
          %2756 = vmatprep.subr.mxu0 0.0
          %2757 = vmatpush1.msra.mxu0 0.0
          %2758 = vmatprep.subr.mxu0 0.0
          %2759 = vmatpush1.msra.mxu0 0.0
          %2760 = vmatprep.subr.mxu0 0.0
          %2761 = vmatpush1.msra.mxu0 0.0
          %2762 = vmatprep.subr.mxu0 0.0
          %2763 = vmatpush1.msra.mxu0 0.0
          %2764 = vmatprep.subr.mxu0 0.0
          %2765 = vmatpush1.msra.mxu0 0.0
          %2766 = vmatprep.subr.mxu0 0.0
          %2767 = vmatpush1.msra.mxu0 0.0
          %2768 = vmatprep.subr.mxu0 0.0
          %2769 = vmatpush1.msra.mxu0 0.0
          %2770 = vmatprep.subr.mxu0 0.0
          %2771 = vmatpush1.msra.mxu0 0.0
          %2772 = vmatprep.subr.mxu0 0.0
          %2773 = vmatpush1.msra.mxu0 0.0
          %2774 = vmatprep.subr.mxu0 0.0
          %2775 = vmatpush1.msra.mxu0 0.0
          %2776 = vmatprep.subr.mxu0 0.0
          %2777 = vmatpush1.msra.mxu0 0.0
          %2778 = vmatprep.subr.mxu0 0.0
          %2779 = vmatpush1.msra.mxu0 0.0
          %2780 = vmatprep.subr.mxu0 0.0
          %2781 = vmatpush1.msra.mxu0 0.0
          %2782 = vmatprep.subr.mxu0 0.0
          %2783 = vmatpush1.msra.mxu0 0.0
          %2784 = vmatprep.subr.mxu0 0.0
          %2785 = vmatpush1.msra.mxu0 0.0
          %2786 = vmatprep.subr.mxu0 0.0
          %2787 = vmatpush1.msra.mxu0 0.0
          %2788 = vmatprep.subr.mxu0 0.0
          %2789 = vmatpush1.msra.mxu0 0.0
          %2790 = vmatprep.subr.mxu0 0.0
          %2791 = vmatpush1.msra.mxu0 0.0
          %2792 = vmatprep.subr.mxu0 0.0
          %2793 = vmatpush1.msra.mxu0 0.0
          %2794 = vmatprep.subr.mxu0 0.0
          %2795 = vmatpush1.msra.mxu0 0.0
          %2796 = vmatprep.mubr.f32.mxu0 0.0
          %2797 = vmatmul.mubr.f32.gmra.mrb[0].mxu0 %v2730
          %v2798 = vpop.f32.mrb[0].mxu0
          %v2799 = vadd.f32 0.0, %v2798
          %v2800 = vpop.f32.mrb[0].mxu0
          %2801 = vdwg.mxu0
          %v2802 = vadd.f32 %v2724, %v2799
          %v2803 = vld [vmem:[#allocation2 + $0x20] sm:$0xff]
          %v2804 = vld [vmem:[%s734] sm:$0xff]
          %2806 = vrot.lane.b32.xlu0 %v2803, 104
          %v2807 = vpop.permute.xlu0 %2806
          %v2808 = vsel %vm325, %v2807, 0
          %2810 = vmatprep.subr.mxu0 0.0
          %2811 = vmatpush1.msra.mxu0 %v2804
          %2812 = vmatprep.subr.mxu0 0.0
          %2813 = vmatpush1.msra.mxu0 0.0
          %2814 = vmatprep.subr.mxu0 0.0
          %2815 = vmatpush1.msra.mxu0 0.0
          %2816 = vmatprep.subr.mxu0 0.0
          %2817 = vmatpush1.msra.mxu0 0.0
          %2818 = vmatprep.subr.mxu0 0.0
          %2819 = vmatpush1.msra.mxu0 0.0
          %2820 = vmatprep.subr.mxu0 0.0
          %2821 = vmatpush1.msra.mxu0 0.0
          %2822 = vmatprep.subr.mxu0 0.0
          %2823 = vmatpush1.msra.mxu0 0.0
          %2824 = vmatprep.subr.mxu0 0.0
          %2825 = vmatpush1.msra.mxu0 0.0
          %2826 = vmatprep.subr.mxu0 0.0
          %2827 = vmatpush1.msra.mxu0 0.0
          %2828 = vmatprep.subr.mxu0 0.0
          %2829 = vmatpush1.msra.mxu0 0.0
          %2830 = vmatprep.subr.mxu0 0.0
          %2831 = vmatpush1.msra.mxu0 0.0
          %2832 = vmatprep.subr.mxu0 0.0
          %2833 = vmatpush1.msra.mxu0 0.0
          %2834 = vmatprep.subr.mxu0 0.0
          %2835 = vmatpush1.msra.mxu0 0.0
          %2836 = vmatprep.subr.mxu0 0.0
          %2837 = vmatpush1.msra.mxu0 0.0
          %2838 = vmatprep.subr.mxu0 0.0
          %2839 = vmatpush1.msra.mxu0 0.0
          %2840 = vmatprep.subr.mxu0 0.0
          %2841 = vmatpush1.msra.mxu0 0.0
          %2842 = vmatprep.subr.mxu0 0.0
          %2843 = vmatpush1.msra.mxu0 0.0
          %2844 = vmatprep.subr.mxu0 0.0
          %2845 = vmatpush1.msra.mxu0 0.0
          %2846 = vmatprep.subr.mxu0 0.0
          %2847 = vmatpush1.msra.mxu0 0.0
          %2848 = vmatprep.subr.mxu0 0.0
          %2849 = vmatpush1.msra.mxu0 0.0
          %2850 = vmatprep.subr.mxu0 0.0
          %2851 = vmatpush1.msra.mxu0 0.0
          %2852 = vmatprep.subr.mxu0 0.0
          %2853 = vmatpush1.msra.mxu0 0.0
          %2854 = vmatprep.subr.mxu0 0.0
          %2855 = vmatpush1.msra.mxu0 0.0
          %2856 = vmatprep.subr.mxu0 0.0
          %2857 = vmatpush1.msra.mxu0 0.0
          %2858 = vmatprep.subr.mxu0 0.0
          %2859 = vmatpush1.msra.mxu0 0.0
          %2860 = vmatprep.subr.mxu0 0.0
          %2861 = vmatpush1.msra.mxu0 0.0
          %2862 = vmatprep.subr.mxu0 0.0
          %2863 = vmatpush1.msra.mxu0 0.0
          %2864 = vmatprep.subr.mxu0 0.0
          %2865 = vmatpush1.msra.mxu0 0.0
          %2866 = vmatprep.subr.mxu0 0.0
          %2867 = vmatpush1.msra.mxu0 0.0
          %2868 = vmatprep.subr.mxu0 0.0
          %2869 = vmatpush1.msra.mxu0 0.0
          %2870 = vmatprep.subr.mxu0 0.0
          %2871 = vmatpush1.msra.mxu0 0.0
          %2872 = vmatprep.subr.mxu0 0.0
          %2873 = vmatpush1.msra.mxu0 0.0
          %2874 = vmatprep.mubr.f32.mxu0 0.0
          %2875 = vmatmul.mubr.f32.gmra.mrb[0].mxu0 %v2808
          %v2876 = vpop.f32.mrb[0].mxu0
          %v2877 = vadd.f32 0.0, %v2876
          %v2878 = vpop.f32.mrb[0].mxu0
          %2879 = vdwg.mxu0
          %v2880 = vadd.f32 %v2802, %v2877
          %v2881 = vld [vmem:[#allocation2 + $0x28] sm:$0xff]
          %v2882 = vld [vmem:[%s811] sm:$0xff]
          %2884 = vrot.lane.b32.xlu0 %v2881, 104
          %v2885 = vpop.permute.xlu0 %2884
          %v2886 = vsel %vm325, %v2885, 0
          %2888 = vmatprep.subr.mxu0 0.0
          %2889 = vmatpush1.msra.mxu0 %v2882
          %2890 = vmatprep.subr.mxu0 0.0
          %2891 = vmatpush1.msra.mxu0 0.0
          %2892 = vmatprep.subr.mxu0 0.0
          %2893 = vmatpush1.msra.mxu0 0.0
          %2894 = vmatprep.subr.mxu0 0.0
          %2895 = vmatpush1.msra.mxu0 0.0
          %2896 = vmatprep.subr.mxu0 0.0
          %2897 = vmatpush1.msra.mxu0 0.0
          %2898 = vmatprep.subr.mxu0 0.0
          %2899 = vmatpush1.msra.mxu0 0.0
          %2900 = vmatprep.subr.mxu0 0.0
          %2901 = vmatpush1.msra.mxu0 0.0
          %2902 = vmatprep.subr.mxu0 0.0
          %2903 = vmatpush1.msra.mxu0 0.0
          %2904 = vmatprep.subr.mxu0 0.0
          %2905 = vmatpush1.msra.mxu0 0.0
          %2906 = vmatprep.subr.mxu0 0.0
          %2907 = vmatpush1.msra.mxu0 0.0
          %2908 = vmatprep.subr.mxu0 0.0
          %2909 = vmatpush1.msra.mxu0 0.0
          %2910 = vmatprep.subr.mxu0 0.0
          %2911 = vmatpush1.msra.mxu0 0.0
          %2912 = vmatprep.subr.mxu0 0.0
          %2913 = vmatpush1.msra.mxu0 0.0
          %2914 = vmatprep.subr.mxu0 0.0
          %2915 = vmatpush1.msra.mxu0 0.0
          %2916 = vmatprep.subr.mxu0 0.0
          %2917 = vmatpush1.msra.mxu0 0.0
          %2918 = vmatprep.subr.mxu0 0.0
          %2919 = vmatpush1.msra.mxu0 0.0
          %2920 = vmatprep.subr.mxu0 0.0
          %2921 = vmatpush1.msra.mxu0 0.0
          %2922 = vmatprep.subr.mxu0 0.0
          %2923 = vmatpush1.msra.mxu0 0.0
          %2924 = vmatprep.subr.mxu0 0.0
          %2925 = vmatpush1.msra.mxu0 0.0
          %2926 = vmatprep.subr.mxu0 0.0
          %2927 = vmatpush1.msra.mxu0 0.0
          %2928 = vmatprep.subr.mxu0 0.0
          %2929 = vmatpush1.msra.mxu0 0.0
          %2930 = vmatprep.subr.mxu0 0.0
          %2931 = vmatpush1.msra.mxu0 0.0
          %2932 = vmatprep.subr.mxu0 0.0
          %2933 = vmatpush1.msra.mxu0 0.0
          %2934 = vmatprep.subr.mxu0 0.0
          %2935 = vmatpush1.msra.mxu0 0.0
          %2936 = vmatprep.subr.mxu0 0.0
          %2937 = vmatpush1.msra.mxu0 0.0
          %2938 = vmatprep.subr.mxu0 0.0
          %2939 = vmatpush1.msra.mxu0 0.0
          %2940 = vmatprep.subr.mxu0 0.0
          %2941 = vmatpush1.msra.mxu0 0.0
          %2942 = vmatprep.subr.mxu0 0.0
          %2943 = vmatpush1.msra.mxu0 0.0
          %2944 = vmatprep.subr.mxu0 0.0
          %2945 = vmatpush1.msra.mxu0 0.0
          %2946 = vmatprep.subr.mxu0 0.0
          %2947 = vmatpush1.msra.mxu0 0.0
          %2948 = vmatprep.subr.mxu0 0.0
          %2949 = vmatpush1.msra.mxu0 0.0
          %2950 = vmatprep.subr.mxu0 0.0
          %2951 = vmatpush1.msra.mxu0 0.0
          %2952 = vmatprep.mubr.f32.mxu0 0.0
          %2953 = vmatmul.mubr.f32.gmra.mrb[0].mxu0 %v2886
          %v2954 = vpop.f32.mrb[0].mxu0
          %v2955 = vadd.f32 0.0, %v2954
          %v2956 = vpop.f32.mrb[0].mxu0
          %2957 = vdwg.mxu0
          %v2958 = vadd.f32 %v2880, %v2955
          %v2959 = vld [vmem:[#allocation2 + $0x30] sm:$0xff]
          %v2960 = vld [vmem:[%s888] sm:$0xff]
          %2962 = vrot.lane.b32.xlu0 %v2959, 104
          %v2963 = vpop.permute.xlu0 %2962
          %v2964 = vsel %vm325, %v2963, 0
          %2966 = vmatprep.subr.mxu0 0.0
          %2967 = vmatpush1.msra.mxu0 %v2960
          %2968 = vmatprep.subr.mxu0 0.0
          %2969 = vmatpush1.msra.mxu0 0.0
          %2970 = vmatprep.subr.mxu0 0.0
          %2971 = vmatpush1.msra.mxu0 0.0
          %2972 = vmatprep.subr.mxu0 0.0
          %2973 = vmatpush1.msra.mxu0 0.0
          %2974 = vmatprep.subr.mxu0 0.0
          %2975 = vmatpush1.msra.mxu0 0.0
          %2976 = vmatprep.subr.mxu0 0.0
          %2977 = vmatpush1.msra.mxu0 0.0
          %2978 = vmatprep.subr.mxu0 0.0
          %2979 = vmatpush1.msra.mxu0 0.0
          %2980 = vmatprep.subr.mxu0 0.0
          %2981 = vmatpush1.msra.mxu0 0.0
          %2982 = vmatprep.subr.mxu0 0.0
          %2983 = vmatpush1.msra.mxu0 0.0
          %2984 = vmatprep.subr.mxu0 0.0
          %2985 = vmatpush1.msra.mxu0 0.0
          %2986 = vmatprep.subr.mxu0 0.0
          %2987 = vmatpush1.msra.mxu0 0.0
          %2988 = vmatprep.subr.mxu0 0.0
          %2989 = vmatpush1.msra.mxu0 0.0
          %2990 = vmatprep.subr.mxu0 0.0
          %2991 = vmatpush1.msra.mxu0 0.0
          %2992 = vmatprep.subr.mxu0 0.0
          %2993 = vmatpush1.msra.mxu0 0.0
          %2994 = vmatprep.subr.mxu0 0.0
          %2995 = vmatpush1.msra.mxu0 0.0
          %2996 = vmatprep.subr.mxu0 0.0
          %2997 = vmatpush1.msra.mxu0 0.0
          %2998 = vmatprep.subr.mxu0 0.0
          %2999 = vmatpush1.msra.mxu0 0.0
          %3000 = vmatprep.subr.mxu0 0.0
          %3001 = vmatpush1.msra.mxu0 0.0
          %3002 = vmatprep.subr.mxu0 0.0
          %3003 = vmatpush1.msra.mxu0 0.0
          %3004 = vmatprep.subr.mxu0 0.0
          %3005 = vmatpush1.msra.mxu0 0.0
          %3006 = vmatprep.subr.mxu0 0.0
          %3007 = vmatpush1.msra.mxu0 0.0
          %3008 = vmatprep.subr.mxu0 0.0
          %3009 = vmatpush1.msra.mxu0 0.0
          %3010 = vmatprep.subr.mxu0 0.0
          %3011 = vmatpush1.msra.mxu0 0.0
          %3012 = vmatprep.subr.mxu0 0.0
          %3013 = vmatpush1.msra.mxu0 0.0
          %3014 = vmatprep.subr.mxu0 0.0
          %3015 = vmatpush1.msra.mxu0 0.0
          %3016 = vmatprep.subr.mxu0 0.0
          %3017 = vmatpush1.msra.mxu0 0.0
          %3018 = vmatprep.subr.mxu0 0.0
          %3019 = vmatpush1.msra.mxu0 0.0
          %3020 = vmatprep.subr.mxu0 0.0
          %3021 = vmatpush1.msra.mxu0 0.0
          %3022 = vmatprep.subr.mxu0 0.0
          %3023 = vmatpush1.msra.mxu0 0.0
          %3024 = vmatprep.subr.mxu0 0.0
          %3025 = vmatpush1.msra.mxu0 0.0
          %3026 = vmatprep.subr.mxu0 0.0
          %3027 = vmatpush1.msra.mxu0 0.0
          %3028 = vmatprep.subr.mxu0 0.0
          %3029 = vmatpush1.msra.mxu0 0.0
          %3030 = vmatprep.mubr.f32.mxu0 0.0
          %3031 = vmatmul.mubr.f32.gmra.mrb[0].mxu0 %v2964
          %v3032 = vpop.f32.mrb[0].mxu0
          %v3033 = vadd.f32 0.0, %v3032
          %v3034 = vpop.f32.mrb[0].mxu0
          %3035 = vdwg.mxu0
          %v3036 = vadd.f32 %v2958, %v3033
          %v3037 = vld [vmem:[#allocation2 + $0x38] sm:$0xff]
          %v3038 = vld [vmem:[%s965] sm:$0xff]
          %3040 = vrot.lane.b32.xlu0 %v3037, 104
          %v3041 = vpop.permute.xlu0 %3040
          %v3042 = vsel %vm325, %v3041, 0
          %3044 = vmatprep.subr.mxu0 0.0
          %3045 = vmatpush1.msra.mxu0 %v3038
          %3046 = vmatprep.subr.mxu0 0.0
          %3047 = vmatpush1.msra.mxu0 0.0
          %3048 = vmatprep.subr.mxu0 0.0
          %3049 = vmatpush1.msra.mxu0 0.0
          %3050 = vmatprep.subr.mxu0 0.0
          %3051 = vmatpush1.msra.mxu0 0.0
          %3052 = vmatprep.subr.mxu0 0.0
          %3053 = vmatpush1.msra.mxu0 0.0
          %3054 = vmatprep.subr.mxu0 0.0
          %3055 = vmatpush1.msra.mxu0 0.0
          %3056 = vmatprep.subr.mxu0 0.0
          %3057 = vmatpush1.msra.mxu0 0.0
          %3058 = vmatprep.subr.mxu0 0.0
          %3059 = vmatpush1.msra.mxu0 0.0
          %3060 = vmatprep.subr.mxu0 0.0
          %3061 = vmatpush1.msra.mxu0 0.0
          %3062 = vmatprep.subr.mxu0 0.0
          %3063 = vmatpush1.msra.mxu0 0.0
          %3064 = vmatprep.subr.mxu0 0.0
          %3065 = vmatpush1.msra.mxu0 0.0
          %3066 = vmatprep.subr.mxu0 0.0
          %3067 = vmatpush1.msra.mxu0 0.0
          %3068 = vmatprep.subr.mxu0 0.0
          %3069 = vmatpush1.msra.mxu0 0.0
          %3070 = vmatprep.subr.mxu0 0.0
          %3071 = vmatpush1.msra.mxu0 0.0
          %3072 = vmatprep.subr.mxu0 0.0
          %3073 = vmatpush1.msra.mxu0 0.0
          %3074 = vmatprep.subr.mxu0 0.0
          %3075 = vmatpush1.msra.mxu0 0.0
          %3076 = vmatprep.subr.mxu0 0.0
          %3077 = vmatpush1.msra.mxu0 0.0
          %3078 = vmatprep.subr.mxu0 0.0
          %3079 = vmatpush1.msra.mxu0 0.0
          %3080 = vmatprep.subr.mxu0 0.0
          %3081 = vmatpush1.msra.mxu0 0.0
          %3082 = vmatprep.subr.mxu0 0.0
          %3083 = vmatpush1.msra.mxu0 0.0
          %3084 = vmatprep.subr.mxu0 0.0
          %3085 = vmatpush1.msra.mxu0 0.0
          %3086 = vmatprep.subr.mxu0 0.0
          %3087 = vmatpush1.msra.mxu0 0.0
          %3088 = vmatprep.subr.mxu0 0.0
          %3089 = vmatpush1.msra.mxu0 0.0
          %3090 = vmatprep.subr.mxu0 0.0
          %3091 = vmatpush1.msra.mxu0 0.0
          %3092 = vmatprep.subr.mxu0 0.0
          %3093 = vmatpush1.msra.mxu0 0.0
          %3094 = vmatprep.subr.mxu0 0.0
          %3095 = vmatpush1.msra.mxu0 0.0
          %3096 = vmatprep.subr.mxu0 0.0
          %3097 = vmatpush1.msra.mxu0 0.0
          %3098 = vmatprep.subr.mxu0 0.0
          %3099 = vmatpush1.msra.mxu0 0.0
          %3100 = vmatprep.subr.mxu0 0.0
          %3101 = vmatpush1.msra.mxu0 0.0
          %3102 = vmatprep.subr.mxu0 0.0
          %3103 = vmatpush1.msra.mxu0 0.0
          %3104 = vmatprep.subr.mxu0 0.0
          %3105 = vmatpush1.msra.mxu0 0.0
          %3106 = vmatprep.subr.mxu0 0.0
          %3107 = vmatpush1.msra.mxu0 0.0
          %3108 = vmatprep.mubr.f32.mxu0 0.0
          %3109 = vmatmul.mubr.f32.gmra.mrb[0].mxu0 %v3042
          %v3110 = vpop.f32.mrb[0].mxu0
          %v3111 = vadd.f32 0.0, %v3110
          %v3112 = vpop.f32.mrb[0].mxu0
          %3113 = vdwg.mxu0
          %v3114 = vadd.f32 %v3036, %v3111
          %v3115 = vadd.f32 %v3114, %v1045
          %v3117 = vcombine.high %v3115, %v3115
          %v3119 = vunpack.c.l.s4 1966171168
          %v3120 = vunpack.c.0.s8 %v3119
          %v3121 = vlaneseq
          %v3122 = vshrl.u32 %v3121, 7
          %v3123 = vsub.s32 %v3120, %v3122
          %v3124 = vrot.slane %v3115, %v3123
          %v3126 = vunpack.c.l.s4 1966171168
          %v3127 = vunpack.c.0.s8 %v3126
          %v3128 = vlaneseq
          %v3129 = vshrl.u32 %v3128, 7
          %v3130 = vsub.s32 %v3127, %v3129
          %v3131 = vrot.slane %v3117, %v3130
          %v3132 = vcombine.high %v3124, %v3124
          %v3133 = vcombine.high %v3131, %v3131
          %v3135 = vunpack.c.l.s4 1966171168
          %v3136 = vunpack.c.0.s8 %v3135
          %v3137 = vlaneseq
          %v3138 = vshrl.u32 %v3137, 7
          %v3139 = vsub.s32 %v3136, %v3138
          %v3140 = vrot.slane %v3124, %v3139
          %v3142 = vunpack.c.l.s4 1966171168
          %v3143 = vunpack.c.0.s8 %v3142
          %v3144 = vlaneseq
          %v3145 = vshrl.u32 %v3144, 7
          %v3146 = vsub.s32 %v3143, %v3145
          %v3147 = vrot.slane %v3131, %v3146
          %v3149 = vunpack.c.l.s4 1966171168
          %v3150 = vunpack.c.0.s8 %v3149
          %v3151 = vlaneseq
          %v3152 = vshrl.u32 %v3151, 7
          %v3153 = vsub.s32 %v3150, %v3152
          %v3154 = vrot.slane %v3132, %v3153
          %v3156 = vunpack.c.l.s4 1966171168
          %v3157 = vunpack.c.0.s8 %v3156
          %v3158 = vlaneseq
          %v3159 = vshrl.u32 %v3158, 7
          %v3160 = vsub.s32 %v3157, %v3159
          %v3161 = vrot.slane %v3133, %v3160
          %v3162 = vcombine.high %v3140, %v3140
          %v3163 = vcombine.high %v3147, %v3147
          %v3164 = vcombine.high %v3154, %v3154
          %v3165 = vcombine.high %v3161, %v3161
          %3174 = vst.msk [vmem:[%s263 + $0x3] sm:$0x1] %vm1106, %v3140
          %3175 = vst.msk [vmem:[%s263 + $0xb] sm:$0x1] %vm1106, %v3154
          %3176 = vst.msk [vmem:[%s263 + $0x13] sm:$0x1] %vm1106, %v3162
          %3177 = vst.msk [vmem:[%s263 + $0x1b] sm:$0x1] %vm1106, %v3164
          %3178 = vst.msk [vmem:[%s263 + $0x23] sm:$0x1] %vm1106, %v3147
          %3179 = vst.msk [vmem:[%s263 + $0x2b] sm:$0x1] %vm1106, %v3161
          %3180 = vst.msk [vmem:[%s263 + $0x33] sm:$0x1] %vm1106, %v3163
          %3181 = vst.msk [vmem:[%s263 + $0x3b] sm:$0x1] %vm1106, %v3165
          %v3182 = vld [vmem:[#allocation2] sm:$0xff]
          %v3183 = vld [vmem:[%s2] sm:$0xff]
          %v3184 = vld [vmem:[#allocation2 + $0x8] sm:$0xff]
          %v3185 = vld [vmem:[%s431] sm:$0xff]
          %3187 = vrot.lane.b32.xlu0 %v3184, 96
          %v3188 = vpop.permute.xlu0 %3187
          %v3189 = vsel %vm325, %v3188, 0
          %3191 = vmatprep.subr.mxu0 0.0
          %3192 = vmatpush1.msra.mxu0 %v3185
          %3193 = vmatprep.subr.mxu0 0.0
          %3194 = vmatpush1.msra.mxu0 0.0
          %3195 = vmatprep.subr.mxu0 0.0
          %3196 = vmatpush1.msra.mxu0 0.0
          %3197 = vmatprep.subr.mxu0 0.0
          %3198 = vmatpush1.msra.mxu0 0.0
          %3199 = vmatprep.subr.mxu0 0.0
          %3200 = vmatpush1.msra.mxu0 0.0
          %3201 = vmatprep.subr.mxu0 0.0
          %3202 = vmatpush1.msra.mxu0 0.0
          %3203 = vmatprep.subr.mxu0 0.0
          %3204 = vmatpush1.msra.mxu0 0.0
          %3205 = vmatprep.subr.mxu0 0.0
          %3206 = vmatpush1.msra.mxu0 0.0
          %3207 = vmatprep.subr.mxu0 0.0
          %3208 = vmatpush1.msra.mxu0 0.0
          %3209 = vmatprep.subr.mxu0 0.0
          %3210 = vmatpush1.msra.mxu0 0.0
          %3211 = vmatprep.subr.mxu0 0.0
          %3212 = vmatpush1.msra.mxu0 0.0
          %3213 = vmatprep.subr.mxu0 0.0
          %3214 = vmatpush1.msra.mxu0 0.0
          %3215 = vmatprep.subr.mxu0 0.0
          %3216 = vmatpush1.msra.mxu0 0.0
          %3217 = vmatprep.subr.mxu0 0.0
          %3218 = vmatpush1.msra.mxu0 0.0
          %3219 = vmatprep.subr.mxu0 0.0
          %3220 = vmatpush1.msra.mxu0 0.0
          %3221 = vmatprep.subr.mxu0 0.0
          %3222 = vmatpush1.msra.mxu0 0.0
          %3223 = vmatprep.subr.mxu0 0.0
          %3224 = vmatpush1.msra.mxu0 0.0
          %3225 = vmatprep.subr.mxu0 0.0
          %3226 = vmatpush1.msra.mxu0 0.0
          %3227 = vmatprep.subr.mxu0 0.0
          %3228 = vmatpush1.msra.mxu0 0.0
          %3229 = vmatprep.subr.mxu0 0.0
          %3230 = vmatpush1.msra.mxu0 0.0
          %3231 = vmatprep.subr.mxu0 0.0
          %3232 = vmatpush1.msra.mxu0 0.0
          %3233 = vmatprep.subr.mxu0 0.0
          %3234 = vmatpush1.msra.mxu0 0.0
          %3235 = vmatprep.subr.mxu0 0.0
          %3236 = vmatpush1.msra.mxu0 0.0
          %3237 = vmatprep.subr.mxu0 0.0
          %3238 = vmatpush1.msra.mxu0 0.0
          %3239 = vmatprep.subr.mxu0 0.0
          %3240 = vmatpush1.msra.mxu0 0.0
          %3241 = vmatprep.subr.mxu0 0.0
          %3242 = vmatpush1.msra.mxu0 0.0
          %3243 = vmatprep.subr.mxu0 0.0
          %3244 = vmatpush1.msra.mxu0 0.0
          %3245 = vmatprep.subr.mxu0 0.0
          %3246 = vmatpush1.msra.mxu0 0.0
          %3247 = vmatprep.subr.mxu0 0.0
          %3248 = vmatpush1.msra.mxu0 0.0
          %3249 = vmatprep.subr.mxu0 0.0
          %3250 = vmatpush1.msra.mxu0 0.0
          %3251 = vmatprep.subr.mxu0 0.0
          %3252 = vmatpush1.msra.mxu0 0.0
          %3253 = vmatprep.subr.mxu0 0.0
          %3254 = vmatpush1.msra.mxu0 0.0
          %3255 = vmatprep.mubr.f32.mxu0 0.0
          %3256 = vmatmul.mubr.f32.gmra.mrb[0].mxu0 %v3189
          %v3257 = vpop.f32.mrb[0].mxu0
          %v3258 = vadd.f32 0.0, %v3257
          %v3259 = vpop.f32.mrb[0].mxu0
          %3260 = vdwg.mxu0
          %3262 = vrot.lane.b32.xlu0 %v3182, 96
          %v3263 = vpop.permute.xlu0 %3262
          %v3264 = vsel %vm325, %v3263, 0
          %3266 = vmatprep.subr.mxu0 0.0
          %3267 = vmatpush1.msra.mxu0 %v3183
          %3268 = vmatprep.subr.mxu0 0.0
          %3269 = vmatpush1.msra.mxu0 0.0
          %3270 = vmatprep.subr.mxu0 0.0
          %3271 = vmatpush1.msra.mxu0 0.0
          %3272 = vmatprep.subr.mxu0 0.0
          %3273 = vmatpush1.msra.mxu0 0.0
          %3274 = vmatprep.subr.mxu0 0.0
          %3275 = vmatpush1.msra.mxu0 0.0
          %3276 = vmatprep.subr.mxu0 0.0
          %3277 = vmatpush1.msra.mxu0 0.0
          %3278 = vmatprep.subr.mxu0 0.0
          %3279 = vmatpush1.msra.mxu0 0.0
          %3280 = vmatprep.subr.mxu0 0.0
          %3281 = vmatpush1.msra.mxu0 0.0
          %3282 = vmatprep.subr.mxu0 0.0
          %3283 = vmatpush1.msra.mxu0 0.0
          %3284 = vmatprep.subr.mxu0 0.0
          %3285 = vmatpush1.msra.mxu0 0.0
          %3286 = vmatprep.subr.mxu0 0.0
          %3287 = vmatpush1.msra.mxu0 0.0
          %3288 = vmatprep.subr.mxu0 0.0
          %3289 = vmatpush1.msra.mxu0 0.0
          %3290 = vmatprep.subr.mxu0 0.0
          %3291 = vmatpush1.msra.mxu0 0.0
          %3292 = vmatprep.subr.mxu0 0.0
          %3293 = vmatpush1.msra.mxu0 0.0
          %3294 = vmatprep.subr.mxu0 0.0
          %3295 = vmatpush1.msra.mxu0 0.0
          %3296 = vmatprep.subr.mxu0 0.0
          %3297 = vmatpush1.msra.mxu0 0.0
          %3298 = vmatprep.subr.mxu0 0.0
          %3299 = vmatpush1.msra.mxu0 0.0
          %3300 = vmatprep.subr.mxu0 0.0
          %3301 = vmatpush1.msra.mxu0 0.0
          %3302 = vmatprep.subr.mxu0 0.0
          %3303 = vmatpush1.msra.mxu0 0.0
          %3304 = vmatprep.subr.mxu0 0.0
          %3305 = vmatpush1.msra.mxu0 0.0
          %3306 = vmatprep.subr.mxu0 0.0
          %3307 = vmatpush1.msra.mxu0 0.0
          %3308 = vmatprep.subr.mxu0 0.0
          %3309 = vmatpush1.msra.mxu0 0.0
          %3310 = vmatprep.subr.mxu0 0.0
          %3311 = vmatpush1.msra.mxu0 0.0
          %3312 = vmatprep.subr.mxu0 0.0
          %3313 = vmatpush1.msra.mxu0 0.0
          %3314 = vmatprep.subr.mxu0 0.0
          %3315 = vmatpush1.msra.mxu0 0.0
          %3316 = vmatprep.subr.mxu0 0.0
          %3317 = vmatpush1.msra.mxu0 0.0
          %3318 = vmatprep.subr.mxu0 0.0
          %3319 = vmatpush1.msra.mxu0 0.0
          %3320 = vmatprep.subr.mxu0 0.0
          %3321 = vmatpush1.msra.mxu0 0.0
          %3322 = vmatprep.subr.mxu0 0.0
          %3323 = vmatpush1.msra.mxu0 0.0
          %3324 = vmatprep.subr.mxu0 0.0
          %3325 = vmatpush1.msra.mxu0 0.0
          %3326 = vmatprep.subr.mxu0 0.0
          %3327 = vmatpush1.msra.mxu0 0.0
          %3328 = vmatprep.subr.mxu0 0.0
          %3329 = vmatpush1.msra.mxu0 0.0
          %3330 = vmatprep.mubr.f32.mxu0 0.0
          %3331 = vmatmul.mubr.f32.gmra.mrb[0].mxu0 %v3264
          %v3332 = vpop.f32.mrb[0].mxu0
          %v3333 = vadd.f32 %v3258, %v3332
          %v3334 = vpop.f32.mrb[0].mxu0
          %3335 = vdwg.mxu0
          %v3336 = vld [vmem:[#allocation2 + $0x10] sm:$0xff]
          %v3337 = vld [vmem:[%s580] sm:$0xff]
          %3339 = vrot.lane.b32.xlu0 %v3336, 96
          %v3340 = vpop.permute.xlu0 %3339
          %v3341 = vsel %vm325, %v3340, 0
          %3343 = vmatprep.subr.mxu0 0.0
          %3344 = vmatpush1.msra.mxu0 %v3337
          %3345 = vmatprep.subr.mxu0 0.0
          %3346 = vmatpush1.msra.mxu0 0.0
          %3347 = vmatprep.subr.mxu0 0.0
          %3348 = vmatpush1.msra.mxu0 0.0
          %3349 = vmatprep.subr.mxu0 0.0
          %3350 = vmatpush1.msra.mxu0 0.0
          %3351 = vmatprep.subr.mxu0 0.0
          %3352 = vmatpush1.msra.mxu0 0.0
          %3353 = vmatprep.subr.mxu0 0.0
          %3354 = vmatpush1.msra.mxu0 0.0
          %3355 = vmatprep.subr.mxu0 0.0
          %3356 = vmatpush1.msra.mxu0 0.0
          %3357 = vmatprep.subr.mxu0 0.0
          %3358 = vmatpush1.msra.mxu0 0.0
          %3359 = vmatprep.subr.mxu0 0.0
          %3360 = vmatpush1.msra.mxu0 0.0
          %3361 = vmatprep.subr.mxu0 0.0
          %3362 = vmatpush1.msra.mxu0 0.0
          %3363 = vmatprep.subr.mxu0 0.0
          %3364 = vmatpush1.msra.mxu0 0.0
          %3365 = vmatprep.subr.mxu0 0.0
          %3366 = vmatpush1.msra.mxu0 0.0
          %3367 = vmatprep.subr.mxu0 0.0
          %3368 = vmatpush1.msra.mxu0 0.0
          %3369 = vmatprep.subr.mxu0 0.0
          %3370 = vmatpush1.msra.mxu0 0.0
          %3371 = vmatprep.subr.mxu0 0.0
          %3372 = vmatpush1.msra.mxu0 0.0
          %3373 = vmatprep.subr.mxu0 0.0
          %3374 = vmatpush1.msra.mxu0 0.0
          %3375 = vmatprep.subr.mxu0 0.0
          %3376 = vmatpush1.msra.mxu0 0.0
          %3377 = vmatprep.subr.mxu0 0.0
          %3378 = vmatpush1.msra.mxu0 0.0
          %3379 = vmatprep.subr.mxu0 0.0
          %3380 = vmatpush1.msra.mxu0 0.0
          %3381 = vmatprep.subr.mxu0 0.0
          %3382 = vmatpush1.msra.mxu0 0.0
          %3383 = vmatprep.subr.mxu0 0.0
          %3384 = vmatpush1.msra.mxu0 0.0
          %3385 = vmatprep.subr.mxu0 0.0
          %3386 = vmatpush1.msra.mxu0 0.0
          %3387 = vmatprep.subr.mxu0 0.0
          %3388 = vmatpush1.msra.mxu0 0.0
          %3389 = vmatprep.subr.mxu0 0.0
          %3390 = vmatpush1.msra.mxu0 0.0
          %3391 = vmatprep.subr.mxu0 0.0
          %3392 = vmatpush1.msra.mxu0 0.0
          %3393 = vmatprep.subr.mxu0 0.0
          %3394 = vmatpush1.msra.mxu0 0.0
          %3395 = vmatprep.subr.mxu0 0.0
          %3396 = vmatpush1.msra.mxu0 0.0
          %3397 = vmatprep.subr.mxu0 0.0
          %3398 = vmatpush1.msra.mxu0 0.0
          %3399 = vmatprep.subr.mxu0 0.0
          %3400 = vmatpush1.msra.mxu0 0.0
          %3401 = vmatprep.subr.mxu0 0.0
          %3402 = vmatpush1.msra.mxu0 0.0
          %3403 = vmatprep.subr.mxu0 0.0
          %3404 = vmatpush1.msra.mxu0 0.0
          %3405 = vmatprep.subr.mxu0 0.0
          %3406 = vmatpush1.msra.mxu0 0.0
          %3407 = vmatprep.mubr.f32.mxu0 0.0
          %3408 = vmatmul.mubr.f32.gmra.mrb[0].mxu0 %v3341
          %v3409 = vpop.f32.mrb[0].mxu0
          %v3410 = vadd.f32 0.0, %v3409
          %v3411 = vpop.f32.mrb[0].mxu0
          %3412 = vdwg.mxu0
          %v3413 = vadd.f32 %v3333, %v3410
          %v3414 = vld [vmem:[#allocation2 + $0x18] sm:$0xff]
          %v3415 = vld [vmem:[%s657] sm:$0xff]
          %3417 = vrot.lane.b32.xlu0 %v3414, 96
          %v3418 = vpop.permute.xlu0 %3417
          %v3419 = vsel %vm325, %v3418, 0
          %3421 = vmatprep.subr.mxu0 0.0
          %3422 = vmatpush1.msra.mxu0 %v3415
          %3423 = vmatprep.subr.mxu0 0.0
          %3424 = vmatpush1.msra.mxu0 0.0
          %3425 = vmatprep.subr.mxu0 0.0
          %3426 = vmatpush1.msra.mxu0 0.0
          %3427 = vmatprep.subr.mxu0 0.0
          %3428 = vmatpush1.msra.mxu0 0.0
          %3429 = vmatprep.subr.mxu0 0.0
          %3430 = vmatpush1.msra.mxu0 0.0
          %3431 = vmatprep.subr.mxu0 0.0
          %3432 = vmatpush1.msra.mxu0 0.0
          %3433 = vmatprep.subr.mxu0 0.0
          %3434 = vmatpush1.msra.mxu0 0.0
          %3435 = vmatprep.subr.mxu0 0.0
          %3436 = vmatpush1.msra.mxu0 0.0
          %3437 = vmatprep.subr.mxu0 0.0
          %3438 = vmatpush1.msra.mxu0 0.0
          %3439 = vmatprep.subr.mxu0 0.0
          %3440 = vmatpush1.msra.mxu0 0.0
          %3441 = vmatprep.subr.mxu0 0.0
          %3442 = vmatpush1.msra.mxu0 0.0
          %3443 = vmatprep.subr.mxu0 0.0
          %3444 = vmatpush1.msra.mxu0 0.0
          %3445 = vmatprep.subr.mxu0 0.0
          %3446 = vmatpush1.msra.mxu0 0.0
          %3447 = vmatprep.subr.mxu0 0.0
          %3448 = vmatpush1.msra.mxu0 0.0
          %3449 = vmatprep.subr.mxu0 0.0
          %3450 = vmatpush1.msra.mxu0 0.0
          %3451 = vmatprep.subr.mxu0 0.0
          %3452 = vmatpush1.msra.mxu0 0.0
          %3453 = vmatprep.subr.mxu0 0.0
          %3454 = vmatpush1.msra.mxu0 0.0
          %3455 = vmatprep.subr.mxu0 0.0
          %3456 = vmatpush1.msra.mxu0 0.0
          %3457 = vmatprep.subr.mxu0 0.0
          %3458 = vmatpush1.msra.mxu0 0.0
          %3459 = vmatprep.subr.mxu0 0.0
          %3460 = vmatpush1.msra.mxu0 0.0
          %3461 = vmatprep.subr.mxu0 0.0
          %3462 = vmatpush1.msra.mxu0 0.0
          %3463 = vmatprep.subr.mxu0 0.0
          %3464 = vmatpush1.msra.mxu0 0.0
          %3465 = vmatprep.subr.mxu0 0.0
          %3466 = vmatpush1.msra.mxu0 0.0
          %3467 = vmatprep.subr.mxu0 0.0
          %3468 = vmatpush1.msra.mxu0 0.0
          %3469 = vmatprep.subr.mxu0 0.0
          %3470 = vmatpush1.msra.mxu0 0.0
          %3471 = vmatprep.subr.mxu0 0.0
          %3472 = vmatpush1.msra.mxu0 0.0
          %3473 = vmatprep.subr.mxu0 0.0
          %3474 = vmatpush1.msra.mxu0 0.0
          %3475 = vmatprep.subr.mxu0 0.0
          %3476 = vmatpush1.msra.mxu0 0.0
          %3477 = vmatprep.subr.mxu0 0.0
          %3478 = vmatpush1.msra.mxu0 0.0
          %3479 = vmatprep.subr.mxu0 0.0
          %3480 = vmatpush1.msra.mxu0 0.0
          %3481 = vmatprep.subr.mxu0 0.0
          %3482 = vmatpush1.msra.mxu0 0.0
          %3483 = vmatprep.subr.mxu0 0.0
          %3484 = vmatpush1.msra.mxu0 0.0
          %3485 = vmatprep.mubr.f32.mxu0 0.0
          %3486 = vmatmul.mubr.f32.gmra.mrb[0].mxu0 %v3419
          %v3487 = vpop.f32.mrb[0].mxu0
          %v3488 = vadd.f32 0.0, %v3487
          %v3489 = vpop.f32.mrb[0].mxu0
          %3490 = vdwg.mxu0
          %v3491 = vadd.f32 %v3413, %v3488
          %v3492 = vld [vmem:[#allocation2 + $0x20] sm:$0xff]
          %v3493 = vld [vmem:[%s734] sm:$0xff]
          %3495 = vrot.lane.b32.xlu0 %v3492, 96
          %v3496 = vpop.permute.xlu0 %3495
          %v3497 = vsel %vm325, %v3496, 0
          %3499 = vmatprep.subr.mxu0 0.0
          %3500 = vmatpush1.msra.mxu0 %v3493
          %3501 = vmatprep.subr.mxu0 0.0
          %3502 = vmatpush1.msra.mxu0 0.0
          %3503 = vmatprep.subr.mxu0 0.0
          %3504 = vmatpush1.msra.mxu0 0.0
          %3505 = vmatprep.subr.mxu0 0.0
          %3506 = vmatpush1.msra.mxu0 0.0
          %3507 = vmatprep.subr.mxu0 0.0
          %3508 = vmatpush1.msra.mxu0 0.0
          %3509 = vmatprep.subr.mxu0 0.0
          %3510 = vmatpush1.msra.mxu0 0.0
          %3511 = vmatprep.subr.mxu0 0.0
          %3512 = vmatpush1.msra.mxu0 0.0
          %3513 = vmatprep.subr.mxu0 0.0
          %3514 = vmatpush1.msra.mxu0 0.0
          %3515 = vmatprep.subr.mxu0 0.0
          %3516 = vmatpush1.msra.mxu0 0.0
          %3517 = vmatprep.subr.mxu0 0.0
          %3518 = vmatpush1.msra.mxu0 0.0
          %3519 = vmatprep.subr.mxu0 0.0
          %3520 = vmatpush1.msra.mxu0 0.0
          %3521 = vmatprep.subr.mxu0 0.0
          %3522 = vmatpush1.msra.mxu0 0.0
          %3523 = vmatprep.subr.mxu0 0.0
          %3524 = vmatpush1.msra.mxu0 0.0
          %3525 = vmatprep.subr.mxu0 0.0
          %3526 = vmatpush1.msra.mxu0 0.0
          %3527 = vmatprep.subr.mxu0 0.0
          %3528 = vmatpush1.msra.mxu0 0.0
          %3529 = vmatprep.subr.mxu0 0.0
          %3530 = vmatpush1.msra.mxu0 0.0
          %3531 = vmatprep.subr.mxu0 0.0
          %3532 = vmatpush1.msra.mxu0 0.0
          %3533 = vmatprep.subr.mxu0 0.0
          %3534 = vmatpush1.msra.mxu0 0.0
          %3535 = vmatprep.subr.mxu0 0.0
          %3536 = vmatpush1.msra.mxu0 0.0
          %3537 = vmatprep.subr.mxu0 0.0
          %3538 = vmatpush1.msra.mxu0 0.0
          %3539 = vmatprep.subr.mxu0 0.0
          %3540 = vmatpush1.msra.mxu0 0.0
          %3541 = vmatprep.subr.mxu0 0.0
          %3542 = vmatpush1.msra.mxu0 0.0
          %3543 = vmatprep.subr.mxu0 0.0
          %3544 = vmatpush1.msra.mxu0 0.0
          %3545 = vmatprep.subr.mxu0 0.0
          %3546 = vmatpush1.msra.mxu0 0.0
          %3547 = vmatprep.subr.mxu0 0.0
          %3548 = vmatpush1.msra.mxu0 0.0
          %3549 = vmatprep.subr.mxu0 0.0
          %3550 = vmatpush1.msra.mxu0 0.0
          %3551 = vmatprep.subr.mxu0 0.0
          %3552 = vmatpush1.msra.mxu0 0.0
          %3553 = vmatprep.subr.mxu0 0.0
          %3554 = vmatpush1.msra.mxu0 0.0
          %3555 = vmatprep.subr.mxu0 0.0
          %3556 = vmatpush1.msra.mxu0 0.0
          %3557 = vmatprep.subr.mxu0 0.0
          %3558 = vmatpush1.msra.mxu0 0.0
          %3559 = vmatprep.subr.mxu0 0.0
          %3560 = vmatpush1.msra.mxu0 0.0
          %3561 = vmatprep.subr.mxu0 0.0
          %3562 = vmatpush1.msra.mxu0 0.0
          %3563 = vmatprep.mubr.f32.mxu0 0.0
          %3564 = vmatmul.mubr.f32.gmra.mrb[0].mxu0 %v3497
          %v3565 = vpop.f32.mrb[0].mxu0
          %v3566 = vadd.f32 0.0, %v3565
          %v3567 = vpop.f32.mrb[0].mxu0
          %3568 = vdwg.mxu0
          %v3569 = vadd.f32 %v3491, %v3566
          %v3570 = vld [vmem:[#allocation2 + $0x28] sm:$0xff]
          %v3571 = vld [vmem:[%s811] sm:$0xff]
          %3573 = vrot.lane.b32.xlu0 %v3570, 96
          %v3574 = vpop.permute.xlu0 %3573
          %v3575 = vsel %vm325, %v3574, 0
          %3577 = vmatprep.subr.mxu0 0.0
          %3578 = vmatpush1.msra.mxu0 %v3571
          %3579 = vmatprep.subr.mxu0 0.0
          %3580 = vmatpush1.msra.mxu0 0.0
          %3581 = vmatprep.subr.mxu0 0.0
          %3582 = vmatpush1.msra.mxu0 0.0
          %3583 = vmatprep.subr.mxu0 0.0
          %3584 = vmatpush1.msra.mxu0 0.0
          %3585 = vmatprep.subr.mxu0 0.0
          %3586 = vmatpush1.msra.mxu0 0.0
          %3587 = vmatprep.subr.mxu0 0.0
          %3588 = vmatpush1.msra.mxu0 0.0
          %3589 = vmatprep.subr.mxu0 0.0
          %3590 = vmatpush1.msra.mxu0 0.0
          %3591 = vmatprep.subr.mxu0 0.0
          %3592 = vmatpush1.msra.mxu0 0.0
          %3593 = vmatprep.subr.mxu0 0.0
          %3594 = vmatpush1.msra.mxu0 0.0
          %3595 = vmatprep.subr.mxu0 0.0
          %3596 = vmatpush1.msra.mxu0 0.0
          %3597 = vmatprep.subr.mxu0 0.0
          %3598 = vmatpush1.msra.mxu0 0.0
          %3599 = vmatprep.subr.mxu0 0.0
          %3600 = vmatpush1.msra.mxu0 0.0
          %3601 = vmatprep.subr.mxu0 0.0
          %3602 = vmatpush1.msra.mxu0 0.0
          %3603 = vmatprep.subr.mxu0 0.0
          %3604 = vmatpush1.msra.mxu0 0.0
          %3605 = vmatprep.subr.mxu0 0.0
          %3606 = vmatpush1.msra.mxu0 0.0
          %3607 = vmatprep.subr.mxu0 0.0
          %3608 = vmatpush1.msra.mxu0 0.0
          %3609 = vmatprep.subr.mxu0 0.0
          %3610 = vmatpush1.msra.mxu0 0.0
          %3611 = vmatprep.subr.mxu0 0.0
          %3612 = vmatpush1.msra.mxu0 0.0
          %3613 = vmatprep.subr.mxu0 0.0
          %3614 = vmatpush1.msra.mxu0 0.0
          %3615 = vmatprep.subr.mxu0 0.0
          %3616 = vmatpush1.msra.mxu0 0.0
          %3617 = vmatprep.subr.mxu0 0.0
          %3618 = vmatpush1.msra.mxu0 0.0
          %3619 = vmatprep.subr.mxu0 0.0
          %3620 = vmatpush1.msra.mxu0 0.0
          %3621 = vmatprep.subr.mxu0 0.0
          %3622 = vmatpush1.msra.mxu0 0.0
          %3623 = vmatprep.subr.mxu0 0.0
          %3624 = vmatpush1.msra.mxu0 0.0
          %3625 = vmatprep.subr.mxu0 0.0
          %3626 = vmatpush1.msra.mxu0 0.0
          %3627 = vmatprep.subr.mxu0 0.0
          %3628 = vmatpush1.msra.mxu0 0.0
          %3629 = vmatprep.subr.mxu0 0.0
          %3630 = vmatpush1.msra.mxu0 0.0
          %3631 = vmatprep.subr.mxu0 0.0
          %3632 = vmatpush1.msra.mxu0 0.0
          %3633 = vmatprep.subr.mxu0 0.0
          %3634 = vmatpush1.msra.mxu0 0.0
          %3635 = vmatprep.subr.mxu0 0.0
          %3636 = vmatpush1.msra.mxu0 0.0
          %3637 = vmatprep.subr.mxu0 0.0
          %3638 = vmatpush1.msra.mxu0 0.0
          %3639 = vmatprep.subr.mxu0 0.0
          %3640 = vmatpush1.msra.mxu0 0.0
          %3641 = vmatprep.mubr.f32.mxu0 0.0
          %3642 = vmatmul.mubr.f32.gmra.mrb[0].mxu0 %v3575
          %v3643 = vpop.f32.mrb[0].mxu0
          %v3644 = vadd.f32 0.0, %v3643
          %v3645 = vpop.f32.mrb[0].mxu0
          %3646 = vdwg.mxu0
          %v3647 = vadd.f32 %v3569, %v3644
          %v3648 = vld [vmem:[#allocation2 + $0x30] sm:$0xff]
          %v3649 = vld [vmem:[%s888] sm:$0xff]
          %3651 = vrot.lane.b32.xlu0 %v3648, 96
          %v3652 = vpop.permute.xlu0 %3651
          %v3653 = vsel %vm325, %v3652, 0
          %3655 = vmatprep.subr.mxu0 0.0
          %3656 = vmatpush1.msra.mxu0 %v3649
          %3657 = vmatprep.subr.mxu0 0.0
          %3658 = vmatpush1.msra.mxu0 0.0
          %3659 = vmatprep.subr.mxu0 0.0
          %3660 = vmatpush1.msra.mxu0 0.0
          %3661 = vmatprep.subr.mxu0 0.0
          %3662 = vmatpush1.msra.mxu0 0.0
          %3663 = vmatprep.subr.mxu0 0.0
          %3664 = vmatpush1.msra.mxu0 0.0
          %3665 = vmatprep.subr.mxu0 0.0
          %3666 = vmatpush1.msra.mxu0 0.0
          %3667 = vmatprep.subr.mxu0 0.0
          %3668 = vmatpush1.msra.mxu0 0.0
          %3669 = vmatprep.subr.mxu0 0.0
          %3670 = vmatpush1.msra.mxu0 0.0
          %3671 = vmatprep.subr.mxu0 0.0
          %3672 = vmatpush1.msra.mxu0 0.0
          %3673 = vmatprep.subr.mxu0 0.0
          %3674 = vmatpush1.msra.mxu0 0.0
          %3675 = vmatprep.subr.mxu0 0.0
          %3676 = vmatpush1.msra.mxu0 0.0
          %3677 = vmatprep.subr.mxu0 0.0
          %3678 = vmatpush1.msra.mxu0 0.0
          %3679 = vmatprep.subr.mxu0 0.0
          %3680 = vmatpush1.msra.mxu0 0.0
          %3681 = vmatprep.subr.mxu0 0.0
          %3682 = vmatpush1.msra.mxu0 0.0
          %3683 = vmatprep.subr.mxu0 0.0
          %3684 = vmatpush1.msra.mxu0 0.0
          %3685 = vmatprep.subr.mxu0 0.0
          %3686 = vmatpush1.msra.mxu0 0.0
          %3687 = vmatprep.subr.mxu0 0.0
          %3688 = vmatpush1.msra.mxu0 0.0
          %3689 = vmatprep.subr.mxu0 0.0
          %3690 = vmatpush1.msra.mxu0 0.0
          %3691 = vmatprep.subr.mxu0 0.0
          %3692 = vmatpush1.msra.mxu0 0.0
          %3693 = vmatprep.subr.mxu0 0.0
          %3694 = vmatpush1.msra.mxu0 0.0
          %3695 = vmatprep.subr.mxu0 0.0
          %3696 = vmatpush1.msra.mxu0 0.0
          %3697 = vmatprep.subr.mxu0 0.0
          %3698 = vmatpush1.msra.mxu0 0.0
          %3699 = vmatprep.subr.mxu0 0.0
          %3700 = vmatpush1.msra.mxu0 0.0
          %3701 = vmatprep.subr.mxu0 0.0
          %3702 = vmatpush1.msra.mxu0 0.0
          %3703 = vmatprep.subr.mxu0 0.0
          %3704 = vmatpush1.msra.mxu0 0.0
          %3705 = vmatprep.subr.mxu0 0.0
          %3706 = vmatpush1.msra.mxu0 0.0
          %3707 = vmatprep.subr.mxu0 0.0
          %3708 = vmatpush1.msra.mxu0 0.0
          %3709 = vmatprep.subr.mxu0 0.0
          %3710 = vmatpush1.msra.mxu0 0.0
          %3711 = vmatprep.subr.mxu0 0.0
          %3712 = vmatpush1.msra.mxu0 0.0
          %3713 = vmatprep.subr.mxu0 0.0
          %3714 = vmatpush1.msra.mxu0 0.0
          %3715 = vmatprep.subr.mxu0 0.0
          %3716 = vmatpush1.msra.mxu0 0.0
          %3717 = vmatprep.subr.mxu0 0.0
          %3718 = vmatpush1.msra.mxu0 0.0
          %3719 = vmatprep.mubr.f32.mxu0 0.0
          %3720 = vmatmul.mubr.f32.gmra.mrb[0].mxu0 %v3653
          %v3721 = vpop.f32.mrb[0].mxu0
          %v3722 = vadd.f32 0.0, %v3721
          %v3723 = vpop.f32.mrb[0].mxu0
          %3724 = vdwg.mxu0
          %v3725 = vadd.f32 %v3647, %v3722
          %v3726 = vld [vmem:[#allocation2 + $0x38] sm:$0xff]
          %v3727 = vld [vmem:[%s965] sm:$0xff]
          %3729 = vrot.lane.b32.xlu0 %v3726, 96
          %v3730 = vpop.permute.xlu0 %3729
          %v3731 = vsel %vm325, %v3730, 0
          %3733 = vmatprep.subr.mxu0 0.0
          %3734 = vmatpush1.msra.mxu0 %v3727
          %3735 = vmatprep.subr.mxu0 0.0
          %3736 = vmatpush1.msra.mxu0 0.0
          %3737 = vmatprep.subr.mxu0 0.0
          %3738 = vmatpush1.msra.mxu0 0.0
          %3739 = vmatprep.subr.mxu0 0.0
          %3740 = vmatpush1.msra.mxu0 0.0
          %3741 = vmatprep.subr.mxu0 0.0
          %3742 = vmatpush1.msra.mxu0 0.0
          %3743 = vmatprep.subr.mxu0 0.0
          %3744 = vmatpush1.msra.mxu0 0.0
          %3745 = vmatprep.subr.mxu0 0.0
          %3746 = vmatpush1.msra.mxu0 0.0
          %3747 = vmatprep.subr.mxu0 0.0
          %3748 = vmatpush1.msra.mxu0 0.0
          %3749 = vmatprep.subr.mxu0 0.0
          %3750 = vmatpush1.msra.mxu0 0.0
          %3751 = vmatprep.subr.mxu0 0.0
          %3752 = vmatpush1.msra.mxu0 0.0
          %3753 = vmatprep.subr.mxu0 0.0
          %3754 = vmatpush1.msra.mxu0 0.0
          %3755 = vmatprep.subr.mxu0 0.0
          %3756 = vmatpush1.msra.mxu0 0.0
          %3757 = vmatprep.subr.mxu0 0.0
          %3758 = vmatpush1.msra.mxu0 0.0
          %3759 = vmatprep.subr.mxu0 0.0
          %3760 = vmatpush1.msra.mxu0 0.0
          %3761 = vmatprep.subr.mxu0 0.0
          %3762 = vmatpush1.msra.mxu0 0.0
          %3763 = vmatprep.subr.mxu0 0.0
          %3764 = vmatpush1.msra.mxu0 0.0
          %3765 = vmatprep.subr.mxu0 0.0
          %3766 = vmatpush1.msra.mxu0 0.0
          %3767 = vmatprep.subr.mxu0 0.0
          %3768 = vmatpush1.msra.mxu0 0.0
          %3769 = vmatprep.subr.mxu0 0.0
          %3770 = vmatpush1.msra.mxu0 0.0
          %3771 = vmatprep.subr.mxu0 0.0
          %3772 = vmatpush1.msra.mxu0 0.0
          %3773 = vmatprep.subr.mxu0 0.0
          %3774 = vmatpush1.msra.mxu0 0.0
          %3775 = vmatprep.subr.mxu0 0.0
          %3776 = vmatpush1.msra.mxu0 0.0
          %3777 = vmatprep.subr.mxu0 0.0
          %3778 = vmatpush1.msra.mxu0 0.0
          %3779 = vmatprep.subr.mxu0 0.0
          %3780 = vmatpush1.msra.mxu0 0.0
          %3781 = vmatprep.subr.mxu0 0.0
          %3782 = vmatpush1.msra.mxu0 0.0
          %3783 = vmatprep.subr.mxu0 0.0
          %3784 = vmatpush1.msra.mxu0 0.0
          %3785 = vmatprep.subr.mxu0 0.0
          %3786 = vmatpush1.msra.mxu0 0.0
          %3787 = vmatprep.subr.mxu0 0.0
          %3788 = vmatpush1.msra.mxu0 0.0
          %3789 = vmatprep.subr.mxu0 0.0
          %3790 = vmatpush1.msra.mxu0 0.0
          %3791 = vmatprep.subr.mxu0 0.0
          %3792 = vmatpush1.msra.mxu0 0.0
          %3793 = vmatprep.subr.mxu0 0.0
          %3794 = vmatpush1.msra.mxu0 0.0
          %3795 = vmatprep.subr.mxu0 0.0
          %3796 = vmatpush1.msra.mxu0 0.0
          %3797 = vmatprep.mubr.f32.mxu0 0.0
          %3798 = vmatmul.mubr.f32.gmra.mrb[0].mxu0 %v3731
          %v3799 = vpop.f32.mrb[0].mxu0
          %v3800 = vadd.f32 0.0, %v3799
          %v3801 = vpop.f32.mrb[0].mxu0
          %3802 = vdwg.mxu0
          %v3803 = vadd.f32 %v3725, %v3800
          %v3804 = vadd.f32 %v3803, %v1045
          %v3806 = vcombine.high %v3804, %v3804
          %v3808 = vunpack.c.l.s4 1966171168
          %v3809 = vunpack.c.0.s8 %v3808
          %v3810 = vlaneseq
          %v3811 = vshrl.u32 %v3810, 7
          %v3812 = vsub.s32 %v3809, %v3811
          %v3813 = vrot.slane %v3804, %v3812
          %v3815 = vunpack.c.l.s4 1966171168
          %v3816 = vunpack.c.0.s8 %v3815
          %v3817 = vlaneseq
          %v3818 = vshrl.u32 %v3817, 7
          %v3819 = vsub.s32 %v3816, %v3818
          %v3820 = vrot.slane %v3806, %v3819
          %v3821 = vcombine.high %v3813, %v3813
          %v3822 = vcombine.high %v3820, %v3820
          %v3824 = vunpack.c.l.s4 1966171168
          %v3825 = vunpack.c.0.s8 %v3824
          %v3826 = vlaneseq
          %v3827 = vshrl.u32 %v3826, 7
          %v3828 = vsub.s32 %v3825, %v3827
          %v3829 = vrot.slane %v3813, %v3828
          %v3831 = vunpack.c.l.s4 1966171168
          %v3832 = vunpack.c.0.s8 %v3831
          %v3833 = vlaneseq
          %v3834 = vshrl.u32 %v3833, 7
          %v3835 = vsub.s32 %v3832, %v3834
          %v3836 = vrot.slane %v3820, %v3835
          %v3838 = vunpack.c.l.s4 1966171168
          %v3839 = vunpack.c.0.s8 %v3838
          %v3840 = vlaneseq
          %v3841 = vshrl.u32 %v3840, 7
          %v3842 = vsub.s32 %v3839, %v3841
          %v3843 = vrot.slane %v3821, %v3842
          %v3845 = vunpack.c.l.s4 1966171168
          %v3846 = vunpack.c.0.s8 %v3845
          %v3847 = vlaneseq
          %v3848 = vshrl.u32 %v3847, 7
          %v3849 = vsub.s32 %v3846, %v3848
          %v3850 = vrot.slane %v3822, %v3849
          %v3851 = vcombine.high %v3829, %v3829
          %v3852 = vcombine.high %v3836, %v3836
          %v3853 = vcombine.high %v3843, %v3843
          %v3854 = vcombine.high %v3850, %v3850
          %3863 = vst.msk [vmem:[%s263 + $0x4] sm:$0x1] %vm1106, %v3829
          %3864 = vst.msk [vmem:[%s263 + $0xc] sm:$0x1] %vm1106, %v3843
          %3865 = vst.msk [vmem:[%s263 + $0x14] sm:$0x1] %vm1106, %v3851
          %3866 = vst.msk [vmem:[%s263 + $0x1c] sm:$0x1] %vm1106, %v3853
          %3867 = vst.msk [vmem:[%s263 + $0x24] sm:$0x1] %vm1106, %v3836
          %3868 = vst.msk [vmem:[%s263 + $0x2c] sm:$0x1] %vm1106, %v3850
          %3869 = vst.msk [vmem:[%s263 + $0x34] sm:$0x1] %vm1106, %v3852
          %3870 = vst.msk [vmem:[%s263 + $0x3c] sm:$0x1] %vm1106, %v3854
          %v3871 = vld [vmem:[#allocation2] sm:$0xff]
          %v3872 = vld [vmem:[%s2] sm:$0xff]
          %v3873 = vld [vmem:[#allocation2 + $0x8] sm:$0xff]
          %v3874 = vld [vmem:[%s431] sm:$0xff]
          %3876 = vrot.lane.b32.xlu0 %v3873, 88
          %v3877 = vpop.permute.xlu0 %3876
          %v3878 = vsel %vm325, %v3877, 0
          %3880 = vmatprep.subr.mxu0 0.0
          %3881 = vmatpush1.msra.mxu0 %v3874
          %3882 = vmatprep.subr.mxu0 0.0
          %3883 = vmatpush1.msra.mxu0 0.0
          %3884 = vmatprep.subr.mxu0 0.0
          %3885 = vmatpush1.msra.mxu0 0.0
          %3886 = vmatprep.subr.mxu0 0.0
          %3887 = vmatpush1.msra.mxu0 0.0
          %3888 = vmatprep.subr.mxu0 0.0
          %3889 = vmatpush1.msra.mxu0 0.0
          %3890 = vmatprep.subr.mxu0 0.0
          %3891 = vmatpush1.msra.mxu0 0.0
          %3892 = vmatprep.subr.mxu0 0.0
          %3893 = vmatpush1.msra.mxu0 0.0
          %3894 = vmatprep.subr.mxu0 0.0
          %3895 = vmatpush1.msra.mxu0 0.0
          %3896 = vmatprep.subr.mxu0 0.0
          %3897 = vmatpush1.msra.mxu0 0.0
          %3898 = vmatprep.subr.mxu0 0.0
          %3899 = vmatpush1.msra.mxu0 0.0
          %3900 = vmatprep.subr.mxu0 0.0
          %3901 = vmatpush1.msra.mxu0 0.0
          %3902 = vmatprep.subr.mxu0 0.0
          %3903 = vmatpush1.msra.mxu0 0.0
          %3904 = vmatprep.subr.mxu0 0.0
          %3905 = vmatpush1.msra.mxu0 0.0
          %3906 = vmatprep.subr.mxu0 0.0
          %3907 = vmatpush1.msra.mxu0 0.0
          %3908 = vmatprep.subr.mxu0 0.0
          %3909 = vmatpush1.msra.mxu0 0.0
          %3910 = vmatprep.subr.mxu0 0.0
          %3911 = vmatpush1.msra.mxu0 0.0
          %3912 = vmatprep.subr.mxu0 0.0
          %3913 = vmatpush1.msra.mxu0 0.0
          %3914 = vmatprep.subr.mxu0 0.0
          %3915 = vmatpush1.msra.mxu0 0.0
          %3916 = vmatprep.subr.mxu0 0.0
          %3917 = vmatpush1.msra.mxu0 0.0
          %3918 = vmatprep.subr.mxu0 0.0
          %3919 = vmatpush1.msra.mxu0 0.0
          %3920 = vmatprep.subr.mxu0 0.0
          %3921 = vmatpush1.msra.mxu0 0.0
          %3922 = vmatprep.subr.mxu0 0.0
          %3923 = vmatpush1.msra.mxu0 0.0
          %3924 = vmatprep.subr.mxu0 0.0
          %3925 = vmatpush1.msra.mxu0 0.0
          %3926 = vmatprep.subr.mxu0 0.0
          %3927 = vmatpush1.msra.mxu0 0.0
          %3928 = vmatprep.subr.mxu0 0.0
          %3929 = vmatpush1.msra.mxu0 0.0
          %3930 = vmatprep.subr.mxu0 0.0
          %3931 = vmatpush1.msra.mxu0 0.0
          %3932 = vmatprep.subr.mxu0 0.0
          %3933 = vmatpush1.msra.mxu0 0.0
          %3934 = vmatprep.subr.mxu0 0.0
          %3935 = vmatpush1.msra.mxu0 0.0
          %3936 = vmatprep.subr.mxu0 0.0
          %3937 = vmatpush1.msra.mxu0 0.0
          %3938 = vmatprep.subr.mxu0 0.0
          %3939 = vmatpush1.msra.mxu0 0.0
          %3940 = vmatprep.subr.mxu0 0.0
          %3941 = vmatpush1.msra.mxu0 0.0
          %3942 = vmatprep.subr.mxu0 0.0
          %3943 = vmatpush1.msra.mxu0 0.0
          %3944 = vmatprep.mubr.f32.mxu0 0.0
          %3945 = vmatmul.mubr.f32.gmra.mrb[0].mxu0 %v3878
          %v3946 = vpop.f32.mrb[0].mxu0
          %v3947 = vadd.f32 0.0, %v3946
          %v3948 = vpop.f32.mrb[0].mxu0
          %3949 = vdwg.mxu0
          %3951 = vrot.lane.b32.xlu0 %v3871, 88
          %v3952 = vpop.permute.xlu0 %3951
          %v3953 = vsel %vm325, %v3952, 0
          %3955 = vmatprep.subr.mxu0 0.0
          %3956 = vmatpush1.msra.mxu0 %v3872
          %3957 = vmatprep.subr.mxu0 0.0
          %3958 = vmatpush1.msra.mxu0 0.0
          %3959 = vmatprep.subr.mxu0 0.0
          %3960 = vmatpush1.msra.mxu0 0.0
          %3961 = vmatprep.subr.mxu0 0.0
          %3962 = vmatpush1.msra.mxu0 0.0
          %3963 = vmatprep.subr.mxu0 0.0
          %3964 = vmatpush1.msra.mxu0 0.0
          %3965 = vmatprep.subr.mxu0 0.0
          %3966 = vmatpush1.msra.mxu0 0.0
          %3967 = vmatprep.subr.mxu0 0.0
          %3968 = vmatpush1.msra.mxu0 0.0
          %3969 = vmatprep.subr.mxu0 0.0
          %3970 = vmatpush1.msra.mxu0 0.0
          %3971 = vmatprep.subr.mxu0 0.0
          %3972 = vmatpush1.msra.mxu0 0.0
          %3973 = vmatprep.subr.mxu0 0.0
          %3974 = vmatpush1.msra.mxu0 0.0
          %3975 = vmatprep.subr.mxu0 0.0
          %3976 = vmatpush1.msra.mxu0 0.0
          %3977 = vmatprep.subr.mxu0 0.0
          %3978 = vmatpush1.msra.mxu0 0.0
          %3979 = vmatprep.subr.mxu0 0.0
          %3980 = vmatpush1.msra.mxu0 0.0
          %3981 = vmatprep.subr.mxu0 0.0
          %3982 = vmatpush1.msra.mxu0 0.0
          %3983 = vmatprep.subr.mxu0 0.0
          %3984 = vmatpush1.msra.mxu0 0.0
          %3985 = vmatprep.subr.mxu0 0.0
          %3986 = vmatpush1.msra.mxu0 0.0
          %3987 = vmatprep.subr.mxu0 0.0
          %3988 = vmatpush1.msra.mxu0 0.0
          %3989 = vmatprep.subr.mxu0 0.0
          %3990 = vmatpush1.msra.mxu0 0.0
          %3991 = vmatprep.subr.mxu0 0.0
          %3992 = vmatpush1.msra.mxu0 0.0
          %3993 = vmatprep.subr.mxu0 0.0
          %3994 = vmatpush1.msra.mxu0 0.0
          %3995 = vmatprep.subr.mxu0 0.0
          %3996 = vmatpush1.msra.mxu0 0.0
          %3997 = vmatprep.subr.mxu0 0.0
          %3998 = vmatpush1.msra.mxu0 0.0
          %3999 = vmatprep.subr.mxu0 0.0
          %4000 = vmatpush1.msra.mxu0 0.0
          %4001 = vmatprep.subr.mxu0 0.0
          %4002 = vmatpush1.msra.mxu0 0.0
          %4003 = vmatprep.subr.mxu0 0.0
          %4004 = vmatpush1.msra.mxu0 0.0
          %4005 = vmatprep.subr.mxu0 0.0
          %4006 = vmatpush1.msra.mxu0 0.0
          %4007 = vmatprep.subr.mxu0 0.0
          %4008 = vmatpush1.msra.mxu0 0.0
          %4009 = vmatprep.subr.mxu0 0.0
          %4010 = vmatpush1.msra.mxu0 0.0
          %4011 = vmatprep.subr.mxu0 0.0
          %4012 = vmatpush1.msra.mxu0 0.0
          %4013 = vmatprep.subr.mxu0 0.0
          %4014 = vmatpush1.msra.mxu0 0.0
          %4015 = vmatprep.subr.mxu0 0.0
          %4016 = vmatpush1.msra.mxu0 0.0
          %4017 = vmatprep.subr.mxu0 0.0
          %4018 = vmatpush1.msra.mxu0 0.0
          %4019 = vmatprep.mubr.f32.mxu0 0.0
          %4020 = vmatmul.mubr.f32.gmra.mrb[0].mxu0 %v3953
          %v4021 = vpop.f32.mrb[0].mxu0
          %v4022 = vadd.f32 %v3947, %v4021
          %v4023 = vpop.f32.mrb[0].mxu0
          %4024 = vdwg.mxu0
          %v4025 = vld [vmem:[#allocation2 + $0x10] sm:$0xff]
          %v4026 = vld [vmem:[%s580] sm:$0xff]
          %4028 = vrot.lane.b32.xlu0 %v4025, 88
          %v4029 = vpop.permute.xlu0 %4028
          %v4030 = vsel %vm325, %v4029, 0
          %4032 = vmatprep.subr.mxu0 0.0
          %4033 = vmatpush1.msra.mxu0 %v4026
          %4034 = vmatprep.subr.mxu0 0.0
          %4035 = vmatpush1.msra.mxu0 0.0
          %4036 = vmatprep.subr.mxu0 0.0
          %4037 = vmatpush1.msra.mxu0 0.0
          %4038 = vmatprep.subr.mxu0 0.0
          %4039 = vmatpush1.msra.mxu0 0.0
          %4040 = vmatprep.subr.mxu0 0.0
          %4041 = vmatpush1.msra.mxu0 0.0
          %4042 = vmatprep.subr.mxu0 0.0
          %4043 = vmatpush1.msra.mxu0 0.0
          %4044 = vmatprep.subr.mxu0 0.0
          %4045 = vmatpush1.msra.mxu0 0.0
          %4046 = vmatprep.subr.mxu0 0.0
          %4047 = vmatpush1.msra.mxu0 0.0
          %4048 = vmatprep.subr.mxu0 0.0
          %4049 = vmatpush1.msra.mxu0 0.0
          %4050 = vmatprep.subr.mxu0 0.0
          %4051 = vmatpush1.msra.mxu0 0.0
          %4052 = vmatprep.subr.mxu0 0.0
          %4053 = vmatpush1.msra.mxu0 0.0
          %4054 = vmatprep.subr.mxu0 0.0
          %4055 = vmatpush1.msra.mxu0 0.0
          %4056 = vmatprep.subr.mxu0 0.0
          %4057 = vmatpush1.msra.mxu0 0.0
          %4058 = vmatprep.subr.mxu0 0.0
          %4059 = vmatpush1.msra.mxu0 0.0
          %4060 = vmatprep.subr.mxu0 0.0
          %4061 = vmatpush1.msra.mxu0 0.0
          %4062 = vmatprep.subr.mxu0 0.0
          %4063 = vmatpush1.msra.mxu0 0.0
          %4064 = vmatprep.subr.mxu0 0.0
          %4065 = vmatpush1.msra.mxu0 0.0
          %4066 = vmatprep.subr.mxu0 0.0
          %4067 = vmatpush1.msra.mxu0 0.0
          %4068 = vmatprep.subr.mxu0 0.0
          %4069 = vmatpush1.msra.mxu0 0.0
          %4070 = vmatprep.subr.mxu0 0.0
          %4071 = vmatpush1.msra.mxu0 0.0
          %4072 = vmatprep.subr.mxu0 0.0
          %4073 = vmatpush1.msra.mxu0 0.0
          %4074 = vmatprep.subr.mxu0 0.0
          %4075 = vmatpush1.msra.mxu0 0.0
          %4076 = vmatprep.subr.mxu0 0.0
          %4077 = vmatpush1.msra.mxu0 0.0
          %4078 = vmatprep.subr.mxu0 0.0
          %4079 = vmatpush1.msra.mxu0 0.0
          %4080 = vmatprep.subr.mxu0 0.0
          %4081 = vmatpush1.msra.mxu0 0.0
          %4082 = vmatprep.subr.mxu0 0.0
          %4083 = vmatpush1.msra.mxu0 0.0
          %4084 = vmatprep.subr.mxu0 0.0
          %4085 = vmatpush1.msra.mxu0 0.0
          %4086 = vmatprep.subr.mxu0 0.0
          %4087 = vmatpush1.msra.mxu0 0.0
          %4088 = vmatprep.subr.mxu0 0.0
          %4089 = vmatpush1.msra.mxu0 0.0
          %4090 = vmatprep.subr.mxu0 0.0
          %4091 = vmatpush1.msra.mxu0 0.0
          %4092 = vmatprep.subr.mxu0 0.0
          %4093 = vmatpush1.msra.mxu0 0.0
          %4094 = vmatprep.subr.mxu0 0.0
          %4095 = vmatpush1.msra.mxu0 0.0
          %4096 = vmatprep.mubr.f32.mxu0 0.0
          %4097 = vmatmul.mubr.f32.gmra.mrb[0].mxu0 %v4030
          %v4098 = vpop.f32.mrb[0].mxu0
          %v4099 = vadd.f32 0.0, %v4098
          %v4100 = vpop.f32.mrb[0].mxu0
          %4101 = vdwg.mxu0
          %v4102 = vadd.f32 %v4022, %v4099
          %v4103 = vld [vmem:[#allocation2 + $0x18] sm:$0xff]
          %v4104 = vld [vmem:[%s657] sm:$0xff]
          %4106 = vrot.lane.b32.xlu0 %v4103, 88
          %v4107 = vpop.permute.xlu0 %4106
          %v4108 = vsel %vm325, %v4107, 0
          %4110 = vmatprep.subr.mxu0 0.0
          %4111 = vmatpush1.msra.mxu0 %v4104
          %4112 = vmatprep.subr.mxu0 0.0
          %4113 = vmatpush1.msra.mxu0 0.0
          %4114 = vmatprep.subr.mxu0 0.0
          %4115 = vmatpush1.msra.mxu0 0.0
          %4116 = vmatprep.subr.mxu0 0.0
          %4117 = vmatpush1.msra.mxu0 0.0
          %4118 = vmatprep.subr.mxu0 0.0
          %4119 = vmatpush1.msra.mxu0 0.0
          %4120 = vmatprep.subr.mxu0 0.0
          %4121 = vmatpush1.msra.mxu0 0.0
          %4122 = vmatprep.subr.mxu0 0.0
          %4123 = vmatpush1.msra.mxu0 0.0
          %4124 = vmatprep.subr.mxu0 0.0
          %4125 = vmatpush1.msra.mxu0 0.0
          %4126 = vmatprep.subr.mxu0 0.0
          %4127 = vmatpush1.msra.mxu0 0.0
          %4128 = vmatprep.subr.mxu0 0.0
          %4129 = vmatpush1.msra.mxu0 0.0
          %4130 = vmatprep.subr.mxu0 0.0
          %4131 = vmatpush1.msra.mxu0 0.0
          %4132 = vmatprep.subr.mxu0 0.0
          %4133 = vmatpush1.msra.mxu0 0.0
          %4134 = vmatprep.subr.mxu0 0.0
          %4135 = vmatpush1.msra.mxu0 0.0
          %4136 = vmatprep.subr.mxu0 0.0
          %4137 = vmatpush1.msra.mxu0 0.0
          %4138 = vmatprep.subr.mxu0 0.0
          %4139 = vmatpush1.msra.mxu0 0.0
          %4140 = vmatprep.subr.mxu0 0.0
          %4141 = vmatpush1.msra.mxu0 0.0
          %4142 = vmatprep.subr.mxu0 0.0
          %4143 = vmatpush1.msra.mxu0 0.0
          %4144 = vmatprep.subr.mxu0 0.0
          %4145 = vmatpush1.msra.mxu0 0.0
          %4146 = vmatprep.subr.mxu0 0.0
          %4147 = vmatpush1.msra.mxu0 0.0
          %4148 = vmatprep.subr.mxu0 0.0
          %4149 = vmatpush1.msra.mxu0 0.0
          %4150 = vmatprep.subr.mxu0 0.0
          %4151 = vmatpush1.msra.mxu0 0.0
          %4152 = vmatprep.subr.mxu0 0.0
          %4153 = vmatpush1.msra.mxu0 0.0
          %4154 = vmatprep.subr.mxu0 0.0
          %4155 = vmatpush1.msra.mxu0 0.0
          %4156 = vmatprep.subr.mxu0 0.0
          %4157 = vmatpush1.msra.mxu0 0.0
          %4158 = vmatprep.subr.mxu0 0.0
          %4159 = vmatpush1.msra.mxu0 0.0
          %4160 = vmatprep.subr.mxu0 0.0
          %4161 = vmatpush1.msra.mxu0 0.0
          %4162 = vmatprep.subr.mxu0 0.0
          %4163 = vmatpush1.msra.mxu0 0.0
          %4164 = vmatprep.subr.mxu0 0.0
          %4165 = vmatpush1.msra.mxu0 0.0
          %4166 = vmatprep.subr.mxu0 0.0
          %4167 = vmatpush1.msra.mxu0 0.0
          %4168 = vmatprep.subr.mxu0 0.0
          %4169 = vmatpush1.msra.mxu0 0.0
          %4170 = vmatprep.subr.mxu0 0.0
          %4171 = vmatpush1.msra.mxu0 0.0
          %4172 = vmatprep.subr.mxu0 0.0
          %4173 = vmatpush1.msra.mxu0 0.0
          %4174 = vmatprep.mubr.f32.mxu0 0.0
          %4175 = vmatmul.mubr.f32.gmra.mrb[0].mxu0 %v4108
          %v4176 = vpop.f32.mrb[0].mxu0
          %v4177 = vadd.f32 0.0, %v4176
          %v4178 = vpop.f32.mrb[0].mxu0
          %4179 = vdwg.mxu0
          %v4180 = vadd.f32 %v4102, %v4177
          %v4181 = vld [vmem:[#allocation2 + $0x20] sm:$0xff]
          %v4182 = vld [vmem:[%s734] sm:$0xff]
          %4184 = vrot.lane.b32.xlu0 %v4181, 88
          %v4185 = vpop.permute.xlu0 %4184
          %v4186 = vsel %vm325, %v4185, 0
          %4188 = vmatprep.subr.mxu0 0.0
          %4189 = vmatpush1.msra.mxu0 %v4182
          %4190 = vmatprep.subr.mxu0 0.0
          %4191 = vmatpush1.msra.mxu0 0.0
          %4192 = vmatprep.subr.mxu0 0.0
          %4193 = vmatpush1.msra.mxu0 0.0
          %4194 = vmatprep.subr.mxu0 0.0
          %4195 = vmatpush1.msra.mxu0 0.0
          %4196 = vmatprep.subr.mxu0 0.0
          %4197 = vmatpush1.msra.mxu0 0.0
          %4198 = vmatprep.subr.mxu0 0.0
          %4199 = vmatpush1.msra.mxu0 0.0
          %4200 = vmatprep.subr.mxu0 0.0
          %4201 = vmatpush1.msra.mxu0 0.0
          %4202 = vmatprep.subr.mxu0 0.0
          %4203 = vmatpush1.msra.mxu0 0.0
          %4204 = vmatprep.subr.mxu0 0.0
          %4205 = vmatpush1.msra.mxu0 0.0
          %4206 = vmatprep.subr.mxu0 0.0
          %4207 = vmatpush1.msra.mxu0 0.0
          %4208 = vmatprep.subr.mxu0 0.0
          %4209 = vmatpush1.msra.mxu0 0.0
          %4210 = vmatprep.subr.mxu0 0.0
          %4211 = vmatpush1.msra.mxu0 0.0
          %4212 = vmatprep.subr.mxu0 0.0
          %4213 = vmatpush1.msra.mxu0 0.0
          %4214 = vmatprep.subr.mxu0 0.0
          %4215 = vmatpush1.msra.mxu0 0.0
          %4216 = vmatprep.subr.mxu0 0.0
          %4217 = vmatpush1.msra.mxu0 0.0
          %4218 = vmatprep.subr.mxu0 0.0
          %4219 = vmatpush1.msra.mxu0 0.0
          %4220 = vmatprep.subr.mxu0 0.0
          %4221 = vmatpush1.msra.mxu0 0.0
          %4222 = vmatprep.subr.mxu0 0.0
          %4223 = vmatpush1.msra.mxu0 0.0
          %4224 = vmatprep.subr.mxu0 0.0
          %4225 = vmatpush1.msra.mxu0 0.0
          %4226 = vmatprep.subr.mxu0 0.0
          %4227 = vmatpush1.msra.mxu0 0.0
          %4228 = vmatprep.subr.mxu0 0.0
          %4229 = vmatpush1.msra.mxu0 0.0
          %4230 = vmatprep.subr.mxu0 0.0
          %4231 = vmatpush1.msra.mxu0 0.0
          %4232 = vmatprep.subr.mxu0 0.0
          %4233 = vmatpush1.msra.mxu0 0.0
          %4234 = vmatprep.subr.mxu0 0.0
          %4235 = vmatpush1.msra.mxu0 0.0
          %4236 = vmatprep.subr.mxu0 0.0
          %4237 = vmatpush1.msra.mxu0 0.0
          %4238 = vmatprep.subr.mxu0 0.0
          %4239 = vmatpush1.msra.mxu0 0.0
          %4240 = vmatprep.subr.mxu0 0.0
          %4241 = vmatpush1.msra.mxu0 0.0
          %4242 = vmatprep.subr.mxu0 0.0
          %4243 = vmatpush1.msra.mxu0 0.0
          %4244 = vmatprep.subr.mxu0 0.0
          %4245 = vmatpush1.msra.mxu0 0.0
          %4246 = vmatprep.subr.mxu0 0.0
          %4247 = vmatpush1.msra.mxu0 0.0
          %4248 = vmatprep.subr.mxu0 0.0
          %4249 = vmatpush1.msra.mxu0 0.0
          %4250 = vmatprep.subr.mxu0 0.0
          %4251 = vmatpush1.msra.mxu0 0.0
          %4252 = vmatprep.mubr.f32.mxu0 0.0
          %4253 = vmatmul.mubr.f32.gmra.mrb[0].mxu0 %v4186
          %v4254 = vpop.f32.mrb[0].mxu0
          %v4255 = vadd.f32 0.0, %v4254
          %v4256 = vpop.f32.mrb[0].mxu0
          %4257 = vdwg.mxu0
          %v4258 = vadd.f32 %v4180, %v4255
          %v4259 = vld [vmem:[#allocation2 + $0x28] sm:$0xff]
          %v4260 = vld [vmem:[%s811] sm:$0xff]
          %4262 = vrot.lane.b32.xlu0 %v4259, 88
          %v4263 = vpop.permute.xlu0 %4262
          %v4264 = vsel %vm325, %v4263, 0
          %4266 = vmatprep.subr.mxu0 0.0
          %4267 = vmatpush1.msra.mxu0 %v4260
          %4268 = vmatprep.subr.mxu0 0.0
          %4269 = vmatpush1.msra.mxu0 0.0
          %4270 = vmatprep.subr.mxu0 0.0
          %4271 = vmatpush1.msra.mxu0 0.0
          %4272 = vmatprep.subr.mxu0 0.0
          %4273 = vmatpush1.msra.mxu0 0.0
          %4274 = vmatprep.subr.mxu0 0.0
          %4275 = vmatpush1.msra.mxu0 0.0
          %4276 = vmatprep.subr.mxu0 0.0
          %4277 = vmatpush1.msra.mxu0 0.0
          %4278 = vmatprep.subr.mxu0 0.0
          %4279 = vmatpush1.msra.mxu0 0.0
          %4280 = vmatprep.subr.mxu0 0.0
          %4281 = vmatpush1.msra.mxu0 0.0
          %4282 = vmatprep.subr.mxu0 0.0
          %4283 = vmatpush1.msra.mxu0 0.0
          %4284 = vmatprep.subr.mxu0 0.0
          %4285 = vmatpush1.msra.mxu0 0.0
          %4286 = vmatprep.subr.mxu0 0.0
          %4287 = vmatpush1.msra.mxu0 0.0
          %4288 = vmatprep.subr.mxu0 0.0
          %4289 = vmatpush1.msra.mxu0 0.0
          %4290 = vmatprep.subr.mxu0 0.0
          %4291 = vmatpush1.msra.mxu0 0.0
          %4292 = vmatprep.subr.mxu0 0.0
          %4293 = vmatpush1.msra.mxu0 0.0
          %4294 = vmatprep.subr.mxu0 0.0
          %4295 = vmatpush1.msra.mxu0 0.0
          %4296 = vmatprep.subr.mxu0 0.0
          %4297 = vmatpush1.msra.mxu0 0.0
          %4298 = vmatprep.subr.mxu0 0.0
          %4299 = vmatpush1.msra.mxu0 0.0
          %4300 = vmatprep.subr.mxu0 0.0
          %4301 = vmatpush1.msra.mxu0 0.0
          %4302 = vmatprep.subr.mxu0 0.0
          %4303 = vmatpush1.msra.mxu0 0.0
          %4304 = vmatprep.subr.mxu0 0.0
          %4305 = vmatpush1.msra.mxu0 0.0
          %4306 = vmatprep.subr.mxu0 0.0
          %4307 = vmatpush1.msra.mxu0 0.0
          %4308 = vmatprep.subr.mxu0 0.0
          %4309 = vmatpush1.msra.mxu0 0.0
          %4310 = vmatprep.subr.mxu0 0.0
          %4311 = vmatpush1.msra.mxu0 0.0
          %4312 = vmatprep.subr.mxu0 0.0
          %4313 = vmatpush1.msra.mxu0 0.0
          %4314 = vmatprep.subr.mxu0 0.0
          %4315 = vmatpush1.msra.mxu0 0.0
          %4316 = vmatprep.subr.mxu0 0.0
          %4317 = vmatpush1.msra.mxu0 0.0
          %4318 = vmatprep.subr.mxu0 0.0
          %4319 = vmatpush1.msra.mxu0 0.0
          %4320 = vmatprep.subr.mxu0 0.0
          %4321 = vmatpush1.msra.mxu0 0.0
          %4322 = vmatprep.subr.mxu0 0.0
          %4323 = vmatpush1.msra.mxu0 0.0
          %4324 = vmatprep.subr.mxu0 0.0
          %4325 = vmatpush1.msra.mxu0 0.0
          %4326 = vmatprep.subr.mxu0 0.0
          %4327 = vmatpush1.msra.mxu0 0.0
          %4328 = vmatprep.subr.mxu0 0.0
          %4329 = vmatpush1.msra.mxu0 0.0
          %4330 = vmatprep.mubr.f32.mxu0 0.0
          %4331 = vmatmul.mubr.f32.gmra.mrb[0].mxu0 %v4264
          %v4332 = vpop.f32.mrb[0].mxu0
          %v4333 = vadd.f32 0.0, %v4332
          %v4334 = vpop.f32.mrb[0].mxu0
          %4335 = vdwg.mxu0
          %v4336 = vadd.f32 %v4258, %v4333
          %v4337 = vld [vmem:[#allocation2 + $0x30] sm:$0xff]
          %v4338 = vld [vmem:[%s888] sm:$0xff]
          %4340 = vrot.lane.b32.xlu0 %v4337, 88
          %v4341 = vpop.permute.xlu0 %4340
          %v4342 = vsel %vm325, %v4341, 0
          %4344 = vmatprep.subr.mxu0 0.0
          %4345 = vmatpush1.msra.mxu0 %v4338
          %4346 = vmatprep.subr.mxu0 0.0
          %4347 = vmatpush1.msra.mxu0 0.0
          %4348 = vmatprep.subr.mxu0 0.0
          %4349 = vmatpush1.msra.mxu0 0.0
          %4350 = vmatprep.subr.mxu0 0.0
          %4351 = vmatpush1.msra.mxu0 0.0
          %4352 = vmatprep.subr.mxu0 0.0
          %4353 = vmatpush1.msra.mxu0 0.0
          %4354 = vmatprep.subr.mxu0 0.0
          %4355 = vmatpush1.msra.mxu0 0.0
          %4356 = vmatprep.subr.mxu0 0.0
          %4357 = vmatpush1.msra.mxu0 0.0
          %4358 = vmatprep.subr.mxu0 0.0
          %4359 = vmatpush1.msra.mxu0 0.0
          %4360 = vmatprep.subr.mxu0 0.0
          %4361 = vmatpush1.msra.mxu0 0.0
          %4362 = vmatprep.subr.mxu0 0.0
          %4363 = vmatpush1.msra.mxu0 0.0
          %4364 = vmatprep.subr.mxu0 0.0
          %4365 = vmatpush1.msra.mxu0 0.0
          %4366 = vmatprep.subr.mxu0 0.0
          %4367 = vmatpush1.msra.mxu0 0.0
          %4368 = vmatprep.subr.mxu0 0.0
          %4369 = vmatpush1.msra.mxu0 0.0
          %4370 = vmatprep.subr.mxu0 0.0
          %4371 = vmatpush1.msra.mxu0 0.0
          %4372 = vmatprep.subr.mxu0 0.0
          %4373 = vmatpush1.msra.mxu0 0.0
          %4374 = vmatprep.subr.mxu0 0.0
          %4375 = vmatpush1.msra.mxu0 0.0
          %4376 = vmatprep.subr.mxu0 0.0
          %4377 = vmatpush1.msra.mxu0 0.0
          %4378 = vmatprep.subr.mxu0 0.0
          %4379 = vmatpush1.msra.mxu0 0.0
          %4380 = vmatprep.subr.mxu0 0.0
          %4381 = vmatpush1.msra.mxu0 0.0
          %4382 = vmatprep.subr.mxu0 0.0
          %4383 = vmatpush1.msra.mxu0 0.0
          %4384 = vmatprep.subr.mxu0 0.0
          %4385 = vmatpush1.msra.mxu0 0.0
          %4386 = vmatprep.subr.mxu0 0.0
          %4387 = vmatpush1.msra.mxu0 0.0
          %4388 = vmatprep.subr.mxu0 0.0
          %4389 = vmatpush1.msra.mxu0 0.0
          %4390 = vmatprep.subr.mxu0 0.0
          %4391 = vmatpush1.msra.mxu0 0.0
          %4392 = vmatprep.subr.mxu0 0.0
          %4393 = vmatpush1.msra.mxu0 0.0
          %4394 = vmatprep.subr.mxu0 0.0
          %4395 = vmatpush1.msra.mxu0 0.0
          %4396 = vmatprep.subr.mxu0 0.0
          %4397 = vmatpush1.msra.mxu0 0.0
          %4398 = vmatprep.subr.mxu0 0.0
          %4399 = vmatpush1.msra.mxu0 0.0
          %4400 = vmatprep.subr.mxu0 0.0
          %4401 = vmatpush1.msra.mxu0 0.0
          %4402 = vmatprep.subr.mxu0 0.0
          %4403 = vmatpush1.msra.mxu0 0.0
          %4404 = vmatprep.subr.mxu0 0.0
          %4405 = vmatpush1.msra.mxu0 0.0
          %4406 = vmatprep.subr.mxu0 0.0
          %4407 = vmatpush1.msra.mxu0 0.0
          %4408 = vmatprep.mubr.f32.mxu0 0.0
          %4409 = vmatmul.mubr.f32.gmra.mrb[0].mxu0 %v4342
          %v4410 = vpop.f32.mrb[0].mxu0
          %v4411 = vadd.f32 0.0, %v4410
          %v4412 = vpop.f32.mrb[0].mxu0
          %4413 = vdwg.mxu0
          %v4414 = vadd.f32 %v4336, %v4411
          %v4415 = vld [vmem:[#allocation2 + $0x38] sm:$0xff]
          %v4416 = vld [vmem:[%s965] sm:$0xff]
          %4418 = vrot.lane.b32.xlu0 %v4415, 88
          %v4419 = vpop.permute.xlu0 %4418
          %v4420 = vsel %vm325, %v4419, 0
          %4422 = vmatprep.subr.mxu0 0.0
          %4423 = vmatpush1.msra.mxu0 %v4416
          %4424 = vmatprep.subr.mxu0 0.0
          %4425 = vmatpush1.msra.mxu0 0.0
          %4426 = vmatprep.subr.mxu0 0.0
          %4427 = vmatpush1.msra.mxu0 0.0
          %4428 = vmatprep.subr.mxu0 0.0
          %4429 = vmatpush1.msra.mxu0 0.0
          %4430 = vmatprep.subr.mxu0 0.0
          %4431 = vmatpush1.msra.mxu0 0.0
          %4432 = vmatprep.subr.mxu0 0.0
          %4433 = vmatpush1.msra.mxu0 0.0
          %4434 = vmatprep.subr.mxu0 0.0
          %4435 = vmatpush1.msra.mxu0 0.0
          %4436 = vmatprep.subr.mxu0 0.0
          %4437 = vmatpush1.msra.mxu0 0.0
          %4438 = vmatprep.subr.mxu0 0.0
          %4439 = vmatpush1.msra.mxu0 0.0
          %4440 = vmatprep.subr.mxu0 0.0
          %4441 = vmatpush1.msra.mxu0 0.0
          %4442 = vmatprep.subr.mxu0 0.0
          %4443 = vmatpush1.msra.mxu0 0.0
          %4444 = vmatprep.subr.mxu0 0.0
          %4445 = vmatpush1.msra.mxu0 0.0
          %4446 = vmatprep.subr.mxu0 0.0
          %4447 = vmatpush1.msra.mxu0 0.0
          %4448 = vmatprep.subr.mxu0 0.0
          %4449 = vmatpush1.msra.mxu0 0.0
          %4450 = vmatprep.subr.mxu0 0.0
          %4451 = vmatpush1.msra.mxu0 0.0
          %4452 = vmatprep.subr.mxu0 0.0
          %4453 = vmatpush1.msra.mxu0 0.0
          %4454 = vmatprep.subr.mxu0 0.0
          %4455 = vmatpush1.msra.mxu0 0.0
          %4456 = vmatprep.subr.mxu0 0.0
          %4457 = vmatpush1.msra.mxu0 0.0
          %4458 = vmatprep.subr.mxu0 0.0
          %4459 = vmatpush1.msra.mxu0 0.0
          %4460 = vmatprep.subr.mxu0 0.0
          %4461 = vmatpush1.msra.mxu0 0.0
          %4462 = vmatprep.subr.mxu0 0.0
          %4463 = vmatpush1.msra.mxu0 0.0
          %4464 = vmatprep.subr.mxu0 0.0
          %4465 = vmatpush1.msra.mxu0 0.0
          %4466 = vmatprep.subr.mxu0 0.0
          %4467 = vmatpush1.msra.mxu0 0.0
          %4468 = vmatprep.subr.mxu0 0.0
          %4469 = vmatpush1.msra.mxu0 0.0
          %4470 = vmatprep.subr.mxu0 0.0
          %4471 = vmatpush1.msra.mxu0 0.0
          %4472 = vmatprep.subr.mxu0 0.0
          %4473 = vmatpush1.msra.mxu0 0.0
          %4474 = vmatprep.subr.mxu0 0.0
          %4475 = vmatpush1.msra.mxu0 0.0
          %4476 = vmatprep.subr.mxu0 0.0
          %4477 = vmatpush1.msra.mxu0 0.0
          %4478 = vmatprep.subr.mxu0 0.0
          %4479 = vmatpush1.msra.mxu0 0.0
          %4480 = vmatprep.subr.mxu0 0.0
          %4481 = vmatpush1.msra.mxu0 0.0
          %4482 = vmatprep.subr.mxu0 0.0
          %4483 = vmatpush1.msra.mxu0 0.0
          %4484 = vmatprep.subr.mxu0 0.0
          %4485 = vmatpush1.msra.mxu0 0.0
          %4486 = vmatprep.mubr.f32.mxu0 0.0
          %4487 = vmatmul.mubr.f32.gmra.mrb[0].mxu0 %v4420
          %v4488 = vpop.f32.mrb[0].mxu0
          %v4489 = vadd.f32 0.0, %v4488
          %v4490 = vpop.f32.mrb[0].mxu0
          %4491 = vdwg.mxu0
          %v4492 = vadd.f32 %v4414, %v4489
          %v4493 = vadd.f32 %v4492, %v1045
          %v4495 = vcombine.high %v4493, %v4493
          %v4497 = vunpack.c.l.s4 1966171168
          %v4498 = vunpack.c.0.s8 %v4497
          %v4499 = vlaneseq
          %v4500 = vshrl.u32 %v4499, 7
          %v4501 = vsub.s32 %v4498, %v4500
          %v4502 = vrot.slane %v4493, %v4501
          %v4504 = vunpack.c.l.s4 1966171168
          %v4505 = vunpack.c.0.s8 %v4504
          %v4506 = vlaneseq
          %v4507 = vshrl.u32 %v4506, 7
          %v4508 = vsub.s32 %v4505, %v4507
          %v4509 = vrot.slane %v4495, %v4508
          %v4510 = vcombine.high %v4502, %v4502
          %v4511 = vcombine.high %v4509, %v4509
          %v4513 = vunpack.c.l.s4 1966171168
          %v4514 = vunpack.c.0.s8 %v4513
          %v4515 = vlaneseq
          %v4516 = vshrl.u32 %v4515, 7
          %v4517 = vsub.s32 %v4514, %v4516
          %v4518 = vrot.slane %v4502, %v4517
          %v4520 = vunpack.c.l.s4 1966171168
          %v4521 = vunpack.c.0.s8 %v4520
          %v4522 = vlaneseq
          %v4523 = vshrl.u32 %v4522, 7
          %v4524 = vsub.s32 %v4521, %v4523
          %v4525 = vrot.slane %v4509, %v4524
          %v4527 = vunpack.c.l.s4 1966171168
          %v4528 = vunpack.c.0.s8 %v4527
          %v4529 = vlaneseq
          %v4530 = vshrl.u32 %v4529, 7
          %v4531 = vsub.s32 %v4528, %v4530
          %v4532 = vrot.slane %v4510, %v4531
          %v4534 = vunpack.c.l.s4 1966171168
          %v4535 = vunpack.c.0.s8 %v4534
          %v4536 = vlaneseq
          %v4537 = vshrl.u32 %v4536, 7
          %v4538 = vsub.s32 %v4535, %v4537
          %v4539 = vrot.slane %v4511, %v4538
          %v4540 = vcombine.high %v4518, %v4518
          %v4541 = vcombine.high %v4525, %v4525
          %v4542 = vcombine.high %v4532, %v4532
          %v4543 = vcombine.high %v4539, %v4539
          %4552 = vst.msk [vmem:[%s263 + $0x5] sm:$0x1] %vm1106, %v4518
          %4553 = vst.msk [vmem:[%s263 + $0xd] sm:$0x1] %vm1106, %v4532
          %4554 = vst.msk [vmem:[%s263 + $0x15] sm:$0x1] %vm1106, %v4540
          %4555 = vst.msk [vmem:[%s263 + $0x1d] sm:$0x1] %vm1106, %v4542
          %4556 = vst.msk [vmem:[%s263 + $0x25] sm:$0x1] %vm1106, %v4525
          %4557 = vst.msk [vmem:[%s263 + $0x2d] sm:$0x1] %vm1106, %v4539
          %4558 = vst.msk [vmem:[%s263 + $0x35] sm:$0x1] %vm1106, %v4541
          %4559 = vst.msk [vmem:[%s263 + $0x3d] sm:$0x1] %vm1106, %v4543
          %v4560 = vld [vmem:[#allocation2] sm:$0xff]
          %v4561 = vld [vmem:[%s2] sm:$0xff]
          %v4562 = vld [vmem:[#allocation2 + $0x8] sm:$0xff]
          %v4563 = vld [vmem:[%s431] sm:$0xff]
          %4565 = vrot.lane.b32.xlu0 %v4562, 80
          %v4566 = vpop.permute.xlu0 %4565
          %v4567 = vsel %vm325, %v4566, 0
          %4569 = vmatprep.subr.mxu0 0.0
          %4570 = vmatpush1.msra.mxu0 %v4563
          %4571 = vmatprep.subr.mxu0 0.0
          %4572 = vmatpush1.msra.mxu0 0.0
          %4573 = vmatprep.subr.mxu0 0.0
          %4574 = vmatpush1.msra.mxu0 0.0
          %4575 = vmatprep.subr.mxu0 0.0
          %4576 = vmatpush1.msra.mxu0 0.0
          %4577 = vmatprep.subr.mxu0 0.0
          %4578 = vmatpush1.msra.mxu0 0.0
          %4579 = vmatprep.subr.mxu0 0.0
          %4580 = vmatpush1.msra.mxu0 0.0
          %4581 = vmatprep.subr.mxu0 0.0
          %4582 = vmatpush1.msra.mxu0 0.0
          %4583 = vmatprep.subr.mxu0 0.0
          %4584 = vmatpush1.msra.mxu0 0.0
          %4585 = vmatprep.subr.mxu0 0.0
          %4586 = vmatpush1.msra.mxu0 0.0
          %4587 = vmatprep.subr.mxu0 0.0
          %4588 = vmatpush1.msra.mxu0 0.0
          %4589 = vmatprep.subr.mxu0 0.0
          %4590 = vmatpush1.msra.mxu0 0.0
          %4591 = vmatprep.subr.mxu0 0.0
          %4592 = vmatpush1.msra.mxu0 0.0
          %4593 = vmatprep.subr.mxu0 0.0
          %4594 = vmatpush1.msra.mxu0 0.0
          %4595 = vmatprep.subr.mxu0 0.0
          %4596 = vmatpush1.msra.mxu0 0.0
          %4597 = vmatprep.subr.mxu0 0.0
          %4598 = vmatpush1.msra.mxu0 0.0
          %4599 = vmatprep.subr.mxu0 0.0
          %4600 = vmatpush1.msra.mxu0 0.0
          %4601 = vmatprep.subr.mxu0 0.0
          %4602 = vmatpush1.msra.mxu0 0.0
          %4603 = vmatprep.subr.mxu0 0.0
          %4604 = vmatpush1.msra.mxu0 0.0
          %4605 = vmatprep.subr.mxu0 0.0
          %4606 = vmatpush1.msra.mxu0 0.0
          %4607 = vmatprep.subr.mxu0 0.0
          %4608 = vmatpush1.msra.mxu0 0.0
          %4609 = vmatprep.subr.mxu0 0.0
          %4610 = vmatpush1.msra.mxu0 0.0
          %4611 = vmatprep.subr.mxu0 0.0
          %4612 = vmatpush1.msra.mxu0 0.0
          %4613 = vmatprep.subr.mxu0 0.0
          %4614 = vmatpush1.msra.mxu0 0.0
          %4615 = vmatprep.subr.mxu0 0.0
          %4616 = vmatpush1.msra.mxu0 0.0
          %4617 = vmatprep.subr.mxu0 0.0
          %4618 = vmatpush1.msra.mxu0 0.0
          %4619 = vmatprep.subr.mxu0 0.0
          %4620 = vmatpush1.msra.mxu0 0.0
          %4621 = vmatprep.subr.mxu0 0.0
          %4622 = vmatpush1.msra.mxu0 0.0
          %4623 = vmatprep.subr.mxu0 0.0
          %4624 = vmatpush1.msra.mxu0 0.0
          %4625 = vmatprep.subr.mxu0 0.0
          %4626 = vmatpush1.msra.mxu0 0.0
          %4627 = vmatprep.subr.mxu0 0.0
          %4628 = vmatpush1.msra.mxu0 0.0
          %4629 = vmatprep.subr.mxu0 0.0
          %4630 = vmatpush1.msra.mxu0 0.0
          %4631 = vmatprep.subr.mxu0 0.0
          %4632 = vmatpush1.msra.mxu0 0.0
          %4633 = vmatprep.mubr.f32.mxu0 0.0
          %4634 = vmatmul.mubr.f32.gmra.mrb[0].mxu0 %v4567
          %v4635 = vpop.f32.mrb[0].mxu0
          %v4636 = vadd.f32 0.0, %v4635
          %v4637 = vpop.f32.mrb[0].mxu0
          %4638 = vdwg.mxu0
          %4640 = vrot.lane.b32.xlu0 %v4560, 80
          %v4641 = vpop.permute.xlu0 %4640
          %v4642 = vsel %vm325, %v4641, 0
          %4644 = vmatprep.subr.mxu0 0.0
          %4645 = vmatpush1.msra.mxu0 %v4561
          %4646 = vmatprep.subr.mxu0 0.0
          %4647 = vmatpush1.msra.mxu0 0.0
          %4648 = vmatprep.subr.mxu0 0.0
          %4649 = vmatpush1.msra.mxu0 0.0
          %4650 = vmatprep.subr.mxu0 0.0
          %4651 = vmatpush1.msra.mxu0 0.0
          %4652 = vmatprep.subr.mxu0 0.0
          %4653 = vmatpush1.msra.mxu0 0.0
          %4654 = vmatprep.subr.mxu0 0.0
          %4655 = vmatpush1.msra.mxu0 0.0
          %4656 = vmatprep.subr.mxu0 0.0
          %4657 = vmatpush1.msra.mxu0 0.0
          %4658 = vmatprep.subr.mxu0 0.0
          %4659 = vmatpush1.msra.mxu0 0.0
          %4660 = vmatprep.subr.mxu0 0.0
          %4661 = vmatpush1.msra.mxu0 0.0
          %4662 = vmatprep.subr.mxu0 0.0
          %4663 = vmatpush1.msra.mxu0 0.0
          %4664 = vmatprep.subr.mxu0 0.0
          %4665 = vmatpush1.msra.mxu0 0.0
          %4666 = vmatprep.subr.mxu0 0.0
          %4667 = vmatpush1.msra.mxu0 0.0
          %4668 = vmatprep.subr.mxu0 0.0
          %4669 = vmatpush1.msra.mxu0 0.0
          %4670 = vmatprep.subr.mxu0 0.0
          %4671 = vmatpush1.msra.mxu0 0.0
          %4672 = vmatprep.subr.mxu0 0.0
          %4673 = vmatpush1.msra.mxu0 0.0
          %4674 = vmatprep.subr.mxu0 0.0
          %4675 = vmatpush1.msra.mxu0 0.0
          %4676 = vmatprep.subr.mxu0 0.0
          %4677 = vmatpush1.msra.mxu0 0.0
          %4678 = vmatprep.subr.mxu0 0.0
          %4679 = vmatpush1.msra.mxu0 0.0
          %4680 = vmatprep.subr.mxu0 0.0
          %4681 = vmatpush1.msra.mxu0 0.0
          %4682 = vmatprep.subr.mxu0 0.0
          %4683 = vmatpush1.msra.mxu0 0.0
          %4684 = vmatprep.subr.mxu0 0.0
          %4685 = vmatpush1.msra.mxu0 0.0
          %4686 = vmatprep.subr.mxu0 0.0
          %4687 = vmatpush1.msra.mxu0 0.0
          %4688 = vmatprep.subr.mxu0 0.0
          %4689 = vmatpush1.msra.mxu0 0.0
          %4690 = vmatprep.subr.mxu0 0.0
          %4691 = vmatpush1.msra.mxu0 0.0
          %4692 = vmatprep.subr.mxu0 0.0
          %4693 = vmatpush1.msra.mxu0 0.0
          %4694 = vmatprep.subr.mxu0 0.0
          %4695 = vmatpush1.msra.mxu0 0.0
          %4696 = vmatprep.subr.mxu0 0.0
          %4697 = vmatpush1.msra.mxu0 0.0
          %4698 = vmatprep.subr.mxu0 0.0
          %4699 = vmatpush1.msra.mxu0 0.0
          %4700 = vmatprep.subr.mxu0 0.0
          %4701 = vmatpush1.msra.mxu0 0.0
          %4702 = vmatprep.subr.mxu0 0.0
          %4703 = vmatpush1.msra.mxu0 0.0
          %4704 = vmatprep.subr.mxu0 0.0
          %4705 = vmatpush1.msra.mxu0 0.0
          %4706 = vmatprep.subr.mxu0 0.0
          %4707 = vmatpush1.msra.mxu0 0.0
          %4708 = vmatprep.mubr.f32.mxu0 0.0
          %4709 = vmatmul.mubr.f32.gmra.mrb[0].mxu0 %v4642
          %v4710 = vpop.f32.mrb[0].mxu0
          %v4711 = vadd.f32 %v4636, %v4710
          %v4712 = vpop.f32.mrb[0].mxu0
          %4713 = vdwg.mxu0
          %v4714 = vld [vmem:[#allocation2 + $0x10] sm:$0xff]
          %v4715 = vld [vmem:[%s580] sm:$0xff]
          %4717 = vrot.lane.b32.xlu0 %v4714, 80
          %v4718 = vpop.permute.xlu0 %4717
          %v4719 = vsel %vm325, %v4718, 0
          %4721 = vmatprep.subr.mxu0 0.0
          %4722 = vmatpush1.msra.mxu0 %v4715
          %4723 = vmatprep.subr.mxu0 0.0
          %4724 = vmatpush1.msra.mxu0 0.0
          %4725 = vmatprep.subr.mxu0 0.0
          %4726 = vmatpush1.msra.mxu0 0.0
          %4727 = vmatprep.subr.mxu0 0.0
          %4728 = vmatpush1.msra.mxu0 0.0
          %4729 = vmatprep.subr.mxu0 0.0
          %4730 = vmatpush1.msra.mxu0 0.0
          %4731 = vmatprep.subr.mxu0 0.0
          %4732 = vmatpush1.msra.mxu0 0.0
          %4733 = vmatprep.subr.mxu0 0.0
          %4734 = vmatpush1.msra.mxu0 0.0
          %4735 = vmatprep.subr.mxu0 0.0
          %4736 = vmatpush1.msra.mxu0 0.0
          %4737 = vmatprep.subr.mxu0 0.0
          %4738 = vmatpush1.msra.mxu0 0.0
          %4739 = vmatprep.subr.mxu0 0.0
          %4740 = vmatpush1.msra.mxu0 0.0
          %4741 = vmatprep.subr.mxu0 0.0
          %4742 = vmatpush1.msra.mxu0 0.0
          %4743 = vmatprep.subr.mxu0 0.0
          %4744 = vmatpush1.msra.mxu0 0.0
          %4745 = vmatprep.subr.mxu0 0.0
          %4746 = vmatpush1.msra.mxu0 0.0
          %4747 = vmatprep.subr.mxu0 0.0
          %4748 = vmatpush1.msra.mxu0 0.0
          %4749 = vmatprep.subr.mxu0 0.0
          %4750 = vmatpush1.msra.mxu0 0.0
          %4751 = vmatprep.subr.mxu0 0.0
          %4752 = vmatpush1.msra.mxu0 0.0
          %4753 = vmatprep.subr.mxu0 0.0
          %4754 = vmatpush1.msra.mxu0 0.0
          %4755 = vmatprep.subr.mxu0 0.0
          %4756 = vmatpush1.msra.mxu0 0.0
          %4757 = vmatprep.subr.mxu0 0.0
          %4758 = vmatpush1.msra.mxu0 0.0
          %4759 = vmatprep.subr.mxu0 0.0
          %4760 = vmatpush1.msra.mxu0 0.0
          %4761 = vmatprep.subr.mxu0 0.0
          %4762 = vmatpush1.msra.mxu0 0.0
          %4763 = vmatprep.subr.mxu0 0.0
          %4764 = vmatpush1.msra.mxu0 0.0
          %4765 = vmatprep.subr.mxu0 0.0
          %4766 = vmatpush1.msra.mxu0 0.0
          %4767 = vmatprep.subr.mxu0 0.0
          %4768 = vmatpush1.msra.mxu0 0.0
          %4769 = vmatprep.subr.mxu0 0.0
          %4770 = vmatpush1.msra.mxu0 0.0
          %4771 = vmatprep.subr.mxu0 0.0
          %4772 = vmatpush1.msra.mxu0 0.0
          %4773 = vmatprep.subr.mxu0 0.0
          %4774 = vmatpush1.msra.mxu0 0.0
          %4775 = vmatprep.subr.mxu0 0.0
          %4776 = vmatpush1.msra.mxu0 0.0
          %4777 = vmatprep.subr.mxu0 0.0
          %4778 = vmatpush1.msra.mxu0 0.0
          %4779 = vmatprep.subr.mxu0 0.0
          %4780 = vmatpush1.msra.mxu0 0.0
          %4781 = vmatprep.subr.mxu0 0.0
          %4782 = vmatpush1.msra.mxu0 0.0
          %4783 = vmatprep.subr.mxu0 0.0
          %4784 = vmatpush1.msra.mxu0 0.0
          %4785 = vmatprep.mubr.f32.mxu0 0.0
          %4786 = vmatmul.mubr.f32.gmra.mrb[0].mxu0 %v4719
          %v4787 = vpop.f32.mrb[0].mxu0
          %v4788 = vadd.f32 0.0, %v4787
          %v4789 = vpop.f32.mrb[0].mxu0
          %4790 = vdwg.mxu0
          %v4791 = vadd.f32 %v4711, %v4788
          %v4792 = vld [vmem:[#allocation2 + $0x18] sm:$0xff]
          %v4793 = vld [vmem:[%s657] sm:$0xff]
          %4795 = vrot.lane.b32.xlu0 %v4792, 80
          %v4796 = vpop.permute.xlu0 %4795
          %v4797 = vsel %vm325, %v4796, 0
          %4799 = vmatprep.subr.mxu0 0.0
          %4800 = vmatpush1.msra.mxu0 %v4793
          %4801 = vmatprep.subr.mxu0 0.0
          %4802 = vmatpush1.msra.mxu0 0.0
          %4803 = vmatprep.subr.mxu0 0.0
          %4804 = vmatpush1.msra.mxu0 0.0
          %4805 = vmatprep.subr.mxu0 0.0
          %4806 = vmatpush1.msra.mxu0 0.0
          %4807 = vmatprep.subr.mxu0 0.0
          %4808 = vmatpush1.msra.mxu0 0.0
          %4809 = vmatprep.subr.mxu0 0.0
          %4810 = vmatpush1.msra.mxu0 0.0
          %4811 = vmatprep.subr.mxu0 0.0
          %4812 = vmatpush1.msra.mxu0 0.0
          %4813 = vmatprep.subr.mxu0 0.0
          %4814 = vmatpush1.msra.mxu0 0.0
          %4815 = vmatprep.subr.mxu0 0.0
          %4816 = vmatpush1.msra.mxu0 0.0
          %4817 = vmatprep.subr.mxu0 0.0
          %4818 = vmatpush1.msra.mxu0 0.0
          %4819 = vmatprep.subr.mxu0 0.0
          %4820 = vmatpush1.msra.mxu0 0.0
          %4821 = vmatprep.subr.mxu0 0.0
          %4822 = vmatpush1.msra.mxu0 0.0
          %4823 = vmatprep.subr.mxu0 0.0
          %4824 = vmatpush1.msra.mxu0 0.0
          %4825 = vmatprep.subr.mxu0 0.0
          %4826 = vmatpush1.msra.mxu0 0.0
          %4827 = vmatprep.subr.mxu0 0.0
          %4828 = vmatpush1.msra.mxu0 0.0
          %4829 = vmatprep.subr.mxu0 0.0
          %4830 = vmatpush1.msra.mxu0 0.0
          %4831 = vmatprep.subr.mxu0 0.0
          %4832 = vmatpush1.msra.mxu0 0.0
          %4833 = vmatprep.subr.mxu0 0.0
          %4834 = vmatpush1.msra.mxu0 0.0
          %4835 = vmatprep.subr.mxu0 0.0
          %4836 = vmatpush1.msra.mxu0 0.0
          %4837 = vmatprep.subr.mxu0 0.0
          %4838 = vmatpush1.msra.mxu0 0.0
          %4839 = vmatprep.subr.mxu0 0.0
          %4840 = vmatpush1.msra.mxu0 0.0
          %4841 = vmatprep.subr.mxu0 0.0
          %4842 = vmatpush1.msra.mxu0 0.0
          %4843 = vmatprep.subr.mxu0 0.0
          %4844 = vmatpush1.msra.mxu0 0.0
          %4845 = vmatprep.subr.mxu0 0.0
          %4846 = vmatpush1.msra.mxu0 0.0
          %4847 = vmatprep.subr.mxu0 0.0
          %4848 = vmatpush1.msra.mxu0 0.0
          %4849 = vmatprep.subr.mxu0 0.0
          %4850 = vmatpush1.msra.mxu0 0.0
          %4851 = vmatprep.subr.mxu0 0.0
          %4852 = vmatpush1.msra.mxu0 0.0
          %4853 = vmatprep.subr.mxu0 0.0
          %4854 = vmatpush1.msra.mxu0 0.0
          %4855 = vmatprep.subr.mxu0 0.0
          %4856 = vmatpush1.msra.mxu0 0.0
          %4857 = vmatprep.subr.mxu0 0.0
          %4858 = vmatpush1.msra.mxu0 0.0
          %4859 = vmatprep.subr.mxu0 0.0
          %4860 = vmatpush1.msra.mxu0 0.0
          %4861 = vmatprep.subr.mxu0 0.0
          %4862 = vmatpush1.msra.mxu0 0.0
          %4863 = vmatprep.mubr.f32.mxu0 0.0
          %4864 = vmatmul.mubr.f32.gmra.mrb[0].mxu0 %v4797
          %v4865 = vpop.f32.mrb[0].mxu0
          %v4866 = vadd.f32 0.0, %v4865
          %v4867 = vpop.f32.mrb[0].mxu0
          %4868 = vdwg.mxu0
          %v4869 = vadd.f32 %v4791, %v4866
          %v4870 = vld [vmem:[#allocation2 + $0x20] sm:$0xff]
          %v4871 = vld [vmem:[%s734] sm:$0xff]
          %4873 = vrot.lane.b32.xlu0 %v4870, 80
          %v4874 = vpop.permute.xlu0 %4873
          %v4875 = vsel %vm325, %v4874, 0
          %4877 = vmatprep.subr.mxu0 0.0
          %4878 = vmatpush1.msra.mxu0 %v4871
          %4879 = vmatprep.subr.mxu0 0.0
          %4880 = vmatpush1.msra.mxu0 0.0
          %4881 = vmatprep.subr.mxu0 0.0
          %4882 = vmatpush1.msra.mxu0 0.0
          %4883 = vmatprep.subr.mxu0 0.0
          %4884 = vmatpush1.msra.mxu0 0.0
          %4885 = vmatprep.subr.mxu0 0.0
          %4886 = vmatpush1.msra.mxu0 0.0
          %4887 = vmatprep.subr.mxu0 0.0
          %4888 = vmatpush1.msra.mxu0 0.0
          %4889 = vmatprep.subr.mxu0 0.0
          %4890 = vmatpush1.msra.mxu0 0.0
          %4891 = vmatprep.subr.mxu0 0.0
          %4892 = vmatpush1.msra.mxu0 0.0
          %4893 = vmatprep.subr.mxu0 0.0
          %4894 = vmatpush1.msra.mxu0 0.0
          %4895 = vmatprep.subr.mxu0 0.0
          %4896 = vmatpush1.msra.mxu0 0.0
          %4897 = vmatprep.subr.mxu0 0.0
          %4898 = vmatpush1.msra.mxu0 0.0
          %4899 = vmatprep.subr.mxu0 0.0
          %4900 = vmatpush1.msra.mxu0 0.0
          %4901 = vmatprep.subr.mxu0 0.0
          %4902 = vmatpush1.msra.mxu0 0.0
          %4903 = vmatprep.subr.mxu0 0.0
          %4904 = vmatpush1.msra.mxu0 0.0
          %4905 = vmatprep.subr.mxu0 0.0
          %4906 = vmatpush1.msra.mxu0 0.0
          %4907 = vmatprep.subr.mxu0 0.0
          %4908 = vmatpush1.msra.mxu0 0.0
          %4909 = vmatprep.subr.mxu0 0.0
          %4910 = vmatpush1.msra.mxu0 0.0
          %4911 = vmatprep.subr.mxu0 0.0
          %4912 = vmatpush1.msra.mxu0 0.0
          %4913 = vmatprep.subr.mxu0 0.0
          %4914 = vmatpush1.msra.mxu0 0.0
          %4915 = vmatprep.subr.mxu0 0.0
          %4916 = vmatpush1.msra.mxu0 0.0
          %4917 = vmatprep.subr.mxu0 0.0
          %4918 = vmatpush1.msra.mxu0 0.0
          %4919 = vmatprep.subr.mxu0 0.0
          %4920 = vmatpush1.msra.mxu0 0.0
          %4921 = vmatprep.subr.mxu0 0.0
          %4922 = vmatpush1.msra.mxu0 0.0
          %4923 = vmatprep.subr.mxu0 0.0
          %4924 = vmatpush1.msra.mxu0 0.0
          %4925 = vmatprep.subr.mxu0 0.0
          %4926 = vmatpush1.msra.mxu0 0.0
          %4927 = vmatprep.subr.mxu0 0.0
          %4928 = vmatpush1.msra.mxu0 0.0
          %4929 = vmatprep.subr.mxu0 0.0
          %4930 = vmatpush1.msra.mxu0 0.0
          %4931 = vmatprep.subr.mxu0 0.0
          %4932 = vmatpush1.msra.mxu0 0.0
          %4933 = vmatprep.subr.mxu0 0.0
          %4934 = vmatpush1.msra.mxu0 0.0
          %4935 = vmatprep.subr.mxu0 0.0
          %4936 = vmatpush1.msra.mxu0 0.0
          %4937 = vmatprep.subr.mxu0 0.0
          %4938 = vmatpush1.msra.mxu0 0.0
          %4939 = vmatprep.subr.mxu0 0.0
          %4940 = vmatpush1.msra.mxu0 0.0
          %4941 = vmatprep.mubr.f32.mxu0 0.0
          %4942 = vmatmul.mubr.f32.gmra.mrb[0].mxu0 %v4875
          %v4943 = vpop.f32.mrb[0].mxu0
          %v4944 = vadd.f32 0.0, %v4943
          %v4945 = vpop.f32.mrb[0].mxu0
          %4946 = vdwg.mxu0
          %v4947 = vadd.f32 %v4869, %v4944
          %v4948 = vld [vmem:[#allocation2 + $0x28] sm:$0xff]
          %v4949 = vld [vmem:[%s811] sm:$0xff]
          %4951 = vrot.lane.b32.xlu0 %v4948, 80
          %v4952 = vpop.permute.xlu0 %4951
          %v4953 = vsel %vm325, %v4952, 0
          %4955 = vmatprep.subr.mxu0 0.0
          %4956 = vmatpush1.msra.mxu0 %v4949
          %4957 = vmatprep.subr.mxu0 0.0
          %4958 = vmatpush1.msra.mxu0 0.0
          %4959 = vmatprep.subr.mxu0 0.0
          %4960 = vmatpush1.msra.mxu0 0.0
          %4961 = vmatprep.subr.mxu0 0.0
          %4962 = vmatpush1.msra.mxu0 0.0
          %4963 = vmatprep.subr.mxu0 0.0
          %4964 = vmatpush1.msra.mxu0 0.0
          %4965 = vmatprep.subr.mxu0 0.0
          %4966 = vmatpush1.msra.mxu0 0.0
          %4967 = vmatprep.subr.mxu0 0.0
          %4968 = vmatpush1.msra.mxu0 0.0
          %4969 = vmatprep.subr.mxu0 0.0
          %4970 = vmatpush1.msra.mxu0 0.0
          %4971 = vmatprep.subr.mxu0 0.0
          %4972 = vmatpush1.msra.mxu0 0.0
          %4973 = vmatprep.subr.mxu0 0.0
          %4974 = vmatpush1.msra.mxu0 0.0
          %4975 = vmatprep.subr.mxu0 0.0
          %4976 = vmatpush1.msra.mxu0 0.0
          %4977 = vmatprep.subr.mxu0 0.0
          %4978 = vmatpush1.msra.mxu0 0.0
          %4979 = vmatprep.subr.mxu0 0.0
          %4980 = vmatpush1.msra.mxu0 0.0
          %4981 = vmatprep.subr.mxu0 0.0
          %4982 = vmatpush1.msra.mxu0 0.0
          %4983 = vmatprep.subr.mxu0 0.0
          %4984 = vmatpush1.msra.mxu0 0.0
          %4985 = vmatprep.subr.mxu0 0.0
          %4986 = vmatpush1.msra.mxu0 0.0
          %4987 = vmatprep.subr.mxu0 0.0
          %4988 = vmatpush1.msra.mxu0 0.0
          %4989 = vmatprep.subr.mxu0 0.0
          %4990 = vmatpush1.msra.mxu0 0.0
          %4991 = vmatprep.subr.mxu0 0.0
          %4992 = vmatpush1.msra.mxu0 0.0
          %4993 = vmatprep.subr.mxu0 0.0
          %4994 = vmatpush1.msra.mxu0 0.0
          %4995 = vmatprep.subr.mxu0 0.0
          %4996 = vmatpush1.msra.mxu0 0.0
          %4997 = vmatprep.subr.mxu0 0.0
          %4998 = vmatpush1.msra.mxu0 0.0
          %4999 = vmatprep.subr.mxu0 0.0
          %5000 = vmatpush1.msra.mxu0 0.0
          %5001 = vmatprep.subr.mxu0 0.0
          %5002 = vmatpush1.msra.mxu0 0.0
          %5003 = vmatprep.subr.mxu0 0.0
          %5004 = vmatpush1.msra.mxu0 0.0
          %5005 = vmatprep.subr.mxu0 0.0
          %5006 = vmatpush1.msra.mxu0 0.0
          %5007 = vmatprep.subr.mxu0 0.0
          %5008 = vmatpush1.msra.mxu0 0.0
          %5009 = vmatprep.subr.mxu0 0.0
          %5010 = vmatpush1.msra.mxu0 0.0
          %5011 = vmatprep.subr.mxu0 0.0
          %5012 = vmatpush1.msra.mxu0 0.0
          %5013 = vmatprep.subr.mxu0 0.0
          %5014 = vmatpush1.msra.mxu0 0.0
          %5015 = vmatprep.subr.mxu0 0.0
          %5016 = vmatpush1.msra.mxu0 0.0
          %5017 = vmatprep.subr.mxu0 0.0
          %5018 = vmatpush1.msra.mxu0 0.0
          %5019 = vmatprep.mubr.f32.mxu0 0.0
          %5020 = vmatmul.mubr.f32.gmra.mrb[0].mxu0 %v4953
          %v5021 = vpop.f32.mrb[0].mxu0
          %v5022 = vadd.f32 0.0, %v5021
          %v5023 = vpop.f32.mrb[0].mxu0
          %5024 = vdwg.mxu0
          %v5025 = vadd.f32 %v4947, %v5022
          %v5026 = vld [vmem:[#allocation2 + $0x30] sm:$0xff]
          %v5027 = vld [vmem:[%s888] sm:$0xff]
          %5029 = vrot.lane.b32.xlu0 %v5026, 80
          %v5030 = vpop.permute.xlu0 %5029
          %v5031 = vsel %vm325, %v5030, 0
          %5033 = vmatprep.subr.mxu0 0.0
          %5034 = vmatpush1.msra.mxu0 %v5027
          %5035 = vmatprep.subr.mxu0 0.0
          %5036 = vmatpush1.msra.mxu0 0.0
          %5037 = vmatprep.subr.mxu0 0.0
          %5038 = vmatpush1.msra.mxu0 0.0
          %5039 = vmatprep.subr.mxu0 0.0
          %5040 = vmatpush1.msra.mxu0 0.0
          %5041 = vmatprep.subr.mxu0 0.0
          %5042 = vmatpush1.msra.mxu0 0.0
          %5043 = vmatprep.subr.mxu0 0.0
          %5044 = vmatpush1.msra.mxu0 0.0
          %5045 = vmatprep.subr.mxu0 0.0
          %5046 = vmatpush1.msra.mxu0 0.0
          %5047 = vmatprep.subr.mxu0 0.0
          %5048 = vmatpush1.msra.mxu0 0.0
          %5049 = vmatprep.subr.mxu0 0.0
          %5050 = vmatpush1.msra.mxu0 0.0
          %5051 = vmatprep.subr.mxu0 0.0
          %5052 = vmatpush1.msra.mxu0 0.0
          %5053 = vmatprep.subr.mxu0 0.0
          %5054 = vmatpush1.msra.mxu0 0.0
          %5055 = vmatprep.subr.mxu0 0.0
          %5056 = vmatpush1.msra.mxu0 0.0
          %5057 = vmatprep.subr.mxu0 0.0
          %5058 = vmatpush1.msra.mxu0 0.0
          %5059 = vmatprep.subr.mxu0 0.0
          %5060 = vmatpush1.msra.mxu0 0.0
          %5061 = vmatprep.subr.mxu0 0.0
          %5062 = vmatpush1.msra.mxu0 0.0
          %5063 = vmatprep.subr.mxu0 0.0
          %5064 = vmatpush1.msra.mxu0 0.0
          %5065 = vmatprep.subr.mxu0 0.0
          %5066 = vmatpush1.msra.mxu0 0.0
          %5067 = vmatprep.subr.mxu0 0.0
          %5068 = vmatpush1.msra.mxu0 0.0
          %5069 = vmatprep.subr.mxu0 0.0
          %5070 = vmatpush1.msra.mxu0 0.0
          %5071 = vmatprep.subr.mxu0 0.0
          %5072 = vmatpush1.msra.mxu0 0.0
          %5073 = vmatprep.subr.mxu0 0.0
          %5074 = vmatpush1.msra.mxu0 0.0
          %5075 = vmatprep.subr.mxu0 0.0
          %5076 = vmatpush1.msra.mxu0 0.0
          %5077 = vmatprep.subr.mxu0 0.0
          %5078 = vmatpush1.msra.mxu0 0.0
          %5079 = vmatprep.subr.mxu0 0.0
          %5080 = vmatpush1.msra.mxu0 0.0
          %5081 = vmatprep.subr.mxu0 0.0
          %5082 = vmatpush1.msra.mxu0 0.0
          %5083 = vmatprep.subr.mxu0 0.0
          %5084 = vmatpush1.msra.mxu0 0.0
          %5085 = vmatprep.subr.mxu0 0.0
          %5086 = vmatpush1.msra.mxu0 0.0
          %5087 = vmatprep.subr.mxu0 0.0
          %5088 = vmatpush1.msra.mxu0 0.0
          %5089 = vmatprep.subr.mxu0 0.0
          %5090 = vmatpush1.msra.mxu0 0.0
          %5091 = vmatprep.subr.mxu0 0.0
          %5092 = vmatpush1.msra.mxu0 0.0
          %5093 = vmatprep.subr.mxu0 0.0
          %5094 = vmatpush1.msra.mxu0 0.0
          %5095 = vmatprep.subr.mxu0 0.0
          %5096 = vmatpush1.msra.mxu0 0.0
          %5097 = vmatprep.mubr.f32.mxu0 0.0
          %5098 = vmatmul.mubr.f32.gmra.mrb[0].mxu0 %v5031
          %v5099 = vpop.f32.mrb[0].mxu0
          %v5100 = vadd.f32 0.0, %v5099
          %v5101 = vpop.f32.mrb[0].mxu0
          %5102 = vdwg.mxu0
          %v5103 = vadd.f32 %v5025, %v5100
          %v5104 = vld [vmem:[#allocation2 + $0x38] sm:$0xff]
          %v5105 = vld [vmem:[%s965] sm:$0xff]
          %5107 = vrot.lane.b32.xlu0 %v5104, 80
          %v5108 = vpop.permute.xlu0 %5107
          %v5109 = vsel %vm325, %v5108, 0
          %5111 = vmatprep.subr.mxu0 0.0
          %5112 = vmatpush1.msra.mxu0 %v5105
          %5113 = vmatprep.subr.mxu0 0.0
          %5114 = vmatpush1.msra.mxu0 0.0
          %5115 = vmatprep.subr.mxu0 0.0
          %5116 = vmatpush1.msra.mxu0 0.0
          %5117 = vmatprep.subr.mxu0 0.0
          %5118 = vmatpush1.msra.mxu0 0.0
          %5119 = vmatprep.subr.mxu0 0.0
          %5120 = vmatpush1.msra.mxu0 0.0
          %5121 = vmatprep.subr.mxu0 0.0
          %5122 = vmatpush1.msra.mxu0 0.0
          %5123 = vmatprep.subr.mxu0 0.0
          %5124 = vmatpush1.msra.mxu0 0.0
          %5125 = vmatprep.subr.mxu0 0.0
          %5126 = vmatpush1.msra.mxu0 0.0
          %5127 = vmatprep.subr.mxu0 0.0
          %5128 = vmatpush1.msra.mxu0 0.0
          %5129 = vmatprep.subr.mxu0 0.0
          %5130 = vmatpush1.msra.mxu0 0.0
          %5131 = vmatprep.subr.mxu0 0.0
          %5132 = vmatpush1.msra.mxu0 0.0
          %5133 = vmatprep.subr.mxu0 0.0
          %5134 = vmatpush1.msra.mxu0 0.0
          %5135 = vmatprep.subr.mxu0 0.0
          %5136 = vmatpush1.msra.mxu0 0.0
          %5137 = vmatprep.subr.mxu0 0.0
          %5138 = vmatpush1.msra.mxu0 0.0
          %5139 = vmatprep.subr.mxu0 0.0
          %5140 = vmatpush1.msra.mxu0 0.0
          %5141 = vmatprep.subr.mxu0 0.0
          %5142 = vmatpush1.msra.mxu0 0.0
          %5143 = vmatprep.subr.mxu0 0.0
          %5144 = vmatpush1.msra.mxu0 0.0
          %5145 = vmatprep.subr.mxu0 0.0
          %5146 = vmatpush1.msra.mxu0 0.0
          %5147 = vmatprep.subr.mxu0 0.0
          %5148 = vmatpush1.msra.mxu0 0.0
          %5149 = vmatprep.subr.mxu0 0.0
          %5150 = vmatpush1.msra.mxu0 0.0
          %5151 = vmatprep.subr.mxu0 0.0
          %5152 = vmatpush1.msra.mxu0 0.0
          %5153 = vmatprep.subr.mxu0 0.0
          %5154 = vmatpush1.msra.mxu0 0.0
          %5155 = vmatprep.subr.mxu0 0.0
          %5156 = vmatpush1.msra.mxu0 0.0
          %5157 = vmatprep.subr.mxu0 0.0
          %5158 = vmatpush1.msra.mxu0 0.0
          %5159 = vmatprep.subr.mxu0 0.0
          %5160 = vmatpush1.msra.mxu0 0.0
          %5161 = vmatprep.subr.mxu0 0.0
          %5162 = vmatpush1.msra.mxu0 0.0
          %5163 = vmatprep.subr.mxu0 0.0
          %5164 = vmatpush1.msra.mxu0 0.0
          %5165 = vmatprep.subr.mxu0 0.0
          %5166 = vmatpush1.msra.mxu0 0.0
          %5167 = vmatprep.subr.mxu0 0.0
          %5168 = vmatpush1.msra.mxu0 0.0
          %5169 = vmatprep.subr.mxu0 0.0
          %5170 = vmatpush1.msra.mxu0 0.0
          %5171 = vmatprep.subr.mxu0 0.0
          %5172 = vmatpush1.msra.mxu0 0.0
          %5173 = vmatprep.subr.mxu0 0.0
          %5174 = vmatpush1.msra.mxu0 0.0
          %5175 = vmatprep.mubr.f32.mxu0 0.0
          %5176 = vmatmul.mubr.f32.gmra.mrb[0].mxu0 %v5109
          %v5177 = vpop.f32.mrb[0].mxu0
          %v5178 = vadd.f32 0.0, %v5177
          %v5179 = vpop.f32.mrb[0].mxu0
          %5180 = vdwg.mxu0
          %v5181 = vadd.f32 %v5103, %v5178
          %v5182 = vadd.f32 %v5181, %v1045
          %v5184 = vcombine.high %v5182, %v5182
          %v5186 = vunpack.c.l.s4 1966171168
          %v5187 = vunpack.c.0.s8 %v5186
          %v5188 = vlaneseq
          %v5189 = vshrl.u32 %v5188, 7
          %v5190 = vsub.s32 %v5187, %v5189
          %v5191 = vrot.slane %v5182, %v5190
          %v5193 = vunpack.c.l.s4 1966171168
          %v5194 = vunpack.c.0.s8 %v5193
          %v5195 = vlaneseq
          %v5196 = vshrl.u32 %v5195, 7
          %v5197 = vsub.s32 %v5194, %v5196
          %v5198 = vrot.slane %v5184, %v5197
          %v5199 = vcombine.high %v5191, %v5191
          %v5200 = vcombine.high %v5198, %v5198
          %v5202 = vunpack.c.l.s4 1966171168
          %v5203 = vunpack.c.0.s8 %v5202
          %v5204 = vlaneseq
          %v5205 = vshrl.u32 %v5204, 7
          %v5206 = vsub.s32 %v5203, %v5205
          %v5207 = vrot.slane %v5191, %v5206
          %v5209 = vunpack.c.l.s4 1966171168
          %v5210 = vunpack.c.0.s8 %v5209
          %v5211 = vlaneseq
          %v5212 = vshrl.u32 %v5211, 7
          %v5213 = vsub.s32 %v5210, %v5212
          %v5214 = vrot.slane %v5198, %v5213
          %v5216 = vunpack.c.l.s4 1966171168
          %v5217 = vunpack.c.0.s8 %v5216
          %v5218 = vlaneseq
          %v5219 = vshrl.u32 %v5218, 7
          %v5220 = vsub.s32 %v5217, %v5219
          %v5221 = vrot.slane %v5199, %v5220
          %v5223 = vunpack.c.l.s4 1966171168
          %v5224 = vunpack.c.0.s8 %v5223
          %v5225 = vlaneseq
          %v5226 = vshrl.u32 %v5225, 7
          %v5227 = vsub.s32 %v5224, %v5226
          %v5228 = vrot.slane %v5200, %v5227
          %v5229 = vcombine.high %v5207, %v5207
          %v5230 = vcombine.high %v5214, %v5214
          %v5231 = vcombine.high %v5221, %v5221
          %v5232 = vcombine.high %v5228, %v5228
          %5241 = vst.msk [vmem:[%s263 + $0x6] sm:$0x1] %vm1106, %v5207
          %5242 = vst.msk [vmem:[%s263 + $0xe] sm:$0x1] %vm1106, %v5221
          %5243 = vst.msk [vmem:[%s263 + $0x16] sm:$0x1] %vm1106, %v5229
          %5244 = vst.msk [vmem:[%s263 + $0x1e] sm:$0x1] %vm1106, %v5231
          %5245 = vst.msk [vmem:[%s263 + $0x26] sm:$0x1] %vm1106, %v5214
          %5246 = vst.msk [vmem:[%s263 + $0x2e] sm:$0x1] %vm1106, %v5228
          %5247 = vst.msk [vmem:[%s263 + $0x36] sm:$0x1] %vm1106, %v5230
          %5248 = vst.msk [vmem:[%s263 + $0x3e] sm:$0x1] %vm1106, %v5232
          %v5249 = vld [vmem:[#allocation2] sm:$0xff]
          %v5250 = vld [vmem:[%s2] sm:$0xff]
          %v5251 = vld [vmem:[#allocation2 + $0x8] sm:$0xff]
          %v5252 = vld [vmem:[%s431] sm:$0xff]
          %5254 = vrot.lane.b32.xlu0 %v5251, 72
          %v5255 = vpop.permute.xlu0 %5254
          %v5256 = vsel %vm325, %v5255, 0
          %5258 = vmatprep.subr.mxu0 0.0
          %5259 = vmatpush1.msra.mxu0 %v5252
          %5260 = vmatprep.subr.mxu0 0.0
          %5261 = vmatpush1.msra.mxu0 0.0
          %5262 = vmatprep.subr.mxu0 0.0
          %5263 = vmatpush1.msra.mxu0 0.0
          %5264 = vmatprep.subr.mxu0 0.0
          %5265 = vmatpush1.msra.mxu0 0.0
          %5266 = vmatprep.subr.mxu0 0.0
          %5267 = vmatpush1.msra.mxu0 0.0
          %5268 = vmatprep.subr.mxu0 0.0
          %5269 = vmatpush1.msra.mxu0 0.0
          %5270 = vmatprep.subr.mxu0 0.0
          %5271 = vmatpush1.msra.mxu0 0.0
          %5272 = vmatprep.subr.mxu0 0.0
          %5273 = vmatpush1.msra.mxu0 0.0
          %5274 = vmatprep.subr.mxu0 0.0
          %5275 = vmatpush1.msra.mxu0 0.0
          %5276 = vmatprep.subr.mxu0 0.0
          %5277 = vmatpush1.msra.mxu0 0.0
          %5278 = vmatprep.subr.mxu0 0.0
          %5279 = vmatpush1.msra.mxu0 0.0
          %5280 = vmatprep.subr.mxu0 0.0
          %5281 = vmatpush1.msra.mxu0 0.0
          %5282 = vmatprep.subr.mxu0 0.0
          %5283 = vmatpush1.msra.mxu0 0.0
          %5284 = vmatprep.subr.mxu0 0.0
          %5285 = vmatpush1.msra.mxu0 0.0
          %5286 = vmatprep.subr.mxu0 0.0
          %5287 = vmatpush1.msra.mxu0 0.0
          %5288 = vmatprep.subr.mxu0 0.0
          %5289 = vmatpush1.msra.mxu0 0.0
          %5290 = vmatprep.subr.mxu0 0.0
          %5291 = vmatpush1.msra.mxu0 0.0
          %5292 = vmatprep.subr.mxu0 0.0
          %5293 = vmatpush1.msra.mxu0 0.0
          %5294 = vmatprep.subr.mxu0 0.0
          %5295 = vmatpush1.msra.mxu0 0.0
          %5296 = vmatprep.subr.mxu0 0.0
          %5297 = vmatpush1.msra.mxu0 0.0
          %5298 = vmatprep.subr.mxu0 0.0
          %5299 = vmatpush1.msra.mxu0 0.0
          %5300 = vmatprep.subr.mxu0 0.0
          %5301 = vmatpush1.msra.mxu0 0.0
          %5302 = vmatprep.subr.mxu0 0.0
          %5303 = vmatpush1.msra.mxu0 0.0
          %5304 = vmatprep.subr.mxu0 0.0
          %5305 = vmatpush1.msra.mxu0 0.0
          %5306 = vmatprep.subr.mxu0 0.0
          %5307 = vmatpush1.msra.mxu0 0.0
          %5308 = vmatprep.subr.mxu0 0.0
          %5309 = vmatpush1.msra.mxu0 0.0
          %5310 = vmatprep.subr.mxu0 0.0
          %5311 = vmatpush1.msra.mxu0 0.0
          %5312 = vmatprep.subr.mxu0 0.0
          %5313 = vmatpush1.msra.mxu0 0.0
          %5314 = vmatprep.subr.mxu0 0.0
          %5315 = vmatpush1.msra.mxu0 0.0
          %5316 = vmatprep.subr.mxu0 0.0
          %5317 = vmatpush1.msra.mxu0 0.0
          %5318 = vmatprep.subr.mxu0 0.0
          %5319 = vmatpush1.msra.mxu0 0.0
          %5320 = vmatprep.subr.mxu0 0.0
          %5321 = vmatpush1.msra.mxu0 0.0
          %5322 = vmatprep.mubr.f32.mxu0 0.0
          %5323 = vmatmul.mubr.f32.gmra.mrb[0].mxu0 %v5256
          %v5324 = vpop.f32.mrb[0].mxu0
          %v5325 = vadd.f32 0.0, %v5324
          %v5326 = vpop.f32.mrb[0].mxu0
          %5327 = vdwg.mxu0
          %5329 = vrot.lane.b32.xlu0 %v5249, 72
          %v5330 = vpop.permute.xlu0 %5329
          %v5331 = vsel %vm325, %v5330, 0
          %5333 = vmatprep.subr.mxu0 0.0
          %5334 = vmatpush1.msra.mxu0 %v5250
          %5335 = vmatprep.subr.mxu0 0.0
          %5336 = vmatpush1.msra.mxu0 0.0
          %5337 = vmatprep.subr.mxu0 0.0
          %5338 = vmatpush1.msra.mxu0 0.0
          %5339 = vmatprep.subr.mxu0 0.0
          %5340 = vmatpush1.msra.mxu0 0.0
          %5341 = vmatprep.subr.mxu0 0.0
          %5342 = vmatpush1.msra.mxu0 0.0
          %5343 = vmatprep.subr.mxu0 0.0
          %5344 = vmatpush1.msra.mxu0 0.0
          %5345 = vmatprep.subr.mxu0 0.0
          %5346 = vmatpush1.msra.mxu0 0.0
          %5347 = vmatprep.subr.mxu0 0.0
          %5348 = vmatpush1.msra.mxu0 0.0
          %5349 = vmatprep.subr.mxu0 0.0
          %5350 = vmatpush1.msra.mxu0 0.0
          %5351 = vmatprep.subr.mxu0 0.0
          %5352 = vmatpush1.msra.mxu0 0.0
          %5353 = vmatprep.subr.mxu0 0.0
          %5354 = vmatpush1.msra.mxu0 0.0
          %5355 = vmatprep.subr.mxu0 0.0
          %5356 = vmatpush1.msra.mxu0 0.0
          %5357 = vmatprep.subr.mxu0 0.0
          %5358 = vmatpush1.msra.mxu0 0.0
          %5359 = vmatprep.subr.mxu0 0.0
          %5360 = vmatpush1.msra.mxu0 0.0
          %5361 = vmatprep.subr.mxu0 0.0
          %5362 = vmatpush1.msra.mxu0 0.0
          %5363 = vmatprep.subr.mxu0 0.0
          %5364 = vmatpush1.msra.mxu0 0.0
          %5365 = vmatprep.subr.mxu0 0.0
          %5366 = vmatpush1.msra.mxu0 0.0
          %5367 = vmatprep.subr.mxu0 0.0
          %5368 = vmatpush1.msra.mxu0 0.0
          %5369 = vmatprep.subr.mxu0 0.0
          %5370 = vmatpush1.msra.mxu0 0.0
          %5371 = vmatprep.subr.mxu0 0.0
          %5372 = vmatpush1.msra.mxu0 0.0
          %5373 = vmatprep.subr.mxu0 0.0
          %5374 = vmatpush1.msra.mxu0 0.0
          %5375 = vmatprep.subr.mxu0 0.0
          %5376 = vmatpush1.msra.mxu0 0.0
          %5377 = vmatprep.subr.mxu0 0.0
          %5378 = vmatpush1.msra.mxu0 0.0
          %5379 = vmatprep.subr.mxu0 0.0
          %5380 = vmatpush1.msra.mxu0 0.0
          %5381 = vmatprep.subr.mxu0 0.0
          %5382 = vmatpush1.msra.mxu0 0.0
          %5383 = vmatprep.subr.mxu0 0.0
          %5384 = vmatpush1.msra.mxu0 0.0
          %5385 = vmatprep.subr.mxu0 0.0
          %5386 = vmatpush1.msra.mxu0 0.0
          %5387 = vmatprep.subr.mxu0 0.0
          %5388 = vmatpush1.msra.mxu0 0.0
          %5389 = vmatprep.subr.mxu0 0.0
          %5390 = vmatpush1.msra.mxu0 0.0
          %5391 = vmatprep.subr.mxu0 0.0
          %5392 = vmatpush1.msra.mxu0 0.0
          %5393 = vmatprep.subr.mxu0 0.0
          %5394 = vmatpush1.msra.mxu0 0.0
          %5395 = vmatprep.subr.mxu0 0.0
          %5396 = vmatpush1.msra.mxu0 0.0
          %5397 = vmatprep.mubr.f32.mxu0 0.0
          %5398 = vmatmul.mubr.f32.gmra.mrb[0].mxu0 %v5331
          %v5399 = vpop.f32.mrb[0].mxu0
          %v5400 = vadd.f32 %v5325, %v5399
          %v5401 = vpop.f32.mrb[0].mxu0
          %5402 = vdwg.mxu0
          %v5403 = vld [vmem:[#allocation2 + $0x10] sm:$0xff]
          %v5404 = vld [vmem:[%s580] sm:$0xff]
          %5406 = vrot.lane.b32.xlu0 %v5403, 72
          %v5407 = vpop.permute.xlu0 %5406
          %v5408 = vsel %vm325, %v5407, 0
          %5410 = vmatprep.subr.mxu0 0.0
          %5411 = vmatpush1.msra.mxu0 %v5404
          %5412 = vmatprep.subr.mxu0 0.0
          %5413 = vmatpush1.msra.mxu0 0.0
          %5414 = vmatprep.subr.mxu0 0.0
          %5415 = vmatpush1.msra.mxu0 0.0
          %5416 = vmatprep.subr.mxu0 0.0
          %5417 = vmatpush1.msra.mxu0 0.0
          %5418 = vmatprep.subr.mxu0 0.0
          %5419 = vmatpush1.msra.mxu0 0.0
          %5420 = vmatprep.subr.mxu0 0.0
          %5421 = vmatpush1.msra.mxu0 0.0
          %5422 = vmatprep.subr.mxu0 0.0
          %5423 = vmatpush1.msra.mxu0 0.0
          %5424 = vmatprep.subr.mxu0 0.0
          %5425 = vmatpush1.msra.mxu0 0.0
          %5426 = vmatprep.subr.mxu0 0.0
          %5427 = vmatpush1.msra.mxu0 0.0
          %5428 = vmatprep.subr.mxu0 0.0
          %5429 = vmatpush1.msra.mxu0 0.0
          %5430 = vmatprep.subr.mxu0 0.0
          %5431 = vmatpush1.msra.mxu0 0.0
          %5432 = vmatprep.subr.mxu0 0.0
          %5433 = vmatpush1.msra.mxu0 0.0
          %5434 = vmatprep.subr.mxu0 0.0
          %5435 = vmatpush1.msra.mxu0 0.0
          %5436 = vmatprep.subr.mxu0 0.0
          %5437 = vmatpush1.msra.mxu0 0.0
          %5438 = vmatprep.subr.mxu0 0.0
          %5439 = vmatpush1.msra.mxu0 0.0
          %5440 = vmatprep.subr.mxu0 0.0
          %5441 = vmatpush1.msra.mxu0 0.0
          %5442 = vmatprep.subr.mxu0 0.0
          %5443 = vmatpush1.msra.mxu0 0.0
          %5444 = vmatprep.subr.mxu0 0.0
          %5445 = vmatpush1.msra.mxu0 0.0
          %5446 = vmatprep.subr.mxu0 0.0
          %5447 = vmatpush1.msra.mxu0 0.0
          %5448 = vmatprep.subr.mxu0 0.0
          %5449 = vmatpush1.msra.mxu0 0.0
          %5450 = vmatprep.subr.mxu0 0.0
          %5451 = vmatpush1.msra.mxu0 0.0
          %5452 = vmatprep.subr.mxu0 0.0
          %5453 = vmatpush1.msra.mxu0 0.0
          %5454 = vmatprep.subr.mxu0 0.0
          %5455 = vmatpush1.msra.mxu0 0.0
          %5456 = vmatprep.subr.mxu0 0.0
          %5457 = vmatpush1.msra.mxu0 0.0
          %5458 = vmatprep.subr.mxu0 0.0
          %5459 = vmatpush1.msra.mxu0 0.0
          %5460 = vmatprep.subr.mxu0 0.0
          %5461 = vmatpush1.msra.mxu0 0.0
          %5462 = vmatprep.subr.mxu0 0.0
          %5463 = vmatpush1.msra.mxu0 0.0
          %5464 = vmatprep.subr.mxu0 0.0
          %5465 = vmatpush1.msra.mxu0 0.0
          %5466 = vmatprep.subr.mxu0 0.0
          %5467 = vmatpush1.msra.mxu0 0.0
          %5468 = vmatprep.subr.mxu0 0.0
          %5469 = vmatpush1.msra.mxu0 0.0
          %5470 = vmatprep.subr.mxu0 0.0
          %5471 = vmatpush1.msra.mxu0 0.0
          %5472 = vmatprep.subr.mxu0 0.0
          %5473 = vmatpush1.msra.mxu0 0.0
          %5474 = vmatprep.mubr.f32.mxu0 0.0
          %5475 = vmatmul.mubr.f32.gmra.mrb[0].mxu0 %v5408
          %v5476 = vpop.f32.mrb[0].mxu0
          %v5477 = vadd.f32 0.0, %v5476
          %v5478 = vpop.f32.mrb[0].mxu0
          %5479 = vdwg.mxu0
          %v5480 = vadd.f32 %v5400, %v5477
          %v5481 = vld [vmem:[#allocation2 + $0x18] sm:$0xff]
          %v5482 = vld [vmem:[%s657] sm:$0xff]
          %5484 = vrot.lane.b32.xlu0 %v5481, 72
          %v5485 = vpop.permute.xlu0 %5484
          %v5486 = vsel %vm325, %v5485, 0
          %5488 = vmatprep.subr.mxu0 0.0
          %5489 = vmatpush1.msra.mxu0 %v5482
          %5490 = vmatprep.subr.mxu0 0.0
          %5491 = vmatpush1.msra.mxu0 0.0
          %5492 = vmatprep.subr.mxu0 0.0
          %5493 = vmatpush1.msra.mxu0 0.0
          %5494 = vmatprep.subr.mxu0 0.0
          %5495 = vmatpush1.msra.mxu0 0.0
          %5496 = vmatprep.subr.mxu0 0.0
          %5497 = vmatpush1.msra.mxu0 0.0
          %5498 = vmatprep.subr.mxu0 0.0
          %5499 = vmatpush1.msra.mxu0 0.0
          %5500 = vmatprep.subr.mxu0 0.0
          %5501 = vmatpush1.msra.mxu0 0.0
          %5502 = vmatprep.subr.mxu0 0.0
          %5503 = vmatpush1.msra.mxu0 0.0
          %5504 = vmatprep.subr.mxu0 0.0
          %5505 = vmatpush1.msra.mxu0 0.0
          %5506 = vmatprep.subr.mxu0 0.0
          %5507 = vmatpush1.msra.mxu0 0.0
          %5508 = vmatprep.subr.mxu0 0.0
          %5509 = vmatpush1.msra.mxu0 0.0
          %5510 = vmatprep.subr.mxu0 0.0
          %5511 = vmatpush1.msra.mxu0 0.0
          %5512 = vmatprep.subr.mxu0 0.0
          %5513 = vmatpush1.msra.mxu0 0.0
          %5514 = vmatprep.subr.mxu0 0.0
          %5515 = vmatpush1.msra.mxu0 0.0
          %5516 = vmatprep.subr.mxu0 0.0
          %5517 = vmatpush1.msra.mxu0 0.0
          %5518 = vmatprep.subr.mxu0 0.0
          %5519 = vmatpush1.msra.mxu0 0.0
          %5520 = vmatprep.subr.mxu0 0.0
          %5521 = vmatpush1.msra.mxu0 0.0
          %5522 = vmatprep.subr.mxu0 0.0
          %5523 = vmatpush1.msra.mxu0 0.0
          %5524 = vmatprep.subr.mxu0 0.0
          %5525 = vmatpush1.msra.mxu0 0.0
          %5526 = vmatprep.subr.mxu0 0.0
          %5527 = vmatpush1.msra.mxu0 0.0
          %5528 = vmatprep.subr.mxu0 0.0
          %5529 = vmatpush1.msra.mxu0 0.0
          %5530 = vmatprep.subr.mxu0 0.0
          %5531 = vmatpush1.msra.mxu0 0.0
          %5532 = vmatprep.subr.mxu0 0.0
          %5533 = vmatpush1.msra.mxu0 0.0
          %5534 = vmatprep.subr.mxu0 0.0
          %5535 = vmatpush1.msra.mxu0 0.0
          %5536 = vmatprep.subr.mxu0 0.0
          %5537 = vmatpush1.msra.mxu0 0.0
          %5538 = vmatprep.subr.mxu0 0.0
          %5539 = vmatpush1.msra.mxu0 0.0
          %5540 = vmatprep.subr.mxu0 0.0
          %5541 = vmatpush1.msra.mxu0 0.0
          %5542 = vmatprep.subr.mxu0 0.0
          %5543 = vmatpush1.msra.mxu0 0.0
          %5544 = vmatprep.subr.mxu0 0.0
          %5545 = vmatpush1.msra.mxu0 0.0
          %5546 = vmatprep.subr.mxu0 0.0
          %5547 = vmatpush1.msra.mxu0 0.0
          %5548 = vmatprep.subr.mxu0 0.0
          %5549 = vmatpush1.msra.mxu0 0.0
          %5550 = vmatprep.subr.mxu0 0.0
          %5551 = vmatpush1.msra.mxu0 0.0
          %5552 = vmatprep.mubr.f32.mxu0 0.0
          %5553 = vmatmul.mubr.f32.gmra.mrb[0].mxu0 %v5486
          %v5554 = vpop.f32.mrb[0].mxu0
          %v5555 = vadd.f32 0.0, %v5554
          %v5556 = vpop.f32.mrb[0].mxu0
          %5557 = vdwg.mxu0
          %v5558 = vadd.f32 %v5480, %v5555
          %v5559 = vld [vmem:[#allocation2 + $0x20] sm:$0xff]
          %v5560 = vld [vmem:[%s734] sm:$0xff]
          %5562 = vrot.lane.b32.xlu0 %v5559, 72
          %v5563 = vpop.permute.xlu0 %5562
          %v5564 = vsel %vm325, %v5563, 0
          %5566 = vmatprep.subr.mxu0 0.0
          %5567 = vmatpush1.msra.mxu0 %v5560
          %5568 = vmatprep.subr.mxu0 0.0
          %5569 = vmatpush1.msra.mxu0 0.0
          %5570 = vmatprep.subr.mxu0 0.0
          %5571 = vmatpush1.msra.mxu0 0.0
          %5572 = vmatprep.subr.mxu0 0.0
          %5573 = vmatpush1.msra.mxu0 0.0
          %5574 = vmatprep.subr.mxu0 0.0
          %5575 = vmatpush1.msra.mxu0 0.0
          %5576 = vmatprep.subr.mxu0 0.0
          %5577 = vmatpush1.msra.mxu0 0.0
          %5578 = vmatprep.subr.mxu0 0.0
          %5579 = vmatpush1.msra.mxu0 0.0
          %5580 = vmatprep.subr.mxu0 0.0
          %5581 = vmatpush1.msra.mxu0 0.0
          %5582 = vmatprep.subr.mxu0 0.0
          %5583 = vmatpush1.msra.mxu0 0.0
          %5584 = vmatprep.subr.mxu0 0.0
          %5585 = vmatpush1.msra.mxu0 0.0
          %5586 = vmatprep.subr.mxu0 0.0
          %5587 = vmatpush1.msra.mxu0 0.0
          %5588 = vmatprep.subr.mxu0 0.0
          %5589 = vmatpush1.msra.mxu0 0.0
          %5590 = vmatprep.subr.mxu0 0.0
          %5591 = vmatpush1.msra.mxu0 0.0
          %5592 = vmatprep.subr.mxu0 0.0
          %5593 = vmatpush1.msra.mxu0 0.0
          %5594 = vmatprep.subr.mxu0 0.0
          %5595 = vmatpush1.msra.mxu0 0.0
          %5596 = vmatprep.subr.mxu0 0.0
          %5597 = vmatpush1.msra.mxu0 0.0
          %5598 = vmatprep.subr.mxu0 0.0
          %5599 = vmatpush1.msra.mxu0 0.0
          %5600 = vmatprep.subr.mxu0 0.0
          %5601 = vmatpush1.msra.mxu0 0.0
          %5602 = vmatprep.subr.mxu0 0.0
          %5603 = vmatpush1.msra.mxu0 0.0
          %5604 = vmatprep.subr.mxu0 0.0
          %5605 = vmatpush1.msra.mxu0 0.0
          %5606 = vmatprep.subr.mxu0 0.0
          %5607 = vmatpush1.msra.mxu0 0.0
          %5608 = vmatprep.subr.mxu0 0.0
          %5609 = vmatpush1.msra.mxu0 0.0
          %5610 = vmatprep.subr.mxu0 0.0
          %5611 = vmatpush1.msra.mxu0 0.0
          %5612 = vmatprep.subr.mxu0 0.0
          %5613 = vmatpush1.msra.mxu0 0.0
          %5614 = vmatprep.subr.mxu0 0.0
          %5615 = vmatpush1.msra.mxu0 0.0
          %5616 = vmatprep.subr.mxu0 0.0
          %5617 = vmatpush1.msra.mxu0 0.0
          %5618 = vmatprep.subr.mxu0 0.0
          %5619 = vmatpush1.msra.mxu0 0.0
          %5620 = vmatprep.subr.mxu0 0.0
          %5621 = vmatpush1.msra.mxu0 0.0
          %5622 = vmatprep.subr.mxu0 0.0
          %5623 = vmatpush1.msra.mxu0 0.0
          %5624 = vmatprep.subr.mxu0 0.0
          %5625 = vmatpush1.msra.mxu0 0.0
          %5626 = vmatprep.subr.mxu0 0.0
          %5627 = vmatpush1.msra.mxu0 0.0
          %5628 = vmatprep.subr.mxu0 0.0
          %5629 = vmatpush1.msra.mxu0 0.0
          %5630 = vmatprep.mubr.f32.mxu0 0.0
          %5631 = vmatmul.mubr.f32.gmra.mrb[0].mxu0 %v5564
          %v5632 = vpop.f32.mrb[0].mxu0
          %v5633 = vadd.f32 0.0, %v5632
          %v5634 = vpop.f32.mrb[0].mxu0
          %5635 = vdwg.mxu0
          %v5636 = vadd.f32 %v5558, %v5633
          %v5637 = vld [vmem:[#allocation2 + $0x28] sm:$0xff]
          %v5638 = vld [vmem:[%s811] sm:$0xff]
          %5640 = vrot.lane.b32.xlu0 %v5637, 72
          %v5641 = vpop.permute.xlu0 %5640
          %v5642 = vsel %vm325, %v5641, 0
          %5644 = vmatprep.subr.mxu0 0.0
          %5645 = vmatpush1.msra.mxu0 %v5638
          %5646 = vmatprep.subr.mxu0 0.0
          %5647 = vmatpush1.msra.mxu0 0.0
          %5648 = vmatprep.subr.mxu0 0.0
          %5649 = vmatpush1.msra.mxu0 0.0
          %5650 = vmatprep.subr.mxu0 0.0
          %5651 = vmatpush1.msra.mxu0 0.0
          %5652 = vmatprep.subr.mxu0 0.0
          %5653 = vmatpush1.msra.mxu0 0.0
          %5654 = vmatprep.subr.mxu0 0.0
          %5655 = vmatpush1.msra.mxu0 0.0
          %5656 = vmatprep.subr.mxu0 0.0
          %5657 = vmatpush1.msra.mxu0 0.0
          %5658 = vmatprep.subr.mxu0 0.0
          %5659 = vmatpush1.msra.mxu0 0.0
          %5660 = vmatprep.subr.mxu0 0.0
          %5661 = vmatpush1.msra.mxu0 0.0
          %5662 = vmatprep.subr.mxu0 0.0
          %5663 = vmatpush1.msra.mxu0 0.0
          %5664 = vmatprep.subr.mxu0 0.0
          %5665 = vmatpush1.msra.mxu0 0.0
          %5666 = vmatprep.subr.mxu0 0.0
          %5667 = vmatpush1.msra.mxu0 0.0
          %5668 = vmatprep.subr.mxu0 0.0
          %5669 = vmatpush1.msra.mxu0 0.0
          %5670 = vmatprep.subr.mxu0 0.0
          %5671 = vmatpush1.msra.mxu0 0.0
          %5672 = vmatprep.subr.mxu0 0.0
          %5673 = vmatpush1.msra.mxu0 0.0
          %5674 = vmatprep.subr.mxu0 0.0
          %5675 = vmatpush1.msra.mxu0 0.0
          %5676 = vmatprep.subr.mxu0 0.0
          %5677 = vmatpush1.msra.mxu0 0.0
          %5678 = vmatprep.subr.mxu0 0.0
          %5679 = vmatpush1.msra.mxu0 0.0
          %5680 = vmatprep.subr.mxu0 0.0
          %5681 = vmatpush1.msra.mxu0 0.0
          %5682 = vmatprep.subr.mxu0 0.0
          %5683 = vmatpush1.msra.mxu0 0.0
          %5684 = vmatprep.subr.mxu0 0.0
          %5685 = vmatpush1.msra.mxu0 0.0
          %5686 = vmatprep.subr.mxu0 0.0
          %5687 = vmatpush1.msra.mxu0 0.0
          %5688 = vmatprep.subr.mxu0 0.0
          %5689 = vmatpush1.msra.mxu0 0.0
          %5690 = vmatprep.subr.mxu0 0.0
          %5691 = vmatpush1.msra.mxu0 0.0
          %5692 = vmatprep.subr.mxu0 0.0
          %5693 = vmatpush1.msra.mxu0 0.0
          %5694 = vmatprep.subr.mxu0 0.0
          %5695 = vmatpush1.msra.mxu0 0.0
          %5696 = vmatprep.subr.mxu0 0.0
          %5697 = vmatpush1.msra.mxu0 0.0
          %5698 = vmatprep.subr.mxu0 0.0
          %5699 = vmatpush1.msra.mxu0 0.0
          %5700 = vmatprep.subr.mxu0 0.0
          %5701 = vmatpush1.msra.mxu0 0.0
          %5702 = vmatprep.subr.mxu0 0.0
          %5703 = vmatpush1.msra.mxu0 0.0
          %5704 = vmatprep.subr.mxu0 0.0
          %5705 = vmatpush1.msra.mxu0 0.0
          %5706 = vmatprep.subr.mxu0 0.0
          %5707 = vmatpush1.msra.mxu0 0.0
          %5708 = vmatprep.mubr.f32.mxu0 0.0
          %5709 = vmatmul.mubr.f32.gmra.mrb[0].mxu0 %v5642
          %v5710 = vpop.f32.mrb[0].mxu0
          %v5711 = vadd.f32 0.0, %v5710
          %v5712 = vpop.f32.mrb[0].mxu0
          %5713 = vdwg.mxu0
          %v5714 = vadd.f32 %v5636, %v5711
          %v5715 = vld [vmem:[#allocation2 + $0x30] sm:$0xff]
          %v5716 = vld [vmem:[%s888] sm:$0xff]
          %5718 = vrot.lane.b32.xlu0 %v5715, 72
          %v5719 = vpop.permute.xlu0 %5718
          %v5720 = vsel %vm325, %v5719, 0
          %5722 = vmatprep.subr.mxu0 0.0
          %5723 = vmatpush1.msra.mxu0 %v5716
          %5724 = vmatprep.subr.mxu0 0.0
          %5725 = vmatpush1.msra.mxu0 0.0
          %5726 = vmatprep.subr.mxu0 0.0
          %5727 = vmatpush1.msra.mxu0 0.0
          %5728 = vmatprep.subr.mxu0 0.0
          %5729 = vmatpush1.msra.mxu0 0.0
          %5730 = vmatprep.subr.mxu0 0.0
          %5731 = vmatpush1.msra.mxu0 0.0
          %5732 = vmatprep.subr.mxu0 0.0
          %5733 = vmatpush1.msra.mxu0 0.0
          %5734 = vmatprep.subr.mxu0 0.0
          %5735 = vmatpush1.msra.mxu0 0.0
          %5736 = vmatprep.subr.mxu0 0.0
          %5737 = vmatpush1.msra.mxu0 0.0
          %5738 = vmatprep.subr.mxu0 0.0
          %5739 = vmatpush1.msra.mxu0 0.0
          %5740 = vmatprep.subr.mxu0 0.0
          %5741 = vmatpush1.msra.mxu0 0.0
          %5742 = vmatprep.subr.mxu0 0.0
          %5743 = vmatpush1.msra.mxu0 0.0
          %5744 = vmatprep.subr.mxu0 0.0
          %5745 = vmatpush1.msra.mxu0 0.0
          %5746 = vmatprep.subr.mxu0 0.0
          %5747 = vmatpush1.msra.mxu0 0.0
          %5748 = vmatprep.subr.mxu0 0.0
          %5749 = vmatpush1.msra.mxu0 0.0
          %5750 = vmatprep.subr.mxu0 0.0
          %5751 = vmatpush1.msra.mxu0 0.0
          %5752 = vmatprep.subr.mxu0 0.0
          %5753 = vmatpush1.msra.mxu0 0.0
          %5754 = vmatprep.subr.mxu0 0.0
          %5755 = vmatpush1.msra.mxu0 0.0
          %5756 = vmatprep.subr.mxu0 0.0
          %5757 = vmatpush1.msra.mxu0 0.0
          %5758 = vmatprep.subr.mxu0 0.0
          %5759 = vmatpush1.msra.mxu0 0.0
          %5760 = vmatprep.subr.mxu0 0.0
          %5761 = vmatpush1.msra.mxu0 0.0
          %5762 = vmatprep.subr.mxu0 0.0
          %5763 = vmatpush1.msra.mxu0 0.0
          %5764 = vmatprep.subr.mxu0 0.0
          %5765 = vmatpush1.msra.mxu0 0.0
          %5766 = vmatprep.subr.mxu0 0.0
          %5767 = vmatpush1.msra.mxu0 0.0
          %5768 = vmatprep.subr.mxu0 0.0
          %5769 = vmatpush1.msra.mxu0 0.0
          %5770 = vmatprep.subr.mxu0 0.0
          %5771 = vmatpush1.msra.mxu0 0.0
          %5772 = vmatprep.subr.mxu0 0.0
          %5773 = vmatpush1.msra.mxu0 0.0
          %5774 = vmatprep.subr.mxu0 0.0
          %5775 = vmatpush1.msra.mxu0 0.0
          %5776 = vmatprep.subr.mxu0 0.0
          %5777 = vmatpush1.msra.mxu0 0.0
          %5778 = vmatprep.subr.mxu0 0.0
          %5779 = vmatpush1.msra.mxu0 0.0
          %5780 = vmatprep.subr.mxu0 0.0
          %5781 = vmatpush1.msra.mxu0 0.0
          %5782 = vmatprep.subr.mxu0 0.0
          %5783 = vmatpush1.msra.mxu0 0.0
          %5784 = vmatprep.subr.mxu0 0.0
          %5785 = vmatpush1.msra.mxu0 0.0
          %5786 = vmatprep.mubr.f32.mxu0 0.0
          %5787 = vmatmul.mubr.f32.gmra.mrb[0].mxu0 %v5720
          %v5788 = vpop.f32.mrb[0].mxu0
          %v5789 = vadd.f32 0.0, %v5788
          %v5790 = vpop.f32.mrb[0].mxu0
          %5791 = vdwg.mxu0
          %v5792 = vadd.f32 %v5714, %v5789
          %v5793 = vld [vmem:[#allocation2 + $0x38] sm:$0xff]
          %v5794 = vld [vmem:[%s965] sm:$0xff]
          %5796 = vrot.lane.b32.xlu0 %v5793, 72
          %v5797 = vpop.permute.xlu0 %5796
          %v5798 = vsel %vm325, %v5797, 0
          %5800 = vmatprep.subr.mxu0 0.0
          %5801 = vmatpush1.msra.mxu0 %v5794
          %5802 = vmatprep.subr.mxu0 0.0
          %5803 = vmatpush1.msra.mxu0 0.0
          %5804 = vmatprep.subr.mxu0 0.0
          %5805 = vmatpush1.msra.mxu0 0.0
          %5806 = vmatprep.subr.mxu0 0.0
          %5807 = vmatpush1.msra.mxu0 0.0
          %5808 = vmatprep.subr.mxu0 0.0
          %5809 = vmatpush1.msra.mxu0 0.0
          %5810 = vmatprep.subr.mxu0 0.0
          %5811 = vmatpush1.msra.mxu0 0.0
          %5812 = vmatprep.subr.mxu0 0.0
          %5813 = vmatpush1.msra.mxu0 0.0
          %5814 = vmatprep.subr.mxu0 0.0
          %5815 = vmatpush1.msra.mxu0 0.0
          %5816 = vmatprep.subr.mxu0 0.0
          %5817 = vmatpush1.msra.mxu0 0.0
          %5818 = vmatprep.subr.mxu0 0.0
          %5819 = vmatpush1.msra.mxu0 0.0
          %5820 = vmatprep.subr.mxu0 0.0
          %5821 = vmatpush1.msra.mxu0 0.0
          %5822 = vmatprep.subr.mxu0 0.0
          %5823 = vmatpush1.msra.mxu0 0.0
          %5824 = vmatprep.subr.mxu0 0.0
          %5825 = vmatpush1.msra.mxu0 0.0
          %5826 = vmatprep.subr.mxu0 0.0
          %5827 = vmatpush1.msra.mxu0 0.0
          %5828 = vmatprep.subr.mxu0 0.0
          %5829 = vmatpush1.msra.mxu0 0.0
          %5830 = vmatprep.subr.mxu0 0.0
          %5831 = vmatpush1.msra.mxu0 0.0
          %5832 = vmatprep.subr.mxu0 0.0
          %5833 = vmatpush1.msra.mxu0 0.0
          %5834 = vmatprep.subr.mxu0 0.0
          %5835 = vmatpush1.msra.mxu0 0.0
          %5836 = vmatprep.subr.mxu0 0.0
          %5837 = vmatpush1.msra.mxu0 0.0
          %5838 = vmatprep.subr.mxu0 0.0
          %5839 = vmatpush1.msra.mxu0 0.0
          %5840 = vmatprep.subr.mxu0 0.0
          %5841 = vmatpush1.msra.mxu0 0.0
          %5842 = vmatprep.subr.mxu0 0.0
          %5843 = vmatpush1.msra.mxu0 0.0
          %5844 = vmatprep.subr.mxu0 0.0
          %5845 = vmatpush1.msra.mxu0 0.0
          %5846 = vmatprep.subr.mxu0 0.0
          %5847 = vmatpush1.msra.mxu0 0.0
          %5848 = vmatprep.subr.mxu0 0.0
          %5849 = vmatpush1.msra.mxu0 0.0
          %5850 = vmatprep.subr.mxu0 0.0
          %5851 = vmatpush1.msra.mxu0 0.0
          %5852 = vmatprep.subr.mxu0 0.0
          %5853 = vmatpush1.msra.mxu0 0.0
          %5854 = vmatprep.subr.mxu0 0.0
          %5855 = vmatpush1.msra.mxu0 0.0
          %5856 = vmatprep.subr.mxu0 0.0
          %5857 = vmatpush1.msra.mxu0 0.0
          %5858 = vmatprep.subr.mxu0 0.0
          %5859 = vmatpush1.msra.mxu0 0.0
          %5860 = vmatprep.subr.mxu0 0.0
          %5861 = vmatpush1.msra.mxu0 0.0
          %5862 = vmatprep.subr.mxu0 0.0
          %5863 = vmatpush1.msra.mxu0 0.0
          %5864 = vmatprep.mubr.f32.mxu0 0.0
          %5865 = vmatmul.mubr.f32.gmra.mrb[0].mxu0 %v5798
          %v5866 = vpop.f32.mrb[0].mxu0
          %v5867 = vadd.f32 0.0, %v5866
          %v5868 = vpop.f32.mrb[0].mxu0
          %5869 = vdwg.mxu0
          %v5870 = vadd.f32 %v5792, %v5867
          %v5871 = vadd.f32 %v5870, %v1045
          %v5873 = vcombine.high %v5871, %v5871
          %v5875 = vunpack.c.l.s4 1966171168
          %v5876 = vunpack.c.0.s8 %v5875
          %v5877 = vlaneseq
          %v5878 = vshrl.u32 %v5877, 7
          %v5879 = vsub.s32 %v5876, %v5878
          %v5880 = vrot.slane %v5871, %v5879
          %v5882 = vunpack.c.l.s4 1966171168
          %v5883 = vunpack.c.0.s8 %v5882
          %v5884 = vlaneseq
          %v5885 = vshrl.u32 %v5884, 7
          %v5886 = vsub.s32 %v5883, %v5885
          %v5887 = vrot.slane %v5873, %v5886
          %v5888 = vcombine.high %v5880, %v5880
          %v5889 = vcombine.high %v5887, %v5887
          %v5891 = vunpack.c.l.s4 1966171168
          %v5892 = vunpack.c.0.s8 %v5891
          %v5893 = vlaneseq
          %v5894 = vshrl.u32 %v5893, 7
          %v5895 = vsub.s32 %v5892, %v5894
          %v5896 = vrot.slane %v5880, %v5895
          %v5898 = vunpack.c.l.s4 1966171168
          %v5899 = vunpack.c.0.s8 %v5898
          %v5900 = vlaneseq
          %v5901 = vshrl.u32 %v5900, 7
          %v5902 = vsub.s32 %v5899, %v5901
          %v5903 = vrot.slane %v5887, %v5902
          %v5905 = vunpack.c.l.s4 1966171168
          %v5906 = vunpack.c.0.s8 %v5905
          %v5907 = vlaneseq
          %v5908 = vshrl.u32 %v5907, 7
          %v5909 = vsub.s32 %v5906, %v5908
          %v5910 = vrot.slane %v5888, %v5909
          %v5912 = vunpack.c.l.s4 1966171168
          %v5913 = vunpack.c.0.s8 %v5912
          %v5914 = vlaneseq
          %v5915 = vshrl.u32 %v5914, 7
          %v5916 = vsub.s32 %v5913, %v5915
          %v5917 = vrot.slane %v5889, %v5916
          %v5918 = vcombine.high %v5896, %v5896
          %v5919 = vcombine.high %v5903, %v5903
          %v5920 = vcombine.high %v5910, %v5910
          %v5921 = vcombine.high %v5917, %v5917
          %5930 = vst.msk [vmem:[%s263 + $0x7] sm:$0x1] %vm1106, %v5896
          %5931 = vst.msk [vmem:[%s263 + $0xf] sm:$0x1] %vm1106, %v5910
          %5932 = vst.msk [vmem:[%s263 + $0x17] sm:$0x1] %vm1106, %v5918
          %5933 = vst.msk [vmem:[%s263 + $0x1f] sm:$0x1] %vm1106, %v5920
          %5934 = vst.msk [vmem:[%s263 + $0x27] sm:$0x1] %vm1106, %v5903
          %5935 = vst.msk [vmem:[%s263 + $0x2f] sm:$0x1] %vm1106, %v5917
          %5936 = vst.msk [vmem:[%s263 + $0x37] sm:$0x1] %vm1106, %v5919
          %5937 = vst.msk [vmem:[%s263 + $0x3f] sm:$0x1] %vm1106, %v5921
        $region44: #{outer_product_mean.3} parent=35 // pred_fallthru
          _
        %s5938 = sand.u32 %s158, 1
        %s5939 = scalar_lea.sflag [#allocation4], %s5938
        %s5940 = sand.u32 %s158, 1
        %s5941 = smul.addr %s5940, 64
        %s5942 = scalar_lea.vmem [#allocation3], %s5941
        // Predicated region
        $region45: #{outer_product_mean.3} parent=35 // pred_check
          %p5943 = pneg %p168
        $region46: #{outer_product_mean.3} parent=35 // pred_check_branch
          %5945 = sbr.rel (%p5943) target = $region48
        $region47: #{outer_product_mean.3} parent=35 // pred_region
          %s5946 = smul.u32 8, %s25
          %s5948 = ssub.s32 1024, 1024
          %5949 = vsyncadd %s5939, %s5948
          %s5950 = sadd.s32 %s26, %s5946
          %s5951 = smul.addr %s24, 8
          %s5952 = sadd.s32 %s5950, %s5951
          %s5953 = smul.addr %s5952, 128
          %s5954 = scalar_lea.hbm %s4, %s5953
          %s5955 = sshll.u32 %s5942, 4
          %s5956 = int_to_ptr.vmem [resolvable:$true] %s5955
          %5961 = dma.vmem_to_hbm [thread:$0]  %s5956, 1024, %s5954, %s5939, 128, 128, 8
        $region48: #{outer_product_mean.3} parent=35 // pred_fallthru
          _
      $region36: #{outer_product_mean.3} parent=5 // pred_fallthru
        _
      %p5962 = scmp.le.s32.totalorder 2, %s13
      // Predicated region
      $region49: #{outer_product_mean.3} parent=5 // pred_check
        %p5963 = pneg %p5962
      $region50: #{outer_product_mean.3} parent=5 // pred_check_branch
        %5965 = sbr.rel (%p5963) target = $region52
      $region51: #{outer_product_mean.3} parent=5 // pred_region
        %s5966 = ssub.s32 %s13, 2
        // Predicated region
        $region53: #{outer_product_mean.3} parent=51 // pred_check
          %p5967 = pneg %p174
        $region54: #{outer_product_mean.3} parent=51 // pred_check_branch
          %5969 = sbr.rel (%p5967) target = $region56
        $region55: #{outer_product_mean.3} parent=51 // pred_region
          %s5970 = sand.u32 %s159, 1
          %s5971 = scalar_lea.sflag [#allocation4], %s5970
          %s5972 = sand.u32 %s159, 1
          %s5973 = smul.addr %s5972, 64
          %s5974 = scalar_lea.vmem [#allocation3], %s5973
          %5975 = dma.done %s5971, 1024
        $region56: #{outer_product_mean.3} parent=51 // pred_fallthru
          _
      $region52: #{outer_product_mean.3} parent=5 // pred_fallthru
        _
    $region6: #{outer_product_mean.3} parent=1 // loop_footer
      %s17 = sadd.s32 1, %s13
    $region7: #{outer_product_mean.3} parent=1 // loop_footer_branch
      %12 = sbr.rel target = $region3
    $region8: #{outer_product_mean.3} parent=1 // loop_exit
      _
    %5976 = vsyncpa [#allocation4], 1
    %s5977 = scalar_lea.sflag [#allocation4], 1
    %5978 = vsyncpa %s5977, 1

</llo_original>
